<compile_context>
chip_gen: v7x
topology: tpu7x:2x2x1
jax: 0.10.0
libtpu: 0.0.40
codegen_flags: <defaults>
</compile_context>

<pallas_src>
import functools

import jax
import jax.numpy as jnp
from jax.experimental import pallas as pl
from jax.experimental.pallas import tpu as pltpu


# ----------------------------------------------------------------------------
# Common spec helpers
# ----------------------------------------------------------------------------

_SMEM = pl.BlockSpec(memory_space=pltpu.MemorySpace.SMEM)


def _pick_tile(npix):
    # Largest lane tile (capped to limit vreg pressure in the unrolled kernels).
    for t in (512, 256, 128):
        if npix % t == 0:
            return t
    return npix  # fallback: whole pixel axis as one block (equals full dim)


def _state_spec(rows, tn):
    # (B, rows, Npix) tensors, batch dim squeezed out of the kernel ref.
    return pl.BlockSpec((None, rows, tn), lambda b, t: (b, 0, t))


def _params_parallel():
    return pltpu.CompilerParams(dimension_semantics=("parallel", "parallel"))


def _params_arbitrary():
    return pltpu.CompilerParams(dimension_semantics=("arbitrary", "arbitrary"))


# ----------------------------------------------------------------------------
# phi_r : residual channel-mixing MLP  (fused forward, fused adjoint)
# ----------------------------------------------------------------------------

def _phi_fwd_kernel(x_ref, w1_ref, b1e_ref, w2_ref, b2_ref, o_ref, h_ref):
    C = x_ref.shape[0]
    C_hid = h_ref.shape[0]
    x = x_ref[...]                                     # (C, TN)
    h_rows = []
    for co in range(C_hid):
        acc = w1_ref[0, co] * x[0]
        for ci in range(1, C):
            acc = acc + w1_ref[ci, co] * x[ci]
        h_rows.append(jnp.tanh(acc + b1e_ref[co]))     # b1e already includes t*tvec
    for co in range(C_hid):
        h_ref[co, :] = h_rows[co]
    for co in range(C):
        acc = w2_ref[0, co] * h_rows[0]
        for ci in range(1, C_hid):
            acc = acc + w2_ref[ci, co] * h_rows[ci]
        o_ref[co, :] = x[co] + acc + b2_ref[co]


def phi_apply(x3, t, params):
    B, C, Np = x3.shape
    C_hid = params["phi_W1"].shape[1]
    TN = _pick_tile(Np)
    grid = (B, Np // TN)
    # fold the time embedding into the bias (tiny XLA op, removes an SMEM operand)
    b1_eff = params["phi_b1"] + jnp.float32(t) * params["phi_tvec"]
    return pl.pallas_call(
        _phi_fwd_kernel,
        grid=grid,
        in_specs=[_state_spec(C, TN), _SMEM, _SMEM, _SMEM, _SMEM],
        out_specs=(_state_spec(C, TN), _state_spec(C_hid, TN)),
        out_shape=(jax.ShapeDtypeStruct((B, C, Np), jnp.float32),
                   jax.ShapeDtypeStruct((B, C_hid, Np), jnp.float32)),
        compiler_params=_params_parallel(),
    )(x3, params["phi_W1"], b1_eff, params["phi_W2"], params["phi_b2"])


def _phi_bwd_kernel(acc_ref, g_ref, h_ref, w1_ref, w2_ref, o_ref):
    # adjoint of phi_r w.r.t. x, accumulated into `acc`:
    #   dpre = (W2 g) * (1 - h^2) ;  dx = g + W1 dpre ;  out = acc + dx
    C = g_ref.shape[0]
    C_hid = h_ref.shape[0]
    g = g_ref[...]
    h = h_ref[...]
    acc = acc_ref[...]
    dpre = []
    for ch in range(C_hid):
        dh = w2_ref[ch, 0] * g[0]
        for c in range(1, C):
            dh = dh + w2_ref[ch, c] * g[c]
        dpre.append(dh * (1.0 - h[ch] * h[ch]))
    for ci in range(C):
        dx = g[ci]
        for ch in range(C_hid):
            dx = dx + w1_ref[ci, ch] * dpre[ch]
        o_ref[ci, :] = acc[ci] + dx


def phi_backprop_acc(acc, g, hsave, params):
    B, C, Np = g.shape
    C_hid = hsave.shape[1]
    TN = _pick_tile(Np)
    grid = (B, Np // TN)
    return pl.pallas_call(
        _phi_bwd_kernel,
        grid=grid,
        in_specs=[_state_spec(C, TN), _state_spec(C, TN), _state_spec(C_hid, TN),
                  _SMEM, _SMEM],
        out_specs=_state_spec(C, TN),
        out_shape=jax.ShapeDtypeStruct((B, C, Np), jnp.float32),
        compiler_params=_params_parallel(),
    )(acc, g, hsave, params["phi_W1"], params["phi_W2"])


# ----------------------------------------------------------------------------
# Observation / regularization term adjoints (Model_Var_Cost + Model_WeightedL2Norm)
# ----------------------------------------------------------------------------

def _obs_adj_kernel(p_ref, y_ref, m_ref, w_ref, o_ref):
    # dL/dpred = (2*alphaObs^2*WObs^2/denom) * mask^2 * (pred - yobs)
    C = p_ref.shape[0]
    p = p_ref[...]
    y = y_ref[...]
    m = m_ref[...]
    for c in range(C):
        o_ref[c, :] = w_ref[c] * (m[c] * m[c]) * (p[c] - y[c])


def obs_adjoint(pred, yobs_i, mask_i, wobs_eff):
    B, C, Np = pred.shape
    TN = _pick_tile(Np)
    grid = (B, Np // TN)
    return pl.pallas_call(
        _obs_adj_kernel,
        grid=grid,
        in_specs=[_state_spec(C, TN)] * 3 + [_SMEM],
        out_specs=_state_spec(C, TN),
        out_shape=jax.ShapeDtypeStruct((B, C, Np), jnp.float32),
        compiler_params=_params_parallel(),
    )(pred, yobs_i, mask_i, wobs_eff)


def _reg_adj_kernel(x_ref, p1_ref, g1_ref, w_ref, reg_ref, adj1_ref):
    # reg = (2*alphaReg^2*WReg^2/denom) * (x_k - preds[1]);  adj[1] = gobs[1] - reg
    C = x_ref.shape[0]
    x = x_ref[...]
    p1 = p1_ref[...]
    g1 = g1_ref[...]
    for c in range(C):
        r = w_ref[c] * (x[c] - p1[c])
        reg_ref[c, :] = r
        adj1_ref[c, :] = g1[c] - r


def reg_adjoint(x3, pred1, gobs1, wreg_eff):
    B, C, Np = x3.shape
    TN = _pick_tile(Np)
    grid = (B, Np // TN)
    return pl.pallas_call(
        _reg_adj_kernel,
        grid=grid,
        in_specs=[_state_spec(C, TN)] * 3 + [_SMEM],
        out_specs=(_state_spec(C, TN), _state_spec(C, TN)),
        out_shape=(jax.ShapeDtypeStruct((B, C, Np), jnp.float32),
                   jax.ShapeDtypeStruct((B, C, Np), jnp.float32)),
        compiler_params=_params_parallel(),
    )(x3, pred1, gobs1, wreg_eff)


def _grad_fin_kernel(a0_ref, reg_ref, g_ref, ss_ref):
    # grad = adj[0] + reg ; also accumulate per-batch sum(grad^2) for normgrad
    b = pl.program_id(0)
    tile = pl.program_id(1)
    d = a0_ref[...] + reg_ref[...]
    g_ref[...] = d
    part = jnp.sum(d * d)

    @pl.when(tile == 0)
    def _():
        ss_ref[b] = part

    @pl.when(tile > 0)
    def _():
        ss_ref[b] = ss_ref[b] + part


def grad_finalize(adj0, reg):
    B, C, Np = adj0.shape
    TN = _pick_tile(Np)
    grid = (B, Np // TN)
    return pl.pallas_call(
        _grad_fin_kernel,
        grid=grid,
        in_specs=[_state_spec(C, TN), _state_spec(C, TN)],
        out_specs=(_state_spec(C, TN), _SMEM),
        out_shape=(jax.ShapeDtypeStruct((B, C, Np), jnp.float32),
                   jax.ShapeDtypeStruct((B,), jnp.float32)),
        compiler_params=_params_arbitrary(),   # resident SMEM reduction output
    )(adj0, reg)


# ----------------------------------------------------------------------------
# model_Grad : channel LSTM cell, fused with grad normalization and the
#              x_{k+1} = x_k - grad / n_grad update
# ----------------------------------------------------------------------------

def _lstm_step_kernel(inv_n_grad, x_ref, g_ref, h_ref, c_ref, invng_ref,
                      wg_ref, bg_ref, wo_ref, bo_ref,
                      xo_ref, ho_ref, co_ref):
    C = x_ref.shape[0]
    b = pl.program_id(0)
    inv_ng = invng_ref[b]                               # per-batch 1/normgrad
    x = x_ref[...]
    g = g_ref[...]
    hp = h_ref[...]
    cp = c_ref[...]
    ins = [g[c] * inv_ng for c in range(C)] + [hp[c] for c in range(C)]   # 2C rows

    h_new = []
    for c in range(C):
        def gate(go):
            a = wg_ref[0, go] * ins[0]
            for gi in range(1, 2 * C):
                a = a + wg_ref[gi, go] * ins[gi]
            return a + bg_ref[go]

        i_g = jax.nn.sigmoid(gate(c))
        f_g = jax.nn.sigmoid(gate(C + c))
        o_g = jax.nn.sigmoid(gate(2 * C + c))
        c_t = jnp.tanh(gate(3 * C + c))
        cn = f_g * cp[c] + i_g * c_t
        hn = o_g * jnp.tanh(cn)
        co_ref[c, :] = cn
        ho_ref[c, :] = hn
        h_new.append(hn)

    for c in range(C):
        o = wo_ref[0, c] * h_new[0]
        for ci in range(1, C):
            o = o + wo_ref[ci, c] * h_new[ci]
        xo_ref[c, :] = x[c] - inv_n_grad * (o + bo_ref[c])


def lstm_update(x_k, grad, hidden, cell, inv_ng, params, inv_n_grad):
    B, C, Np = x_k.shape
    TN = _pick_tile(Np)
    grid = (B, Np // TN)
    return pl.pallas_call(
        functools.partial(_lstm_step_kernel, float(inv_n_grad)),
        grid=grid,
        in_specs=[_state_spec(C, TN)] * 4 + [_SMEM] * 5,
        out_specs=(_state_spec(C, TN),) * 3,
        out_shape=(jax.ShapeDtypeStruct((B, C, Np), jnp.float32),) * 3,
        compiler_params=_params_parallel(),
    )(x_k, grad, hidden, cell, inv_ng,
      params["lstm_Wg"], params["lstm_bg"], params["lstm_Wo"], params["lstm_bo"])


# ----------------------------------------------------------------------------
# Forecast scheduling (same branch order as the PyTorch reference) and the
# hand-written adjoint of the variational cost (gradient w.r.t. x_k only,
# exactly what torch.autograd.grad(loss, xb) produces).
# ----------------------------------------------------------------------------

def _forecast_plan(n_obs, dt):
    plan = []
    for i in range(1, n_obs // dt):
        for h in (24, 12, 6, 3, 1):
            step = h // dt
            if step > 0 and i % step == 0:
                plan.append((i - step, float(h) / 100.0))
                break
    return plan


def var_cost_grad(x_k, yobs3, mask3, params, plan, wobs_eff, wreg_eff):
    # forward forecast (save tanh activations for the adjoint sweep)
    preds = [x_k]
    hsaves = [None]
    for src, tval in plan:
        out, hsave = phi_apply(preds[src], tval, params)
        preds.append(out)
        hsaves.append(hsave)
    P = len(preds)

    # direct adjoints from the observation term  (model_H: masked innovation)
    adj = [obs_adjoint(preds[i], yobs3[:, i], mask3[:, i], wobs_eff)
           for i in range(P)]

    # regularization term dx = x_k - preds[1]; fused adj[1] update
    reg, adj1 = reg_adjoint(x_k, preds[1], adj[1], wreg_eff)
    adj[1] = adj1

    # reverse sweep through the phi_r forecast DAG
    for i in range(P - 1, 0, -1):
        src = plan[i - 1][0]
        adj[src] = phi_backprop_acc(adj[src], adj[i], hsaves[i], params)

    # dL/dx_k = adj[0] + reg, fused with the per-batch sum(grad^2) reduction
    return grad_finalize(adj[0], reg)


# ----------------------------------------------------------------------------
# Solver_Grad_4DVarNN.solve
# ----------------------------------------------------------------------------

def solve(x_0, yobs, mask, params, n_grad, dt):
    B, C, H, W = x_0.shape
    Np = H * W
    T = yobs.shape[1]
    plan = _forecast_plan(T, dt)
    P = len(plan) + 1
    assert 2 <= P <= T, "forecast must produce at least 2 preds and <= T obs slots"

    # NCHW -> (B, C, Npix): pure reshape (no transpose), done once.
    x3 = x_0.reshape(B, C, Np).astype(jnp.float32)
    yobs3 = yobs.reshape(B, T, C, Np).astype(jnp.float32)
    mask3 = mask.reshape(B, T, C, Np).astype(jnp.float32)

    # Effective per-channel weights of Model_Var_Cost's L2 norms, including the
    # factor 2 from d(x^2) and the nansum denominator (numel / n_channels).
    # TODO(synk): torch.nansum NaN-skipping not reproduced; inputs assumed finite.
    wobs_eff = (2.0 * params["alphaObs"][0, 0] ** 2) * (params["WObs"][0] ** 2) \
        / float(B * P * Np)
    wreg_eff = (2.0 * params["alphaReg"][0] ** 2) * (params["WReg"] ** 2) \
        / float(B * Np)

    h0 = jnp.zeros_like(x3)
    c0 = jnp.zeros_like(x3)
    inv_n_grad = 1.0 / float(n_grad)

    def body(_, carry):
        x_k, hid, cel = carry
        grad, ssq = var_cost_grad(x_k, yobs3, mask3, params, plan,
                                  wobs_eff, wreg_eff)
        # normgrad = sqrt(mean(grad^2 over C,H,W)) per batch, nan/0/inf -> 1
        ng = jnp.sqrt(ssq / float(C * Np))
        bad = jnp.isnan(ng) | (ng == 0.0) | jnp.isinf(ng)
        inv_ng = 1.0 / jnp.where(bad, 1.0, ng)
        return lstm_update(x_k, grad, hid, cel, inv_ng, params, inv_n_grad)

    x_fin, _, _ = jax.lax.fori_loop(0, n_grad, body, (x3, h0, c0))
    return x_fin.reshape(B, C, H, W)


# ----------------------------------------------------------------------------
# Deterministic parameter construction (synthetic injected sub-modules)
# ----------------------------------------------------------------------------

def make_params(C, C_hid, key):
    ks = jax.random.split(key, 5)
    s = 0.1
    return {
        # phi_r: residual channel-mixing MLP (dynamical prior)
        "phi_W1": s * jax.random.normal(ks[0], (C, C_hid), jnp.float32),
        "phi_b1": jnp.zeros((C_hid,), jnp.float32),
        "phi_tvec": s * jax.random.normal(ks[1], (C_hid,), jnp.float32),
        "phi_W2": s * jax.random.normal(ks[2], (C_hid, C), jnp.float32),
        "phi_b2": jnp.zeros((C,), jnp.float32),
        # model_Grad: channel LSTM cell
        "lstm_Wg": s * jax.random.normal(ks[3], (2 * C, 4 * C), jnp.float32),
        "lstm_bg": jnp.zeros((4 * C,), jnp.float32),
        "lstm_Wo": s * jax.random.normal(ks[4], (C, C), jnp.float32),
        "lstm_bo": jnp.zeros((C,), jnp.float32),
        # Model_Var_Cost parameters (PyTorch inits: ones / 0.1; eps unused by L2)
        "alphaObs": jnp.ones((1, 1), jnp.float32),
        "alphaReg": jnp.ones((1,), jnp.float32),
        "WObs": jnp.ones((1, C), jnp.float32),
        "WReg": jnp.ones((C,), jnp.float32),
        "epsObs": 0.1 * jnp.ones((1,), jnp.float32),
        "epsReg": 0.1 * jnp.ones((1,), jnp.float32),
    }


# ----------------------------------------------------------------------------
# Main
# ----------------------------------------------------------------------------

if __name__ == "__main__":
    B, C, H, W = 2, 4, 16, 16
    T = 8            # hours of observations
    DT = 1           # solver dt -> forecast length = T // DT
    N_GRAD = 3       # n_iter_grad
    C_HID = 8

    params = make_params(C, C_HID, jax.random.PRNGKey(1))

    kx, ky, km = jax.random.split(jax.random.PRNGKey(0), 3)
    x0 = jax.random.normal(kx, (B, C, H, W), jnp.float32)
    yobs = jax.random.normal(ky, (B, T, C, H, W), jnp.float32)
    mask = (jax.random.uniform(km, (B, T, C, H, W)) < 0.7).astype(jnp.float32)

    @jax.jit
    def run(x, y, m):
        # forward(x, yobs, mask, vars, out_vars) -> solve(...)
        return solve(x, y, m, params, n_grad=N_GRAD, dt=DT)

    out = run(x0, yobs, mask)
    jax.block_until_ready(out)
    assert out.shape == (B, C, H, W)
    print("KERNEL_OK")
</pallas_src>

<mosaic_0001>
module attributes {stable_mosaic.version = 11 : i64} {
  func.func @_phi_bwd_kernel(%arg0: i32, %arg1: i32, %arg2: memref<1x4x256xf32, #tpu.memory_space<vmem>>, %arg3: memref<1x4x256xf32, #tpu.memory_space<vmem>>, %arg4: memref<1x8x256xf32, #tpu.memory_space<vmem>>, %arg5: memref<4x8xf32, #tpu.memory_space<smem>>, %arg6: memref<8x4xf32, #tpu.memory_space<smem>>, %arg7: memref<1x4x256xf32, #tpu.memory_space<vmem>>) attributes {dimension_semantics = [#tpu.dimension_semantics<parallel>, #tpu.dimension_semantics<parallel>], iteration_bounds = array<i64: 2, 1>, scalar_prefetch = 0 : i64, scratch_operands = 0 : i64, tpu.core_type = #tpu.core_type<tc>, window_params = [{transform_indices = @transform_0, window_bounds = array<i64: 1, 4, 256>}, {transform_indices = @transform_1, window_bounds = array<i64: 1, 4, 256>}, {transform_indices = @transform_2, window_bounds = array<i64: 1, 8, 256>}, {transform_indices = @transform_3, window_bounds = array<i64: 4, 8>}, {transform_indices = @transform_4, window_bounds = array<i64: 8, 4>}, {transform_indices = @transform_5, window_bounds = array<i64: 1, 4, 256>}]} {
    %c0 = arith.constant 0 : index
    %c0_0 = arith.constant 0 : index
    %c0_1 = arith.constant 0 : index
    %0 = vector.load %arg3[%c0, %c0_0, %c0_1] : memref<1x4x256xf32, #tpu.memory_space<vmem>>, vector<1x4x256xf32>
    %1 = vector.shape_cast %0 : vector<1x4x256xf32> to vector<4x256xf32>
    %c0_2 = arith.constant 0 : index
    %c0_3 = arith.constant 0 : index
    %c0_4 = arith.constant 0 : index
    %2 = vector.load %arg4[%c0_2, %c0_3, %c0_4] : memref<1x8x256xf32, #tpu.memory_space<vmem>>, vector<1x8x256xf32>
    %3 = vector.shape_cast %2 : vector<1x8x256xf32> to vector<8x256xf32>
    %c0_5 = arith.constant 0 : index
    %c0_6 = arith.constant 0 : index
    %c0_7 = arith.constant 0 : index
    %4 = vector.load %arg2[%c0_5, %c0_6, %c0_7] : memref<1x4x256xf32, #tpu.memory_space<vmem>>, vector<1x4x256xf32>
    %5 = vector.shape_cast %4 : vector<1x4x256xf32> to vector<4x256xf32>
    %c0_8 = arith.constant 0 : index
    %c0_9 = arith.constant 0 : index
    %6 = memref.load %arg6[%c0_8, %c0_9] : memref<8x4xf32, #tpu.memory_space<smem>>
    %7 = vector.extract_strided_slice %1 {offsets = [0, 0], sizes = [1, 256], strides = [1, 1]} : vector<4x256xf32> to vector<1x256xf32>
    %8 = vector.shape_cast %7 : vector<1x256xf32> to vector<256xf32>
    %9 = vector.broadcast %6 : f32 to vector<256xf32>
    %10 = arith.mulf %9, %8 : vector<256xf32>
    %c0_10 = arith.constant 0 : index
    %c1 = arith.constant 1 : index
    %11 = memref.load %arg6[%c0_10, %c1] : memref<8x4xf32, #tpu.memory_space<smem>>
    %12 = vector.extract_strided_slice %1 {offsets = [1, 0], sizes = [1, 256], strides = [1, 1]} : vector<4x256xf32> to vector<1x256xf32>
    %13 = vector.shape_cast %12 : vector<1x256xf32> to vector<256xf32>
    %14 = vector.broadcast %11 : f32 to vector<256xf32>
    %15 = arith.mulf %14, %13 : vector<256xf32>
    %16 = arith.addf %10, %15 : vector<256xf32>
    %c0_11 = arith.constant 0 : index
    %c2 = arith.constant 2 : index
    %17 = memref.load %arg6[%c0_11, %c2] : memref<8x4xf32, #tpu.memory_space<smem>>
    %18 = vector.extract_strided_slice %1 {offsets = [2, 0], sizes = [1, 256], strides = [1, 1]} : vector<4x256xf32> to vector<1x256xf32>
    %19 = vector.shape_cast %18 : vector<1x256xf32> to vector<256xf32>
    %20 = vector.broadcast %17 : f32 to vector<256xf32>
    %21 = arith.mulf %20, %19 : vector<256xf32>
    %22 = arith.addf %16, %21 : vector<256xf32>
    %c0_12 = arith.constant 0 : index
    %c3 = arith.constant 3 : index
    %23 = memref.load %arg6[%c0_12, %c3] : memref<8x4xf32, #tpu.memory_space<smem>>
    %24 = vector.extract_strided_slice %1 {offsets = [3, 0], sizes = [1, 256], strides = [1, 1]} : vector<4x256xf32> to vector<1x256xf32>
    %25 = vector.shape_cast %24 : vector<1x256xf32> to vector<256xf32>
    %26 = vector.broadcast %23 : f32 to vector<256xf32>
    %27 = arith.mulf %26, %25 : vector<256xf32>
    %28 = arith.addf %22, %27 : vector<256xf32>
    %29 = vector.extract_strided_slice %3 {offsets = [0, 0], sizes = [1, 256], strides = [1, 1]} : vector<8x256xf32> to vector<1x256xf32>
    %30 = vector.shape_cast %29 : vector<1x256xf32> to vector<256xf32>
    %31 = vector.extract_strided_slice %3 {offsets = [0, 0], sizes = [1, 256], strides = [1, 1]} : vector<8x256xf32> to vector<1x256xf32>
    %32 = vector.shape_cast %31 : vector<1x256xf32> to vector<256xf32>
    %33 = arith.mulf %30, %32 : vector<256xf32>
    %cst = arith.constant 1.000000e+00 : f32
    %34 = vector.broadcast %cst : f32 to vector<256xf32>
    %35 = arith.subf %34, %33 : vector<256xf32>
    %36 = arith.mulf %28, %35 : vector<256xf32>
    %c1_13 = arith.constant 1 : index
    %c0_14 = arith.constant 0 : index
    %37 = memref.load %arg6[%c1_13, %c0_14] : memref<8x4xf32, #tpu.memory_space<smem>>
    %38 = vector.extract_strided_slice %1 {offsets = [0, 0], sizes = [1, 256], strides = [1, 1]} : vector<4x256xf32> to vector<1x256xf32>
    %39 = vector.shape_cast %38 : vector<1x256xf32> to vector<256xf32>
    %40 = vector.broadcast %37 : f32 to vector<256xf32>
    %41 = arith.mulf %40, %39 : vector<256xf32>
    %c1_15 = arith.constant 1 : index
    %c1_16 = arith.constant 1 : index
    %42 = memref.load %arg6[%c1_15, %c1_16] : memref<8x4xf32, #tpu.memory_space<smem>>
    %43 = vector.extract_strided_slice %1 {offsets = [1, 0], sizes = [1, 256], strides = [1, 1]} : vector<4x256xf32> to vector<1x256xf32>
    %44 = vector.shape_cast %43 : vector<1x256xf32> to vector<256xf32>
    %45 = vector.broadcast %42 : f32 to vector<256xf32>
    %46 = arith.mulf %45, %44 : vector<256xf32>
    %47 = arith.addf %41, %46 : vector<256xf32>
    %c1_17 = arith.constant 1 : index
    %c2_18 = arith.constant 2 : index
    %48 = memref.load %arg6[%c1_17, %c2_18] : memref<8x4xf32, #tpu.memory_space<smem>>
    %49 = vector.extract_strided_slice %1 {offsets = [2, 0], sizes = [1, 256], strides = [1, 1]} : vector<4x256xf32> to vector<1x256xf32>
    %50 = vector.shape_cast %49 : vector<1x256xf32> to vector<256xf32>
    %51 = vector.broadcast %48 : f32 to vector<256xf32>
    %52 = arith.mulf %51, %50 : vector<256xf32>
    %53 = arith.addf %47, %52 : vector<256xf32>
    %c1_19 = arith.constant 1 : index
    %c3_20 = arith.constant 3 : index
    %54 = memref.load %arg6[%c1_19, %c3_20] : memref<8x4xf32, #tpu.memory_space<smem>>
    %55 = vector.extract_strided_slice %1 {offsets = [3, 0], sizes = [1, 256], strides = [1, 1]} : vector<4x256xf32> to vector<1x256xf32>
    %56 = vector.shape_cast %55 : vector<1x256xf32> to vector<256xf32>
    %57 = vector.broadcast %54 : f32 to vector<256xf32>
    %58 = arith.mulf %57, %56 : vector<256xf32>
    %59 = arith.addf %53, %58 : vector<256xf32>
    %60 = vector.extract_strided_slice %3 {offsets = [1, 0], sizes = [1, 256], strides = [1, 1]} : vector<8x256xf32> to vector<1x256xf32>
    %61 = vector.shape_cast %60 : vector<1x256xf32> to vector<256xf32>
    %62 = vector.extract_strided_slice %3 {offsets = [1, 0], sizes = [1, 256], strides = [1, 1]} : vector<8x256xf32> to vector<1x256xf32>
    %63 = vector.shape_cast %62 : vector<1x256xf32> to vector<256xf32>
    %64 = arith.mulf %61, %63 : vector<256xf32>
    %cst_21 = arith.constant 1.000000e+00 : f32
    %65 = vector.broadcast %cst_21 : f32 to vector<256xf32>
    %66 = arith.subf %65, %64 : vector<256xf32>
    %67 = arith.mulf %59, %66 : vector<256xf32>
    %c2_22 = arith.constant 2 : index
    %c0_23 = arith.constant 0 : index
    %68 = memref.load %arg6[%c2_22, %c0_23] : memref<8x4xf32, #tpu.memory_space<smem>>
    %69 = vector.extract_strided_slice %1 {offsets = [0, 0], sizes = [1, 256], strides = [1, 1]} : vector<4x256xf32> to vector<1x256xf32>
    %70 = vector.shape_cast %69 : vector<1x256xf32> to vector<256xf32>
    %71 = vector.broadcast %68 : f32 to vector<256xf32>
    %72 = arith.mulf %71, %70 : vector<256xf32>
    %c2_24 = arith.constant 2 : index
    %c1_25 = arith.constant 1 : index
    %73 = memref.load %arg6[%c2_24, %c1_25] : memref<8x4xf32, #tpu.memory_space<smem>>
    %74 = vector.extract_strided_slice %1 {offsets = [1, 0], sizes = [1, 256], strides = [1, 1]} : vector<4x256xf32> to vector<1x256xf32>
    %75 = vector.shape_cast %74 : vector<1x256xf32> to vector<256xf32>
    %76 = vector.broadcast %73 : f32 to vector<256xf32>
    %77 = arith.mulf %76, %75 : vector<256xf32>
    %78 = arith.addf %72, %77 : vector<256xf32>
    %c2_26 = arith.constant 2 : index
    %c2_27 = arith.constant 2 : index
    %79 = memref.load %arg6[%c2_26, %c2_27] : memref<8x4xf32, #tpu.memory_space<smem>>
    %80 = vector.extract_strided_slice %1 {offsets = [2, 0], sizes = [1, 256], strides = [1, 1]} : vector<4x256xf32> to vector<1x256xf32>
    %81 = vector.shape_cast %80 : vector<1x256xf32> to vector<256xf32>
    %82 = vector.broadcast %79 : f32 to vector<256xf32>
    %83 = arith.mulf %82, %81 : vector<256xf32>
    %84 = arith.addf %78, %83 : vector<256xf32>
    %c2_28 = arith.constant 2 : index
    %c3_29 = arith.constant 3 : index
    %85 = memref.load %arg6[%c2_28, %c3_29] : memref<8x4xf32, #tpu.memory_space<smem>>
    %86 = vector.extract_strided_slice %1 {offsets = [3, 0], sizes = [1, 256], strides = [1, 1]} : vector<4x256xf32> to vector<1x256xf32>
    %87 = vector.shape_cast %86 : vector<1x256xf32> to vector<256xf32>
    %88 = vector.broadcast %85 : f32 to vector<256xf32>
    %89 = arith.mulf %88, %87 : vector<256xf32>
    %90 = arith.addf %84, %89 : vector<256xf32>
    %91 = vector.extract_strided_slice %3 {offsets = [2, 0], sizes = [1, 256], strides = [1, 1]} : vector<8x256xf32> to vector<1x256xf32>
    %92 = vector.shape_cast %91 : vector<1x256xf32> to vector<256xf32>
    %93 = vector.extract_strided_slice %3 {offsets = [2, 0], sizes = [1, 256], strides = [1, 1]} : vector<8x256xf32> to vector<1x256xf32>
    %94 = vector.shape_cast %93 : vector<1x256xf32> to vector<256xf32>
    %95 = arith.mulf %92, %94 : vector<256xf32>
    %cst_30 = arith.constant 1.000000e+00 : f32
    %96 = vector.broadcast %cst_30 : f32 to vector<256xf32>
    %97 = arith.subf %96, %95 : vector<256xf32>
    %98 = arith.mulf %90, %97 : vector<256xf32>
    %c3_31 = arith.constant 3 : index
    %c0_32 = arith.constant 0 : index
    %99 = memref.load %arg6[%c3_31, %c0_32] : memref<8x4xf32, #tpu.memory_space<smem>>
    %100 = vector.extract_strided_slice %1 {offsets = [0, 0], sizes = [1, 256], strides = [1, 1]} : vector<4x256xf32> to vector<1x256xf32>
    %101 = vector.shape_cast %100 : vector<1x256xf32> to vector<256xf32>
    %102 = vector.broadcast %99 : f32 to vector<256xf32>
    %103 = arith.mulf %102, %101 : vector<256xf32>
    %c3_33 = arith.constant 3 : index
    %c1_34 = arith.constant 1 : index
    %104 = memref.load %arg6[%c3_33, %c1_34] : memref<8x4xf32, #tpu.memory_space<smem>>
    %105 = vector.extract_strided_slice %1 {offsets = [1, 0], sizes = [1, 256], strides = [1, 1]} : vector<4x256xf32> to vector<1x256xf32>
    %106 = vector.shape_cast %105 : vector<1x256xf32> to vector<256xf32>
    %107 = vector.broadcast %104 : f32 to vector<256xf32>
    %108 = arith.mulf %107, %106 : vector<256xf32>
    %109 = arith.addf %103, %108 : vector<256xf32>
    %c3_35 = arith.constant 3 : index
    %c2_36 = arith.constant 2 : index
    %110 = memref.load %arg6[%c3_35, %c2_36] : memref<8x4xf32, #tpu.memory_space<smem>>
    %111 = vector.extract_strided_slice %1 {offsets = [2, 0], sizes = [1, 256], strides = [1, 1]} : vector<4x256xf32> to vector<1x256xf32>
    %112 = vector.shape_cast %111 : vector<1x256xf32> to vector<256xf32>
    %113 = vector.broadcast %110 : f32 to vector<256xf32>
    %114 = arith.mulf %113, %112 : vector<256xf32>
    %115 = arith.addf %109, %114 : vector<256xf32>
    %c3_37 = arith.constant 3 : index
    %c3_38 = arith.constant 3 : index
    %116 = memref.load %arg6[%c3_37, %c3_38] : memref<8x4xf32, #tpu.memory_space<smem>>
    %117 = vector.extract_strided_slice %1 {offsets = [3, 0], sizes = [1, 256], strides = [1, 1]} : vector<4x256xf32> to vector<1x256xf32>
    %118 = vector.shape_cast %117 : vector<1x256xf32> to vector<256xf32>
    %119 = vector.broadcast %116 : f32 to vector<256xf32>
    %120 = arith.mulf %119, %118 : vector<256xf32>
    %121 = arith.addf %115, %120 : vector<256xf32>
    %122 = vector.extract_strided_slice %3 {offsets = [3, 0], sizes = [1, 256], strides = [1, 1]} : vector<8x256xf32> to vector<1x256xf32>
    %123 = vector.shape_cast %122 : vector<1x256xf32> to vector<256xf32>
    %124 = vector.extract_strided_slice %3 {offsets = [3, 0], sizes = [1, 256], strides = [1, 1]} : vector<8x256xf32> to vector<1x256xf32>
    %125 = vector.shape_cast %124 : vector<1x256xf32> to vector<256xf32>
    %126 = arith.mulf %123, %125 : vector<256xf32>
    %cst_39 = arith.constant 1.000000e+00 : f32
    %127 = vector.broadcast %cst_39 : f32 to vector<256xf32>
    %128 = arith.subf %127, %126 : vector<256xf32>
    %129 = arith.mulf %121, %128 : vector<256xf32>
    %c4 = arith.constant 4 : index
    %c0_40 = arith.constant 0 : index
    %130 = memref.load %arg6[%c4, %c0_40] : memref<8x4xf32, #tpu.memory_space<smem>>
    %131 = vector.extract_strided_slice %1 {offsets = [0, 0], sizes = [1, 256], strides = [1, 1]} : vector<4x256xf32> to vector<1x256xf32>
    %132 = vector.shape_cast %131 : vector<1x256xf32> to vector<256xf32>
    %133 = vector.broadcast %130 : f32 to vector<256xf32>
    %134 = arith.mulf %133, %132 : vector<256xf32>
    %c4_41 = arith.constant 4 : index
    %c1_42 = arith.constant 1 : index
    %135 = memref.load %arg6[%c4_41, %c1_42] : memref<8x4xf32, #tpu.memory_space<smem>>
    %136 = vector.extract_strided_slice %1 {offsets = [1, 0], sizes = [1, 256], strides = [1, 1]} : vector<4x256xf32> to vector<1x256xf32>
    %137 = vector.shape_cast %136 : vector<1x256xf32> to vector<256xf32>
    %138 = vector.broadcast %135 : f32 to vector<256xf32>
    %139 = arith.mulf %138, %137 : vector<256xf32>
    %140 = arith.addf %134, %139 : vector<256xf32>
    %c4_43 = arith.constant 4 : index
    %c2_44 = arith.constant 2 : index
    %141 = memref.load %arg6[%c4_43, %c2_44] : memref<8x4xf32, #tpu.memory_space<smem>>
    %142 = vector.extract_strided_slice %1 {offsets = [2, 0], sizes = [1, 256], strides = [1, 1]} : vector<4x256xf32> to vector<1x256xf32>
    %143 = vector.shape_cast %142 : vector<1x256xf32> to vector<256xf32>
    %144 = vector.broadcast %141 : f32 to vector<256xf32>
    %145 = arith.mulf %144, %143 : vector<256xf32>
    %146 = arith.addf %140, %145 : vector<256xf32>
    %c4_45 = arith.constant 4 : index
    %c3_46 = arith.constant 3 : index
    %147 = memref.load %arg6[%c4_45, %c3_46] : memref<8x4xf32, #tpu.memory_space<smem>>
    %148 = vector.extract_strided_slice %1 {offsets = [3, 0], sizes = [1, 256], strides = [1, 1]} : vector<4x256xf32> to vector<1x256xf32>
    %149 = vector.shape_cast %148 : vector<1x256xf32> to vector<256xf32>
    %150 = vector.broadcast %147 : f32 to vector<256xf32>
    %151 = arith.mulf %150, %149 : vector<256xf32>
    %152 = arith.addf %146, %151 : vector<256xf32>
    %153 = vector.extract_strided_slice %3 {offsets = [4, 0], sizes = [1, 256], strides = [1, 1]} : vector<8x256xf32> to vector<1x256xf32>
    %154 = vector.shape_cast %153 : vector<1x256xf32> to vector<256xf32>
    %155 = vector.extract_strided_slice %3 {offsets = [4, 0], sizes = [1, 256], strides = [1, 1]} : vector<8x256xf32> to vector<1x256xf32>
    %156 = vector.shape_cast %155 : vector<1x256xf32> to vector<256xf32>
    %157 = arith.mulf %154, %156 : vector<256xf32>
    %cst_47 = arith.constant 1.000000e+00 : f32
    %158 = vector.broadcast %cst_47 : f32 to vector<256xf32>
    %159 = arith.subf %158, %157 : vector<256xf32>
    %160 = arith.mulf %152, %159 : vector<256xf32>
    %c5 = arith.constant 5 : index
    %c0_48 = arith.constant 0 : index
    %161 = memref.load %arg6[%c5, %c0_48] : memref<8x4xf32, #tpu.memory_space<smem>>
    %162 = vector.extract_strided_slice %1 {offsets = [0, 0], sizes = [1, 256], strides = [1, 1]} : vector<4x256xf32> to vector<1x256xf32>
    %163 = vector.shape_cast %162 : vector<1x256xf32> to vector<256xf32>
    %164 = vector.broadcast %161 : f32 to vector<256xf32>
    %165 = arith.mulf %164, %163 : vector<256xf32>
    %c5_49 = arith.constant 5 : index
    %c1_50 = arith.constant 1 : index
    %166 = memref.load %arg6[%c5_49, %c1_50] : memref<8x4xf32, #tpu.memory_space<smem>>
    %167 = vector.extract_strided_slice %1 {offsets = [1, 0], sizes = [1, 256], strides = [1, 1]} : vector<4x256xf32> to vector<1x256xf32>
    %168 = vector.shape_cast %167 : vector<1x256xf32> to vector<256xf32>
    %169 = vector.broadcast %166 : f32 to vector<256xf32>
    %170 = arith.mulf %169, %168 : vector<256xf32>
    %171 = arith.addf %165, %170 : vector<256xf32>
    %c5_51 = arith.constant 5 : index
    %c2_52 = arith.constant 2 : index
    %172 = memref.load %arg6[%c5_51, %c2_52] : memref<8x4xf32, #tpu.memory_space<smem>>
    %173 = vector.extract_strided_slice %1 {offsets = [2, 0], sizes = [1, 256], strides = [1, 1]} : vector<4x256xf32> to vector<1x256xf32>
    %174 = vector.shape_cast %173 : vector<1x256xf32> to vector<256xf32>
    %175 = vector.broadcast %172 : f32 to vector<256xf32>
    %176 = arith.mulf %175, %174 : vector<256xf32>
    %177 = arith.addf %171, %176 : vector<256xf32>
    %c5_53 = arith.constant 5 : index
    %c3_54 = arith.constant 3 : index
    %178 = memref.load %arg6[%c5_53, %c3_54] : memref<8x4xf32, #tpu.memory_space<smem>>
    %179 = vector.extract_strided_slice %1 {offsets = [3, 0], sizes = [1, 256], strides = [1, 1]} : vector<4x256xf32> to vector<1x256xf32>
    %180 = vector.shape_cast %179 : vector<1x256xf32> to vector<256xf32>
    %181 = vector.broadcast %178 : f32 to vector<256xf32>
    %182 = arith.mulf %181, %180 : vector<256xf32>
    %183 = arith.addf %177, %182 : vector<256xf32>
    %184 = vector.extract_strided_slice %3 {offsets = [5, 0], sizes = [1, 256], strides = [1, 1]} : vector<8x256xf32> to vector<1x256xf32>
    %185 = vector.shape_cast %184 : vector<1x256xf32> to vector<256xf32>
    %186 = vector.extract_strided_slice %3 {offsets = [5, 0], sizes = [1, 256], strides = [1, 1]} : vector<8x256xf32> to vector<1x256xf32>
    %187 = vector.shape_cast %186 : vector<1x256xf32> to vector<256xf32>
    %188 = arith.mulf %185, %187 : vector<256xf32>
    %cst_55 = arith.constant 1.000000e+00 : f32
    %189 = vector.broadcast %cst_55 : f32 to vector<256xf32>
    %190 = arith.subf %189, %188 : vector<256xf32>
    %191 = arith.mulf %183, %190 : vector<256xf32>
    %c6 = arith.constant 6 : index
    %c0_56 = arith.constant 0 : index
    %192 = memref.load %arg6[%c6, %c0_56] : memref<8x4xf32, #tpu.memory_space<smem>>
    %193 = vector.extract_strided_slice %1 {offsets = [0, 0], sizes = [1, 256], strides = [1, 1]} : vector<4x256xf32> to vector<1x256xf32>
    %194 = vector.shape_cast %193 : vector<1x256xf32> to vector<256xf32>
    %195 = vector.broadcast %192 : f32 to vector<256xf32>
    %196 = arith.mulf %195, %194 : vector<256xf32>
    %c6_57 = arith.constant 6 : index
    %c1_58 = arith.constant 1 : index
    %197 = memref.load %arg6[%c6_57, %c1_58] : memref<8x4xf32, #tpu.memory_space<smem>>
    %198 = vector.extract_strided_slice %1 {offsets = [1, 0], sizes = [1, 256], strides = [1, 1]} : vector<4x256xf32> to vector<1x256xf32>
    %199 = vector.shape_cast %198 : vector<1x256xf32> to vector<256xf32>
    %200 = vector.broadcast %197 : f32 to vector<256xf32>
    %201 = arith.mulf %200, %199 : vector<256xf32>
    %202 = arith.addf %196, %201 : vector<256xf32>
    %c6_59 = arith.constant 6 : index
    %c2_60 = arith.constant 2 : index
    %203 = memref.load %arg6[%c6_59, %c2_60] : memref<8x4xf32, #tpu.memory_space<smem>>
    %204 = vector.extract_strided_slice %1 {offsets = [2, 0], sizes = [1, 256], strides = [1, 1]} : vector<4x256xf32> to vector<1x256xf32>
    %205 = vector.shape_cast %204 : vector<1x256xf32> to vector<256xf32>
    %206 = vector.broadcast %203 : f32 to vector<256xf32>
    %207 = arith.mulf %206, %205 : vector<256xf32>
    %208 = arith.addf %202, %207 : vector<256xf32>
    %c6_61 = arith.constant 6 : index
    %c3_62 = arith.constant 3 : index
    %209 = memref.load %arg6[%c6_61, %c3_62] : memref<8x4xf32, #tpu.memory_space<smem>>
    %210 = vector.extract_strided_slice %1 {offsets = [3, 0], sizes = [1, 256], strides = [1, 1]} : vector<4x256xf32> to vector<1x256xf32>
    %211 = vector.shape_cast %210 : vector<1x256xf32> to vector<256xf32>
    %212 = vector.broadcast %209 : f32 to vector<256xf32>
    %213 = arith.mulf %212, %211 : vector<256xf32>
    %214 = arith.addf %208, %213 : vector<256xf32>
    %215 = vector.extract_strided_slice %3 {offsets = [6, 0], sizes = [1, 256], strides = [1, 1]} : vector<8x256xf32> to vector<1x256xf32>
    %216 = vector.shape_cast %215 : vector<1x256xf32> to vector<256xf32>
    %217 = vector.extract_strided_slice %3 {offsets = [6, 0], sizes = [1, 256], strides = [1, 1]} : vector<8x256xf32> to vector<1x256xf32>
    %218 = vector.shape_cast %217 : vector<1x256xf32> to vector<256xf32>
    %219 = arith.mulf %216, %218 : vector<256xf32>
    %cst_63 = arith.constant 1.000000e+00 : f32
    %220 = vector.broadcast %cst_63 : f32 to vector<256xf32>
    %221 = arith.subf %220, %219 : vector<256xf32>
    %222 = arith.mulf %214, %221 : vector<256xf32>
    %c7 = arith.constant 7 : index
    %c0_64 = arith.constant 0 : index
    %223 = memref.load %arg6[%c7, %c0_64] : memref<8x4xf32, #tpu.memory_space<smem>>
    %224 = vector.extract_strided_slice %1 {offsets = [0, 0], sizes = [1, 256], strides = [1, 1]} : vector<4x256xf32> to vector<1x256xf32>
    %225 = vector.shape_cast %224 : vector<1x256xf32> to vector<256xf32>
    %226 = vector.broadcast %223 : f32 to vector<256xf32>
    %227 = arith.mulf %226, %225 : vector<256xf32>
    %c7_65 = arith.constant 7 : index
    %c1_66 = arith.constant 1 : index
    %228 = memref.load %arg6[%c7_65, %c1_66] : memref<8x4xf32, #tpu.memory_space<smem>>
    %229 = vector.extract_strided_slice %1 {offsets = [1, 0], sizes = [1, 256], strides = [1, 1]} : vector<4x256xf32> to vector<1x256xf32>
    %230 = vector.shape_cast %229 : vector<1x256xf32> to vector<256xf32>
    %231 = vector.broadcast %228 : f32 to vector<256xf32>
    %232 = arith.mulf %231, %230 : vector<256xf32>
    %233 = arith.addf %227, %232 : vector<256xf32>
    %c7_67 = arith.constant 7 : index
    %c2_68 = arith.constant 2 : index
    %234 = memref.load %arg6[%c7_67, %c2_68] : memref<8x4xf32, #tpu.memory_space<smem>>
    %235 = vector.extract_strided_slice %1 {offsets = [2, 0], sizes = [1, 256], strides = [1, 1]} : vector<4x256xf32> to vector<1x256xf32>
    %236 = vector.shape_cast %235 : vector<1x256xf32> to vector<256xf32>
    %237 = vector.broadcast %234 : f32 to vector<256xf32>
    %238 = arith.mulf %237, %236 : vector<256xf32>
    %239 = arith.addf %233, %238 : vector<256xf32>
    %c7_69 = arith.constant 7 : index
    %c3_70 = arith.constant 3 : index
    %240 = memref.load %arg6[%c7_69, %c3_70] : memref<8x4xf32, #tpu.memory_space<smem>>
    %241 = vector.extract_strided_slice %1 {offsets = [3, 0], sizes = [1, 256], strides = [1, 1]} : vector<4x256xf32> to vector<1x256xf32>
    %242 = vector.shape_cast %241 : vector<1x256xf32> to vector<256xf32>
    %243 = vector.broadcast %240 : f32 to vector<256xf32>
    %244 = arith.mulf %243, %242 : vector<256xf32>
    %245 = arith.addf %239, %244 : vector<256xf32>
    %246 = vector.extract_strided_slice %3 {offsets = [7, 0], sizes = [1, 256], strides = [1, 1]} : vector<8x256xf32> to vector<1x256xf32>
    %247 = vector.shape_cast %246 : vector<1x256xf32> to vector<256xf32>
    %248 = vector.extract_strided_slice %3 {offsets = [7, 0], sizes = [1, 256], strides = [1, 1]} : vector<8x256xf32> to vector<1x256xf32>
    %249 = vector.shape_cast %248 : vector<1x256xf32> to vector<256xf32>
    %250 = arith.mulf %247, %249 : vector<256xf32>
    %cst_71 = arith.constant 1.000000e+00 : f32
    %251 = vector.broadcast %cst_71 : f32 to vector<256xf32>
    %252 = arith.subf %251, %250 : vector<256xf32>
    %253 = arith.mulf %245, %252 : vector<256xf32>
    %254 = vector.extract_strided_slice %1 {offsets = [0, 0], sizes = [1, 256], strides = [1, 1]} : vector<4x256xf32> to vector<1x256xf32>
    %255 = vector.shape_cast %254 : vector<1x256xf32> to vector<256xf32>
    %c0_72 = arith.constant 0 : index
    %c0_73 = arith.constant 0 : index
    %256 = memref.load %arg5[%c0_72, %c0_73] : memref<4x8xf32, #tpu.memory_space<smem>>
    %257 = vector.broadcast %256 : f32 to vector<256xf32>
    %258 = arith.mulf %257, %36 : vector<256xf32>
    %259 = arith.addf %255, %258 : vector<256xf32>
    %c0_74 = arith.constant 0 : index
    %c1_75 = arith.constant 1 : index
    %260 = memref.load %arg5[%c0_74, %c1_75] : memref<4x8xf32, #tpu.memory_space<smem>>
    %261 = vector.broadcast %260 : f32 to vector<256xf32>
    %262 = arith.mulf %261, %67 : vector<256xf32>
    %263 = arith.addf %259, %262 : vector<256xf32>
    %c0_76 = arith.constant 0 : index
    %c2_77 = arith.constant 2 : index
    %264 = memref.load %arg5[%c0_76, %c2_77] : memref<4x8xf32, #tpu.memory_space<smem>>
    %265 = vector.broadcast %264 : f32 to vector<256xf32>
    %266 = arith.mulf %265, %98 : vector<256xf32>
    %267 = arith.addf %263, %266 : vector<256xf32>
    %c0_78 = arith.constant 0 : index
    %c3_79 = arith.constant 3 : index
    %268 = memref.load %arg5[%c0_78, %c3_79] : memref<4x8xf32, #tpu.memory_space<smem>>
    %269 = vector.broadcast %268 : f32 to vector<256xf32>
    %270 = arith.mulf %269, %129 : vector<256xf32>
    %271 = arith.addf %267, %270 : vector<256xf32>
    %c0_80 = arith.constant 0 : index
    %c4_81 = arith.constant 4 : index
    %272 = memref.load %arg5[%c0_80, %c4_81] : memref<4x8xf32, #tpu.memory_space<smem>>
    %273 = vector.broadcast %272 : f32 to vector<256xf32>
    %274 = arith.mulf %273, %160 : vector<256xf32>
    %275 = arith.addf %271, %274 : vector<256xf32>
    %c0_82 = arith.constant 0 : index
    %c5_83 = arith.constant 5 : index
    %276 = memref.load %arg5[%c0_82, %c5_83] : memref<4x8xf32, #tpu.memory_space<smem>>
    %277 = vector.broadcast %276 : f32 to vector<256xf32>
    %278 = arith.mulf %277, %191 : vector<256xf32>
    %279 = arith.addf %275, %278 : vector<256xf32>
    %c0_84 = arith.constant 0 : index
    %c6_85 = arith.constant 6 : index
    %280 = memref.load %arg5[%c0_84, %c6_85] : memref<4x8xf32, #tpu.memory_space<smem>>
    %281 = vector.broadcast %280 : f32 to vector<256xf32>
    %282 = arith.mulf %281, %222 : vector<256xf32>
    %283 = arith.addf %279, %282 : vector<256xf32>
    %c0_86 = arith.constant 0 : index
    %c7_87 = arith.constant 7 : index
    %284 = memref.load %arg5[%c0_86, %c7_87] : memref<4x8xf32, #tpu.memory_space<smem>>
    %285 = vector.broadcast %284 : f32 to vector<256xf32>
    %286 = arith.mulf %285, %253 : vector<256xf32>
    %287 = arith.addf %283, %286 : vector<256xf32>
    %288 = vector.extract_strided_slice %5 {offsets = [0, 0], sizes = [1, 256], strides = [1, 1]} : vector<4x256xf32> to vector<1x256xf32>
    %289 = vector.shape_cast %288 : vector<1x256xf32> to vector<256xf32>
    %290 = arith.addf %289, %287 : vector<256xf32>
    %c0_88 = arith.constant 0 : index
    %c0_89 = arith.constant 0 : index
    %c0_90 = arith.constant 0 : index
    %291 = vector.load %arg7[%c0_88, %c0_89, %c0_90] : memref<1x4x256xf32, #tpu.memory_space<vmem>>, vector<1x1x256xf32>
    %292 = vector.shape_cast %291 : vector<1x1x256xf32> to vector<256xf32>
    %293 = vector.shape_cast %290 : vector<256xf32> to vector<1x1x256xf32>
    tpu.vector_store %arg7[%c0_88, %c0_89, %c0_90], %293 {strides = array<i32>} : memref<1x4x256xf32, #tpu.memory_space<vmem>>, vector<1x1x256xf32>,
    %294 = vector.extract_strided_slice %1 {offsets = [1, 0], sizes = [1, 256], strides = [1, 1]} : vector<4x256xf32> to vector<1x256xf32>
    %295 = vector.shape_cast %294 : vector<1x256xf32> to vector<256xf32>
    %c1_91 = arith.constant 1 : index
    %c0_92 = arith.constant 0 : index
    %296 = memref.load %arg5[%c1_91, %c0_92] : memref<4x8xf32, #tpu.memory_space<smem>>
    %297 = vector.broadcast %296 : f32 to vector<256xf32>
    %298 = arith.mulf %297, %36 : vector<256xf32>
    %299 = arith.addf %295, %298 : vector<256xf32>
    %c1_93 = arith.constant 1 : index
    %c1_94 = arith.constant 1 : index
    %300 = memref.load %arg5[%c1_93, %c1_94] : memref<4x8xf32, #tpu.memory_space<smem>>
    %301 = vector.broadcast %300 : f32 to vector<256xf32>
    %302 = arith.mulf %301, %67 : vector<256xf32>
    %303 = arith.addf %299, %302 : vector<256xf32>
    %c1_95 = arith.constant 1 : index
    %c2_96 = arith.constant 2 : index
    %304 = memref.load %arg5[%c1_95, %c2_96] : memref<4x8xf32, #tpu.memory_space<smem>>
    %305 = vector.broadcast %304 : f32 to vector<256xf32>
    %306 = arith.mulf %305, %98 : vector<256xf32>
    %307 = arith.addf %303, %306 : vector<256xf32>
    %c1_97 = arith.constant 1 : index
    %c3_98 = arith.constant 3 : index
    %308 = memref.load %arg5[%c1_97, %c3_98] : memref<4x8xf32, #tpu.memory_space<smem>>
    %309 = vector.broadcast %308 : f32 to vector<256xf32>
    %310 = arith.mulf %309, %129 : vector<256xf32>
    %311 = arith.addf %307, %310 : vector<256xf32>
    %c1_99 = arith.constant 1 : index
    %c4_100 = arith.constant 4 : index
    %312 = memref.load %arg5[%c1_99, %c4_100] : memref<4x8xf32, #tpu.memory_space<smem>>
    %313 = vector.broadcast %312 : f32 to vector<256xf32>
    %314 = arith.mulf %313, %160 : vector<256xf32>
    %315 = arith.addf %311, %314 : vector<256xf32>
    %c1_101 = arith.constant 1 : index
    %c5_102 = arith.constant 5 : index
    %316 = memref.load %arg5[%c1_101, %c5_102] : memref<4x8xf32, #tpu.memory_space<smem>>
    %317 = vector.broadcast %316 : f32 to vector<256xf32>
    %318 = arith.mulf %317, %191 : vector<256xf32>
    %319 = arith.addf %315, %318 : vector<256xf32>
    %c1_103 = arith.constant 1 : index
    %c6_104 = arith.constant 6 : index
    %320 = memref.load %arg5[%c1_103, %c6_104] : memref<4x8xf32, #tpu.memory_space<smem>>
    %321 = vector.broadcast %320 : f32 to vector<256xf32>
    %322 = arith.mulf %321, %222 : vector<256xf32>
    %323 = arith.addf %319, %322 : vector<256xf32>
    %c1_105 = arith.constant 1 : index
    %c7_106 = arith.constant 7 : index
    %324 = memref.load %arg5[%c1_105, %c7_106] : memref<4x8xf32, #tpu.memory_space<smem>>
    %325 = vector.broadcast %324 : f32 to vector<256xf32>
    %326 = arith.mulf %325, %253 : vector<256xf32>
    %327 = arith.addf %323, %326 : vector<256xf32>
    %328 = vector.extract_strided_slice %5 {offsets = [1, 0], sizes = [1, 256], strides = [1, 1]} : vector<4x256xf32> to vector<1x256xf32>
    %329 = vector.shape_cast %328 : vector<1x256xf32> to vector<256xf32>
    %330 = arith.addf %329, %327 : vector<256xf32>
    %c0_107 = arith.constant 0 : index
    %c1_108 = arith.constant 1 : index
    %c0_109 = arith.constant 0 : index
    %331 = vector.load %arg7[%c0_107, %c1_108, %c0_109] : memref<1x4x256xf32, #tpu.memory_space<vmem>>, vector<1x1x256xf32>
    %332 = vector.shape_cast %331 : vector<1x1x256xf32> to vector<256xf32>
    %333 = vector.shape_cast %330 : vector<256xf32> to vector<1x1x256xf32>
    tpu.vector_store %arg7[%c0_107, %c1_108, %c0_109], %333 {strides = array<i32>} : memref<1x4x256xf32, #tpu.memory_space<vmem>>, vector<1x1x256xf32>,
    %334 = vector.extract_strided_slice %1 {offsets = [2, 0], sizes = [1, 256], strides = [1, 1]} : vector<4x256xf32> to vector<1x256xf32>
    %335 = vector.shape_cast %334 : vector<1x256xf32> to vector<256xf32>
    %c2_110 = arith.constant 2 : index
    %c0_111 = arith.constant 0 : index
    %336 = memref.load %arg5[%c2_110, %c0_111] : memref<4x8xf32, #tpu.memory_space<smem>>
    %337 = vector.broadcast %336 : f32 to vector<256xf32>
    %338 = arith.mulf %337, %36 : vector<256xf32>
    %339 = arith.addf %335, %338 : vector<256xf32>
    %c2_112 = arith.constant 2 : index
    %c1_113 = arith.constant 1 : index
    %340 = memref.load %arg5[%c2_112, %c1_113] : memref<4x8xf32, #tpu.memory_space<smem>>
    %341 = vector.broadcast %340 : f32 to vector<256xf32>
    %342 = arith.mulf %341, %67 : vector<256xf32>
    %343 = arith.addf %339, %342 : vector<256xf32>
    %c2_114 = arith.constant 2 : index
    %c2_115 = arith.constant 2 : index
    %344 = memref.load %arg5[%c2_114, %c2_115] : memref<4x8xf32, #tpu.memory_space<smem>>
    %345 = vector.broadcast %344 : f32 to vector<256xf32>
    %346 = arith.mulf %345, %98 : vector<256xf32>
    %347 = arith.addf %343, %346 : vector<256xf32>
    %c2_116 = arith.constant 2 : index
    %c3_117 = arith.constant 3 : index
    %348 = memref.load %arg5[%c2_116, %c3_117] : memref<4x8xf32, #tpu.memory_space<smem>>
    %349 = vector.broadcast %348 : f32 to vector<256xf32>
    %350 = arith.mulf %349, %129 : vector<256xf32>
    %351 = arith.addf %347, %350 : vector<256xf32>
    %c2_118 = arith.constant 2 : index
    %c4_119 = arith.constant 4 : index
    %352 = memref.load %arg5[%c2_118, %c4_119] : memref<4x8xf32, #tpu.memory_space<smem>>
    %353 = vector.broadcast %352 : f32 to vector<256xf32>
    %354 = arith.mulf %353, %160 : vector<256xf32>
    %355 = arith.addf %351, %354 : vector<256xf32>
    %c2_120 = arith.constant 2 : index
    %c5_121 = arith.constant 5 : index
    %356 = memref.load %arg5[%c2_120, %c5_121] : memref<4x8xf32, #tpu.memory_space<smem>>
    %357 = vector.broadcast %356 : f32 to vector<256xf32>
    %358 = arith.mulf %357, %191 : vector<256xf32>
    %359 = arith.addf %355, %358 : vector<256xf32>
    %c2_122 = arith.constant 2 : index
    %c6_123 = arith.constant 6 : index
    %360 = memref.load %arg5[%c2_122, %c6_123] : memref<4x8xf32, #tpu.memory_space<smem>>
    %361 = vector.broadcast %360 : f32 to vector<256xf32>
    %362 = arith.mulf %361, %222 : vector<256xf32>
    %363 = arith.addf %359, %362 : vector<256xf32>
    %c2_124 = arith.constant 2 : index
    %c7_125 = arith.constant 7 : index
    %364 = memref.load %arg5[%c2_124, %c7_125] : memref<4x8xf32, #tpu.memory_space<smem>>
    %365 = vector.broadcast %364 : f32 to vector<256xf32>
    %366 = arith.mulf %365, %253 : vector<256xf32>
    %367 = arith.addf %363, %366 : vector<256xf32>
    %368 = vector.extract_strided_slice %5 {offsets = [2, 0], sizes = [1, 256], strides = [1, 1]} : vector<4x256xf32> to vector<1x256xf32>
    %369 = vector.shape_cast %368 : vector<1x256xf32> to vector<256xf32>
    %370 = arith.addf %369, %367 : vector<256xf32>
    %c0_126 = arith.constant 0 : index
    %c2_127 = arith.constant 2 : index
    %c0_128 = arith.constant 0 : index
    %371 = vector.load %arg7[%c0_126, %c2_127, %c0_128] : memref<1x4x256xf32, #tpu.memory_space<vmem>>, vector<1x1x256xf32>
    %372 = vector.shape_cast %371 : vector<1x1x256xf32> to vector<256xf32>
    %373 = vector.shape_cast %370 : vector<256xf32> to vector<1x1x256xf32>
    tpu.vector_store %arg7[%c0_126, %c2_127, %c0_128], %373 {strides = array<i32>} : memref<1x4x256xf32, #tpu.memory_space<vmem>>, vector<1x1x256xf32>,
    %374 = vector.extract_strided_slice %1 {offsets = [3, 0], sizes = [1, 256], strides = [1, 1]} : vector<4x256xf32> to vector<1x256xf32>
    %375 = vector.shape_cast %374 : vector<1x256xf32> to vector<256xf32>
    %c3_129 = arith.constant 3 : index
    %c0_130 = arith.constant 0 : index
    %376 = memref.load %arg5[%c3_129, %c0_130] : memref<4x8xf32, #tpu.memory_space<smem>>
    %377 = vector.broadcast %376 : f32 to vector<256xf32>
    %378 = arith.mulf %377, %36 : vector<256xf32>
    %379 = arith.addf %375, %378 : vector<256xf32>
    %c3_131 = arith.constant 3 : index
    %c1_132 = arith.constant 1 : index
    %380 = memref.load %arg5[%c3_131, %c1_132] : memref<4x8xf32, #tpu.memory_space<smem>>
    %381 = vector.broadcast %380 : f32 to vector<256xf32>
    %382 = arith.mulf %381, %67 : vector<256xf32>
    %383 = arith.addf %379, %382 : vector<256xf32>
    %c3_133 = arith.constant 3 : index
    %c2_134 = arith.constant 2 : index
    %384 = memref.load %arg5[%c3_133, %c2_134] : memref<4x8xf32, #tpu.memory_space<smem>>
    %385 = vector.broadcast %384 : f32 to vector<256xf32>
    %386 = arith.mulf %385, %98 : vector<256xf32>
    %387 = arith.addf %383, %386 : vector<256xf32>
    %c3_135 = arith.constant 3 : index
    %c3_136 = arith.constant 3 : index
    %388 = memref.load %arg5[%c3_135, %c3_136] : memref<4x8xf32, #tpu.memory_space<smem>>
    %389 = vector.broadcast %388 : f32 to vector<256xf32>
    %390 = arith.mulf %389, %129 : vector<256xf32>
    %391 = arith.addf %387, %390 : vector<256xf32>
    %c3_137 = arith.constant 3 : index
    %c4_138 = arith.constant 4 : index
    %392 = memref.load %arg5[%c3_137, %c4_138] : memref<4x8xf32, #tpu.memory_space<smem>>
    %393 = vector.broadcast %392 : f32 to vector<256xf32>
    %394 = arith.mulf %393, %160 : vector<256xf32>
    %395 = arith.addf %391, %394 : vector<256xf32>
    %c3_139 = arith.constant 3 : index
    %c5_140 = arith.constant 5 : index
    %396 = memref.load %arg5[%c3_139, %c5_140] : memref<4x8xf32, #tpu.memory_space<smem>>
    %397 = vector.broadcast %396 : f32 to vector<256xf32>
    %398 = arith.mulf %397, %191 : vector<256xf32>
    %399 = arith.addf %395, %398 : vector<256xf32>
    %c3_141 = arith.constant 3 : index
    %c6_142 = arith.constant 6 : index
    %400 = memref.load %arg5[%c3_141, %c6_142] : memref<4x8xf32, #tpu.memory_space<smem>>
    %401 = vector.broadcast %400 : f32 to vector<256xf32>
    %402 = arith.mulf %401, %222 : vector<256xf32>
    %403 = arith.addf %399, %402 : vector<256xf32>
    %c3_143 = arith.constant 3 : index
    %c7_144 = arith.constant 7 : index
    %404 = memref.load %arg5[%c3_143, %c7_144] : memref<4x8xf32, #tpu.memory_space<smem>>
    %405 = vector.broadcast %404 : f32 to vector<256xf32>
    %406 = arith.mulf %405, %253 : vector<256xf32>
    %407 = arith.addf %403, %406 : vector<256xf32>
    %408 = vector.extract_strided_slice %5 {offsets = [3, 0], sizes = [1, 256], strides = [1, 1]} : vector<4x256xf32> to vector<1x256xf32>
    %409 = vector.shape_cast %408 : vector<1x256xf32> to vector<256xf32>
    %410 = arith.addf %409, %407 : vector<256xf32>
    %c0_145 = arith.constant 0 : index
    %c3_146 = arith.constant 3 : index
    %c0_147 = arith.constant 0 : index
    %411 = vector.load %arg7[%c0_145, %c3_146, %c0_147] : memref<1x4x256xf32, #tpu.memory_space<vmem>>, vector<1x1x256xf32>
    %412 = vector.shape_cast %411 : vector<1x1x256xf32> to vector<256xf32>
    %413 = vector.shape_cast %410 : vector<256xf32> to vector<1x1x256xf32>
    tpu.vector_store %arg7[%c0_145, %c3_146, %c0_147], %413 {strides = array<i32>} : memref<1x4x256xf32, #tpu.memory_space<vmem>>, vector<1x1x256xf32>,
    return
  }
  func.func @transform_0(%arg0: i32, %arg1: i32) -> (i32, i32, i32) {
    %c0_i32 = arith.constant 0 : i32
    %c0_i32_0 = arith.constant 0 : i32
    return %arg0, %c0_i32, %arg1 : i32, i32, i32
  }
  func.func @transform_1(%arg0: i32, %arg1: i32) -> (i32, i32, i32) {
    %c0_i32 = arith.constant 0 : i32
    %c0_i32_0 = arith.constant 0 : i32
    return %arg0, %c0_i32, %arg1 : i32, i32, i32
  }
  func.func @transform_2(%arg0: i32, %arg1: i32) -> (i32, i32, i32) {
    %c0_i32 = arith.constant 0 : i32
    %c0_i32_0 = arith.constant 0 : i32
    return %arg0, %c0_i32, %arg1 : i32, i32, i32
  }
  func.func @transform_3(%arg0: i32, %arg1: i32) -> (i32, i32) {
    %c0_i32 = arith.constant 0 : i32
    %c0_i32_0 = arith.constant 0 : i32
    %c0_i32_1 = arith.constant 0 : i32
    return %c0_i32, %c0_i32_0 : i32, i32
  }
  func.func @transform_4(%arg0: i32, %arg1: i32) -> (i32, i32) {
    %c0_i32 = arith.constant 0 : i32
    %c0_i32_0 = arith.constant 0 : i32
    %c0_i32_1 = arith.constant 0 : i32
    return %c0_i32, %c0_i32_0 : i32, i32
  }
  func.func @transform_5(%arg0: i32, %arg1: i32) -> (i32, i32, i32) {
    %c0_i32 = arith.constant 0 : i32
    %c0_i32_0 = arith.constant 0 : i32
    return %arg0, %c0_i32, %arg1 : i32, i32, i32
  }
}

module attributes {stable_mosaic.version = 11 : i64} {
  func.func @_obs_adj_kernel(%arg0: i32, %arg1: i32, %arg2: memref<1x4x256xf32, #tpu.memory_space<vmem>>, %arg3: memref<1x4x256xf32, #tpu.memory_space<vmem>>, %arg4: memref<1x4x256xf32, #tpu.memory_space<vmem>>, %arg5: memref<4xf32, #tpu.memory_space<smem>>, %arg6: memref<1x4x256xf32, #tpu.memory_space<vmem>>) attributes {dimension_semantics = [#tpu.dimension_semantics<parallel>, #tpu.dimension_semantics<parallel>], iteration_bounds = array<i64: 2, 1>, scalar_prefetch = 0 : i64, scratch_operands = 0 : i64, tpu.core_type = #tpu.core_type<tc>, window_params = [{transform_indices = @transform_0, window_bounds = array<i64: 1, 4, 256>}, {transform_indices = @transform_1, window_bounds = array<i64: 1, 4, 256>}, {transform_indices = @transform_2, window_bounds = array<i64: 1, 4, 256>}, {transform_indices = @transform_3, window_bounds = array<i64: 4>}, {transform_indices = @transform_4, window_bounds = array<i64: 1, 4, 256>}]} {
    %c0 = arith.constant 0 : index
    %c0_0 = arith.constant 0 : index
    %c0_1 = arith.constant 0 : index
    %0 = vector.load %arg2[%c0, %c0_0, %c0_1] : memref<1x4x256xf32, #tpu.memory_space<vmem>>, vector<1x4x256xf32>
    %1 = vector.shape_cast %0 : vector<1x4x256xf32> to vector<4x256xf32>
    %c0_2 = arith.constant 0 : index
    %c0_3 = arith.constant 0 : index
    %c0_4 = arith.constant 0 : index
    %2 = vector.load %arg3[%c0_2, %c0_3, %c0_4] : memref<1x4x256xf32, #tpu.memory_space<vmem>>, vector<1x4x256xf32>
    %3 = vector.shape_cast %2 : vector<1x4x256xf32> to vector<4x256xf32>
    %c0_5 = arith.constant 0 : index
    %c0_6 = arith.constant 0 : index
    %c0_7 = arith.constant 0 : index
    %4 = vector.load %arg4[%c0_5, %c0_6, %c0_7] : memref<1x4x256xf32, #tpu.memory_space<vmem>>, vector<1x4x256xf32>
    %5 = vector.shape_cast %4 : vector<1x4x256xf32> to vector<4x256xf32>
    %c0_8 = arith.constant 0 : index
    %6 = memref.load %arg5[%c0_8] : memref<4xf32, #tpu.memory_space<smem>>
    %7 = vector.extract_strided_slice %5 {offsets = [0, 0], sizes = [1, 256], strides = [1, 1]} : vector<4x256xf32> to vector<1x256xf32>
    %8 = vector.shape_cast %7 : vector<1x256xf32> to vector<256xf32>
    %9 = vector.extract_strided_slice %5 {offsets = [0, 0], sizes = [1, 256], strides = [1, 1]} : vector<4x256xf32> to vector<1x256xf32>
    %10 = vector.shape_cast %9 : vector<1x256xf32> to vector<256xf32>
    %11 = arith.mulf %8, %10 : vector<256xf32>
    %12 = vector.broadcast %6 : f32 to vector<256xf32>
    %13 = arith.mulf %12, %11 : vector<256xf32>
    %14 = vector.extract_strided_slice %1 {offsets = [0, 0], sizes = [1, 256], strides = [1, 1]} : vector<4x256xf32> to vector<1x256xf32>
    %15 = vector.shape_cast %14 : vector<1x256xf32> to vector<256xf32>
    %16 = vector.extract_strided_slice %3 {offsets = [0, 0], sizes = [1, 256], strides = [1, 1]} : vector<4x256xf32> to vector<1x256xf32>
    %17 = vector.shape_cast %16 : vector<1x256xf32> to vector<256xf32>
    %18 = arith.subf %15, %17 : vector<256xf32>
    %19 = arith.mulf %13, %18 : vector<256xf32>
    %c0_9 = arith.constant 0 : index
    %c0_10 = arith.constant 0 : index
    %c0_11 = arith.constant 0 : index
    %20 = vector.load %arg6[%c0_9, %c0_10, %c0_11] : memref<1x4x256xf32, #tpu.memory_space<vmem>>, vector<1x1x256xf32>
    %21 = vector.shape_cast %20 : vector<1x1x256xf32> to vector<256xf32>
    %22 = vector.shape_cast %19 : vector<256xf32> to vector<1x1x256xf32>
    tpu.vector_store %arg6[%c0_9, %c0_10, %c0_11], %22 {strides = array<i32>} : memref<1x4x256xf32, #tpu.memory_space<vmem>>, vector<1x1x256xf32>,
    %c1 = arith.constant 1 : index
    %23 = memref.load %arg5[%c1] : memref<4xf32, #tpu.memory_space<smem>>
    %24 = vector.extract_strided_slice %5 {offsets = [1, 0], sizes = [1, 256], strides = [1, 1]} : vector<4x256xf32> to vector<1x256xf32>
    %25 = vector.shape_cast %24 : vector<1x256xf32> to vector<256xf32>
    %26 = vector.extract_strided_slice %5 {offsets = [1, 0], sizes = [1, 256], strides = [1, 1]} : vector<4x256xf32> to vector<1x256xf32>
    %27 = vector.shape_cast %26 : vector<1x256xf32> to vector<256xf32>
    %28 = arith.mulf %25, %27 : vector<256xf32>
    %29 = vector.broadcast %23 : f32 to vector<256xf32>
    %30 = arith.mulf %29, %28 : vector<256xf32>
    %31 = vector.extract_strided_slice %1 {offsets = [1, 0], sizes = [1, 256], strides = [1, 1]} : vector<4x256xf32> to vector<1x256xf32>
    %32 = vector.shape_cast %31 : vector<1x256xf32> to vector<256xf32>
    %33 = vector.extract_strided_slice %3 {offsets = [1, 0], sizes = [1, 256], strides = [1, 1]} : vector<4x256xf32> to vector<1x256xf32>
    %34 = vector.shape_cast %33 : vector<1x256xf32> to vector<256xf32>
    %35 = arith.subf %32, %34 : vector<256xf32>
    %36 = arith.mulf %30, %35 : vector<256xf32>
    %c0_12 = arith.constant 0 : index
    %c1_13 = arith.constant 1 : index
    %c0_14 = arith.constant 0 : index
    %37 = vector.load %arg6[%c0_12, %c1_13, %c0_14] : memref<1x4x256xf32, #tpu.memory_space<vmem>>, vector<1x1x256xf32>
    %38 = vector.shape_cast %37 : vector<1x1x256xf32> to vector<256xf32>
    %39 = vector.shape_cast %36 : vector<256xf32> to vector<1x1x256xf32>
    tpu.vector_store %arg6[%c0_12, %c1_13, %c0_14], %39 {strides = array<i32>} : memref<1x4x256xf32, #tpu.memory_space<vmem>>, vector<1x1x256xf32>,
    %c2 = arith.constant 2 : index
    %40 = memref.load %arg5[%c2] : memref<4xf32, #tpu.memory_space<smem>>
    %41 = vector.extract_strided_slice %5 {offsets = [2, 0], sizes = [1, 256], strides = [1, 1]} : vector<4x256xf32> to vector<1x256xf32>
    %42 = vector.shape_cast %41 : vector<1x256xf32> to vector<256xf32>
    %43 = vector.extract_strided_slice %5 {offsets = [2, 0], sizes = [1, 256], strides = [1, 1]} : vector<4x256xf32> to vector<1x256xf32>
    %44 = vector.shape_cast %43 : vector<1x256xf32> to vector<256xf32>
    %45 = arith.mulf %42, %44 : vector<256xf32>
    %46 = vector.broadcast %40 : f32 to vector<256xf32>
    %47 = arith.mulf %46, %45 : vector<256xf32>
    %48 = vector.extract_strided_slice %1 {offsets = [2, 0], sizes = [1, 256], strides = [1, 1]} : vector<4x256xf32> to vector<1x256xf32>
    %49 = vector.shape_cast %48 : vector<1x256xf32> to vector<256xf32>
    %50 = vector.extract_strided_slice %3 {offsets = [2, 0], sizes = [1, 256], strides = [1, 1]} : vector<4x256xf32> to vector<1x256xf32>
    %51 = vector.shape_cast %50 : vector<1x256xf32> to vector<256xf32>
    %52 = arith.subf %49, %51 : vector<256xf32>
    %53 = arith.mulf %47, %52 : vector<256xf32>
    %c0_15 = arith.constant 0 : index
    %c2_16 = arith.constant 2 : index
    %c0_17 = arith.constant 0 : index
    %54 = vector.load %arg6[%c0_15, %c2_16, %c0_17] : memref<1x4x256xf32, #tpu.memory_space<vmem>>, vector<1x1x256xf32>
    %55 = vector.shape_cast %54 : vector<1x1x256xf32> to vector<256xf32>
    %56 = vector.shape_cast %53 : vector<256xf32> to vector<1x1x256xf32>
    tpu.vector_store %arg6[%c0_15, %c2_16, %c0_17], %56 {strides = array<i32>} : memref<1x4x256xf32, #tpu.memory_space<vmem>>, vector<1x1x256xf32>,
    %c3 = arith.constant 3 : index
    %57 = memref.load %arg5[%c3] : memref<4xf32, #tpu.memory_space<smem>>
    %58 = vector.extract_strided_slice %5 {offsets = [3, 0], sizes = [1, 256], strides = [1, 1]} : vector<4x256xf32> to vector<1x256xf32>
    %59 = vector.shape_cast %58 : vector<1x256xf32> to vector<256xf32>
    %60 = vector.extract_strided_slice %5 {offsets = [3, 0], sizes = [1, 256], strides = [1, 1]} : vector<4x256xf32> to vector<1x256xf32>
    %61 = vector.shape_cast %60 : vector<1x256xf32> to vector<256xf32>
    %62 = arith.mulf %59, %61 : vector<256xf32>
    %63 = vector.broadcast %57 : f32 to vector<256xf32>
    %64 = arith.mulf %63, %62 : vector<256xf32>
    %65 = vector.extract_strided_slice %1 {offsets = [3, 0], sizes = [1, 256], strides = [1, 1]} : vector<4x256xf32> to vector<1x256xf32>
    %66 = vector.shape_cast %65 : vector<1x256xf32> to vector<256xf32>
    %67 = vector.extract_strided_slice %3 {offsets = [3, 0], sizes = [1, 256], strides = [1, 1]} : vector<4x256xf32> to vector<1x256xf32>
    %68 = vector.shape_cast %67 : vector<1x256xf32> to vector<256xf32>
    %69 = arith.subf %66, %68 : vector<256xf32>
    %70 = arith.mulf %64, %69 : vector<256xf32>
    %c0_18 = arith.constant 0 : index
    %c3_19 = arith.constant 3 : index
    %c0_20 = arith.constant 0 : index
    %71 = vector.load %arg6[%c0_18, %c3_19, %c0_20] : memref<1x4x256xf32, #tpu.memory_space<vmem>>, vector<1x1x256xf32>
    %72 = vector.shape_cast %71 : vector<1x1x256xf32> to vector<256xf32>
    %73 = vector.shape_cast %70 : vector<256xf32> to vector<1x1x256xf32>
    tpu.vector_store %arg6[%c0_18, %c3_19, %c0_20], %73 {strides = array<i32>} : memref<1x4x256xf32, #tpu.memory_space<vmem>>, vector<1x1x256xf32>,
    return
  }
  func.func @transform_0(%arg0: i32, %arg1: i32) -> (i32, i32, i32) {
    %c0_i32 = arith.constant 0 : i32
    %c0_i32_0 = arith.constant 0 : i32
    return %arg0, %c0_i32, %arg1 : i32, i32, i32
  }
  func.func @transform_1(%arg0: i32, %arg1: i32) -> (i32, i32, i32) {
    %c0_i32 = arith.constant 0 : i32
    %c0_i32_0 = arith.constant 0 : i32
    return %arg0, %c0_i32, %arg1 : i32, i32, i32
  }
  func.func @transform_2(%arg0: i32, %arg1: i32) -> (i32, i32, i32) {
    %c0_i32 = arith.constant 0 : i32
    %c0_i32_0 = arith.constant 0 : i32
    return %arg0, %c0_i32, %arg1 : i32, i32, i32
  }
  func.func @transform_3(%arg0: i32, %arg1: i32) -> i32 {
    %c0_i32 = arith.constant 0 : i32
    %c0_i32_0 = arith.constant 0 : i32
    return %c0_i32 : i32
  }
  func.func @transform_4(%arg0: i32, %arg1: i32) -> (i32, i32, i32) {
    %c0_i32 = arith.constant 0 : i32
    %c0_i32_0 = arith.constant 0 : i32
    return %arg0, %c0_i32, %arg1 : i32, i32, i32
  }
}

module attributes {stable_mosaic.version = 11 : i64} {
  func.func @_phi_fwd_kernel(%arg0: i32, %arg1: i32, %arg2: memref<1x4x256xf32, #tpu.memory_space<vmem>>, %arg3: memref<4x8xf32, #tpu.memory_space<smem>>, %arg4: memref<8xf32, #tpu.memory_space<smem>>, %arg5: memref<8x4xf32, #tpu.memory_space<smem>>, %arg6: memref<4xf32, #tpu.memory_space<smem>>, %arg7: memref<1x4x256xf32, #tpu.memory_space<vmem>>, %arg8: memref<1x8x256xf32, #tpu.memory_space<vmem>>) attributes {dimension_semantics = [#tpu.dimension_semantics<parallel>, #tpu.dimension_semantics<parallel>], iteration_bounds = array<i64: 2, 1>, scalar_prefetch = 0 : i64, scratch_operands = 0 : i64, tpu.core_type = #tpu.core_type<tc>, window_params = [{transform_indices = @transform_0, window_bounds = array<i64: 1, 4, 256>}, {transform_indices = @transform_1, window_bounds = array<i64: 4, 8>}, {transform_indices = @transform_2, window_bounds = array<i64: 8>}, {transform_indices = @transform_3, window_bounds = array<i64: 8, 4>}, {transform_indices = @transform_4, window_bounds = array<i64: 4>}, {transform_indices = @transform_5, window_bounds = array<i64: 1, 4, 256>}, {transform_indices = @transform_6, window_bounds = array<i64: 1, 8, 256>}]} {
    %c0 = arith.constant 0 : index
    %c0_0 = arith.constant 0 : index
    %c0_1 = arith.constant 0 : index
    %0 = vector.load %arg2[%c0, %c0_0, %c0_1] : memref<1x4x256xf32, #tpu.memory_space<vmem>>, vector<1x4x256xf32>
    %1 = vector.shape_cast %0 : vector<1x4x256xf32> to vector<4x256xf32>
    %c0_2 = arith.constant 0 : index
    %c0_3 = arith.constant 0 : index
    %2 = memref.load %arg3[%c0_2, %c0_3] : memref<4x8xf32, #tpu.memory_space<smem>>
    %3 = vector.extract_strided_slice %1 {offsets = [0, 0], sizes = [1, 256], strides = [1, 1]} : vector<4x256xf32> to vector<1x256xf32>
    %4 = vector.shape_cast %3 : vector<1x256xf32> to vector<256xf32>
    %5 = vector.broadcast %2 : f32 to vector<256xf32>
    %6 = arith.mulf %5, %4 : vector<256xf32>
    %c1 = arith.constant 1 : index
    %c0_4 = arith.constant 0 : index
    %7 = memref.load %arg3[%c1, %c0_4] : memref<4x8xf32, #tpu.memory_space<smem>>
    %8 = vector.extract_strided_slice %1 {offsets = [1, 0], sizes = [1, 256], strides = [1, 1]} : vector<4x256xf32> to vector<1x256xf32>
    %9 = vector.shape_cast %8 : vector<1x256xf32> to vector<256xf32>
    %10 = vector.broadcast %7 : f32 to vector<256xf32>
    %11 = arith.mulf %10, %9 : vector<256xf32>
    %12 = arith.addf %6, %11 : vector<256xf32>
    %c2 = arith.constant 2 : index
    %c0_5 = arith.constant 0 : index
    %13 = memref.load %arg3[%c2, %c0_5] : memref<4x8xf32, #tpu.memory_space<smem>>
    %14 = vector.extract_strided_slice %1 {offsets = [2, 0], sizes = [1, 256], strides = [1, 1]} : vector<4x256xf32> to vector<1x256xf32>
    %15 = vector.shape_cast %14 : vector<1x256xf32> to vector<256xf32>
    %16 = vector.broadcast %13 : f32 to vector<256xf32>
    %17 = arith.mulf %16, %15 : vector<256xf32>
    %18 = arith.addf %12, %17 : vector<256xf32>
    %c3 = arith.constant 3 : index
    %c0_6 = arith.constant 0 : index
    %19 = memref.load %arg3[%c3, %c0_6] : memref<4x8xf32, #tpu.memory_space<smem>>
    %20 = vector.extract_strided_slice %1 {offsets = [3, 0], sizes = [1, 256], strides = [1, 1]} : vector<4x256xf32> to vector<1x256xf32>
    %21 = vector.shape_cast %20 : vector<1x256xf32> to vector<256xf32>
    %22 = vector.broadcast %19 : f32 to vector<256xf32>
    %23 = arith.mulf %22, %21 : vector<256xf32>
    %24 = arith.addf %18, %23 : vector<256xf32>
    %c0_7 = arith.constant 0 : index
    %25 = memref.load %arg4[%c0_7] : memref<8xf32, #tpu.memory_space<smem>>
    %26 = vector.broadcast %25 : f32 to vector<256xf32>
    %27 = arith.addf %24, %26 : vector<256xf32>
    %28 = math.tanh %27 : vector<256xf32>
    %c0_8 = arith.constant 0 : index
    %c1_9 = arith.constant 1 : index
    %29 = memref.load %arg3[%c0_8, %c1_9] : memref<4x8xf32, #tpu.memory_space<smem>>
    %30 = vector.extract_strided_slice %1 {offsets = [0, 0], sizes = [1, 256], strides = [1, 1]} : vector<4x256xf32> to vector<1x256xf32>
    %31 = vector.shape_cast %30 : vector<1x256xf32> to vector<256xf32>
    %32 = vector.broadcast %29 : f32 to vector<256xf32>
    %33 = arith.mulf %32, %31 : vector<256xf32>
    %c1_10 = arith.constant 1 : index
    %c1_11 = arith.constant 1 : index
    %34 = memref.load %arg3[%c1_10, %c1_11] : memref<4x8xf32, #tpu.memory_space<smem>>
    %35 = vector.extract_strided_slice %1 {offsets = [1, 0], sizes = [1, 256], strides = [1, 1]} : vector<4x256xf32> to vector<1x256xf32>
    %36 = vector.shape_cast %35 : vector<1x256xf32> to vector<256xf32>
    %37 = vector.broadcast %34 : f32 to vector<256xf32>
    %38 = arith.mulf %37, %36 : vector<256xf32>
    %39 = arith.addf %33, %38 : vector<256xf32>
    %c2_12 = arith.constant 2 : index
    %c1_13 = arith.constant 1 : index
    %40 = memref.load %arg3[%c2_12, %c1_13] : memref<4x8xf32, #tpu.memory_space<smem>>
    %41 = vector.extract_strided_slice %1 {offsets = [2, 0], sizes = [1, 256], strides = [1, 1]} : vector<4x256xf32> to vector<1x256xf32>
    %42 = vector.shape_cast %41 : vector<1x256xf32> to vector<256xf32>
    %43 = vector.broadcast %40 : f32 to vector<256xf32>
    %44 = arith.mulf %43, %42 : vector<256xf32>
    %45 = arith.addf %39, %44 : vector<256xf32>
    %c3_14 = arith.constant 3 : index
    %c1_15 = arith.constant 1 : index
    %46 = memref.load %arg3[%c3_14, %c1_15] : memref<4x8xf32, #tpu.memory_space<smem>>
    %47 = vector.extract_strided_slice %1 {offsets = [3, 0], sizes = [1, 256], strides = [1, 1]} : vector<4x256xf32> to vector<1x256xf32>
    %48 = vector.shape_cast %47 : vector<1x256xf32> to vector<256xf32>
    %49 = vector.broadcast %46 : f32 to vector<256xf32>
    %50 = arith.mulf %49, %48 : vector<256xf32>
    %51 = arith.addf %45, %50 : vector<256xf32>
    %c1_16 = arith.constant 1 : index
    %52 = memref.load %arg4[%c1_16] : memref<8xf32, #tpu.memory_space<smem>>
    %53 = vector.broadcast %52 : f32 to vector<256xf32>
    %54 = arith.addf %51, %53 : vector<256xf32>
    %55 = math.tanh %54 : vector<256xf32>
    %c0_17 = arith.constant 0 : index
    %c2_18 = arith.constant 2 : index
    %56 = memref.load %arg3[%c0_17, %c2_18] : memref<4x8xf32, #tpu.memory_space<smem>>
    %57 = vector.extract_strided_slice %1 {offsets = [0, 0], sizes = [1, 256], strides = [1, 1]} : vector<4x256xf32> to vector<1x256xf32>
    %58 = vector.shape_cast %57 : vector<1x256xf32> to vector<256xf32>
    %59 = vector.broadcast %56 : f32 to vector<256xf32>
    %60 = arith.mulf %59, %58 : vector<256xf32>
    %c1_19 = arith.constant 1 : index
    %c2_20 = arith.constant 2 : index
    %61 = memref.load %arg3[%c1_19, %c2_20] : memref<4x8xf32, #tpu.memory_space<smem>>
    %62 = vector.extract_strided_slice %1 {offsets = [1, 0], sizes = [1, 256], strides = [1, 1]} : vector<4x256xf32> to vector<1x256xf32>
    %63 = vector.shape_cast %62 : vector<1x256xf32> to vector<256xf32>
    %64 = vector.broadcast %61 : f32 to vector<256xf32>
    %65 = arith.mulf %64, %63 : vector<256xf32>
    %66 = arith.addf %60, %65 : vector<256xf32>
    %c2_21 = arith.constant 2 : index
    %c2_22 = arith.constant 2 : index
    %67 = memref.load %arg3[%c2_21, %c2_22] : memref<4x8xf32, #tpu.memory_space<smem>>
    %68 = vector.extract_strided_slice %1 {offsets = [2, 0], sizes = [1, 256], strides = [1, 1]} : vector<4x256xf32> to vector<1x256xf32>
    %69 = vector.shape_cast %68 : vector<1x256xf32> to vector<256xf32>
    %70 = vector.broadcast %67 : f32 to vector<256xf32>
    %71 = arith.mulf %70, %69 : vector<256xf32>
    %72 = arith.addf %66, %71 : vector<256xf32>
    %c3_23 = arith.constant 3 : index
    %c2_24 = arith.constant 2 : index
    %73 = memref.load %arg3[%c3_23, %c2_24] : memref<4x8xf32, #tpu.memory_space<smem>>
    %74 = vector.extract_strided_slice %1 {offsets = [3, 0], sizes = [1, 256], strides = [1, 1]} : vector<4x256xf32> to vector<1x256xf32>
    %75 = vector.shape_cast %74 : vector<1x256xf32> to vector<256xf32>
    %76 = vector.broadcast %73 : f32 to vector<256xf32>
    %77 = arith.mulf %76, %75 : vector<256xf32>
    %78 = arith.addf %72, %77 : vector<256xf32>
    %c2_25 = arith.constant 2 : index
    %79 = memref.load %arg4[%c2_25] : memref<8xf32, #tpu.memory_space<smem>>
    %80 = vector.broadcast %79 : f32 to vector<256xf32>
    %81 = arith.addf %78, %80 : vector<256xf32>
    %82 = math.tanh %81 : vector<256xf32>
    %c0_26 = arith.constant 0 : index
    %c3_27 = arith.constant 3 : index
    %83 = memref.load %arg3[%c0_26, %c3_27] : memref<4x8xf32, #tpu.memory_space<smem>>
    %84 = vector.extract_strided_slice %1 {offsets = [0, 0], sizes = [1, 256], strides = [1, 1]} : vector<4x256xf32> to vector<1x256xf32>
    %85 = vector.shape_cast %84 : vector<1x256xf32> to vector<256xf32>
    %86 = vector.broadcast %83 : f32 to vector<256xf32>
    %87 = arith.mulf %86, %85 : vector<256xf32>
    %c1_28 = arith.constant 1 : index
    %c3_29 = arith.constant 3 : index
    %88 = memref.load %arg3[%c1_28, %c3_29] : memref<4x8xf32, #tpu.memory_space<smem>>
    %89 = vector.extract_strided_slice %1 {offsets = [1, 0], sizes = [1, 256], strides = [1, 1]} : vector<4x256xf32> to vector<1x256xf32>
    %90 = vector.shape_cast %89 : vector<1x256xf32> to vector<256xf32>
    %91 = vector.broadcast %88 : f32 to vector<256xf32>
    %92 = arith.mulf %91, %90 : vector<256xf32>
    %93 = arith.addf %87, %92 : vector<256xf32>
    %c2_30 = arith.constant 2 : index
    %c3_31 = arith.constant 3 : index
    %94 = memref.load %arg3[%c2_30, %c3_31] : memref<4x8xf32, #tpu.memory_space<smem>>
    %95 = vector.extract_strided_slice %1 {offsets = [2, 0], sizes = [1, 256], strides = [1, 1]} : vector<4x256xf32> to vector<1x256xf32>
    %96 = vector.shape_cast %95 : vector<1x256xf32> to vector<256xf32>
    %97 = vector.broadcast %94 : f32 to vector<256xf32>
    %98 = arith.mulf %97, %96 : vector<256xf32>
    %99 = arith.addf %93, %98 : vector<256xf32>
    %c3_32 = arith.constant 3 : index
    %c3_33 = arith.constant 3 : index
    %100 = memref.load %arg3[%c3_32, %c3_33] : memref<4x8xf32, #tpu.memory_space<smem>>
    %101 = vector.extract_strided_slice %1 {offsets = [3, 0], sizes = [1, 256], strides = [1, 1]} : vector<4x256xf32> to vector<1x256xf32>
    %102 = vector.shape_cast %101 : vector<1x256xf32> to vector<256xf32>
    %103 = vector.broadcast %100 : f32 to vector<256xf32>
    %104 = arith.mulf %103, %102 : vector<256xf32>
    %105 = arith.addf %99, %104 : vector<256xf32>
    %c3_34 = arith.constant 3 : index
    %106 = memref.load %arg4[%c3_34] : memref<8xf32, #tpu.memory_space<smem>>
    %107 = vector.broadcast %106 : f32 to vector<256xf32>
    %108 = arith.addf %105, %107 : vector<256xf32>
    %109 = math.tanh %108 : vector<256xf32>
    %c0_35 = arith.constant 0 : index
    %c4 = arith.constant 4 : index
    %110 = memref.load %arg3[%c0_35, %c4] : memref<4x8xf32, #tpu.memory_space<smem>>
    %111 = vector.extract_strided_slice %1 {offsets = [0, 0], sizes = [1, 256], strides = [1, 1]} : vector<4x256xf32> to vector<1x256xf32>
    %112 = vector.shape_cast %111 : vector<1x256xf32> to vector<256xf32>
    %113 = vector.broadcast %110 : f32 to vector<256xf32>
    %114 = arith.mulf %113, %112 : vector<256xf32>
    %c1_36 = arith.constant 1 : index
    %c4_37 = arith.constant 4 : index
    %115 = memref.load %arg3[%c1_36, %c4_37] : memref<4x8xf32, #tpu.memory_space<smem>>
    %116 = vector.extract_strided_slice %1 {offsets = [1, 0], sizes = [1, 256], strides = [1, 1]} : vector<4x256xf32> to vector<1x256xf32>
    %117 = vector.shape_cast %116 : vector<1x256xf32> to vector<256xf32>
    %118 = vector.broadcast %115 : f32 to vector<256xf32>
    %119 = arith.mulf %118, %117 : vector<256xf32>
    %120 = arith.addf %114, %119 : vector<256xf32>
    %c2_38 = arith.constant 2 : index
    %c4_39 = arith.constant 4 : index
    %121 = memref.load %arg3[%c2_38, %c4_39] : memref<4x8xf32, #tpu.memory_space<smem>>
    %122 = vector.extract_strided_slice %1 {offsets = [2, 0], sizes = [1, 256], strides = [1, 1]} : vector<4x256xf32> to vector<1x256xf32>
    %123 = vector.shape_cast %122 : vector<1x256xf32> to vector<256xf32>
    %124 = vector.broadcast %121 : f32 to vector<256xf32>
    %125 = arith.mulf %124, %123 : vector<256xf32>
    %126 = arith.addf %120, %125 : vector<256xf32>
    %c3_40 = arith.constant 3 : index
    %c4_41 = arith.constant 4 : index
    %127 = memref.load %arg3[%c3_40, %c4_41] : memref<4x8xf32, #tpu.memory_space<smem>>
    %128 = vector.extract_strided_slice %1 {offsets = [3, 0], sizes = [1, 256], strides = [1, 1]} : vector<4x256xf32> to vector<1x256xf32>
    %129 = vector.shape_cast %128 : vector<1x256xf32> to vector<256xf32>
    %130 = vector.broadcast %127 : f32 to vector<256xf32>
    %131 = arith.mulf %130, %129 : vector<256xf32>
    %132 = arith.addf %126, %131 : vector<256xf32>
    %c4_42 = arith.constant 4 : index
    %133 = memref.load %arg4[%c4_42] : memref<8xf32, #tpu.memory_space<smem>>
    %134 = vector.broadcast %133 : f32 to vector<256xf32>
    %135 = arith.addf %132, %134 : vector<256xf32>
    %136 = math.tanh %135 : vector<256xf32>
    %c0_43 = arith.constant 0 : index
    %c5 = arith.constant 5 : index
    %137 = memref.load %arg3[%c0_43, %c5] : memref<4x8xf32, #tpu.memory_space<smem>>
    %138 = vector.extract_strided_slice %1 {offsets = [0, 0], sizes = [1, 256], strides = [1, 1]} : vector<4x256xf32> to vector<1x256xf32>
    %139 = vector.shape_cast %138 : vector<1x256xf32> to vector<256xf32>
    %140 = vector.broadcast %137 : f32 to vector<256xf32>
    %141 = arith.mulf %140, %139 : vector<256xf32>
    %c1_44 = arith.constant 1 : index
    %c5_45 = arith.constant 5 : index
    %142 = memref.load %arg3[%c1_44, %c5_45] : memref<4x8xf32, #tpu.memory_space<smem>>
    %143 = vector.extract_strided_slice %1 {offsets = [1, 0], sizes = [1, 256], strides = [1, 1]} : vector<4x256xf32> to vector<1x256xf32>
    %144 = vector.shape_cast %143 : vector<1x256xf32> to vector<256xf32>
    %145 = vector.broadcast %142 : f32 to vector<256xf32>
    %146 = arith.mulf %145, %144 : vector<256xf32>
    %147 = arith.addf %141, %146 : vector<256xf32>
    %c2_46 = arith.constant 2 : index
    %c5_47 = arith.constant 5 : index
    %148 = memref.load %arg3[%c2_46, %c5_47] : memref<4x8xf32, #tpu.memory_space<smem>>
    %149 = vector.extract_strided_slice %1 {offsets = [2, 0], sizes = [1, 256], strides = [1, 1]} : vector<4x256xf32> to vector<1x256xf32>
    %150 = vector.shape_cast %149 : vector<1x256xf32> to vector<256xf32>
    %151 = vector.broadcast %148 : f32 to vector<256xf32>
    %152 = arith.mulf %151, %150 : vector<256xf32>
    %153 = arith.addf %147, %152 : vector<256xf32>
    %c3_48 = arith.constant 3 : index
    %c5_49 = arith.constant 5 : index
    %154 = memref.load %arg3[%c3_48, %c5_49] : memref<4x8xf32, #tpu.memory_space<smem>>
    %155 = vector.extract_strided_slice %1 {offsets = [3, 0], sizes = [1, 256], strides = [1, 1]} : vector<4x256xf32> to vector<1x256xf32>
    %156 = vector.shape_cast %155 : vector<1x256xf32> to vector<256xf32>
    %157 = vector.broadcast %154 : f32 to vector<256xf32>
    %158 = arith.mulf %157, %156 : vector<256xf32>
    %159 = arith.addf %153, %158 : vector<256xf32>
    %c5_50 = arith.constant 5 : index
    %160 = memref.load %arg4[%c5_50] : memref<8xf32, #tpu.memory_space<smem>>
    %161 = vector.broadcast %160 : f32 to vector<256xf32>
    %162 = arith.addf %159, %161 : vector<256xf32>
    %163 = math.tanh %162 : vector<256xf32>
    %c0_51 = arith.constant 0 : index
    %c6 = arith.constant 6 : index
    %164 = memref.load %arg3[%c0_51, %c6] : memref<4x8xf32, #tpu.memory_space<smem>>
    %165 = vector.extract_strided_slice %1 {offsets = [0, 0], sizes = [1, 256], strides = [1, 1]} : vector<4x256xf32> to vector<1x256xf32>
    %166 = vector.shape_cast %165 : vector<1x256xf32> to vector<256xf32>
    %167 = vector.broadcast %164 : f32 to vector<256xf32>
    %168 = arith.mulf %167, %166 : vector<256xf32>
    %c1_52 = arith.constant 1 : index
    %c6_53 = arith.constant 6 : index
    %169 = memref.load %arg3[%c1_52, %c6_53] : memref<4x8xf32, #tpu.memory_space<smem>>
    %170 = vector.extract_strided_slice %1 {offsets = [1, 0], sizes = [1, 256], strides = [1, 1]} : vector<4x256xf32> to vector<1x256xf32>
    %171 = vector.shape_cast %170 : vector<1x256xf32> to vector<256xf32>
    %172 = vector.broadcast %169 : f32 to vector<256xf32>
    %173 = arith.mulf %172, %171 : vector<256xf32>
    %174 = arith.addf %168, %173 : vector<256xf32>
    %c2_54 = arith.constant 2 : index
    %c6_55 = arith.constant 6 : index
    %175 = memref.load %arg3[%c2_54, %c6_55] : memref<4x8xf32, #tpu.memory_space<smem>>
    %176 = vector.extract_strided_slice %1 {offsets = [2, 0], sizes = [1, 256], strides = [1, 1]} : vector<4x256xf32> to vector<1x256xf32>
    %177 = vector.shape_cast %176 : vector<1x256xf32> to vector<256xf32>
    %178 = vector.broadcast %175 : f32 to vector<256xf32>
    %179 = arith.mulf %178, %177 : vector<256xf32>
    %180 = arith.addf %174, %179 : vector<256xf32>
    %c3_56 = arith.constant 3 : index
    %c6_57 = arith.constant 6 : index
    %181 = memref.load %arg3[%c3_56, %c6_57] : memref<4x8xf32, #tpu.memory_space<smem>>
    %182 = vector.extract_strided_slice %1 {offsets = [3, 0], sizes = [1, 256], strides = [1, 1]} : vector<4x256xf32> to vector<1x256xf32>
    %183 = vector.shape_cast %182 : vector<1x256xf32> to vector<256xf32>
    %184 = vector.broadcast %181 : f32 to vector<256xf32>
    %185 = arith.mulf %184, %183 : vector<256xf32>
    %186 = arith.addf %180, %185 : vector<256xf32>
    %c6_58 = arith.constant 6 : index
    %187 = memref.load %arg4[%c6_58] : memref<8xf32, #tpu.memory_space<smem>>
    %188 = vector.broadcast %187 : f32 to vector<256xf32>
    %189 = arith.addf %186, %188 : vector<256xf32>
    %190 = math.tanh %189 : vector<256xf32>
    %c0_59 = arith.constant 0 : index
    %c7 = arith.constant 7 : index
    %191 = memref.load %arg3[%c0_59, %c7] : memref<4x8xf32, #tpu.memory_space<smem>>
    %192 = vector.extract_strided_slice %1 {offsets = [0, 0], sizes = [1, 256], strides = [1, 1]} : vector<4x256xf32> to vector<1x256xf32>
    %193 = vector.shape_cast %192 : vector<1x256xf32> to vector<256xf32>
    %194 = vector.broadcast %191 : f32 to vector<256xf32>
    %195 = arith.mulf %194, %193 : vector<256xf32>
    %c1_60 = arith.constant 1 : index
    %c7_61 = arith.constant 7 : index
    %196 = memref.load %arg3[%c1_60, %c7_61] : memref<4x8xf32, #tpu.memory_space<smem>>
    %197 = vector.extract_strided_slice %1 {offsets = [1, 0], sizes = [1, 256], strides = [1, 1]} : vector<4x256xf32> to vector<1x256xf32>
    %198 = vector.shape_cast %197 : vector<1x256xf32> to vector<256xf32>
    %199 = vector.broadcast %196 : f32 to vector<256xf32>
    %200 = arith.mulf %199, %198 : vector<256xf32>
    %201 = arith.addf %195, %200 : vector<256xf32>
    %c2_62 = arith.constant 2 : index
    %c7_63 = arith.constant 7 : index
    %202 = memref.load %arg3[%c2_62, %c7_63] : memref<4x8xf32, #tpu.memory_space<smem>>
    %203 = vector.extract_strided_slice %1 {offsets = [2, 0], sizes = [1, 256], strides = [1, 1]} : vector<4x256xf32> to vector<1x256xf32>
    %204 = vector.shape_cast %203 : vector<1x256xf32> to vector<256xf32>
    %205 = vector.broadcast %202 : f32 to vector<256xf32>
    %206 = arith.mulf %205, %204 : vector<256xf32>
    %207 = arith.addf %201, %206 : vector<256xf32>
    %c3_64 = arith.constant 3 : index
    %c7_65 = arith.constant 7 : index
    %208 = memref.load %arg3[%c3_64, %c7_65] : memref<4x8xf32, #tpu.memory_space<smem>>
    %209 = vector.extract_strided_slice %1 {offsets = [3, 0], sizes = [1, 256], strides = [1, 1]} : vector<4x256xf32> to vector<1x256xf32>
    %210 = vector.shape_cast %209 : vector<1x256xf32> to vector<256xf32>
    %211 = vector.broadcast %208 : f32 to vector<256xf32>
    %212 = arith.mulf %211, %210 : vector<256xf32>
    %213 = arith.addf %207, %212 : vector<256xf32>
    %c7_66 = arith.constant 7 : index
    %214 = memref.load %arg4[%c7_66] : memref<8xf32, #tpu.memory_space<smem>>
    %215 = vector.broadcast %214 : f32 to vector<256xf32>
    %216 = arith.addf %213, %215 : vector<256xf32>
    %217 = math.tanh %216 : vector<256xf32>
    %c0_67 = arith.constant 0 : index
    %c0_68 = arith.constant 0 : index
    %c0_69 = arith.constant 0 : index
    %218 = vector.load %arg8[%c0_67, %c0_68, %c0_69] : memref<1x8x256xf32, #tpu.memory_space<vmem>>, vector<1x1x256xf32>
    %219 = vector.shape_cast %218 : vector<1x1x256xf32> to vector<256xf32>
    %220 = vector.shape_cast %28 : vector<256xf32> to vector<1x1x256xf32>
    tpu.vector_store %arg8[%c0_67, %c0_68, %c0_69], %220 {strides = array<i32>} : memref<1x8x256xf32, #tpu.memory_space<vmem>>, vector<1x1x256xf32>,
    %c0_70 = arith.constant 0 : index
    %c1_71 = arith.constant 1 : index
    %c0_72 = arith.constant 0 : index
    %221 = vector.load %arg8[%c0_70, %c1_71, %c0_72] : memref<1x8x256xf32, #tpu.memory_space<vmem>>, vector<1x1x256xf32>
    %222 = vector.shape_cast %221 : vector<1x1x256xf32> to vector<256xf32>
    %223 = vector.shape_cast %55 : vector<256xf32> to vector<1x1x256xf32>
    tpu.vector_store %arg8[%c0_70, %c1_71, %c0_72], %223 {strides = array<i32>} : memref<1x8x256xf32, #tpu.memory_space<vmem>>, vector<1x1x256xf32>,
    %c0_73 = arith.constant 0 : index
    %c2_74 = arith.constant 2 : index
    %c0_75 = arith.constant 0 : index
    %224 = vector.load %arg8[%c0_73, %c2_74, %c0_75] : memref<1x8x256xf32, #tpu.memory_space<vmem>>, vector<1x1x256xf32>
    %225 = vector.shape_cast %224 : vector<1x1x256xf32> to vector<256xf32>
    %226 = vector.shape_cast %82 : vector<256xf32> to vector<1x1x256xf32>
    tpu.vector_store %arg8[%c0_73, %c2_74, %c0_75], %226 {strides = array<i32>} : memref<1x8x256xf32, #tpu.memory_space<vmem>>, vector<1x1x256xf32>,
    %c0_76 = arith.constant 0 : index
    %c3_77 = arith.constant 3 : index
    %c0_78 = arith.constant 0 : index
    %227 = vector.load %arg8[%c0_76, %c3_77, %c0_78] : memref<1x8x256xf32, #tpu.memory_space<vmem>>, vector<1x1x256xf32>
    %228 = vector.shape_cast %227 : vector<1x1x256xf32> to vector<256xf32>
    %229 = vector.shape_cast %109 : vector<256xf32> to vector<1x1x256xf32>
    tpu.vector_store %arg8[%c0_76, %c3_77, %c0_78], %229 {strides = array<i32>} : memref<1x8x256xf32, #tpu.memory_space<vmem>>, vector<1x1x256xf32>,
    %c0_79 = arith.constant 0 : index
    %c4_80 = arith.constant 4 : index
    %c0_81 = arith.constant 0 : index
    %230 = vector.load %arg8[%c0_79, %c4_80, %c0_81] : memref<1x8x256xf32, #tpu.memory_space<vmem>>, vector<1x1x256xf32>
    %231 = vector.shape_cast %230 : vector<1x1x256xf32> to vector<256xf32>
    %232 = vector.shape_cast %136 : vector<256xf32> to vector<1x1x256xf32>
    tpu.vector_store %arg8[%c0_79, %c4_80, %c0_81], %232 {strides = array<i32>} : memref<1x8x256xf32, #tpu.memory_space<vmem>>, vector<1x1x256xf32>,
    %c0_82 = arith.constant 0 : index
    %c5_83 = arith.constant 5 : index
    %c0_84 = arith.constant 0 : index
    %233 = vector.load %arg8[%c0_82, %c5_83, %c0_84] : memref<1x8x256xf32, #tpu.memory_space<vmem>>, vector<1x1x256xf32>
    %234 = vector.shape_cast %233 : vector<1x1x256xf32> to vector<256xf32>
    %235 = vector.shape_cast %163 : vector<256xf32> to vector<1x1x256xf32>
    tpu.vector_store %arg8[%c0_82, %c5_83, %c0_84], %235 {strides = array<i32>} : memref<1x8x256xf32, #tpu.memory_space<vmem>>, vector<1x1x256xf32>,
    %c0_85 = arith.constant 0 : index
    %c6_86 = arith.constant 6 : index
    %c0_87 = arith.constant 0 : index
    %236 = vector.load %arg8[%c0_85, %c6_86, %c0_87] : memref<1x8x256xf32, #tpu.memory_space<vmem>>, vector<1x1x256xf32>
    %237 = vector.shape_cast %236 : vector<1x1x256xf32> to vector<256xf32>
    %238 = vector.shape_cast %190 : vector<256xf32> to vector<1x1x256xf32>
    tpu.vector_store %arg8[%c0_85, %c6_86, %c0_87], %238 {strides = array<i32>} : memref<1x8x256xf32, #tpu.memory_space<vmem>>, vector<1x1x256xf32>,
    %c0_88 = arith.constant 0 : index
    %c7_89 = arith.constant 7 : index
    %c0_90 = arith.constant 0 : index
    %239 = vector.load %arg8[%c0_88, %c7_89, %c0_90] : memref<1x8x256xf32, #tpu.memory_space<vmem>>, vector<1x1x256xf32>
    %240 = vector.shape_cast %239 : vector<1x1x256xf32> to vector<256xf32>
    %241 = vector.shape_cast %217 : vector<256xf32> to vector<1x1x256xf32>
    tpu.vector_store %arg8[%c0_88, %c7_89, %c0_90], %241 {strides = array<i32>} : memref<1x8x256xf32, #tpu.memory_space<vmem>>, vector<1x1x256xf32>,
    %c0_91 = arith.constant 0 : index
    %c0_92 = arith.constant 0 : index
    %242 = memref.load %arg5[%c0_91, %c0_92] : memref<8x4xf32, #tpu.memory_space<smem>>
    %243 = vector.broadcast %242 : f32 to vector<256xf32>
    %244 = arith.mulf %243, %28 : vector<256xf32>
    %c1_93 = arith.constant 1 : index
    %c0_94 = arith.constant 0 : index
    %245 = memref.load %arg5[%c1_93, %c0_94] : memref<8x4xf32, #tpu.memory_space<smem>>
    %246 = vector.broadcast %245 : f32 to vector<256xf32>
    %247 = arith.mulf %246, %55 : vector<256xf32>
    %248 = arith.addf %244, %247 : vector<256xf32>
    %c2_95 = arith.constant 2 : index
    %c0_96 = arith.constant 0 : index
    %249 = memref.load %arg5[%c2_95, %c0_96] : memref<8x4xf32, #tpu.memory_space<smem>>
    %250 = vector.broadcast %249 : f32 to vector<256xf32>
    %251 = arith.mulf %250, %82 : vector<256xf32>
    %252 = arith.addf %248, %251 : vector<256xf32>
    %c3_97 = arith.constant 3 : index
    %c0_98 = arith.constant 0 : index
    %253 = memref.load %arg5[%c3_97, %c0_98] : memref<8x4xf32, #tpu.memory_space<smem>>
    %254 = vector.broadcast %253 : f32 to vector<256xf32>
    %255 = arith.mulf %254, %109 : vector<256xf32>
    %256 = arith.addf %252, %255 : vector<256xf32>
    %c4_99 = arith.constant 4 : index
    %c0_100 = arith.constant 0 : index
    %257 = memref.load %arg5[%c4_99, %c0_100] : memref<8x4xf32, #tpu.memory_space<smem>>
    %258 = vector.broadcast %257 : f32 to vector<256xf32>
    %259 = arith.mulf %258, %136 : vector<256xf32>
    %260 = arith.addf %256, %259 : vector<256xf32>
    %c5_101 = arith.constant 5 : index
    %c0_102 = arith.constant 0 : index
    %261 = memref.load %arg5[%c5_101, %c0_102] : memref<8x4xf32, #tpu.memory_space<smem>>
    %262 = vector.broadcast %261 : f32 to vector<256xf32>
    %263 = arith.mulf %262, %163 : vector<256xf32>
    %264 = arith.addf %260, %263 : vector<256xf32>
    %c6_103 = arith.constant 6 : index
    %c0_104 = arith.constant 0 : index
    %265 = memref.load %arg5[%c6_103, %c0_104] : memref<8x4xf32, #tpu.memory_space<smem>>
    %266 = vector.broadcast %265 : f32 to vector<256xf32>
    %267 = arith.mulf %266, %190 : vector<256xf32>
    %268 = arith.addf %264, %267 : vector<256xf32>
    %c7_105 = arith.constant 7 : index
    %c0_106 = arith.constant 0 : index
    %269 = memref.load %arg5[%c7_105, %c0_106] : memref<8x4xf32, #tpu.memory_space<smem>>
    %270 = vector.broadcast %269 : f32 to vector<256xf32>
    %271 = arith.mulf %270, %217 : vector<256xf32>
    %272 = arith.addf %268, %271 : vector<256xf32>
    %273 = vector.extract_strided_slice %1 {offsets = [0, 0], sizes = [1, 256], strides = [1, 1]} : vector<4x256xf32> to vector<1x256xf32>
    %274 = vector.shape_cast %273 : vector<1x256xf32> to vector<256xf32>
    %275 = arith.addf %274, %272 : vector<256xf32>
    %c0_107 = arith.constant 0 : index
    %276 = memref.load %arg6[%c0_107] : memref<4xf32, #tpu.memory_space<smem>>
    %277 = vector.broadcast %276 : f32 to vector<256xf32>
    %278 = arith.addf %275, %277 : vector<256xf32>
    %c0_108 = arith.constant 0 : index
    %c0_109 = arith.constant 0 : index
    %c0_110 = arith.constant 0 : index
    %279 = vector.load %arg7[%c0_108, %c0_109, %c0_110] : memref<1x4x256xf32, #tpu.memory_space<vmem>>, vector<1x1x256xf32>
    %280 = vector.shape_cast %279 : vector<1x1x256xf32> to vector<256xf32>
    %281 = vector.shape_cast %278 : vector<256xf32> to vector<1x1x256xf32>
    tpu.vector_store %arg7[%c0_108, %c0_109, %c0_110], %281 {strides = array<i32>} : memref<1x4x256xf32, #tpu.memory_space<vmem>>, vector<1x1x256xf32>,
    %c0_111 = arith.constant 0 : index
    %c1_112 = arith.constant 1 : index
    %282 = memref.load %arg5[%c0_111, %c1_112] : memref<8x4xf32, #tpu.memory_space<smem>>
    %283 = vector.broadcast %282 : f32 to vector<256xf32>
    %284 = arith.mulf %283, %28 : vector<256xf32>
    %c1_113 = arith.constant 1 : index
    %c1_114 = arith.constant 1 : index
    %285 = memref.load %arg5[%c1_113, %c1_114] : memref<8x4xf32, #tpu.memory_space<smem>>
    %286 = vector.broadcast %285 : f32 to vector<256xf32>
    %287 = arith.mulf %286, %55 : vector<256xf32>
    %288 = arith.addf %284, %287 : vector<256xf32>
    %c2_115 = arith.constant 2 : index
    %c1_116 = arith.constant 1 : index
    %289 = memref.load %arg5[%c2_115, %c1_116] : memref<8x4xf32, #tpu.memory_space<smem>>
    %290 = vector.broadcast %289 : f32 to vector<256xf32>
    %291 = arith.mulf %290, %82 : vector<256xf32>
    %292 = arith.addf %288, %291 : vector<256xf32>
    %c3_117 = arith.constant 3 : index
    %c1_118 = arith.constant 1 : index
    %293 = memref.load %arg5[%c3_117, %c1_118] : memref<8x4xf32, #tpu.memory_space<smem>>
    %294 = vector.broadcast %293 : f32 to vector<256xf32>
    %295 = arith.mulf %294, %109 : vector<256xf32>
    %296 = arith.addf %292, %295 : vector<256xf32>
    %c4_119 = arith.constant 4 : index
    %c1_120 = arith.constant 1 : index
    %297 = memref.load %arg5[%c4_119, %c1_120] : memref<8x4xf32, #tpu.memory_space<smem>>
    %298 = vector.broadcast %297 : f32 to vector<256xf32>
    %299 = arith.mulf %298, %136 : vector<256xf32>
    %300 = arith.addf %296, %299 : vector<256xf32>
    %c5_121 = arith.constant 5 : index
    %c1_122 = arith.constant 1 : index
    %301 = memref.load %arg5[%c5_121, %c1_122] : memref<8x4xf32, #tpu.memory_space<smem>>
    %302 = vector.broadcast %301 : f32 to vector<256xf32>
    %303 = arith.mulf %302, %163 : vector<256xf32>
    %304 = arith.addf %300, %303 : vector<256xf32>
    %c6_123 = arith.constant 6 : index
    %c1_124 = arith.constant 1 : index
    %305 = memref.load %arg5[%c6_123, %c1_124] : memref<8x4xf32, #tpu.memory_space<smem>>
    %306 = vector.broadcast %305 : f32 to vector<256xf32>
    %307 = arith.mulf %306, %190 : vector<256xf32>
    %308 = arith.addf %304, %307 : vector<256xf32>
    %c7_125 = arith.constant 7 : index
    %c1_126 = arith.constant 1 : index
    %309 = memref.load %arg5[%c7_125, %c1_126] : memref<8x4xf32, #tpu.memory_space<smem>>
    %310 = vector.broadcast %309 : f32 to vector<256xf32>
    %311 = arith.mulf %310, %217 : vector<256xf32>
    %312 = arith.addf %308, %311 : vector<256xf32>
    %313 = vector.extract_strided_slice %1 {offsets = [1, 0], sizes = [1, 256], strides = [1, 1]} : vector<4x256xf32> to vector<1x256xf32>
    %314 = vector.shape_cast %313 : vector<1x256xf32> to vector<256xf32>
    %315 = arith.addf %314, %312 : vector<256xf32>
    %c1_127 = arith.constant 1 : index
    %316 = memref.load %arg6[%c1_127] : memref<4xf32, #tpu.memory_space<smem>>
    %317 = vector.broadcast %316 : f32 to vector<256xf32>
    %318 = arith.addf %315, %317 : vector<256xf32>
    %c0_128 = arith.constant 0 : index
    %c1_129 = arith.constant 1 : index
    %c0_130 = arith.constant 0 : index
    %319 = vector.load %arg7[%c0_128, %c1_129, %c0_130] : memref<1x4x256xf32, #tpu.memory_space<vmem>>, vector<1x1x256xf32>
    %320 = vector.shape_cast %319 : vector<1x1x256xf32> to vector<256xf32>
    %321 = vector.shape_cast %318 : vector<256xf32> to vector<1x1x256xf32>
    tpu.vector_store %arg7[%c0_128, %c1_129, %c0_130], %321 {strides = array<i32>} : memref<1x4x256xf32, #tpu.memory_space<vmem>>, vector<1x1x256xf32>,
    %c0_131 = arith.constant 0 : index
    %c2_132 = arith.constant 2 : index
    %322 = memref.load %arg5[%c0_131, %c2_132] : memref<8x4xf32, #tpu.memory_space<smem>>
    %323 = vector.broadcast %322 : f32 to vector<256xf32>
    %324 = arith.mulf %323, %28 : vector<256xf32>
    %c1_133 = arith.constant 1 : index
    %c2_134 = arith.constant 2 : index
    %325 = memref.load %arg5[%c1_133, %c2_134] : memref<8x4xf32, #tpu.memory_space<smem>>
    %326 = vector.broadcast %325 : f32 to vector<256xf32>
    %327 = arith.mulf %326, %55 : vector<256xf32>
    %328 = arith.addf %324, %327 : vector<256xf32>
    %c2_135 = arith.constant 2 : index
    %c2_136 = arith.constant 2 : index
    %329 = memref.load %arg5[%c2_135, %c2_136] : memref<8x4xf32, #tpu.memory_space<smem>>
    %330 = vector.broadcast %329 : f32 to vector<256xf32>
    %331 = arith.mulf %330, %82 : vector<256xf32>
    %332 = arith.addf %328, %331 : vector<256xf32>
    %c3_137 = arith.constant 3 : index
    %c2_138 = arith.constant 2 : index
    %333 = memref.load %arg5[%c3_137, %c2_138] : memref<8x4xf32, #tpu.memory_space<smem>>
    %334 = vector.broadcast %333 : f32 to vector<256xf32>
    %335 = arith.mulf %334, %109 : vector<256xf32>
    %336 = arith.addf %332, %335 : vector<256xf32>
    %c4_139 = arith.constant 4 : index
    %c2_140 = arith.constant 2 : index
    %337 = memref.load %arg5[%c4_139, %c2_140] : memref<8x4xf32, #tpu.memory_space<smem>>
    %338 = vector.broadcast %337 : f32 to vector<256xf32>
    %339 = arith.mulf %338, %136 : vector<256xf32>
    %340 = arith.addf %336, %339 : vector<256xf32>
    %c5_141 = arith.constant 5 : index
    %c2_142 = arith.constant 2 : index
    %341 = memref.load %arg5[%c5_141, %c2_142] : memref<8x4xf32, #tpu.memory_space<smem>>
    %342 = vector.broadcast %341 : f32 to vector<256xf32>
    %343 = arith.mulf %342, %163 : vector<256xf32>
    %344 = arith.addf %340, %343 : vector<256xf32>
    %c6_143 = arith.constant 6 : index
    %c2_144 = arith.constant 2 : index
    %345 = memref.load %arg5[%c6_143, %c2_144] : memref<8x4xf32, #tpu.memory_space<smem>>
    %346 = vector.broadcast %345 : f32 to vector<256xf32>
    %347 = arith.mulf %346, %190 : vector<256xf32>
    %348 = arith.addf %344, %347 : vector<256xf32>
    %c7_145 = arith.constant 7 : index
    %c2_146 = arith.constant 2 : index
    %349 = memref.load %arg5[%c7_145, %c2_146] : memref<8x4xf32, #tpu.memory_space<smem>>
    %350 = vector.broadcast %349 : f32 to vector<256xf32>
    %351 = arith.mulf %350, %217 : vector<256xf32>
    %352 = arith.addf %348, %351 : vector<256xf32>
    %353 = vector.extract_strided_slice %1 {offsets = [2, 0], sizes = [1, 256], strides = [1, 1]} : vector<4x256xf32> to vector<1x256xf32>
    %354 = vector.shape_cast %353 : vector<1x256xf32> to vector<256xf32>
    %355 = arith.addf %354, %352 : vector<256xf32>
    %c2_147 = arith.constant 2 : index
    %356 = memref.load %arg6[%c2_147] : memref<4xf32, #tpu.memory_space<smem>>
    %357 = vector.broadcast %356 : f32 to vector<256xf32>
    %358 = arith.addf %355, %357 : vector<256xf32>
    %c0_148 = arith.constant 0 : index
    %c2_149 = arith.constant 2 : index
    %c0_150 = arith.constant 0 : index
    %359 = vector.load %arg7[%c0_148, %c2_149, %c0_150] : memref<1x4x256xf32, #tpu.memory_space<vmem>>, vector<1x1x256xf32>
    %360 = vector.shape_cast %359 : vector<1x1x256xf32> to vector<256xf32>
    %361 = vector.shape_cast %358 : vector<256xf32> to vector<1x1x256xf32>
    tpu.vector_store %arg7[%c0_148, %c2_149, %c0_150], %361 {strides = array<i32>} : memref<1x4x256xf32, #tpu.memory_space<vmem>>, vector<1x1x256xf32>,
    %c0_151 = arith.constant 0 : index
    %c3_152 = arith.constant 3 : index
    %362 = memref.load %arg5[%c0_151, %c3_152] : memref<8x4xf32, #tpu.memory_space<smem>>
    %363 = vector.broadcast %362 : f32 to vector<256xf32>
    %364 = arith.mulf %363, %28 : vector<256xf32>
    %c1_153 = arith.constant 1 : index
    %c3_154 = arith.constant 3 : index
    %365 = memref.load %arg5[%c1_153, %c3_154] : memref<8x4xf32, #tpu.memory_space<smem>>
    %366 = vector.broadcast %365 : f32 to vector<256xf32>
    %367 = arith.mulf %366, %55 : vector<256xf32>
    %368 = arith.addf %364, %367 : vector<256xf32>
    %c2_155 = arith.constant 2 : index
    %c3_156 = arith.constant 3 : index
    %369 = memref.load %arg5[%c2_155, %c3_156] : memref<8x4xf32, #tpu.memory_space<smem>>
    %370 = vector.broadcast %369 : f32 to vector<256xf32>
    %371 = arith.mulf %370, %82 : vector<256xf32>
    %372 = arith.addf %368, %371 : vector<256xf32>
    %c3_157 = arith.constant 3 : index
    %c3_158 = arith.constant 3 : index
    %373 = memref.load %arg5[%c3_157, %c3_158] : memref<8x4xf32, #tpu.memory_space<smem>>
    %374 = vector.broadcast %373 : f32 to vector<256xf32>
    %375 = arith.mulf %374, %109 : vector<256xf32>
    %376 = arith.addf %372, %375 : vector<256xf32>
    %c4_159 = arith.constant 4 : index
    %c3_160 = arith.constant 3 : index
    %377 = memref.load %arg5[%c4_159, %c3_160] : memref<8x4xf32, #tpu.memory_space<smem>>
    %378 = vector.broadcast %377 : f32 to vector<256xf32>
    %379 = arith.mulf %378, %136 : vector<256xf32>
    %380 = arith.addf %376, %379 : vector<256xf32>
    %c5_161 = arith.constant 5 : index
    %c3_162 = arith.constant 3 : index
    %381 = memref.load %arg5[%c5_161, %c3_162] : memref<8x4xf32, #tpu.memory_space<smem>>
    %382 = vector.broadcast %381 : f32 to vector<256xf32>
    %383 = arith.mulf %382, %163 : vector<256xf32>
    %384 = arith.addf %380, %383 : vector<256xf32>
    %c6_163 = arith.constant 6 : index
    %c3_164 = arith.constant 3 : index
    %385 = memref.load %arg5[%c6_163, %c3_164] : memref<8x4xf32, #tpu.memory_space<smem>>
    %386 = vector.broadcast %385 : f32 to vector<256xf32>
    %387 = arith.mulf %386, %190 : vector<256xf32>
    %388 = arith.addf %384, %387 : vector<256xf32>
    %c7_165 = arith.constant 7 : index
    %c3_166 = arith.constant 3 : index
    %389 = memref.load %arg5[%c7_165, %c3_166] : memref<8x4xf32, #tpu.memory_space<smem>>
    %390 = vector.broadcast %389 : f32 to vector<256xf32>
    %391 = arith.mulf %390, %217 : vector<256xf32>
    %392 = arith.addf %388, %391 : vector<256xf32>
    %393 = vector.extract_strided_slice %1 {offsets = [3, 0], sizes = [1, 256], strides = [1, 1]} : vector<4x256xf32> to vector<1x256xf32>
    %394 = vector.shape_cast %393 : vector<1x256xf32> to vector<256xf32>
    %395 = arith.addf %394, %392 : vector<256xf32>
    %c3_167 = arith.constant 3 : index
    %396 = memref.load %arg6[%c3_167] : memref<4xf32, #tpu.memory_space<smem>>
    %397 = vector.broadcast %396 : f32 to vector<256xf32>
    %398 = arith.addf %395, %397 : vector<256xf32>
    %c0_168 = arith.constant 0 : index
    %c3_169 = arith.constant 3 : index
    %c0_170 = arith.constant 0 : index
    %399 = vector.load %arg7[%c0_168, %c3_169, %c0_170] : memref<1x4x256xf32, #tpu.memory_space<vmem>>, vector<1x1x256xf32>
    %400 = vector.shape_cast %399 : vector<1x1x256xf32> to vector<256xf32>
    %401 = vector.shape_cast %398 : vector<256xf32> to vector<1x1x256xf32>
    tpu.vector_store %arg7[%c0_168, %c3_169, %c0_170], %401 {strides = array<i32>} : memref<1x4x256xf32, #tpu.memory_space<vmem>>, vector<1x1x256xf32>,
    return
  }
  func.func @transform_0(%arg0: i32, %arg1: i32) -> (i32, i32, i32) {
    %c0_i32 = arith.constant 0 : i32
    %c0_i32_0 = arith.constant 0 : i32
    return %arg0, %c0_i32, %arg1 : i32, i32, i32
  }
  func.func @transform_1(%arg0: i32, %arg1: i32) -> (i32, i32) {
    %c0_i32 = arith.constant 0 : i32
    %c0_i32_0 = arith.constant 0 : i32
    %c0_i32_1 = arith.constant 0 : i32
    return %c0_i32, %c0_i32_0 : i32, i32
  }
  func.func @transform_2(%arg0: i32, %arg1: i32) -> i32 {
    %c0_i32 = arith.constant 0 : i32
    %c0_i32_0 = arith.constant 0 : i32
    return %c0_i32 : i32
  }
  func.func @transform_3(%arg0: i32, %arg1: i32) -> (i32, i32) {
    %c0_i32 = arith.constant 0 : i32
    %c0_i32_0 = arith.constant 0 : i32
    %c0_i32_1 = arith.constant 0 : i32
    return %c0_i32, %c0_i32_0 : i32, i32
  }
  func.func @transform_4(%arg0: i32, %arg1: i32) -> i32 {
    %c0_i32 = arith.constant 0 : i32
    %c0_i32_0 = arith.constant 0 : i32
    return %c0_i32 : i32
  }
  func.func @transform_5(%arg0: i32, %arg1: i32) -> (i32, i32, i32) {
    %c0_i32 = arith.constant 0 : i32
    %c0_i32_0 = arith.constant 0 : i32
    return %arg0, %c0_i32, %arg1 : i32, i32, i32
  }
  func.func @transform_6(%arg0: i32, %arg1: i32) -> (i32, i32, i32) {
    %c0_i32 = arith.constant 0 : i32
    %c0_i32_0 = arith.constant 0 : i32
    return %arg0, %c0_i32, %arg1 : i32, i32, i32
  }
}

module attributes {stable_mosaic.version = 11 : i64} {
  func.func @_reg_adj_kernel(%arg0: i32, %arg1: i32, %arg2: memref<1x4x256xf32, #tpu.memory_space<vmem>>, %arg3: memref<1x4x256xf32, #tpu.memory_space<vmem>>, %arg4: memref<1x4x256xf32, #tpu.memory_space<vmem>>, %arg5: memref<4xf32, #tpu.memory_space<smem>>, %arg6: memref<1x4x256xf32, #tpu.memory_space<vmem>>, %arg7: memref<1x4x256xf32, #tpu.memory_space<vmem>>) attributes {dimension_semantics = [#tpu.dimension_semantics<parallel>, #tpu.dimension_semantics<parallel>], iteration_bounds = array<i64: 2, 1>, scalar_prefetch = 0 : i64, scratch_operands = 0 : i64, tpu.core_type = #tpu.core_type<tc>, window_params = [{transform_indices = @transform_0, window_bounds = array<i64: 1, 4, 256>}, {transform_indices = @transform_1, window_bounds = array<i64: 1, 4, 256>}, {transform_indices = @transform_2, window_bounds = array<i64: 1, 4, 256>}, {transform_indices = @transform_3, window_bounds = array<i64: 4>}, {transform_indices = @transform_4, window_bounds = array<i64: 1, 4, 256>}, {transform_indices = @transform_5, window_bounds = array<i64: 1, 4, 256>}]} {
    %c0 = arith.constant 0 : index
    %c0_0 = arith.constant 0 : index
    %c0_1 = arith.constant 0 : index
    %0 = vector.load %arg2[%c0, %c0_0, %c0_1] : memref<1x4x256xf32, #tpu.memory_space<vmem>>, vector<1x4x256xf32>
    %1 = vector.shape_cast %0 : vector<1x4x256xf32> to vector<4x256xf32>
    %c0_2 = arith.constant 0 : index
    %c0_3 = arith.constant 0 : index
    %c0_4 = arith.constant 0 : index
    %2 = vector.load %arg3[%c0_2, %c0_3, %c0_4] : memref<1x4x256xf32, #tpu.memory_space<vmem>>, vector<1x4x256xf32>
    %3 = vector.shape_cast %2 : vector<1x4x256xf32> to vector<4x256xf32>
    %c0_5 = arith.constant 0 : index
    %c0_6 = arith.constant 0 : index
    %c0_7 = arith.constant 0 : index
    %4 = vector.load %arg4[%c0_5, %c0_6, %c0_7] : memref<1x4x256xf32, #tpu.memory_space<vmem>>, vector<1x4x256xf32>
    %5 = vector.shape_cast %4 : vector<1x4x256xf32> to vector<4x256xf32>
    %c0_8 = arith.constant 0 : index
    %6 = memref.load %arg5[%c0_8] : memref<4xf32, #tpu.memory_space<smem>>
    %7 = vector.extract_strided_slice %1 {offsets = [0, 0], sizes = [1, 256], strides = [1, 1]} : vector<4x256xf32> to vector<1x256xf32>
    %8 = vector.shape_cast %7 : vector<1x256xf32> to vector<256xf32>
    %9 = vector.extract_strided_slice %3 {offsets = [0, 0], sizes = [1, 256], strides = [1, 1]} : vector<4x256xf32> to vector<1x256xf32>
    %10 = vector.shape_cast %9 : vector<1x256xf32> to vector<256xf32>
    %11 = arith.subf %8, %10 : vector<256xf32>
    %12 = vector.broadcast %6 : f32 to vector<256xf32>
    %13 = arith.mulf %12, %11 : vector<256xf32>
    %c0_9 = arith.constant 0 : index
    %c0_10 = arith.constant 0 : index
    %c0_11 = arith.constant 0 : index
    %14 = vector.load %arg6[%c0_9, %c0_10, %c0_11] : memref<1x4x256xf32, #tpu.memory_space<vmem>>, vector<1x1x256xf32>
    %15 = vector.shape_cast %14 : vector<1x1x256xf32> to vector<256xf32>
    %16 = vector.shape_cast %13 : vector<256xf32> to vector<1x1x256xf32>
    tpu.vector_store %arg6[%c0_9, %c0_10, %c0_11], %16 {strides = array<i32>} : memref<1x4x256xf32, #tpu.memory_space<vmem>>, vector<1x1x256xf32>,
    %17 = vector.extract_strided_slice %5 {offsets = [0, 0], sizes = [1, 256], strides = [1, 1]} : vector<4x256xf32> to vector<1x256xf32>
    %18 = vector.shape_cast %17 : vector<1x256xf32> to vector<256xf32>
    %19 = arith.subf %18, %13 : vector<256xf32>
    %c0_12 = arith.constant 0 : index
    %c0_13 = arith.constant 0 : index
    %c0_14 = arith.constant 0 : index
    %20 = vector.load %arg7[%c0_12, %c0_13, %c0_14] : memref<1x4x256xf32, #tpu.memory_space<vmem>>, vector<1x1x256xf32>
    %21 = vector.shape_cast %20 : vector<1x1x256xf32> to vector<256xf32>
    %22 = vector.shape_cast %19 : vector<256xf32> to vector<1x1x256xf32>
    tpu.vector_store %arg7[%c0_12, %c0_13, %c0_14], %22 {strides = array<i32>} : memref<1x4x256xf32, #tpu.memory_space<vmem>>, vector<1x1x256xf32>,
    %c1 = arith.constant 1 : index
    %23 = memref.load %arg5[%c1] : memref<4xf32, #tpu.memory_space<smem>>
    %24 = vector.extract_strided_slice %1 {offsets = [1, 0], sizes = [1, 256], strides = [1, 1]} : vector<4x256xf32> to vector<1x256xf32>
    %25 = vector.shape_cast %24 : vector<1x256xf32> to vector<256xf32>
    %26 = vector.extract_strided_slice %3 {offsets = [1, 0], sizes = [1, 256], strides = [1, 1]} : vector<4x256xf32> to vector<1x256xf32>
    %27 = vector.shape_cast %26 : vector<1x256xf32> to vector<256xf32>
    %28 = arith.subf %25, %27 : vector<256xf32>
    %29 = vector.broadcast %23 : f32 to vector<256xf32>
    %30 = arith.mulf %29, %28 : vector<256xf32>
    %c0_15 = arith.constant 0 : index
    %c1_16 = arith.constant 1 : index
    %c0_17 = arith.constant 0 : index
    %31 = vector.load %arg6[%c0_15, %c1_16, %c0_17] : memref<1x4x256xf32, #tpu.memory_space<vmem>>, vector<1x1x256xf32>
    %32 = vector.shape_cast %31 : vector<1x1x256xf32> to vector<256xf32>
    %33 = vector.shape_cast %30 : vector<256xf32> to vector<1x1x256xf32>
    tpu.vector_store %arg6[%c0_15, %c1_16, %c0_17], %33 {strides = array<i32>} : memref<1x4x256xf32, #tpu.memory_space<vmem>>, vector<1x1x256xf32>,
    %34 = vector.extract_strided_slice %5 {offsets = [1, 0], sizes = [1, 256], strides = [1, 1]} : vector<4x256xf32> to vector<1x256xf32>
    %35 = vector.shape_cast %34 : vector<1x256xf32> to vector<256xf32>
    %36 = arith.subf %35, %30 : vector<256xf32>
    %c0_18 = arith.constant 0 : index
    %c1_19 = arith.constant 1 : index
    %c0_20 = arith.constant 0 : index
    %37 = vector.load %arg7[%c0_18, %c1_19, %c0_20] : memref<1x4x256xf32, #tpu.memory_space<vmem>>, vector<1x1x256xf32>
    %38 = vector.shape_cast %37 : vector<1x1x256xf32> to vector<256xf32>
    %39 = vector.shape_cast %36 : vector<256xf32> to vector<1x1x256xf32>
    tpu.vector_store %arg7[%c0_18, %c1_19, %c0_20], %39 {strides = array<i32>} : memref<1x4x256xf32, #tpu.memory_space<vmem>>, vector<1x1x256xf32>,
    %c2 = arith.constant 2 : index
    %40 = memref.load %arg5[%c2] : memref<4xf32, #tpu.memory_space<smem>>
    %41 = vector.extract_strided_slice %1 {offsets = [2, 0], sizes = [1, 256], strides = [1, 1]} : vector<4x256xf32> to vector<1x256xf32>
    %42 = vector.shape_cast %41 : vector<1x256xf32> to vector<256xf32>
    %43 = vector.extract_strided_slice %3 {offsets = [2, 0], sizes = [1, 256], strides = [1, 1]} : vector<4x256xf32> to vector<1x256xf32>
    %44 = vector.shape_cast %43 : vector<1x256xf32> to vector<256xf32>
    %45 = arith.subf %42, %44 : vector<256xf32>
    %46 = vector.broadcast %40 : f32 to vector<256xf32>
    %47 = arith.mulf %46, %45 : vector<256xf32>
    %c0_21 = arith.constant 0 : index
    %c2_22 = arith.constant 2 : index
    %c0_23 = arith.constant 0 : index
    %48 = vector.load %arg6[%c0_21, %c2_22, %c0_23] : memref<1x4x256xf32, #tpu.memory_space<vmem>>, vector<1x1x256xf32>
    %49 = vector.shape_cast %48 : vector<1x1x256xf32> to vector<256xf32>
    %50 = vector.shape_cast %47 : vector<256xf32> to vector<1x1x256xf32>
    tpu.vector_store %arg6[%c0_21, %c2_22, %c0_23], %50 {strides = array<i32>} : memref<1x4x256xf32, #tpu.memory_space<vmem>>, vector<1x1x256xf32>,
    %51 = vector.extract_strided_slice %5 {offsets = [2, 0], sizes = [1, 256], strides = [1, 1]} : vector<4x256xf32> to vector<1x256xf32>
    %52 = vector.shape_cast %51 : vector<1x256xf32> to vector<256xf32>
    %53 = arith.subf %52, %47 : vector<256xf32>
    %c0_24 = arith.constant 0 : index
    %c2_25 = arith.constant 2 : index
    %c0_26 = arith.constant 0 : index
    %54 = vector.load %arg7[%c0_24, %c2_25, %c0_26] : memref<1x4x256xf32, #tpu.memory_space<vmem>>, vector<1x1x256xf32>
    %55 = vector.shape_cast %54 : vector<1x1x256xf32> to vector<256xf32>
    %56 = vector.shape_cast %53 : vector<256xf32> to vector<1x1x256xf32>
    tpu.vector_store %arg7[%c0_24, %c2_25, %c0_26], %56 {strides = array<i32>} : memref<1x4x256xf32, #tpu.memory_space<vmem>>, vector<1x1x256xf32>,
    %c3 = arith.constant 3 : index
    %57 = memref.load %arg5[%c3] : memref<4xf32, #tpu.memory_space<smem>>
    %58 = vector.extract_strided_slice %1 {offsets = [3, 0], sizes = [1, 256], strides = [1, 1]} : vector<4x256xf32> to vector<1x256xf32>
    %59 = vector.shape_cast %58 : vector<1x256xf32> to vector<256xf32>
    %60 = vector.extract_strided_slice %3 {offsets = [3, 0], sizes = [1, 256], strides = [1, 1]} : vector<4x256xf32> to vector<1x256xf32>
    %61 = vector.shape_cast %60 : vector<1x256xf32> to vector<256xf32>
    %62 = arith.subf %59, %61 : vector<256xf32>
    %63 = vector.broadcast %57 : f32 to vector<256xf32>
    %64 = arith.mulf %63, %62 : vector<256xf32>
    %c0_27 = arith.constant 0 : index
    %c3_28 = arith.constant 3 : index
    %c0_29 = arith.constant 0 : index
    %65 = vector.load %arg6[%c0_27, %c3_28, %c0_29] : memref<1x4x256xf32, #tpu.memory_space<vmem>>, vector<1x1x256xf32>
    %66 = vector.shape_cast %65 : vector<1x1x256xf32> to vector<256xf32>
    %67 = vector.shape_cast %64 : vector<256xf32> to vector<1x1x256xf32>
    tpu.vector_store %arg6[%c0_27, %c3_28, %c0_29], %67 {strides = array<i32>} : memref<1x4x256xf32, #tpu.memory_space<vmem>>, vector<1x1x256xf32>,
    %68 = vector.extract_strided_slice %5 {offsets = [3, 0], sizes = [1, 256], strides = [1, 1]} : vector<4x256xf32> to vector<1x256xf32>
    %69 = vector.shape_cast %68 : vector<1x256xf32> to vector<256xf32>
    %70 = arith.subf %69, %64 : vector<256xf32>
    %c0_30 = arith.constant 0 : index
    %c3_31 = arith.constant 3 : index
    %c0_32 = arith.constant 0 : index
    %71 = vector.load %arg7[%c0_30, %c3_31, %c0_32] : memref<1x4x256xf32, #tpu.memory_space<vmem>>, vector<1x1x256xf32>
    %72 = vector.shape_cast %71 : vector<1x1x256xf32> to vector<256xf32>
    %73 = vector.shape_cast %70 : vector<256xf32> to vector<1x1x256xf32>
    tpu.vector_store %arg7[%c0_30, %c3_31, %c0_32], %73 {strides = array<i32>} : memref<1x4x256xf32, #tpu.memory_space<vmem>>, vector<1x1x256xf32>,
    return
  }
  func.func @transform_0(%arg0: i32, %arg1: i32) -> (i32, i32, i32) {
    %c0_i32 = arith.constant 0 : i32
    %c0_i32_0 = arith.constant 0 : i32
    return %arg0, %c0_i32, %arg1 : i32, i32, i32
  }
  func.func @transform_1(%arg0: i32, %arg1: i32) -> (i32, i32, i32) {
    %c0_i32 = arith.constant 0 : i32
    %c0_i32_0 = arith.constant 0 : i32
    return %arg0, %c0_i32, %arg1 : i32, i32, i32
  }
  func.func @transform_2(%arg0: i32, %arg1: i32) -> (i32, i32, i32) {
    %c0_i32 = arith.constant 0 : i32
    %c0_i32_0 = arith.constant 0 : i32
    return %arg0, %c0_i32, %arg1 : i32, i32, i32
  }
  func.func @transform_3(%arg0: i32, %arg1: i32) -> i32 {
    %c0_i32 = arith.constant 0 : i32
    %c0_i32_0 = arith.constant 0 : i32
    return %c0_i32 : i32
  }
  func.func @transform_4(%arg0: i32, %arg1: i32) -> (i32, i32, i32) {
    %c0_i32 = arith.constant 0 : i32
    %c0_i32_0 = arith.constant 0 : i32
    return %arg0, %c0_i32, %arg1 : i32, i32, i32
  }
  func.func @transform_5(%arg0: i32, %arg1: i32) -> (i32, i32, i32) {
    %c0_i32 = arith.constant 0 : i32
    %c0_i32_0 = arith.constant 0 : i32
    return %arg0, %c0_i32, %arg1 : i32, i32, i32
  }
}

module attributes {stable_mosaic.version = 11 : i64} {
  func.func @_grad_fin_kernel(%arg0: i32, %arg1: i32, %arg2: memref<1x4x256xf32, #tpu.memory_space<vmem>>, %arg3: memref<1x4x256xf32, #tpu.memory_space<vmem>>, %arg4: memref<1x4x256xf32, #tpu.memory_space<vmem>>, %arg5: memref<2xf32, #tpu.memory_space<smem>>) attributes {dimension_semantics = [#tpu.dimension_semantics<arbitrary>, #tpu.dimension_semantics<arbitrary>], iteration_bounds = array<i64: 2, 1>, scalar_prefetch = 0 : i64, scratch_operands = 0 : i64, tpu.core_type = #tpu.core_type<tc>, window_params = [{transform_indices = @transform_0, window_bounds = array<i64: 1, 4, 256>}, {transform_indices = @transform_1, window_bounds = array<i64: 1, 4, 256>}, {transform_indices = @transform_2, window_bounds = array<i64: 1, 4, 256>}, {transform_indices = @transform_3, window_bounds = array<i64: 2>}]} {
    %c0 = arith.constant 0 : index
    %c0_0 = arith.constant 0 : index
    %c0_1 = arith.constant 0 : index
    %0 = vector.load %arg2[%c0, %c0_0, %c0_1] : memref<1x4x256xf32, #tpu.memory_space<vmem>>, vector<1x4x256xf32>
    %1 = vector.shape_cast %0 : vector<1x4x256xf32> to vector<4x256xf32>
    %c0_2 = arith.constant 0 : index
    %c0_3 = arith.constant 0 : index
    %c0_4 = arith.constant 0 : index
    %2 = vector.load %arg3[%c0_2, %c0_3, %c0_4] : memref<1x4x256xf32, #tpu.memory_space<vmem>>, vector<1x4x256xf32>
    %3 = vector.shape_cast %2 : vector<1x4x256xf32> to vector<4x256xf32>
    %4 = arith.addf %1, %3 : vector<4x256xf32>
    %c0_5 = arith.constant 0 : index
    %c0_6 = arith.constant 0 : index
    %c0_7 = arith.constant 0 : index
    %5 = vector.load %arg4[%c0_5, %c0_6, %c0_7] : memref<1x4x256xf32, #tpu.memory_space<vmem>>, vector<1x4x256xf32>
    %6 = vector.shape_cast %5 : vector<1x4x256xf32> to vector<4x256xf32>
    %7 = vector.shape_cast %4 : vector<4x256xf32> to vector<1x4x256xf32>
    tpu.vector_store %arg4[%c0_5, %c0_6, %c0_7], %7 {strides = array<i32>} : memref<1x4x256xf32, #tpu.memory_space<vmem>>, vector<1x4x256xf32>,
    %8 = arith.mulf %4, %4 : vector<4x256xf32>
    %9 = vector.shape_cast %8 : vector<4x256xf32> to vector<1x4x256xf32>
    %cst = arith.constant dense<0.000000e+00> : vector<1xf32>
    %10 = vector.multi_reduction <add>, %9, %cst [1, 2] : vector<1x4x256xf32> to vector<1xf32>
    %11 = vector.shape_cast %10 : vector<1xf32> to vector<1x1x1xf32>
    %12 = vector.extract %11[0, 0, 0] : f32 from vector<1x1x1xf32>
    %c0_i32 = arith.constant 0 : i32
    %13 = arith.cmpi eq, %arg1, %c0_i32 : i32
    %14 = arith.extui %13 : i1 to i32
    %c0_i32_8 = arith.constant 0 : i32
    %15 = arith.cmpi ne, %14, %c0_i32_8 : i32
    scf.if %15 {
      %19 = arith.index_cast %arg0 : i32 to index
      %20 = memref.load %arg5[%19] : memref<2xf32, #tpu.memory_space<smem>>
      memref.store %12, %arg5[%19] : memref<2xf32, #tpu.memory_space<smem>>
    } else {
    }
    %c0_i32_9 = arith.constant 0 : i32
    %16 = arith.cmpi sgt, %arg1, %c0_i32_9 : i32
    %17 = arith.extui %16 : i1 to i32
    %c0_i32_10 = arith.constant 0 : i32
    %18 = arith.cmpi ne, %17, %c0_i32_10 : i32
    scf.if %18 {
      %19 = arith.index_cast %arg0 : i32 to index
      %20 = memref.load %arg5[%19] : memref<2xf32, #tpu.memory_space<smem>>
      %21 = arith.addf %20, %12 : f32
      %22 = arith.index_cast %arg0 : i32 to index
      %23 = memref.load %arg5[%22] : memref<2xf32, #tpu.memory_space<smem>>
      memref.store %21, %arg5[%22] : memref<2xf32, #tpu.memory_space<smem>>
    } else {
    }
    return
  }
  func.func @transform_0(%arg0: i32, %arg1: i32) -> (i32, i32, i32) {
    %c0_i32 = arith.constant 0 : i32
    %c0_i32_0 = arith.constant 0 : i32
    return %arg0, %c0_i32, %arg1 : i32, i32, i32
  }
  func.func @transform_1(%arg0: i32, %arg1: i32) -> (i32, i32, i32) {
    %c0_i32 = arith.constant 0 : i32
    %c0_i32_0 = arith.constant 0 : i32
    return %arg0, %c0_i32, %arg1 : i32, i32, i32
  }
  func.func @transform_2(%arg0: i32, %arg1: i32) -> (i32, i32, i32) {
    %c0_i32 = arith.constant 0 : i32
    %c0_i32_0 = arith.constant 0 : i32
    return %arg0, %c0_i32, %arg1 : i32, i32, i32
  }
  func.func @transform_3(%arg0: i32, %arg1: i32) -> i32 {
    %c0_i32 = arith.constant 0 : i32
    %c0_i32_0 = arith.constant 0 : i32
    return %c0_i32 : i32
  }
}

module attributes {stable_mosaic.version = 11 : i64} {
  func.func @_lstm_step_kernel(%arg0: i32, %arg1: i32, %arg2: memref<1x4x256xf32, #tpu.memory_space<vmem>>, %arg3: memref<1x4x256xf32, #tpu.memory_space<vmem>>, %arg4: memref<1x4x256xf32, #tpu.memory_space<vmem>>, %arg5: memref<1x4x256xf32, #tpu.memory_space<vmem>>, %arg6: memref<2xf32, #tpu.memory_space<smem>>, %arg7: memref<8x16xf32, #tpu.memory_space<smem>>, %arg8: memref<16xf32, #tpu.memory_space<smem>>, %arg9: memref<4x4xf32, #tpu.memory_space<smem>>, %arg10: memref<4xf32, #tpu.memory_space<smem>>, %arg11: memref<1x4x256xf32, #tpu.memory_space<vmem>>, %arg12: memref<1x4x256xf32, #tpu.memory_space<vmem>>, %arg13: memref<1x4x256xf32, #tpu.memory_space<vmem>>) attributes {dimension_semantics = [#tpu.dimension_semantics<parallel>, #tpu.dimension_semantics<parallel>], iteration_bounds = array<i64: 2, 1>, scalar_prefetch = 0 : i64, scratch_operands = 0 : i64, tpu.core_type = #tpu.core_type<tc>, window_params = [{transform_indices = @transform_0, window_bounds = array<i64: 1, 4, 256>}, {transform_indices = @transform_1, window_bounds = array<i64: 1, 4, 256>}, {transform_indices = @transform_2, window_bounds = array<i64: 1, 4, 256>}, {transform_indices = @transform_3, window_bounds = array<i64: 1, 4, 256>}, {transform_indices = @transform_4, window_bounds = array<i64: 2>}, {transform_indices = @transform_5, window_bounds = array<i64: 8, 16>}, {transform_indices = @transform_6, window_bounds = array<i64: 16>}, {transform_indices = @transform_7, window_bounds = array<i64: 4, 4>}, {transform_indices = @transform_8, window_bounds = array<i64: 4>}, {transform_indices = @transform_9, window_bounds = array<i64: 1, 4, 256>}, {transform_indices = @transform_10, window_bounds = array<i64: 1, 4, 256>}, {transform_indices = @transform_11, window_bounds = array<i64: 1, 4, 256>}]} {
    %0 = arith.index_cast %arg0 : i32 to index
    %1 = memref.load %arg6[%0] : memref<2xf32, #tpu.memory_space<smem>>
    %c0 = arith.constant 0 : index
    %c0_0 = arith.constant 0 : index
    %c0_1 = arith.constant 0 : index
    %2 = vector.load %arg2[%c0, %c0_0, %c0_1] : memref<1x4x256xf32, #tpu.memory_space<vmem>>, vector<1x4x256xf32>
    %3 = vector.shape_cast %2 : vector<1x4x256xf32> to vector<4x256xf32>
    %c0_2 = arith.constant 0 : index
    %c0_3 = arith.constant 0 : index
    %c0_4 = arith.constant 0 : index
    %4 = vector.load %arg3[%c0_2, %c0_3, %c0_4] : memref<1x4x256xf32, #tpu.memory_space<vmem>>, vector<1x4x256xf32>
    %5 = vector.shape_cast %4 : vector<1x4x256xf32> to vector<4x256xf32>
    %c0_5 = arith.constant 0 : index
    %c0_6 = arith.constant 0 : index
    %c0_7 = arith.constant 0 : index
    %6 = vector.load %arg4[%c0_5, %c0_6, %c0_7] : memref<1x4x256xf32, #tpu.memory_space<vmem>>, vector<1x4x256xf32>
    %7 = vector.shape_cast %6 : vector<1x4x256xf32> to vector<4x256xf32>
    %c0_8 = arith.constant 0 : index
    %c0_9 = arith.constant 0 : index
    %c0_10 = arith.constant 0 : index
    %8 = vector.load %arg5[%c0_8, %c0_9, %c0_10] : memref<1x4x256xf32, #tpu.memory_space<vmem>>, vector<1x4x256xf32>
    %9 = vector.shape_cast %8 : vector<1x4x256xf32> to vector<4x256xf32>
    %10 = vector.extract_strided_slice %5 {offsets = [0, 0], sizes = [1, 256], strides = [1, 1]} : vector<4x256xf32> to vector<1x256xf32>
    %11 = vector.shape_cast %10 : vector<1x256xf32> to vector<256xf32>
    %12 = vector.broadcast %1 : f32 to vector<256xf32>
    %13 = arith.mulf %11, %12 : vector<256xf32>
    %14 = vector.extract_strided_slice %5 {offsets = [1, 0], sizes = [1, 256], strides = [1, 1]} : vector<4x256xf32> to vector<1x256xf32>
    %15 = vector.shape_cast %14 : vector<1x256xf32> to vector<256xf32>
    %16 = vector.broadcast %1 : f32 to vector<256xf32>
    %17 = arith.mulf %15, %16 : vector<256xf32>
    %18 = vector.extract_strided_slice %5 {offsets = [2, 0], sizes = [1, 256], strides = [1, 1]} : vector<4x256xf32> to vector<1x256xf32>
    %19 = vector.shape_cast %18 : vector<1x256xf32> to vector<256xf32>
    %20 = vector.broadcast %1 : f32 to vector<256xf32>
    %21 = arith.mulf %19, %20 : vector<256xf32>
    %22 = vector.extract_strided_slice %5 {offsets = [3, 0], sizes = [1, 256], strides = [1, 1]} : vector<4x256xf32> to vector<1x256xf32>
    %23 = vector.shape_cast %22 : vector<1x256xf32> to vector<256xf32>
    %24 = vector.broadcast %1 : f32 to vector<256xf32>
    %25 = arith.mulf %23, %24 : vector<256xf32>
    %26 = vector.extract_strided_slice %7 {offsets = [0, 0], sizes = [1, 256], strides = [1, 1]} : vector<4x256xf32> to vector<1x256xf32>
    %27 = vector.shape_cast %26 : vector<1x256xf32> to vector<256xf32>
    %28 = vector.extract_strided_slice %7 {offsets = [1, 0], sizes = [1, 256], strides = [1, 1]} : vector<4x256xf32> to vector<1x256xf32>
    %29 = vector.shape_cast %28 : vector<1x256xf32> to vector<256xf32>
    %30 = vector.extract_strided_slice %7 {offsets = [2, 0], sizes = [1, 256], strides = [1, 1]} : vector<4x256xf32> to vector<1x256xf32>
    %31 = vector.shape_cast %30 : vector<1x256xf32> to vector<256xf32>
    %32 = vector.extract_strided_slice %7 {offsets = [3, 0], sizes = [1, 256], strides = [1, 1]} : vector<4x256xf32> to vector<1x256xf32>
    %33 = vector.shape_cast %32 : vector<1x256xf32> to vector<256xf32>
    %c0_11 = arith.constant 0 : index
    %c0_12 = arith.constant 0 : index
    %34 = memref.load %arg7[%c0_11, %c0_12] : memref<8x16xf32, #tpu.memory_space<smem>>
    %35 = vector.broadcast %34 : f32 to vector<256xf32>
    %36 = arith.mulf %35, %13 : vector<256xf32>
    %c1 = arith.constant 1 : index
    %c0_13 = arith.constant 0 : index
    %37 = memref.load %arg7[%c1, %c0_13] : memref<8x16xf32, #tpu.memory_space<smem>>
    %38 = vector.broadcast %37 : f32 to vector<256xf32>
    %39 = arith.mulf %38, %17 : vector<256xf32>
    %40 = arith.addf %36, %39 : vector<256xf32>
    %c2 = arith.constant 2 : index
    %c0_14 = arith.constant 0 : index
    %41 = memref.load %arg7[%c2, %c0_14] : memref<8x16xf32, #tpu.memory_space<smem>>
    %42 = vector.broadcast %41 : f32 to vector<256xf32>
    %43 = arith.mulf %42, %21 : vector<256xf32>
    %44 = arith.addf %40, %43 : vector<256xf32>
    %c3 = arith.constant 3 : index
    %c0_15 = arith.constant 0 : index
    %45 = memref.load %arg7[%c3, %c0_15] : memref<8x16xf32, #tpu.memory_space<smem>>
    %46 = vector.broadcast %45 : f32 to vector<256xf32>
    %47 = arith.mulf %46, %25 : vector<256xf32>
    %48 = arith.addf %44, %47 : vector<256xf32>
    %c4 = arith.constant 4 : index
    %c0_16 = arith.constant 0 : index
    %49 = memref.load %arg7[%c4, %c0_16] : memref<8x16xf32, #tpu.memory_space<smem>>
    %50 = vector.broadcast %49 : f32 to vector<256xf32>
    %51 = arith.mulf %50, %27 : vector<256xf32>
    %52 = arith.addf %48, %51 : vector<256xf32>
    %c5 = arith.constant 5 : index
    %c0_17 = arith.constant 0 : index
    %53 = memref.load %arg7[%c5, %c0_17] : memref<8x16xf32, #tpu.memory_space<smem>>
    %54 = vector.broadcast %53 : f32 to vector<256xf32>
    %55 = arith.mulf %54, %29 : vector<256xf32>
    %56 = arith.addf %52, %55 : vector<256xf32>
    %c6 = arith.constant 6 : index
    %c0_18 = arith.constant 0 : index
    %57 = memref.load %arg7[%c6, %c0_18] : memref<8x16xf32, #tpu.memory_space<smem>>
    %58 = vector.broadcast %57 : f32 to vector<256xf32>
    %59 = arith.mulf %58, %31 : vector<256xf32>
    %60 = arith.addf %56, %59 : vector<256xf32>
    %c7 = arith.constant 7 : index
    %c0_19 = arith.constant 0 : index
    %61 = memref.load %arg7[%c7, %c0_19] : memref<8x16xf32, #tpu.memory_space<smem>>
    %62 = vector.broadcast %61 : f32 to vector<256xf32>
    %63 = arith.mulf %62, %33 : vector<256xf32>
    %64 = arith.addf %60, %63 : vector<256xf32>
    %c0_20 = arith.constant 0 : index
    %65 = memref.load %arg8[%c0_20] : memref<16xf32, #tpu.memory_space<smem>>
    %66 = vector.broadcast %65 : f32 to vector<256xf32>
    %67 = arith.addf %64, %66 : vector<256xf32>
    %68 = arith.negf %67 : vector<256xf32>
    %69 = math.exp %68 : vector<256xf32>
    %cst = arith.constant 1.000000e+00 : f32
    %70 = vector.broadcast %cst : f32 to vector<256xf32>
    %71 = arith.addf %70, %69 : vector<256xf32>
    %72 = arith.divf %70, %71 : vector<256xf32>
    %c0_21 = arith.constant 0 : index
    %c4_22 = arith.constant 4 : index
    %73 = memref.load %arg7[%c0_21, %c4_22] : memref<8x16xf32, #tpu.memory_space<smem>>
    %74 = vector.broadcast %73 : f32 to vector<256xf32>
    %75 = arith.mulf %74, %13 : vector<256xf32>
    %c1_23 = arith.constant 1 : index
    %c4_24 = arith.constant 4 : index
    %76 = memref.load %arg7[%c1_23, %c4_24] : memref<8x16xf32, #tpu.memory_space<smem>>
    %77 = vector.broadcast %76 : f32 to vector<256xf32>
    %78 = arith.mulf %77, %17 : vector<256xf32>
    %79 = arith.addf %75, %78 : vector<256xf32>
    %c2_25 = arith.constant 2 : index
    %c4_26 = arith.constant 4 : index
    %80 = memref.load %arg7[%c2_25, %c4_26] : memref<8x16xf32, #tpu.memory_space<smem>>
    %81 = vector.broadcast %80 : f32 to vector<256xf32>
    %82 = arith.mulf %81, %21 : vector<256xf32>
    %83 = arith.addf %79, %82 : vector<256xf32>
    %c3_27 = arith.constant 3 : index
    %c4_28 = arith.constant 4 : index
    %84 = memref.load %arg7[%c3_27, %c4_28] : memref<8x16xf32, #tpu.memory_space<smem>>
    %85 = vector.broadcast %84 : f32 to vector<256xf32>
    %86 = arith.mulf %85, %25 : vector<256xf32>
    %87 = arith.addf %83, %86 : vector<256xf32>
    %c4_29 = arith.constant 4 : index
    %c4_30 = arith.constant 4 : index
    %88 = memref.load %arg7[%c4_29, %c4_30] : memref<8x16xf32, #tpu.memory_space<smem>>
    %89 = vector.broadcast %88 : f32 to vector<256xf32>
    %90 = arith.mulf %89, %27 : vector<256xf32>
    %91 = arith.addf %87, %90 : vector<256xf32>
    %c5_31 = arith.constant 5 : index
    %c4_32 = arith.constant 4 : index
    %92 = memref.load %arg7[%c5_31, %c4_32] : memref<8x16xf32, #tpu.memory_space<smem>>
    %93 = vector.broadcast %92 : f32 to vector<256xf32>
    %94 = arith.mulf %93, %29 : vector<256xf32>
    %95 = arith.addf %91, %94 : vector<256xf32>
    %c6_33 = arith.constant 6 : index
    %c4_34 = arith.constant 4 : index
    %96 = memref.load %arg7[%c6_33, %c4_34] : memref<8x16xf32, #tpu.memory_space<smem>>
    %97 = vector.broadcast %96 : f32 to vector<256xf32>
    %98 = arith.mulf %97, %31 : vector<256xf32>
    %99 = arith.addf %95, %98 : vector<256xf32>
    %c7_35 = arith.constant 7 : index
    %c4_36 = arith.constant 4 : index
    %100 = memref.load %arg7[%c7_35, %c4_36] : memref<8x16xf32, #tpu.memory_space<smem>>
    %101 = vector.broadcast %100 : f32 to vector<256xf32>
    %102 = arith.mulf %101, %33 : vector<256xf32>
    %103 = arith.addf %99, %102 : vector<256xf32>
    %c4_37 = arith.constant 4 : index
    %104 = memref.load %arg8[%c4_37] : memref<16xf32, #tpu.memory_space<smem>>
    %105 = vector.broadcast %104 : f32 to vector<256xf32>
    %106 = arith.addf %103, %105 : vector<256xf32>
    %107 = arith.negf %106 : vector<256xf32>
    %108 = math.exp %107 : vector<256xf32>
    %cst_38 = arith.constant 1.000000e+00 : f32
    %109 = vector.broadcast %cst_38 : f32 to vector<256xf32>
    %110 = arith.addf %109, %108 : vector<256xf32>
    %111 = arith.divf %109, %110 : vector<256xf32>
    %c0_39 = arith.constant 0 : index
    %c8 = arith.constant 8 : index
    %112 = memref.load %arg7[%c0_39, %c8] : memref<8x16xf32, #tpu.memory_space<smem>>
    %113 = vector.broadcast %112 : f32 to vector<256xf32>
    %114 = arith.mulf %113, %13 : vector<256xf32>
    %c1_40 = arith.constant 1 : index
    %c8_41 = arith.constant 8 : index
    %115 = memref.load %arg7[%c1_40, %c8_41] : memref<8x16xf32, #tpu.memory_space<smem>>
    %116 = vector.broadcast %115 : f32 to vector<256xf32>
    %117 = arith.mulf %116, %17 : vector<256xf32>
    %118 = arith.addf %114, %117 : vector<256xf32>
    %c2_42 = arith.constant 2 : index
    %c8_43 = arith.constant 8 : index
    %119 = memref.load %arg7[%c2_42, %c8_43] : memref<8x16xf32, #tpu.memory_space<smem>>
    %120 = vector.broadcast %119 : f32 to vector<256xf32>
    %121 = arith.mulf %120, %21 : vector<256xf32>
    %122 = arith.addf %118, %121 : vector<256xf32>
    %c3_44 = arith.constant 3 : index
    %c8_45 = arith.constant 8 : index
    %123 = memref.load %arg7[%c3_44, %c8_45] : memref<8x16xf32, #tpu.memory_space<smem>>
    %124 = vector.broadcast %123 : f32 to vector<256xf32>
    %125 = arith.mulf %124, %25 : vector<256xf32>
    %126 = arith.addf %122, %125 : vector<256xf32>
    %c4_46 = arith.constant 4 : index
    %c8_47 = arith.constant 8 : index
    %127 = memref.load %arg7[%c4_46, %c8_47] : memref<8x16xf32, #tpu.memory_space<smem>>
    %128 = vector.broadcast %127 : f32 to vector<256xf32>
    %129 = arith.mulf %128, %27 : vector<256xf32>
    %130 = arith.addf %126, %129 : vector<256xf32>
    %c5_48 = arith.constant 5 : index
    %c8_49 = arith.constant 8 : index
    %131 = memref.load %arg7[%c5_48, %c8_49] : memref<8x16xf32, #tpu.memory_space<smem>>
    %132 = vector.broadcast %131 : f32 to vector<256xf32>
    %133 = arith.mulf %132, %29 : vector<256xf32>
    %134 = arith.addf %130, %133 : vector<256xf32>
    %c6_50 = arith.constant 6 : index
    %c8_51 = arith.constant 8 : index
    %135 = memref.load %arg7[%c6_50, %c8_51] : memref<8x16xf32, #tpu.memory_space<smem>>
    %136 = vector.broadcast %135 : f32 to vector<256xf32>
    %137 = arith.mulf %136, %31 : vector<256xf32>
    %138 = arith.addf %134, %137 : vector<256xf32>
    %c7_52 = arith.constant 7 : index
    %c8_53 = arith.constant 8 : index
    %139 = memref.load %arg7[%c7_52, %c8_53] : memref<8x16xf32, #tpu.memory_space<smem>>
    %140 = vector.broadcast %139 : f32 to vector<256xf32>
    %141 = arith.mulf %140, %33 : vector<256xf32>
    %142 = arith.addf %138, %141 : vector<256xf32>
    %c8_54 = arith.constant 8 : index
    %143 = memref.load %arg8[%c8_54] : memref<16xf32, #tpu.memory_space<smem>>
    %144 = vector.broadcast %143 : f32 to vector<256xf32>
    %145 = arith.addf %142, %144 : vector<256xf32>
    %146 = arith.negf %145 : vector<256xf32>
    %147 = math.exp %146 : vector<256xf32>
    %cst_55 = arith.constant 1.000000e+00 : f32
    %148 = vector.broadcast %cst_55 : f32 to vector<256xf32>
    %149 = arith.addf %148, %147 : vector<256xf32>
    %150 = arith.divf %148, %149 : vector<256xf32>
    %c0_56 = arith.constant 0 : index
    %c12 = arith.constant 12 : index
    %151 = memref.load %arg7[%c0_56, %c12] : memref<8x16xf32, #tpu.memory_space<smem>>
    %152 = vector.broadcast %151 : f32 to vector<256xf32>
    %153 = arith.mulf %152, %13 : vector<256xf32>
    %c1_57 = arith.constant 1 : index
    %c12_58 = arith.constant 12 : index
    %154 = memref.load %arg7[%c1_57, %c12_58] : memref<8x16xf32, #tpu.memory_space<smem>>
    %155 = vector.broadcast %154 : f32 to vector<256xf32>
    %156 = arith.mulf %155, %17 : vector<256xf32>
    %157 = arith.addf %153, %156 : vector<256xf32>
    %c2_59 = arith.constant 2 : index
    %c12_60 = arith.constant 12 : index
    %158 = memref.load %arg7[%c2_59, %c12_60] : memref<8x16xf32, #tpu.memory_space<smem>>
    %159 = vector.broadcast %158 : f32 to vector<256xf32>
    %160 = arith.mulf %159, %21 : vector<256xf32>
    %161 = arith.addf %157, %160 : vector<256xf32>
    %c3_61 = arith.constant 3 : index
    %c12_62 = arith.constant 12 : index
    %162 = memref.load %arg7[%c3_61, %c12_62] : memref<8x16xf32, #tpu.memory_space<smem>>
    %163 = vector.broadcast %162 : f32 to vector<256xf32>
    %164 = arith.mulf %163, %25 : vector<256xf32>
    %165 = arith.addf %161, %164 : vector<256xf32>
    %c4_63 = arith.constant 4 : index
    %c12_64 = arith.constant 12 : index
    %166 = memref.load %arg7[%c4_63, %c12_64] : memref<8x16xf32, #tpu.memory_space<smem>>
    %167 = vector.broadcast %166 : f32 to vector<256xf32>
    %168 = arith.mulf %167, %27 : vector<256xf32>
    %169 = arith.addf %165, %168 : vector<256xf32>
    %c5_65 = arith.constant 5 : index
    %c12_66 = arith.constant 12 : index
    %170 = memref.load %arg7[%c5_65, %c12_66] : memref<8x16xf32, #tpu.memory_space<smem>>
    %171 = vector.broadcast %170 : f32 to vector<256xf32>
    %172 = arith.mulf %171, %29 : vector<256xf32>
    %173 = arith.addf %169, %172 : vector<256xf32>
    %c6_67 = arith.constant 6 : index
    %c12_68 = arith.constant 12 : index
    %174 = memref.load %arg7[%c6_67, %c12_68] : memref<8x16xf32, #tpu.memory_space<smem>>
    %175 = vector.broadcast %174 : f32 to vector<256xf32>
    %176 = arith.mulf %175, %31 : vector<256xf32>
    %177 = arith.addf %173, %176 : vector<256xf32>
    %c7_69 = arith.constant 7 : index
    %c12_70 = arith.constant 12 : index
    %178 = memref.load %arg7[%c7_69, %c12_70] : memref<8x16xf32, #tpu.memory_space<smem>>
    %179 = vector.broadcast %178 : f32 to vector<256xf32>
    %180 = arith.mulf %179, %33 : vector<256xf32>
    %181 = arith.addf %177, %180 : vector<256xf32>
    %c12_71 = arith.constant 12 : index
    %182 = memref.load %arg8[%c12_71] : memref<16xf32, #tpu.memory_space<smem>>
    %183 = vector.broadcast %182 : f32 to vector<256xf32>
    %184 = arith.addf %181, %183 : vector<256xf32>
    %185 = math.tanh %184 : vector<256xf32>
    %186 = vector.extract_strided_slice %9 {offsets = [0, 0], sizes = [1, 256], strides = [1, 1]} : vector<4x256xf32> to vector<1x256xf32>
    %187 = vector.shape_cast %186 : vector<1x256xf32> to vector<256xf32>
    %188 = arith.mulf %111, %187 : vector<256xf32>
    %189 = arith.mulf %72, %185 : vector<256xf32>
    %190 = arith.addf %188, %189 : vector<256xf32>
    %191 = math.tanh %190 : vector<256xf32>
    %192 = arith.mulf %150, %191 : vector<256xf32>
    %c0_72 = arith.constant 0 : index
    %c0_73 = arith.constant 0 : index
    %c0_74 = arith.constant 0 : index
    %193 = vector.load %arg13[%c0_72, %c0_73, %c0_74] : memref<1x4x256xf32, #tpu.memory_space<vmem>>, vector<1x1x256xf32>
    %194 = vector.shape_cast %193 : vector<1x1x256xf32> to vector<256xf32>
    %195 = vector.shape_cast %190 : vector<256xf32> to vector<1x1x256xf32>
    tpu.vector_store %arg13[%c0_72, %c0_73, %c0_74], %195 {strides = array<i32>} : memref<1x4x256xf32, #tpu.memory_space<vmem>>, vector<1x1x256xf32>,
    %c0_75 = arith.constant 0 : index
    %c0_76 = arith.constant 0 : index
    %c0_77 = arith.constant 0 : index
    %196 = vector.load %arg12[%c0_75, %c0_76, %c0_77] : memref<1x4x256xf32, #tpu.memory_space<vmem>>, vector<1x1x256xf32>
    %197 = vector.shape_cast %196 : vector<1x1x256xf32> to vector<256xf32>
    %198 = vector.shape_cast %192 : vector<256xf32> to vector<1x1x256xf32>
    tpu.vector_store %arg12[%c0_75, %c0_76, %c0_77], %198 {strides = array<i32>} : memref<1x4x256xf32, #tpu.memory_space<vmem>>, vector<1x1x256xf32>,
    %c0_78 = arith.constant 0 : index
    %c1_79 = arith.constant 1 : index
    %199 = memref.load %arg7[%c0_78, %c1_79] : memref<8x16xf32, #tpu.memory_space<smem>>
    %200 = vector.broadcast %199 : f32 to vector<256xf32>
    %201 = arith.mulf %200, %13 : vector<256xf32>
    %c1_80 = arith.constant 1 : index
    %c1_81 = arith.constant 1 : index
    %202 = memref.load %arg7[%c1_80, %c1_81] : memref<8x16xf32, #tpu.memory_space<smem>>
    %203 = vector.broadcast %202 : f32 to vector<256xf32>
    %204 = arith.mulf %203, %17 : vector<256xf32>
    %205 = arith.addf %201, %204 : vector<256xf32>
    %c2_82 = arith.constant 2 : index
    %c1_83 = arith.constant 1 : index
    %206 = memref.load %arg7[%c2_82, %c1_83] : memref<8x16xf32, #tpu.memory_space<smem>>
    %207 = vector.broadcast %206 : f32 to vector<256xf32>
    %208 = arith.mulf %207, %21 : vector<256xf32>
    %209 = arith.addf %205, %208 : vector<256xf32>
    %c3_84 = arith.constant 3 : index
    %c1_85 = arith.constant 1 : index
    %210 = memref.load %arg7[%c3_84, %c1_85] : memref<8x16xf32, #tpu.memory_space<smem>>
    %211 = vector.broadcast %210 : f32 to vector<256xf32>
    %212 = arith.mulf %211, %25 : vector<256xf32>
    %213 = arith.addf %209, %212 : vector<256xf32>
    %c4_86 = arith.constant 4 : index
    %c1_87 = arith.constant 1 : index
    %214 = memref.load %arg7[%c4_86, %c1_87] : memref<8x16xf32, #tpu.memory_space<smem>>
    %215 = vector.broadcast %214 : f32 to vector<256xf32>
    %216 = arith.mulf %215, %27 : vector<256xf32>
    %217 = arith.addf %213, %216 : vector<256xf32>
    %c5_88 = arith.constant 5 : index
    %c1_89 = arith.constant 1 : index
    %218 = memref.load %arg7[%c5_88, %c1_89] : memref<8x16xf32, #tpu.memory_space<smem>>
    %219 = vector.broadcast %218 : f32 to vector<256xf32>
    %220 = arith.mulf %219, %29 : vector<256xf32>
    %221 = arith.addf %217, %220 : vector<256xf32>
    %c6_90 = arith.constant 6 : index
    %c1_91 = arith.constant 1 : index
    %222 = memref.load %arg7[%c6_90, %c1_91] : memref<8x16xf32, #tpu.memory_space<smem>>
    %223 = vector.broadcast %222 : f32 to vector<256xf32>
    %224 = arith.mulf %223, %31 : vector<256xf32>
    %225 = arith.addf %221, %224 : vector<256xf32>
    %c7_92 = arith.constant 7 : index
    %c1_93 = arith.constant 1 : index
    %226 = memref.load %arg7[%c7_92, %c1_93] : memref<8x16xf32, #tpu.memory_space<smem>>
    %227 = vector.broadcast %226 : f32 to vector<256xf32>
    %228 = arith.mulf %227, %33 : vector<256xf32>
    %229 = arith.addf %225, %228 : vector<256xf32>
    %c1_94 = arith.constant 1 : index
    %230 = memref.load %arg8[%c1_94] : memref<16xf32, #tpu.memory_space<smem>>
    %231 = vector.broadcast %230 : f32 to vector<256xf32>
    %232 = arith.addf %229, %231 : vector<256xf32>
    %233 = arith.negf %232 : vector<256xf32>
    %234 = math.exp %233 : vector<256xf32>
    %cst_95 = arith.constant 1.000000e+00 : f32
    %235 = vector.broadcast %cst_95 : f32 to vector<256xf32>
    %236 = arith.addf %235, %234 : vector<256xf32>
    %237 = arith.divf %235, %236 : vector<256xf32>
    %c0_96 = arith.constant 0 : index
    %c5_97 = arith.constant 5 : index
    %238 = memref.load %arg7[%c0_96, %c5_97] : memref<8x16xf32, #tpu.memory_space<smem>>
    %239 = vector.broadcast %238 : f32 to vector<256xf32>
    %240 = arith.mulf %239, %13 : vector<256xf32>
    %c1_98 = arith.constant 1 : index
    %c5_99 = arith.constant 5 : index
    %241 = memref.load %arg7[%c1_98, %c5_99] : memref<8x16xf32, #tpu.memory_space<smem>>
    %242 = vector.broadcast %241 : f32 to vector<256xf32>
    %243 = arith.mulf %242, %17 : vector<256xf32>
    %244 = arith.addf %240, %243 : vector<256xf32>
    %c2_100 = arith.constant 2 : index
    %c5_101 = arith.constant 5 : index
    %245 = memref.load %arg7[%c2_100, %c5_101] : memref<8x16xf32, #tpu.memory_space<smem>>
    %246 = vector.broadcast %245 : f32 to vector<256xf32>
    %247 = arith.mulf %246, %21 : vector<256xf32>
    %248 = arith.addf %244, %247 : vector<256xf32>
    %c3_102 = arith.constant 3 : index
    %c5_103 = arith.constant 5 : index
    %249 = memref.load %arg7[%c3_102, %c5_103] : memref<8x16xf32, #tpu.memory_space<smem>>
    %250 = vector.broadcast %249 : f32 to vector<256xf32>
    %251 = arith.mulf %250, %25 : vector<256xf32>
    %252 = arith.addf %248, %251 : vector<256xf32>
    %c4_104 = arith.constant 4 : index
    %c5_105 = arith.constant 5 : index
    %253 = memref.load %arg7[%c4_104, %c5_105] : memref<8x16xf32, #tpu.memory_space<smem>>
    %254 = vector.broadcast %253 : f32 to vector<256xf32>
    %255 = arith.mulf %254, %27 : vector<256xf32>
    %256 = arith.addf %252, %255 : vector<256xf32>
    %c5_106 = arith.constant 5 : index
    %c5_107 = arith.constant 5 : index
    %257 = memref.load %arg7[%c5_106, %c5_107] : memref<8x16xf32, #tpu.memory_space<smem>>
    %258 = vector.broadcast %257 : f32 to vector<256xf32>
    %259 = arith.mulf %258, %29 : vector<256xf32>
    %260 = arith.addf %256, %259 : vector<256xf32>
    %c6_108 = arith.constant 6 : index
    %c5_109 = arith.constant 5 : index
    %261 = memref.load %arg7[%c6_108, %c5_109] : memref<8x16xf32, #tpu.memory_space<smem>>
    %262 = vector.broadcast %261 : f32 to vector<256xf32>
    %263 = arith.mulf %262, %31 : vector<256xf32>
    %264 = arith.addf %260, %263 : vector<256xf32>
    %c7_110 = arith.constant 7 : index
    %c5_111 = arith.constant 5 : index
    %265 = memref.load %arg7[%c7_110, %c5_111] : memref<8x16xf32, #tpu.memory_space<smem>>
    %266 = vector.broadcast %265 : f32 to vector<256xf32>
    %267 = arith.mulf %266, %33 : vector<256xf32>
    %268 = arith.addf %264, %267 : vector<256xf32>
    %c5_112 = arith.constant 5 : index
    %269 = memref.load %arg8[%c5_112] : memref<16xf32, #tpu.memory_space<smem>>
    %270 = vector.broadcast %269 : f32 to vector<256xf32>
    %271 = arith.addf %268, %270 : vector<256xf32>
    %272 = arith.negf %271 : vector<256xf32>
    %273 = math.exp %272 : vector<256xf32>
    %cst_113 = arith.constant 1.000000e+00 : f32
    %274 = vector.broadcast %cst_113 : f32 to vector<256xf32>
    %275 = arith.addf %274, %273 : vector<256xf32>
    %276 = arith.divf %274, %275 : vector<256xf32>
    %c0_114 = arith.constant 0 : index
    %c9 = arith.constant 9 : index
    %277 = memref.load %arg7[%c0_114, %c9] : memref<8x16xf32, #tpu.memory_space<smem>>
    %278 = vector.broadcast %277 : f32 to vector<256xf32>
    %279 = arith.mulf %278, %13 : vector<256xf32>
    %c1_115 = arith.constant 1 : index
    %c9_116 = arith.constant 9 : index
    %280 = memref.load %arg7[%c1_115, %c9_116] : memref<8x16xf32, #tpu.memory_space<smem>>
    %281 = vector.broadcast %280 : f32 to vector<256xf32>
    %282 = arith.mulf %281, %17 : vector<256xf32>
    %283 = arith.addf %279, %282 : vector<256xf32>
    %c2_117 = arith.constant 2 : index
    %c9_118 = arith.constant 9 : index
    %284 = memref.load %arg7[%c2_117, %c9_118] : memref<8x16xf32, #tpu.memory_space<smem>>
    %285 = vector.broadcast %284 : f32 to vector<256xf32>
    %286 = arith.mulf %285, %21 : vector<256xf32>
    %287 = arith.addf %283, %286 : vector<256xf32>
    %c3_119 = arith.constant 3 : index
    %c9_120 = arith.constant 9 : index
    %288 = memref.load %arg7[%c3_119, %c9_120] : memref<8x16xf32, #tpu.memory_space<smem>>
    %289 = vector.broadcast %288 : f32 to vector<256xf32>
    %290 = arith.mulf %289, %25 : vector<256xf32>
    %291 = arith.addf %287, %290 : vector<256xf32>
    %c4_121 = arith.constant 4 : index
    %c9_122 = arith.constant 9 : index
    %292 = memref.load %arg7[%c4_121, %c9_122] : memref<8x16xf32, #tpu.memory_space<smem>>
    %293 = vector.broadcast %292 : f32 to vector<256xf32>
    %294 = arith.mulf %293, %27 : vector<256xf32>
    %295 = arith.addf %291, %294 : vector<256xf32>
    %c5_123 = arith.constant 5 : index
    %c9_124 = arith.constant 9 : index
    %296 = memref.load %arg7[%c5_123, %c9_124] : memref<8x16xf32, #tpu.memory_space<smem>>
    %297 = vector.broadcast %296 : f32 to vector<256xf32>
    %298 = arith.mulf %297, %29 : vector<256xf32>
    %299 = arith.addf %295, %298 : vector<256xf32>
    %c6_125 = arith.constant 6 : index
    %c9_126 = arith.constant 9 : index
    %300 = memref.load %arg7[%c6_125, %c9_126] : memref<8x16xf32, #tpu.memory_space<smem>>
    %301 = vector.broadcast %300 : f32 to vector<256xf32>
    %302 = arith.mulf %301, %31 : vector<256xf32>
    %303 = arith.addf %299, %302 : vector<256xf32>
    %c7_127 = arith.constant 7 : index
    %c9_128 = arith.constant 9 : index
    %304 = memref.load %arg7[%c7_127, %c9_128] : memref<8x16xf32, #tpu.memory_space<smem>>
    %305 = vector.broadcast %304 : f32 to vector<256xf32>
    %306 = arith.mulf %305, %33 : vector<256xf32>
    %307 = arith.addf %303, %306 : vector<256xf32>
    %c9_129 = arith.constant 9 : index
    %308 = memref.load %arg8[%c9_129] : memref<16xf32, #tpu.memory_space<smem>>
    %309 = vector.broadcast %308 : f32 to vector<256xf32>
    %310 = arith.addf %307, %309 : vector<256xf32>
    %311 = arith.negf %310 : vector<256xf32>
    %312 = math.exp %311 : vector<256xf32>
    %cst_130 = arith.constant 1.000000e+00 : f32
    %313 = vector.broadcast %cst_130 : f32 to vector<256xf32>
    %314 = arith.addf %313, %312 : vector<256xf32>
    %315 = arith.divf %313, %314 : vector<256xf32>
    %c0_131 = arith.constant 0 : index
    %c13 = arith.constant 13 : index
    %316 = memref.load %arg7[%c0_131, %c13] : memref<8x16xf32, #tpu.memory_space<smem>>
    %317 = vector.broadcast %316 : f32 to vector<256xf32>
    %318 = arith.mulf %317, %13 : vector<256xf32>
    %c1_132 = arith.constant 1 : index
    %c13_133 = arith.constant 13 : index
    %319 = memref.load %arg7[%c1_132, %c13_133] : memref<8x16xf32, #tpu.memory_space<smem>>
    %320 = vector.broadcast %319 : f32 to vector<256xf32>
    %321 = arith.mulf %320, %17 : vector<256xf32>
    %322 = arith.addf %318, %321 : vector<256xf32>
    %c2_134 = arith.constant 2 : index
    %c13_135 = arith.constant 13 : index
    %323 = memref.load %arg7[%c2_134, %c13_135] : memref<8x16xf32, #tpu.memory_space<smem>>
    %324 = vector.broadcast %323 : f32 to vector<256xf32>
    %325 = arith.mulf %324, %21 : vector<256xf32>
    %326 = arith.addf %322, %325 : vector<256xf32>
    %c3_136 = arith.constant 3 : index
    %c13_137 = arith.constant 13 : index
    %327 = memref.load %arg7[%c3_136, %c13_137] : memref<8x16xf32, #tpu.memory_space<smem>>
    %328 = vector.broadcast %327 : f32 to vector<256xf32>
    %329 = arith.mulf %328, %25 : vector<256xf32>
    %330 = arith.addf %326, %329 : vector<256xf32>
    %c4_138 = arith.constant 4 : index
    %c13_139 = arith.constant 13 : index
    %331 = memref.load %arg7[%c4_138, %c13_139] : memref<8x16xf32, #tpu.memory_space<smem>>
    %332 = vector.broadcast %331 : f32 to vector<256xf32>
    %333 = arith.mulf %332, %27 : vector<256xf32>
    %334 = arith.addf %330, %333 : vector<256xf32>
    %c5_140 = arith.constant 5 : index
    %c13_141 = arith.constant 13 : index
    %335 = memref.load %arg7[%c5_140, %c13_141] : memref<8x16xf32, #tpu.memory_space<smem>>
    %336 = vector.broadcast %335 : f32 to vector<256xf32>
    %337 = arith.mulf %336, %29 : vector<256xf32>
    %338 = arith.addf %334, %337 : vector<256xf32>
    %c6_142 = arith.constant 6 : index
    %c13_143 = arith.constant 13 : index
    %339 = memref.load %arg7[%c6_142, %c13_143] : memref<8x16xf32, #tpu.memory_space<smem>>
    %340 = vector.broadcast %339 : f32 to vector<256xf32>
    %341 = arith.mulf %340, %31 : vector<256xf32>
    %342 = arith.addf %338, %341 : vector<256xf32>
    %c7_144 = arith.constant 7 : index
    %c13_145 = arith.constant 13 : index
    %343 = memref.load %arg7[%c7_144, %c13_145] : memref<8x16xf32, #tpu.memory_space<smem>>
    %344 = vector.broadcast %343 : f32 to vector<256xf32>
    %345 = arith.mulf %344, %33 : vector<256xf32>
    %346 = arith.addf %342, %345 : vector<256xf32>
    %c13_146 = arith.constant 13 : index
    %347 = memref.load %arg8[%c13_146] : memref<16xf32, #tpu.memory_space<smem>>
    %348 = vector.broadcast %347 : f32 to vector<256xf32>
    %349 = arith.addf %346, %348 : vector<256xf32>
    %350 = math.tanh %349 : vector<256xf32>
    %351 = vector.extract_strided_slice %9 {offsets = [1, 0], sizes = [1, 256], strides = [1, 1]} : vector<4x256xf32> to vector<1x256xf32>
    %352 = vector.shape_cast %351 : vector<1x256xf32> to vector<256xf32>
    %353 = arith.mulf %276, %352 : vector<256xf32>
    %354 = arith.mulf %237, %350 : vector<256xf32>
    %355 = arith.addf %353, %354 : vector<256xf32>
    %356 = math.tanh %355 : vector<256xf32>
    %357 = arith.mulf %315, %356 : vector<256xf32>
    %c0_147 = arith.constant 0 : index
    %c1_148 = arith.constant 1 : index
    %c0_149 = arith.constant 0 : index
    %358 = vector.load %arg13[%c0_147, %c1_148, %c0_149] : memref<1x4x256xf32, #tpu.memory_space<vmem>>, vector<1x1x256xf32>
    %359 = vector.shape_cast %358 : vector<1x1x256xf32> to vector<256xf32>
    %360 = vector.shape_cast %355 : vector<256xf32> to vector<1x1x256xf32>
    tpu.vector_store %arg13[%c0_147, %c1_148, %c0_149], %360 {strides = array<i32>} : memref<1x4x256xf32, #tpu.memory_space<vmem>>, vector<1x1x256xf32>,
    %c0_150 = arith.constant 0 : index
    %c1_151 = arith.constant 1 : index
    %c0_152 = arith.constant 0 : index
    %361 = vector.load %arg12[%c0_150, %c1_151, %c0_152] : memref<1x4x256xf32, #tpu.memory_space<vmem>>, vector<1x1x256xf32>
    %362 = vector.shape_cast %361 : vector<1x1x256xf32> to vector<256xf32>
    %363 = vector.shape_cast %357 : vector<256xf32> to vector<1x1x256xf32>
    tpu.vector_store %arg12[%c0_150, %c1_151, %c0_152], %363 {strides = array<i32>} : memref<1x4x256xf32, #tpu.memory_space<vmem>>, vector<1x1x256xf32>,
    %c0_153 = arith.constant 0 : index
    %c2_154 = arith.constant 2 : index
    %364 = memref.load %arg7[%c0_153, %c2_154] : memref<8x16xf32, #tpu.memory_space<smem>>
    %365 = vector.broadcast %364 : f32 to vector<256xf32>
    %366 = arith.mulf %365, %13 : vector<256xf32>
    %c1_155 = arith.constant 1 : index
    %c2_156 = arith.constant 2 : index
    %367 = memref.load %arg7[%c1_155, %c2_156] : memref<8x16xf32, #tpu.memory_space<smem>>
    %368 = vector.broadcast %367 : f32 to vector<256xf32>
    %369 = arith.mulf %368, %17 : vector<256xf32>
    %370 = arith.addf %366, %369 : vector<256xf32>
    %c2_157 = arith.constant 2 : index
    %c2_158 = arith.constant 2 : index
    %371 = memref.load %arg7[%c2_157, %c2_158] : memref<8x16xf32, #tpu.memory_space<smem>>
    %372 = vector.broadcast %371 : f32 to vector<256xf32>
    %373 = arith.mulf %372, %21 : vector<256xf32>
    %374 = arith.addf %370, %373 : vector<256xf32>
    %c3_159 = arith.constant 3 : index
    %c2_160 = arith.constant 2 : index
    %375 = memref.load %arg7[%c3_159, %c2_160] : memref<8x16xf32, #tpu.memory_space<smem>>
    %376 = vector.broadcast %375 : f32 to vector<256xf32>
    %377 = arith.mulf %376, %25 : vector<256xf32>
    %378 = arith.addf %374, %377 : vector<256xf32>
    %c4_161 = arith.constant 4 : index
    %c2_162 = arith.constant 2 : index
    %379 = memref.load %arg7[%c4_161, %c2_162] : memref<8x16xf32, #tpu.memory_space<smem>>
    %380 = vector.broadcast %379 : f32 to vector<256xf32>
    %381 = arith.mulf %380, %27 : vector<256xf32>
    %382 = arith.addf %378, %381 : vector<256xf32>
    %c5_163 = arith.constant 5 : index
    %c2_164 = arith.constant 2 : index
    %383 = memref.load %arg7[%c5_163, %c2_164] : memref<8x16xf32, #tpu.memory_space<smem>>
    %384 = vector.broadcast %383 : f32 to vector<256xf32>
    %385 = arith.mulf %384, %29 : vector<256xf32>
    %386 = arith.addf %382, %385 : vector<256xf32>
    %c6_165 = arith.constant 6 : index
    %c2_166 = arith.constant 2 : index
    %387 = memref.load %arg7[%c6_165, %c2_166] : memref<8x16xf32, #tpu.memory_space<smem>>
    %388 = vector.broadcast %387 : f32 to vector<256xf32>
    %389 = arith.mulf %388, %31 : vector<256xf32>
    %390 = arith.addf %386, %389 : vector<256xf32>
    %c7_167 = arith.constant 7 : index
    %c2_168 = arith.constant 2 : index
    %391 = memref.load %arg7[%c7_167, %c2_168] : memref<8x16xf32, #tpu.memory_space<smem>>
    %392 = vector.broadcast %391 : f32 to vector<256xf32>
    %393 = arith.mulf %392, %33 : vector<256xf32>
    %394 = arith.addf %390, %393 : vector<256xf32>
    %c2_169 = arith.constant 2 : index
    %395 = memref.load %arg8[%c2_169] : memref<16xf32, #tpu.memory_space<smem>>
    %396 = vector.broadcast %395 : f32 to vector<256xf32>
    %397 = arith.addf %394, %396 : vector<256xf32>
    %398 = arith.negf %397 : vector<256xf32>
    %399 = math.exp %398 : vector<256xf32>
    %cst_170 = arith.constant 1.000000e+00 : f32
    %400 = vector.broadcast %cst_170 : f32 to vector<256xf32>
    %401 = arith.addf %400, %399 : vector<256xf32>
    %402 = arith.divf %400, %401 : vector<256xf32>
    %c0_171 = arith.constant 0 : index
    %c6_172 = arith.constant 6 : index
    %403 = memref.load %arg7[%c0_171, %c6_172] : memref<8x16xf32, #tpu.memory_space<smem>>
    %404 = vector.broadcast %403 : f32 to vector<256xf32>
    %405 = arith.mulf %404, %13 : vector<256xf32>
    %c1_173 = arith.constant 1 : index
    %c6_174 = arith.constant 6 : index
    %406 = memref.load %arg7[%c1_173, %c6_174] : memref<8x16xf32, #tpu.memory_space<smem>>
    %407 = vector.broadcast %406 : f32 to vector<256xf32>
    %408 = arith.mulf %407, %17 : vector<256xf32>
    %409 = arith.addf %405, %408 : vector<256xf32>
    %c2_175 = arith.constant 2 : index
    %c6_176 = arith.constant 6 : index
    %410 = memref.load %arg7[%c2_175, %c6_176] : memref<8x16xf32, #tpu.memory_space<smem>>
    %411 = vector.broadcast %410 : f32 to vector<256xf32>
    %412 = arith.mulf %411, %21 : vector<256xf32>
    %413 = arith.addf %409, %412 : vector<256xf32>
    %c3_177 = arith.constant 3 : index
    %c6_178 = arith.constant 6 : index
    %414 = memref.load %arg7[%c3_177, %c6_178] : memref<8x16xf32, #tpu.memory_space<smem>>
    %415 = vector.broadcast %414 : f32 to vector<256xf32>
    %416 = arith.mulf %415, %25 : vector<256xf32>
    %417 = arith.addf %413, %416 : vector<256xf32>
    %c4_179 = arith.constant 4 : index
    %c6_180 = arith.constant 6 : index
    %418 = memref.load %arg7[%c4_179, %c6_180] : memref<8x16xf32, #tpu.memory_space<smem>>
    %419 = vector.broadcast %418 : f32 to vector<256xf32>
    %420 = arith.mulf %419, %27 : vector<256xf32>
    %421 = arith.addf %417, %420 : vector<256xf32>
    %c5_181 = arith.constant 5 : index
    %c6_182 = arith.constant 6 : index
    %422 = memref.load %arg7[%c5_181, %c6_182] : memref<8x16xf32, #tpu.memory_space<smem>>
    %423 = vector.broadcast %422 : f32 to vector<256xf32>
    %424 = arith.mulf %423, %29 : vector<256xf32>
    %425 = arith.addf %421, %424 : vector<256xf32>
    %c6_183 = arith.constant 6 : index
    %c6_184 = arith.constant 6 : index
    %426 = memref.load %arg7[%c6_183, %c6_184] : memref<8x16xf32, #tpu.memory_space<smem>>
    %427 = vector.broadcast %426 : f32 to vector<256xf32>
    %428 = arith.mulf %427, %31 : vector<256xf32>
    %429 = arith.addf %425, %428 : vector<256xf32>
    %c7_185 = arith.constant 7 : index
    %c6_186 = arith.constant 6 : index
    %430 = memref.load %arg7[%c7_185, %c6_186] : memref<8x16xf32, #tpu.memory_space<smem>>
    %431 = vector.broadcast %430 : f32 to vector<256xf32>
    %432 = arith.mulf %431, %33 : vector<256xf32>
    %433 = arith.addf %429, %432 : vector<256xf32>
    %c6_187 = arith.constant 6 : index
    %434 = memref.load %arg8[%c6_187] : memref<16xf32, #tpu.memory_space<smem>>
    %435 = vector.broadcast %434 : f32 to vector<256xf32>
    %436 = arith.addf %433, %435 : vector<256xf32>
    %437 = arith.negf %436 : vector<256xf32>
    %438 = math.exp %437 : vector<256xf32>
    %cst_188 = arith.constant 1.000000e+00 : f32
    %439 = vector.broadcast %cst_188 : f32 to vector<256xf32>
    %440 = arith.addf %439, %438 : vector<256xf32>
    %441 = arith.divf %439, %440 : vector<256xf32>
    %c0_189 = arith.constant 0 : index
    %c10 = arith.constant 10 : index
    %442 = memref.load %arg7[%c0_189, %c10] : memref<8x16xf32, #tpu.memory_space<smem>>
    %443 = vector.broadcast %442 : f32 to vector<256xf32>
    %444 = arith.mulf %443, %13 : vector<256xf32>
    %c1_190 = arith.constant 1 : index
    %c10_191 = arith.constant 10 : index
    %445 = memref.load %arg7[%c1_190, %c10_191] : memref<8x16xf32, #tpu.memory_space<smem>>
    %446 = vector.broadcast %445 : f32 to vector<256xf32>
    %447 = arith.mulf %446, %17 : vector<256xf32>
    %448 = arith.addf %444, %447 : vector<256xf32>
    %c2_192 = arith.constant 2 : index
    %c10_193 = arith.constant 10 : index
    %449 = memref.load %arg7[%c2_192, %c10_193] : memref<8x16xf32, #tpu.memory_space<smem>>
    %450 = vector.broadcast %449 : f32 to vector<256xf32>
    %451 = arith.mulf %450, %21 : vector<256xf32>
    %452 = arith.addf %448, %451 : vector<256xf32>
    %c3_194 = arith.constant 3 : index
    %c10_195 = arith.constant 10 : index
    %453 = memref.load %arg7[%c3_194, %c10_195] : memref<8x16xf32, #tpu.memory_space<smem>>
    %454 = vector.broadcast %453 : f32 to vector<256xf32>
    %455 = arith.mulf %454, %25 : vector<256xf32>
    %456 = arith.addf %452, %455 : vector<256xf32>
    %c4_196 = arith.constant 4 : index
    %c10_197 = arith.constant 10 : index
    %457 = memref.load %arg7[%c4_196, %c10_197] : memref<8x16xf32, #tpu.memory_space<smem>>
    %458 = vector.broadcast %457 : f32 to vector<256xf32>
    %459 = arith.mulf %458, %27 : vector<256xf32>
    %460 = arith.addf %456, %459 : vector<256xf32>
    %c5_198 = arith.constant 5 : index
    %c10_199 = arith.constant 10 : index
    %461 = memref.load %arg7[%c5_198, %c10_199] : memref<8x16xf32, #tpu.memory_space<smem>>
    %462 = vector.broadcast %461 : f32 to vector<256xf32>
    %463 = arith.mulf %462, %29 : vector<256xf32>
    %464 = arith.addf %460, %463 : vector<256xf32>
    %c6_200 = arith.constant 6 : index
    %c10_201 = arith.constant 10 : index
    %465 = memref.load %arg7[%c6_200, %c10_201] : memref<8x16xf32, #tpu.memory_space<smem>>
    %466 = vector.broadcast %465 : f32 to vector<256xf32>
    %467 = arith.mulf %466, %31 : vector<256xf32>
    %468 = arith.addf %464, %467 : vector<256xf32>
    %c7_202 = arith.constant 7 : index
    %c10_203 = arith.constant 10 : index
    %469 = memref.load %arg7[%c7_202, %c10_203] : memref<8x16xf32, #tpu.memory_space<smem>>
    %470 = vector.broadcast %469 : f32 to vector<256xf32>
    %471 = arith.mulf %470, %33 : vector<256xf32>
    %472 = arith.addf %468, %471 : vector<256xf32>
    %c10_204 = arith.constant 10 : index
    %473 = memref.load %arg8[%c10_204] : memref<16xf32, #tpu.memory_space<smem>>
    %474 = vector.broadcast %473 : f32 to vector<256xf32>
    %475 = arith.addf %472, %474 : vector<256xf32>
    %476 = arith.negf %475 : vector<256xf32>
    %477 = math.exp %476 : vector<256xf32>
    %cst_205 = arith.constant 1.000000e+00 : f32
    %478 = vector.broadcast %cst_205 : f32 to vector<256xf32>
    %479 = arith.addf %478, %477 : vector<256xf32>
    %480 = arith.divf %478, %479 : vector<256xf32>
    %c0_206 = arith.constant 0 : index
    %c14 = arith.constant 14 : index
    %481 = memref.load %arg7[%c0_206, %c14] : memref<8x16xf32, #tpu.memory_space<smem>>
    %482 = vector.broadcast %481 : f32 to vector<256xf32>
    %483 = arith.mulf %482, %13 : vector<256xf32>
    %c1_207 = arith.constant 1 : index
    %c14_208 = arith.constant 14 : index
    %484 = memref.load %arg7[%c1_207, %c14_208] : memref<8x16xf32, #tpu.memory_space<smem>>
    %485 = vector.broadcast %484 : f32 to vector<256xf32>
    %486 = arith.mulf %485, %17 : vector<256xf32>
    %487 = arith.addf %483, %486 : vector<256xf32>
    %c2_209 = arith.constant 2 : index
    %c14_210 = arith.constant 14 : index
    %488 = memref.load %arg7[%c2_209, %c14_210] : memref<8x16xf32, #tpu.memory_space<smem>>
    %489 = vector.broadcast %488 : f32 to vector<256xf32>
    %490 = arith.mulf %489, %21 : vector<256xf32>
    %491 = arith.addf %487, %490 : vector<256xf32>
    %c3_211 = arith.constant 3 : index
    %c14_212 = arith.constant 14 : index
    %492 = memref.load %arg7[%c3_211, %c14_212] : memref<8x16xf32, #tpu.memory_space<smem>>
    %493 = vector.broadcast %492 : f32 to vector<256xf32>
    %494 = arith.mulf %493, %25 : vector<256xf32>
    %495 = arith.addf %491, %494 : vector<256xf32>
    %c4_213 = arith.constant 4 : index
    %c14_214 = arith.constant 14 : index
    %496 = memref.load %arg7[%c4_213, %c14_214] : memref<8x16xf32, #tpu.memory_space<smem>>
    %497 = vector.broadcast %496 : f32 to vector<256xf32>
    %498 = arith.mulf %497, %27 : vector<256xf32>
    %499 = arith.addf %495, %498 : vector<256xf32>
    %c5_215 = arith.constant 5 : index
    %c14_216 = arith.constant 14 : index
    %500 = memref.load %arg7[%c5_215, %c14_216] : memref<8x16xf32, #tpu.memory_space<smem>>
    %501 = vector.broadcast %500 : f32 to vector<256xf32>
    %502 = arith.mulf %501, %29 : vector<256xf32>
    %503 = arith.addf %499, %502 : vector<256xf32>
    %c6_217 = arith.constant 6 : index
    %c14_218 = arith.constant 14 : index
    %504 = memref.load %arg7[%c6_217, %c14_218] : memref<8x16xf32, #tpu.memory_space<smem>>
    %505 = vector.broadcast %504 : f32 to vector<256xf32>
    %506 = arith.mulf %505, %31 : vector<256xf32>
    %507 = arith.addf %503, %506 : vector<256xf32>
    %c7_219 = arith.constant 7 : index
    %c14_220 = arith.constant 14 : index
    %508 = memref.load %arg7[%c7_219, %c14_220] : memref<8x16xf32, #tpu.memory_space<smem>>
    %509 = vector.broadcast %508 : f32 to vector<256xf32>
    %510 = arith.mulf %509, %33 : vector<256xf32>
    %511 = arith.addf %507, %510 : vector<256xf32>
    %c14_221 = arith.constant 14 : index
    %512 = memref.load %arg8[%c14_221] : memref<16xf32, #tpu.memory_space<smem>>
    %513 = vector.broadcast %512 : f32 to vector<256xf32>
    %514 = arith.addf %511, %513 : vector<256xf32>
    %515 = math.tanh %514 : vector<256xf32>
    %516 = vector.extract_strided_slice %9 {offsets = [2, 0], sizes = [1, 256], strides = [1, 1]} : vector<4x256xf32> to vector<1x256xf32>
    %517 = vector.shape_cast %516 : vector<1x256xf32> to vector<256xf32>
    %518 = arith.mulf %441, %517 : vector<256xf32>
    %519 = arith.mulf %402, %515 : vector<256xf32>
    %520 = arith.addf %518, %519 : vector<256xf32>
    %521 = math.tanh %520 : vector<256xf32>
    %522 = arith.mulf %480, %521 : vector<256xf32>
    %c0_222 = arith.constant 0 : index
    %c2_223 = arith.constant 2 : index
    %c0_224 = arith.constant 0 : index
    %523 = vector.load %arg13[%c0_222, %c2_223, %c0_224] : memref<1x4x256xf32, #tpu.memory_space<vmem>>, vector<1x1x256xf32>
    %524 = vector.shape_cast %523 : vector<1x1x256xf32> to vector<256xf32>
    %525 = vector.shape_cast %520 : vector<256xf32> to vector<1x1x256xf32>
    tpu.vector_store %arg13[%c0_222, %c2_223, %c0_224], %525 {strides = array<i32>} : memref<1x4x256xf32, #tpu.memory_space<vmem>>, vector<1x1x256xf32>,
    %c0_225 = arith.constant 0 : index
    %c2_226 = arith.constant 2 : index
    %c0_227 = arith.constant 0 : index
    %526 = vector.load %arg12[%c0_225, %c2_226, %c0_227] : memref<1x4x256xf32, #tpu.memory_space<vmem>>, vector<1x1x256xf32>
    %527 = vector.shape_cast %526 : vector<1x1x256xf32> to vector<256xf32>
    %528 = vector.shape_cast %522 : vector<256xf32> to vector<1x1x256xf32>
    tpu.vector_store %arg12[%c0_225, %c2_226, %c0_227], %528 {strides = array<i32>} : memref<1x4x256xf32, #tpu.memory_space<vmem>>, vector<1x1x256xf32>,
    %c0_228 = arith.constant 0 : index
    %c3_229 = arith.constant 3 : index
    %529 = memref.load %arg7[%c0_228, %c3_229] : memref<8x16xf32, #tpu.memory_space<smem>>
    %530 = vector.broadcast %529 : f32 to vector<256xf32>
    %531 = arith.mulf %530, %13 : vector<256xf32>
    %c1_230 = arith.constant 1 : index
    %c3_231 = arith.constant 3 : index
    %532 = memref.load %arg7[%c1_230, %c3_231] : memref<8x16xf32, #tpu.memory_space<smem>>
    %533 = vector.broadcast %532 : f32 to vector<256xf32>
    %534 = arith.mulf %533, %17 : vector<256xf32>
    %535 = arith.addf %531, %534 : vector<256xf32>
    %c2_232 = arith.constant 2 : index
    %c3_233 = arith.constant 3 : index
    %536 = memref.load %arg7[%c2_232, %c3_233] : memref<8x16xf32, #tpu.memory_space<smem>>
    %537 = vector.broadcast %536 : f32 to vector<256xf32>
    %538 = arith.mulf %537, %21 : vector<256xf32>
    %539 = arith.addf %535, %538 : vector<256xf32>
    %c3_234 = arith.constant 3 : index
    %c3_235 = arith.constant 3 : index
    %540 = memref.load %arg7[%c3_234, %c3_235] : memref<8x16xf32, #tpu.memory_space<smem>>
    %541 = vector.broadcast %540 : f32 to vector<256xf32>
    %542 = arith.mulf %541, %25 : vector<256xf32>
    %543 = arith.addf %539, %542 : vector<256xf32>
    %c4_236 = arith.constant 4 : index
    %c3_237 = arith.constant 3 : index
    %544 = memref.load %arg7[%c4_236, %c3_237] : memref<8x16xf32, #tpu.memory_space<smem>>
    %545 = vector.broadcast %544 : f32 to vector<256xf32>
    %546 = arith.mulf %545, %27 : vector<256xf32>
    %547 = arith.addf %543, %546 : vector<256xf32>
    %c5_238 = arith.constant 5 : index
    %c3_239 = arith.constant 3 : index
    %548 = memref.load %arg7[%c5_238, %c3_239] : memref<8x16xf32, #tpu.memory_space<smem>>
    %549 = vector.broadcast %548 : f32 to vector<256xf32>
    %550 = arith.mulf %549, %29 : vector<256xf32>
    %551 = arith.addf %547, %550 : vector<256xf32>
    %c6_240 = arith.constant 6 : index
    %c3_241 = arith.constant 3 : index
    %552 = memref.load %arg7[%c6_240, %c3_241] : memref<8x16xf32, #tpu.memory_space<smem>>
    %553 = vector.broadcast %552 : f32 to vector<256xf32>
    %554 = arith.mulf %553, %31 : vector<256xf32>
    %555 = arith.addf %551, %554 : vector<256xf32>
    %c7_242 = arith.constant 7 : index
    %c3_243 = arith.constant 3 : index
    %556 = memref.load %arg7[%c7_242, %c3_243] : memref<8x16xf32, #tpu.memory_space<smem>>
    %557 = vector.broadcast %556 : f32 to vector<256xf32>
    %558 = arith.mulf %557, %33 : vector<256xf32>
    %559 = arith.addf %555, %558 : vector<256xf32>
    %c3_244 = arith.constant 3 : index
    %560 = memref.load %arg8[%c3_244] : memref<16xf32, #tpu.memory_space<smem>>
    %561 = vector.broadcast %560 : f32 to vector<256xf32>
    %562 = arith.addf %559, %561 : vector<256xf32>
    %563 = arith.negf %562 : vector<256xf32>
    %564 = math.exp %563 : vector<256xf32>
    %cst_245 = arith.constant 1.000000e+00 : f32
    %565 = vector.broadcast %cst_245 : f32 to vector<256xf32>
    %566 = arith.addf %565, %564 : vector<256xf32>
    %567 = arith.divf %565, %566 : vector<256xf32>
    %c0_246 = arith.constant 0 : index
    %c7_247 = arith.constant 7 : index
    %568 = memref.load %arg7[%c0_246, %c7_247] : memref<8x16xf32, #tpu.memory_space<smem>>
    %569 = vector.broadcast %568 : f32 to vector<256xf32>
    %570 = arith.mulf %569, %13 : vector<256xf32>
    %c1_248 = arith.constant 1 : index
    %c7_249 = arith.constant 7 : index
    %571 = memref.load %arg7[%c1_248, %c7_249] : memref<8x16xf32, #tpu.memory_space<smem>>
    %572 = vector.broadcast %571 : f32 to vector<256xf32>
    %573 = arith.mulf %572, %17 : vector<256xf32>
    %574 = arith.addf %570, %573 : vector<256xf32>
    %c2_250 = arith.constant 2 : index
    %c7_251 = arith.constant 7 : index
    %575 = memref.load %arg7[%c2_250, %c7_251] : memref<8x16xf32, #tpu.memory_space<smem>>
    %576 = vector.broadcast %575 : f32 to vector<256xf32>
    %577 = arith.mulf %576, %21 : vector<256xf32>
    %578 = arith.addf %574, %577 : vector<256xf32>
    %c3_252 = arith.constant 3 : index
    %c7_253 = arith.constant 7 : index
    %579 = memref.load %arg7[%c3_252, %c7_253] : memref<8x16xf32, #tpu.memory_space<smem>>
    %580 = vector.broadcast %579 : f32 to vector<256xf32>
    %581 = arith.mulf %580, %25 : vector<256xf32>
    %582 = arith.addf %578, %581 : vector<256xf32>
    %c4_254 = arith.constant 4 : index
    %c7_255 = arith.constant 7 : index
    %583 = memref.load %arg7[%c4_254, %c7_255] : memref<8x16xf32, #tpu.memory_space<smem>>
    %584 = vector.broadcast %583 : f32 to vector<256xf32>
    %585 = arith.mulf %584, %27 : vector<256xf32>
    %586 = arith.addf %582, %585 : vector<256xf32>
    %c5_256 = arith.constant 5 : index
    %c7_257 = arith.constant 7 : index
    %587 = memref.load %arg7[%c5_256, %c7_257] : memref<8x16xf32, #tpu.memory_space<smem>>
    %588 = vector.broadcast %587 : f32 to vector<256xf32>
    %589 = arith.mulf %588, %29 : vector<256xf32>
    %590 = arith.addf %586, %589 : vector<256xf32>
    %c6_258 = arith.constant 6 : index
    %c7_259 = arith.constant 7 : index
    %591 = memref.load %arg7[%c6_258, %c7_259] : memref<8x16xf32, #tpu.memory_space<smem>>
    %592 = vector.broadcast %591 : f32 to vector<256xf32>
    %593 = arith.mulf %592, %31 : vector<256xf32>
    %594 = arith.addf %590, %593 : vector<256xf32>
    %c7_260 = arith.constant 7 : index
    %c7_261 = arith.constant 7 : index
    %595 = memref.load %arg7[%c7_260, %c7_261] : memref<8x16xf32, #tpu.memory_space<smem>>
    %596 = vector.broadcast %595 : f32 to vector<256xf32>
    %597 = arith.mulf %596, %33 : vector<256xf32>
    %598 = arith.addf %594, %597 : vector<256xf32>
    %c7_262 = arith.constant 7 : index
    %599 = memref.load %arg8[%c7_262] : memref<16xf32, #tpu.memory_space<smem>>
    %600 = vector.broadcast %599 : f32 to vector<256xf32>
    %601 = arith.addf %598, %600 : vector<256xf32>
    %602 = arith.negf %601 : vector<256xf32>
    %603 = math.exp %602 : vector<256xf32>
    %cst_263 = arith.constant 1.000000e+00 : f32
    %604 = vector.broadcast %cst_263 : f32 to vector<256xf32>
    %605 = arith.addf %604, %603 : vector<256xf32>
    %606 = arith.divf %604, %605 : vector<256xf32>
    %c0_264 = arith.constant 0 : index
    %c11 = arith.constant 11 : index
    %607 = memref.load %arg7[%c0_264, %c11] : memref<8x16xf32, #tpu.memory_space<smem>>
    %608 = vector.broadcast %607 : f32 to vector<256xf32>
    %609 = arith.mulf %608, %13 : vector<256xf32>
    %c1_265 = arith.constant 1 : index
    %c11_266 = arith.constant 11 : index
    %610 = memref.load %arg7[%c1_265, %c11_266] : memref<8x16xf32, #tpu.memory_space<smem>>
    %611 = vector.broadcast %610 : f32 to vector<256xf32>
    %612 = arith.mulf %611, %17 : vector<256xf32>
    %613 = arith.addf %609, %612 : vector<256xf32>
    %c2_267 = arith.constant 2 : index
    %c11_268 = arith.constant 11 : index
    %614 = memref.load %arg7[%c2_267, %c11_268] : memref<8x16xf32, #tpu.memory_space<smem>>
    %615 = vector.broadcast %614 : f32 to vector<256xf32>
    %616 = arith.mulf %615, %21 : vector<256xf32>
    %617 = arith.addf %613, %616 : vector<256xf32>
    %c3_269 = arith.constant 3 : index
    %c11_270 = arith.constant 11 : index
    %618 = memref.load %arg7[%c3_269, %c11_270] : memref<8x16xf32, #tpu.memory_space<smem>>
    %619 = vector.broadcast %618 : f32 to vector<256xf32>
    %620 = arith.mulf %619, %25 : vector<256xf32>
    %621 = arith.addf %617, %620 : vector<256xf32>
    %c4_271 = arith.constant 4 : index
    %c11_272 = arith.constant 11 : index
    %622 = memref.load %arg7[%c4_271, %c11_272] : memref<8x16xf32, #tpu.memory_space<smem>>
    %623 = vector.broadcast %622 : f32 to vector<256xf32>
    %624 = arith.mulf %623, %27 : vector<256xf32>
    %625 = arith.addf %621, %624 : vector<256xf32>
    %c5_273 = arith.constant 5 : index
    %c11_274 = arith.constant 11 : index
    %626 = memref.load %arg7[%c5_273, %c11_274] : memref<8x16xf32, #tpu.memory_space<smem>>
    %627 = vector.broadcast %626 : f32 to vector<256xf32>
    %628 = arith.mulf %627, %29 : vector<256xf32>
    %629 = arith.addf %625, %628 : vector<256xf32>
    %c6_275 = arith.constant 6 : index
    %c11_276 = arith.constant 11 : index
    %630 = memref.load %arg7[%c6_275, %c11_276] : memref<8x16xf32, #tpu.memory_space<smem>>
    %631 = vector.broadcast %630 : f32 to vector<256xf32>
    %632 = arith.mulf %631, %31 : vector<256xf32>
    %633 = arith.addf %629, %632 : vector<256xf32>
    %c7_277 = arith.constant 7 : index
    %c11_278 = arith.constant 11 : index
    %634 = memref.load %arg7[%c7_277, %c11_278] : memref<8x16xf32, #tpu.memory_space<smem>>
    %635 = vector.broadcast %634 : f32 to vector<256xf32>
    %636 = arith.mulf %635, %33 : vector<256xf32>
    %637 = arith.addf %633, %636 : vector<256xf32>
    %c11_279 = arith.constant 11 : index
    %638 = memref.load %arg8[%c11_279] : memref<16xf32, #tpu.memory_space<smem>>
    %639 = vector.broadcast %638 : f32 to vector<256xf32>
    %640 = arith.addf %637, %639 : vector<256xf32>
    %641 = arith.negf %640 : vector<256xf32>
    %642 = math.exp %641 : vector<256xf32>
    %cst_280 = arith.constant 1.000000e+00 : f32
    %643 = vector.broadcast %cst_280 : f32 to vector<256xf32>
    %644 = arith.addf %643, %642 : vector<256xf32>
    %645 = arith.divf %643, %644 : vector<256xf32>
    %c0_281 = arith.constant 0 : index
    %c15 = arith.constant 15 : index
    %646 = memref.load %arg7[%c0_281, %c15] : memref<8x16xf32, #tpu.memory_space<smem>>
    %647 = vector.broadcast %646 : f32 to vector<256xf32>
    %648 = arith.mulf %647, %13 : vector<256xf32>
    %c1_282 = arith.constant 1 : index
    %c15_283 = arith.constant 15 : index
    %649 = memref.load %arg7[%c1_282, %c15_283] : memref<8x16xf32, #tpu.memory_space<smem>>
    %650 = vector.broadcast %649 : f32 to vector<256xf32>
    %651 = arith.mulf %650, %17 : vector<256xf32>
    %652 = arith.addf %648, %651 : vector<256xf32>
    %c2_284 = arith.constant 2 : index
    %c15_285 = arith.constant 15 : index
    %653 = memref.load %arg7[%c2_284, %c15_285] : memref<8x16xf32, #tpu.memory_space<smem>>
    %654 = vector.broadcast %653 : f32 to vector<256xf32>
    %655 = arith.mulf %654, %21 : vector<256xf32>
    %656 = arith.addf %652, %655 : vector<256xf32>
    %c3_286 = arith.constant 3 : index
    %c15_287 = arith.constant 15 : index
    %657 = memref.load %arg7[%c3_286, %c15_287] : memref<8x16xf32, #tpu.memory_space<smem>>
    %658 = vector.broadcast %657 : f32 to vector<256xf32>
    %659 = arith.mulf %658, %25 : vector<256xf32>
    %660 = arith.addf %656, %659 : vector<256xf32>
    %c4_288 = arith.constant 4 : index
    %c15_289 = arith.constant 15 : index
    %661 = memref.load %arg7[%c4_288, %c15_289] : memref<8x16xf32, #tpu.memory_space<smem>>
    %662 = vector.broadcast %661 : f32 to vector<256xf32>
    %663 = arith.mulf %662, %27 : vector<256xf32>
    %664 = arith.addf %660, %663 : vector<256xf32>
    %c5_290 = arith.constant 5 : index
    %c15_291 = arith.constant 15 : index
    %665 = memref.load %arg7[%c5_290, %c15_291] : memref<8x16xf32, #tpu.memory_space<smem>>
    %666 = vector.broadcast %665 : f32 to vector<256xf32>
    %667 = arith.mulf %666, %29 : vector<256xf32>
    %668 = arith.addf %664, %667 : vector<256xf32>
    %c6_292 = arith.constant 6 : index
    %c15_293 = arith.constant 15 : index
    %669 = memref.load %arg7[%c6_292, %c15_293] : memref<8x16xf32, #tpu.memory_space<smem>>
    %670 = vector.broadcast %669 : f32 to vector<256xf32>
    %671 = arith.mulf %670, %31 : vector<256xf32>
    %672 = arith.addf %668, %671 : vector<256xf32>
    %c7_294 = arith.constant 7 : index
    %c15_295 = arith.constant 15 : index
    %673 = memref.load %arg7[%c7_294, %c15_295] : memref<8x16xf32, #tpu.memory_space<smem>>
    %674 = vector.broadcast %673 : f32 to vector<256xf32>
    %675 = arith.mulf %674, %33 : vector<256xf32>
    %676 = arith.addf %672, %675 : vector<256xf32>
    %c15_296 = arith.constant 15 : index
    %677 = memref.load %arg8[%c15_296] : memref<16xf32, #tpu.memory_space<smem>>
    %678 = vector.broadcast %677 : f32 to vector<256xf32>
    %679 = arith.addf %676, %678 : vector<256xf32>
    %680 = math.tanh %679 : vector<256xf32>
    %681 = vector.extract_strided_slice %9 {offsets = [3, 0], sizes = [1, 256], strides = [1, 1]} : vector<4x256xf32> to vector<1x256xf32>
    %682 = vector.shape_cast %681 : vector<1x256xf32> to vector<256xf32>
    %683 = arith.mulf %606, %682 : vector<256xf32>
    %684 = arith.mulf %567, %680 : vector<256xf32>
    %685 = arith.addf %683, %684 : vector<256xf32>
    %686 = math.tanh %685 : vector<256xf32>
    %687 = arith.mulf %645, %686 : vector<256xf32>
    %c0_297 = arith.constant 0 : index
    %c3_298 = arith.constant 3 : index
    %c0_299 = arith.constant 0 : index
    %688 = vector.load %arg13[%c0_297, %c3_298, %c0_299] : memref<1x4x256xf32, #tpu.memory_space<vmem>>, vector<1x1x256xf32>
    %689 = vector.shape_cast %688 : vector<1x1x256xf32> to vector<256xf32>
    %690 = vector.shape_cast %685 : vector<256xf32> to vector<1x1x256xf32>
    tpu.vector_store %arg13[%c0_297, %c3_298, %c0_299], %690 {strides = array<i32>} : memref<1x4x256xf32, #tpu.memory_space<vmem>>, vector<1x1x256xf32>,
    %c0_300 = arith.constant 0 : index
    %c3_301 = arith.constant 3 : index
    %c0_302 = arith.constant 0 : index
    %691 = vector.load %arg12[%c0_300, %c3_301, %c0_302] : memref<1x4x256xf32, #tpu.memory_space<vmem>>, vector<1x1x256xf32>
    %692 = vector.shape_cast %691 : vector<1x1x256xf32> to vector<256xf32>
    %693 = vector.shape_cast %687 : vector<256xf32> to vector<1x1x256xf32>
    tpu.vector_store %arg12[%c0_300, %c3_301, %c0_302], %693 {strides = array<i32>} : memref<1x4x256xf32, #tpu.memory_space<vmem>>, vector<1x1x256xf32>,
    %c0_303 = arith.constant 0 : index
    %c0_304 = arith.constant 0 : index
    %694 = memref.load %arg9[%c0_303, %c0_304] : memref<4x4xf32, #tpu.memory_space<smem>>
    %695 = vector.broadcast %694 : f32 to vector<256xf32>
    %696 = arith.mulf %695, %192 : vector<256xf32>
    %c1_305 = arith.constant 1 : index
    %c0_306 = arith.constant 0 : index
    %697 = memref.load %arg9[%c1_305, %c0_306] : memref<4x4xf32, #tpu.memory_space<smem>>
    %698 = vector.broadcast %697 : f32 to vector<256xf32>
    %699 = arith.mulf %698, %357 : vector<256xf32>
    %700 = arith.addf %696, %699 : vector<256xf32>
    %c2_307 = arith.constant 2 : index
    %c0_308 = arith.constant 0 : index
    %701 = memref.load %arg9[%c2_307, %c0_308] : memref<4x4xf32, #tpu.memory_space<smem>>
    %702 = vector.broadcast %701 : f32 to vector<256xf32>
    %703 = arith.mulf %702, %522 : vector<256xf32>
    %704 = arith.addf %700, %703 : vector<256xf32>
    %c3_309 = arith.constant 3 : index
    %c0_310 = arith.constant 0 : index
    %705 = memref.load %arg9[%c3_309, %c0_310] : memref<4x4xf32, #tpu.memory_space<smem>>
    %706 = vector.broadcast %705 : f32 to vector<256xf32>
    %707 = arith.mulf %706, %687 : vector<256xf32>
    %708 = arith.addf %704, %707 : vector<256xf32>
    %709 = vector.extract_strided_slice %3 {offsets = [0, 0], sizes = [1, 256], strides = [1, 1]} : vector<4x256xf32> to vector<1x256xf32>
    %710 = vector.shape_cast %709 : vector<1x256xf32> to vector<256xf32>
    %c0_311 = arith.constant 0 : index
    %711 = memref.load %arg10[%c0_311] : memref<4xf32, #tpu.memory_space<smem>>
    %712 = vector.broadcast %711 : f32 to vector<256xf32>
    %713 = arith.addf %708, %712 : vector<256xf32>
    %cst_312 = arith.constant 0.333333343 : f32
    %714 = vector.broadcast %cst_312 : f32 to vector<256xf32>
    %715 = arith.mulf %714, %713 : vector<256xf32>
    %716 = arith.subf %710, %715 : vector<256xf32>
    %c0_313 = arith.constant 0 : index
    %c0_314 = arith.constant 0 : index
    %c0_315 = arith.constant 0 : index
    %717 = vector.load %arg11[%c0_313, %c0_314, %c0_315] : memref<1x4x256xf32, #tpu.memory_space<vmem>>, vector<1x1x256xf32>
    %718 = vector.shape_cast %717 : vector<1x1x256xf32> to vector<256xf32>
    %719 = vector.shape_cast %716 : vector<256xf32> to vector<1x1x256xf32>
    tpu.vector_store %arg11[%c0_313, %c0_314, %c0_315], %719 {strides = array<i32>} : memref<1x4x256xf32, #tpu.memory_space<vmem>>, vector<1x1x256xf32>,
    %c0_316 = arith.constant 0 : index
    %c1_317 = arith.constant 1 : index
    %720 = memref.load %arg9[%c0_316, %c1_317] : memref<4x4xf32, #tpu.memory_space<smem>>
    %721 = vector.broadcast %720 : f32 to vector<256xf32>
    %722 = arith.mulf %721, %192 : vector<256xf32>
    %c1_318 = arith.constant 1 : index
    %c1_319 = arith.constant 1 : index
    %723 = memref.load %arg9[%c1_318, %c1_319] : memref<4x4xf32, #tpu.memory_space<smem>>
    %724 = vector.broadcast %723 : f32 to vector<256xf32>
    %725 = arith.mulf %724, %357 : vector<256xf32>
    %726 = arith.addf %722, %725 : vector<256xf32>
    %c2_320 = arith.constant 2 : index
    %c1_321 = arith.constant 1 : index
    %727 = memref.load %arg9[%c2_320, %c1_321] : memref<4x4xf32, #tpu.memory_space<smem>>
    %728 = vector.broadcast %727 : f32 to vector<256xf32>
    %729 = arith.mulf %728, %522 : vector<256xf32>
    %730 = arith.addf %726, %729 : vector<256xf32>
    %c3_322 = arith.constant 3 : index
    %c1_323 = arith.constant 1 : index
    %731 = memref.load %arg9[%c3_322, %c1_323] : memref<4x4xf32, #tpu.memory_space<smem>>
    %732 = vector.broadcast %731 : f32 to vector<256xf32>
    %733 = arith.mulf %732, %687 : vector<256xf32>
    %734 = arith.addf %730, %733 : vector<256xf32>
    %735 = vector.extract_strided_slice %3 {offsets = [1, 0], sizes = [1, 256], strides = [1, 1]} : vector<4x256xf32> to vector<1x256xf32>
    %736 = vector.shape_cast %735 : vector<1x256xf32> to vector<256xf32>
    %c1_324 = arith.constant 1 : index
    %737 = memref.load %arg10[%c1_324] : memref<4xf32, #tpu.memory_space<smem>>
    %738 = vector.broadcast %737 : f32 to vector<256xf32>
    %739 = arith.addf %734, %738 : vector<256xf32>
    %cst_325 = arith.constant 0.333333343 : f32
    %740 = vector.broadcast %cst_325 : f32 to vector<256xf32>
    %741 = arith.mulf %740, %739 : vector<256xf32>
    %742 = arith.subf %736, %741 : vector<256xf32>
    %c0_326 = arith.constant 0 : index
    %c1_327 = arith.constant 1 : index
    %c0_328 = arith.constant 0 : index
    %743 = vector.load %arg11[%c0_326, %c1_327, %c0_328] : memref<1x4x256xf32, #tpu.memory_space<vmem>>, vector<1x1x256xf32>
    %744 = vector.shape_cast %743 : vector<1x1x256xf32> to vector<256xf32>
    %745 = vector.shape_cast %742 : vector<256xf32> to vector<1x1x256xf32>
    tpu.vector_store %arg11[%c0_326, %c1_327, %c0_328], %745 {strides = array<i32>} : memref<1x4x256xf32, #tpu.memory_space<vmem>>, vector<1x1x256xf32>,
    %c0_329 = arith.constant 0 : index
    %c2_330 = arith.constant 2 : index
    %746 = memref.load %arg9[%c0_329, %c2_330] : memref<4x4xf32, #tpu.memory_space<smem>>
    %747 = vector.broadcast %746 : f32 to vector<256xf32>
    %748 = arith.mulf %747, %192 : vector<256xf32>
    %c1_331 = arith.constant 1 : index
    %c2_332 = arith.constant 2 : index
    %749 = memref.load %arg9[%c1_331, %c2_332] : memref<4x4xf32, #tpu.memory_space<smem>>
    %750 = vector.broadcast %749 : f32 to vector<256xf32>
    %751 = arith.mulf %750, %357 : vector<256xf32>
    %752 = arith.addf %748, %751 : vector<256xf32>
    %c2_333 = arith.constant 2 : index
    %c2_334 = arith.constant 2 : index
    %753 = memref.load %arg9[%c2_333, %c2_334] : memref<4x4xf32, #tpu.memory_space<smem>>
    %754 = vector.broadcast %753 : f32 to vector<256xf32>
    %755 = arith.mulf %754, %522 : vector<256xf32>
    %756 = arith.addf %752, %755 : vector<256xf32>
    %c3_335 = arith.constant 3 : index
    %c2_336 = arith.constant 2 : index
    %757 = memref.load %arg9[%c3_335, %c2_336] : memref<4x4xf32, #tpu.memory_space<smem>>
    %758 = vector.broadcast %757 : f32 to vector<256xf32>
    %759 = arith.mulf %758, %687 : vector<256xf32>
    %760 = arith.addf %756, %759 : vector<256xf32>
    %761 = vector.extract_strided_slice %3 {offsets = [2, 0], sizes = [1, 256], strides = [1, 1]} : vector<4x256xf32> to vector<1x256xf32>
    %762 = vector.shape_cast %761 : vector<1x256xf32> to vector<256xf32>
    %c2_337 = arith.constant 2 : index
    %763 = memref.load %arg10[%c2_337] : memref<4xf32, #tpu.memory_space<smem>>
    %764 = vector.broadcast %763 : f32 to vector<256xf32>
    %765 = arith.addf %760, %764 : vector<256xf32>
    %cst_338 = arith.constant 0.333333343 : f32
    %766 = vector.broadcast %cst_338 : f32 to vector<256xf32>
    %767 = arith.mulf %766, %765 : vector<256xf32>
    %768 = arith.subf %762, %767 : vector<256xf32>
    %c0_339 = arith.constant 0 : index
    %c2_340 = arith.constant 2 : index
    %c0_341 = arith.constant 0 : index
    %769 = vector.load %arg11[%c0_339, %c2_340, %c0_341] : memref<1x4x256xf32, #tpu.memory_space<vmem>>, vector<1x1x256xf32>
    %770 = vector.shape_cast %769 : vector<1x1x256xf32> to vector<256xf32>
    %771 = vector.shape_cast %768 : vector<256xf32> to vector<1x1x256xf32>
    tpu.vector_store %arg11[%c0_339, %c2_340, %c0_341], %771 {strides = array<i32>} : memref<1x4x256xf32, #tpu.memory_space<vmem>>, vector<1x1x256xf32>,
    %c0_342 = arith.constant 0 : index
    %c3_343 = arith.constant 3 : index
    %772 = memref.load %arg9[%c0_342, %c3_343] : memref<4x4xf32, #tpu.memory_space<smem>>
    %773 = vector.broadcast %772 : f32 to vector<256xf32>
    %774 = arith.mulf %773, %192 : vector<256xf32>
    %c1_344 = arith.constant 1 : index
    %c3_345 = arith.constant 3 : index
    %775 = memref.load %arg9[%c1_344, %c3_345] : memref<4x4xf32, #tpu.memory_space<smem>>
    %776 = vector.broadcast %775 : f32 to vector<256xf32>
    %777 = arith.mulf %776, %357 : vector<256xf32>
    %778 = arith.addf %774, %777 : vector<256xf32>
    %c2_346 = arith.constant 2 : index
    %c3_347 = arith.constant 3 : index
    %779 = memref.load %arg9[%c2_346, %c3_347] : memref<4x4xf32, #tpu.memory_space<smem>>
    %780 = vector.broadcast %779 : f32 to vector<256xf32>
    %781 = arith.mulf %780, %522 : vector<256xf32>
    %782 = arith.addf %778, %781 : vector<256xf32>
    %c3_348 = arith.constant 3 : index
    %c3_349 = arith.constant 3 : index
    %783 = memref.load %arg9[%c3_348, %c3_349] : memref<4x4xf32, #tpu.memory_space<smem>>
    %784 = vector.broadcast %783 : f32 to vector<256xf32>
    %785 = arith.mulf %784, %687 : vector<256xf32>
    %786 = arith.addf %782, %785 : vector<256xf32>
    %787 = vector.extract_strided_slice %3 {offsets = [3, 0], sizes = [1, 256], strides = [1, 1]} : vector<4x256xf32> to vector<1x256xf32>
    %788 = vector.shape_cast %787 : vector<1x256xf32> to vector<256xf32>
    %c3_350 = arith.constant 3 : index
    %789 = memref.load %arg10[%c3_350] : memref<4xf32, #tpu.memory_space<smem>>
    %790 = vector.broadcast %789 : f32 to vector<256xf32>
    %791 = arith.addf %786, %790 : vector<256xf32>
    %cst_351 = arith.constant 0.333333343 : f32
    %792 = vector.broadcast %cst_351 : f32 to vector<256xf32>
    %793 = arith.mulf %792, %791 : vector<256xf32>
    %794 = arith.subf %788, %793 : vector<256xf32>
    %c0_352 = arith.constant 0 : index
    %c3_353 = arith.constant 3 : index
    %c0_354 = arith.constant 0 : index
    %795 = vector.load %arg11[%c0_352, %c3_353, %c0_354] : memref<1x4x256xf32, #tpu.memory_space<vmem>>, vector<1x1x256xf32>
    %796 = vector.shape_cast %795 : vector<1x1x256xf32> to vector<256xf32>
    %797 = vector.shape_cast %794 : vector<256xf32> to vector<1x1x256xf32>
    tpu.vector_store %arg11[%c0_352, %c3_353, %c0_354], %797 {strides = array<i32>} : memref<1x4x256xf32, #tpu.memory_space<vmem>>, vector<1x1x256xf32>,
    return
  }
  func.func @transform_0(%arg0: i32, %arg1: i32) -> (i32, i32, i32) {
    %c0_i32 = arith.constant 0 : i32
    %c0_i32_0 = arith.constant 0 : i32
    return %arg0, %c0_i32, %arg1 : i32, i32, i32
  }
  func.func @transform_1(%arg0: i32, %arg1: i32) -> (i32, i32, i32) {
    %c0_i32 = arith.constant 0 : i32
    %c0_i32_0 = arith.constant 0 : i32
    return %arg0, %c0_i32, %arg1 : i32, i32, i32
  }
  func.func @transform_2(%arg0: i32, %arg1: i32) -> (i32, i32, i32) {
    %c0_i32 = arith.constant 0 : i32
    %c0_i32_0 = arith.constant 0 : i32
    return %arg0, %c0_i32, %arg1 : i32, i32, i32
  }
  func.func @transform_3(%arg0: i32, %arg1: i32) -> (i32, i32, i32) {
    %c0_i32 = arith.constant 0 : i32
    %c0_i32_0 = arith.constant 0 : i32
    return %arg0, %c0_i32, %arg1 : i32, i32, i32
  }
  func.func @transform_4(%arg0: i32, %arg1: i32) -> i32 {
    %c0_i32 = arith.constant 0 : i32
    %c0_i32_0 = arith.constant 0 : i32
    return %c0_i32 : i32
  }
  func.func @transform_5(%arg0: i32, %arg1: i32) -> (i32, i32) {
    %c0_i32 = arith.constant 0 : i32
    %c0_i32_0 = arith.constant 0 : i32
    %c0_i32_1 = arith.constant 0 : i32
    return %c0_i32, %c0_i32_0 : i32, i32
  }
  func.func @transform_6(%arg0: i32, %arg1: i32) -> i32 {
    %c0_i32 = arith.constant 0 : i32
    %c0_i32_0 = arith.constant 0 : i32
    return %c0_i32 : i32
  }
  func.func @transform_7(%arg0: i32, %arg1: i32) -> (i32, i32) {
    %c0_i32 = arith.constant 0 : i32
    %c0_i32_0 = arith.constant 0 : i32
    %c0_i32_1 = arith.constant 0 : i32
    return %c0_i32, %c0_i32_0 : i32, i32
  }
  func.func @transform_8(%arg0: i32, %arg1: i32) -> i32 {
    %c0_i32 = arith.constant 0 : i32
    %c0_i32_0 = arith.constant 0 : i32
    return %c0_i32 : i32
  }
  func.func @transform_9(%arg0: i32, %arg1: i32) -> (i32, i32, i32) {
    %c0_i32 = arith.constant 0 : i32
    %c0_i32_0 = arith.constant 0 : i32
    return %arg0, %c0_i32, %arg1 : i32, i32, i32
  }
  func.func @transform_10(%arg0: i32, %arg1: i32) -> (i32, i32, i32) {
    %c0_i32 = arith.constant 0 : i32
    %c0_i32_0 = arith.constant 0 : i32
    return %arg0, %c0_i32, %arg1 : i32, i32, i32
  }
  func.func @transform_11(%arg0: i32, %arg1: i32) -> (i32, i32, i32) {
    %c0_i32 = arith.constant 0 : i32
    %c0_i32_0 = arith.constant 0 : i32
    return %arg0, %c0_i32, %arg1 : i32, i32, i32
  }
}

</mosaic_0001>

<llo_original>
// kernel: closed_call.82
$region0: #{closed_call.82}
  #allocation0 [shape = 'u32[]', space=smem, size = 0x4, offset = 0x4, fixed_abs, tag = 'smem constant byte address 0x4 - core index']
  #allocation1 [shape = 'u32[144,128]{1,0:T(1,128)}', space=vmem, size = 0x12000, scoped, tag = 'internal scratch']
  %s0 = inlined_call_operand.vmem [shape: f32[2,4,256], index: 0, kind: input, shape index: {}]
  %s1 = inlined_call_operand.vmem [shape: f32[2,4,256], index: 1, kind: input, shape index: {}]
  %s2 = inlined_call_operand.vmem [shape: f32[2,4,256], index: 2, kind: input, shape index: {}]
  %s3 = inlined_call_operand.vmem [shape: f32[4], index: 3, kind: input, shape index: {}]
  %s4 = inlined_call_operand.vmem [shape: f32[2,4,256], index: 4, kind: output, shape index: {}]
  %s5 = sld [smem:[#allocation0]]
  $region53: #{closed_call.82} parent=0
    _
  %s7 = ssub.s32 1, %s5
  %s8 = scalar_select 0, %s7, %s5
  $region1: #{closed_call.82} parent=0
    #allocation2 [shape = 'u8[512]{0}', space=smem, size = 0x200, scoped, tag = 'input window, operand 3, single buffered']
    #allocation3 [shape = 's32[2]{0}', space=sflag, size = 0x8, scoped, tag = 'scoped memory for closed_call.82']
    %9 = vsyncpa [#allocation3], 0
    loop: start=0, step=1, limit=4
    $region2: #{closed_call.82} parent=1 // loop_pre_header
      _
    $region3: #{closed_call.82} parent=1 // loop_header
      %s11 = sphi 0, %s15
      %p12 = scmp.ge.s32.totalorder %s11, 4
      %s18 = sphi 0, %s30
      %s19 = sphi 0, %s26
      %s20 = sphi 0, %s18
      %s21 = sphi 0, %s19
      %s22 = sphi 0, %s20
      %s23 = sphi 0, %s21
      %s35 = sphi 0, %s37
      %s38 = sphi 0, %s35
      %s39 = sphi 0, %s38
      %s55 = sphi 0, %s39
      %s63 = sphi 0, %s65
      %s66 = sphi 0, %s63
      %s67 = sphi 0, %s66
      %s83 = sphi 0, %s67
      %s91 = sphi 0, %s93
      %s94 = sphi 0, %s91
      %s95 = sphi 0, %s94
      %s111 = sphi 0, %s95
      %s115 = sphi 0, %s115
      %s117 = sphi 0, %s115
      %s118 = sphi 0, %s117
      %s132 = sphi 0, %s118
      %s140 = sphi 0, %s142
      %s143 = sphi 0, %s140
      %s144 = sphi 0, %s143
      %s160 = sphi 0, %s144
    $region4: #{closed_call.82} parent=1 // loop_header_branch
      %14 = sbr.rel (%p12) target = $region8
    $region5: #{closed_call.82} parent=1 // loop_body
      %s16 = ssub.s32 %s11, 1
      %s17 = ssub.s32 %s11, 2
      %s24 = sadd.s32 1, %s19
      %p25 = scmp.ge.s32.totalorder %s24, 1
      %s26 = scalar_select %p25, 0, %s24
      %s27 = sadd.s32 1, %s18
      %s28 = scalar_select %p25, %s27, %s18
      %p29 = scmp.ge.s32.totalorder %s28, 2
      %s30 = scalar_select %p29, 0, %s28
      %s31 = ssub.s32 %s18, %s30
      %s32 = ssub.s32 %s19, %s26
      %s33 = sor.u32 %s31, %s32
      %p34 = scmp.eq.s32.totalorder %s33, 0
      %s36 = sadd.s32 %s35, 1
      %s37 = scalar_select %p34, %s35, %s36
      %p40 = pneg %p34
      %p41 = scmp.eq.s32.totalorder %s11, 1
      %p42 = por %p40, %p41
      %p43 = scmp.ne.s32.totalorder %s35, %s38
      %p44 = scmp.eq.s32.totalorder %s11, 0
      %p45 = por %p43, %p44
      %p46 = scmp.ne.s32.totalorder %s35, %s38
      %p47 = scmp.eq.s32.totalorder %s16, 1
      %p48 = por %p46, %p47
      %p49 = scmp.ne.s32.totalorder %s38, %s39
      %p50 = scmp.eq.s32.totalorder %s16, 0
      %p51 = por %p49, %p50
      %p52 = scmp.ne.s32.totalorder %s38, %s39
      %p53 = scmp.eq.s32.totalorder %s17, 1
      %p54 = por %p52, %p53
      %p56 = scmp.ne.s32.totalorder %s39, %s55
      %p57 = scmp.eq.s32.totalorder %s17, 0
      %p58 = por %p56, %p57
      %s59 = ssub.s32 %s18, %s30
      %s60 = ssub.s32 %s19, %s26
      %s61 = sor.u32 %s59, %s60
      %p62 = scmp.eq.s32.totalorder %s61, 0
      %s64 = sadd.s32 %s63, 1
      %s65 = scalar_select %p62, %s63, %s64
      %p68 = pneg %p62
      %p69 = scmp.eq.s32.totalorder %s11, 1
      %p70 = por %p68, %p69
      %p71 = scmp.ne.s32.totalorder %s63, %s66
      %p72 = scmp.eq.s32.totalorder %s11, 0
      %p73 = por %p71, %p72
      %p74 = scmp.ne.s32.totalorder %s63, %s66
      %p75 = scmp.eq.s32.totalorder %s16, 1
      %p76 = por %p74, %p75
      %p77 = scmp.ne.s32.totalorder %s66, %s67
      %p78 = scmp.eq.s32.totalorder %s16, 0
      %p79 = por %p77, %p78
      %p80 = scmp.ne.s32.totalorder %s66, %s67
      %p81 = scmp.eq.s32.totalorder %s17, 1
      %p82 = por %p80, %p81
      %p84 = scmp.ne.s32.totalorder %s67, %s83
      %p85 = scmp.eq.s32.totalorder %s17, 0
      %p86 = por %p84, %p85
      %s87 = ssub.s32 %s18, %s30
      %s88 = ssub.s32 %s19, %s26
      %s89 = sor.u32 %s87, %s88
      %p90 = scmp.eq.s32.totalorder %s89, 0
      %s92 = sadd.s32 %s91, 1
      %s93 = scalar_select %p90, %s91, %s92
      %p96 = pneg %p90
      %p97 = scmp.eq.s32.totalorder %s11, 1
      %p98 = por %p96, %p97
      %p99 = scmp.ne.s32.totalorder %s91, %s94
      %p100 = scmp.eq.s32.totalorder %s11, 0
      %p101 = por %p99, %p100
      %p102 = scmp.ne.s32.totalorder %s91, %s94
      %p103 = scmp.eq.s32.totalorder %s16, 1
      %p104 = por %p102, %p103
      %p105 = scmp.ne.s32.totalorder %s94, %s95
      %p106 = scmp.eq.s32.totalorder %s16, 0
      %p107 = por %p105, %p106
      %p108 = scmp.ne.s32.totalorder %s94, %s95
      %p109 = scmp.eq.s32.totalorder %s17, 1
      %p110 = por %p108, %p109
      %p112 = scmp.ne.s32.totalorder %s95, %s111
      %p113 = scmp.eq.s32.totalorder %s17, 0
      %p114 = por %p112, %p113
      %s116 = sadd.s32 %s115, 1
      %p119 = scmp.eq.s32.totalorder %s11, 1
      %p120 = scmp.ne.s32.totalorder %s115, %s117
      %p121 = scmp.eq.s32.totalorder %s11, 0
      %p122 = por %p120, %p121
      %p123 = scmp.ne.s32.totalorder %s115, %s117
      %p124 = scmp.eq.s32.totalorder %s16, 1
      %p125 = por %p123, %p124
      %p126 = scmp.ne.s32.totalorder %s117, %s118
      %p127 = scmp.eq.s32.totalorder %s16, 0
      %p128 = por %p126, %p127
      %p129 = scmp.ne.s32.totalorder %s117, %s118
      %p130 = scmp.eq.s32.totalorder %s17, 1
      %p131 = por %p129, %p130
      %p133 = scmp.ne.s32.totalorder %s118, %s132
      %p134 = scmp.eq.s32.totalorder %s17, 0
      %p135 = por %p133, %p134
      %s136 = ssub.s32 %s18, %s30
      %s137 = ssub.s32 %s19, %s26
      %s138 = sor.u32 %s136, %s137
      %p139 = scmp.eq.s32.totalorder %s138, 0
      %s141 = sadd.s32 %s140, 1
      %s142 = scalar_select %p139, %s140, %s141
      %p145 = pneg %p139
      %p146 = scmp.eq.s32.totalorder %s11, 1
      %p147 = por %p145, %p146
      %p148 = scmp.ne.s32.totalorder %s140, %s143
      %p149 = scmp.eq.s32.totalorder %s11, 0
      %p150 = por %p148, %p149
      %p151 = scmp.ne.s32.totalorder %s140, %s143
      %p152 = scmp.eq.s32.totalorder %s16, 1
      %p153 = por %p151, %p152
      %p154 = scmp.ne.s32.totalorder %s143, %s144
      %p155 = scmp.eq.s32.totalorder %s16, 0
      %p156 = por %p154, %p155
      %p157 = scmp.ne.s32.totalorder %s143, %s144
      %p158 = scmp.eq.s32.totalorder %s17, 1
      %p159 = por %p157, %p158
      %p161 = scmp.ne.s32.totalorder %s144, %s160
      %p162 = scmp.eq.s32.totalorder %s17, 0
      %p163 = por %p161, %p162
      %p164 = scmp.le.s32.totalorder 1, %s11
      %p165 = scmp.lt.s32.totalorder %s11, 3
      %p166 = pnand %p164, %p165
      %p167 = pneg %p166
      // Predicated region
      $region9: #{closed_call.82} parent=5 // pred_check
        _
      $region10: #{closed_call.82} parent=5 // pred_check_branch
        %169 = sbr.rel (%p166) target = $region12
      $region11: #{closed_call.82} parent=5 // pred_region
        %s170 = ssub.s32 %s11, 1
        // Predicated region
        $region13: #{closed_call.82} parent=11 // pred_check
          %p171 = pneg %p128
        $region14: #{closed_call.82} parent=11 // pred_check_branch
          %173 = sbr.rel (%p171) target = $region16
        $region15: #{closed_call.82} parent=11 // pred_region
          %s175 = ssub.s32 16, 16
          %176 = vsyncadd [#allocation3], %s175
          %s178 = sshll.u32 %s3, 4
          %s179 = int_to_ptr.vmem [resolvable:$true] %s178
          %181 = dma.vmem_to_smem %s179, 16, [#allocation2], [#allocation3]
        $region16: #{closed_call.82} parent=11 // pred_fallthru
          _
      $region12: #{closed_call.82} parent=5 // pred_fallthru
        _
      %p182 = scmp.lt.s32.totalorder %s11, 2
      // Predicated region
      $region17: #{closed_call.82} parent=5 // pred_check
        %p183 = pneg %p182
      $region18: #{closed_call.82} parent=5 // pred_check_branch
        %185 = sbr.rel (%p183) target = $region20
      $region19: #{closed_call.82} parent=5 // pred_region
        // Predicated region
        $region21: #{closed_call.82} parent=19 // pred_check
          %p186 = pneg %p45
        $region22: #{closed_call.82} parent=19 // pred_check_branch
          %188 = sbr.rel (%p186) target = $region24
        $region23: #{closed_call.82} parent=19 // pred_region
          %s189 = smul.u32 2, %s19
          %p190 = scmp.lt.s32.totalorder %s18, 1
          %s191 = scalar_select %p190, %s18, 1
          %p192 = scmp.lt.s32.totalorder %s189, 1
          %s193 = scalar_select %p192, %s189, 1
          %s194 = smul.addr %s191, 2
          %s195 = sadd.s32 %s193, %s194
          %s196 = smul.addr %s195, 4
          %s197 = scalar_lea.vmem %s0, %s196
          %s198 = smul.u32 2, %s19
        $region24: #{closed_call.82} parent=19 // pred_fallthru
          _
        // Predicated region
        $region25: #{closed_call.82} parent=19 // pred_check
          %p199 = pneg %p73
        $region26: #{closed_call.82} parent=19 // pred_check_branch
          %201 = sbr.rel (%p199) target = $region28
        $region27: #{closed_call.82} parent=19 // pred_region
          %s202 = smul.u32 2, %s19
          %p203 = scmp.lt.s32.totalorder %s18, 1
          %s204 = scalar_select %p203, %s18, 1
          %p205 = scmp.lt.s32.totalorder %s202, 1
          %s206 = scalar_select %p205, %s202, 1
          %s207 = smul.addr %s204, 2
          %s208 = sadd.s32 %s206, %s207
          %s209 = smul.addr %s208, 4
          %s210 = scalar_lea.vmem %s1, %s209
          %s211 = smul.u32 2, %s19
        $region28: #{closed_call.82} parent=19 // pred_fallthru
          _
        // Predicated region
        $region29: #{closed_call.82} parent=19 // pred_check
          %p212 = pneg %p101
        $region30: #{closed_call.82} parent=19 // pred_check_branch
          %214 = sbr.rel (%p212) target = $region32
        $region31: #{closed_call.82} parent=19 // pred_region
          %s215 = smul.u32 2, %s19
          %p216 = scmp.lt.s32.totalorder %s18, 1
          %s217 = scalar_select %p216, %s18, 1
          %p218 = scmp.lt.s32.totalorder %s215, 1
          %s219 = scalar_select %p218, %s215, 1
          %s220 = smul.addr %s217, 2
          %s221 = sadd.s32 %s219, %s220
          %s222 = smul.addr %s221, 4
          %s223 = scalar_lea.vmem %s2, %s222
          %s224 = smul.u32 2, %s19
        $region32: #{closed_call.82} parent=19 // pred_fallthru
          _
      $region20: #{closed_call.82} parent=5 // pred_fallthru
        _
      %p225 = scmp.le.s32.totalorder 1, %s11
      %p226 = scmp.lt.s32.totalorder %s11, 3
      %p227 = pnand %p225, %p226
      %p228 = pneg %p227
      // Predicated region
      $region33: #{closed_call.82} parent=5 // pred_check
        _
      $region34: #{closed_call.82} parent=5 // pred_check_branch
        %230 = sbr.rel (%p227) target = $region36
      $region35: #{closed_call.82} parent=5 // pred_region
        %s231 = ssub.s32 %s11, 1
        // Predicated region
        $region37: #{closed_call.82} parent=35 // pred_check
          %p232 = pneg %p128
        $region38: #{closed_call.82} parent=35 // pred_check_branch
          %234 = sbr.rel (%p232) target = $region40
        $region39: #{closed_call.82} parent=35 // pred_region
          %235 = dma.done [#allocation3], 16
        $region40: #{closed_call.82} parent=35 // pred_fallthru
          _
        %236 = sfence
        %s237 = smul.u32 2, %s21
        %p238 = scmp.lt.s32.totalorder %s20, 1
        %s239 = scalar_select %p238, %s20, 1
        %p240 = scmp.lt.s32.totalorder %s237, 1
        %s241 = scalar_select %p240, %s237, 1
        %s242 = smul.addr %s239, 2
        %s243 = sadd.s32 %s241, %s242
        %s244 = smul.addr %s243, 4
        %s245 = scalar_lea.vmem %s0, %s244
        %p246 = pneg %p51
        %p247 = pneg %p48
        %s248 = smul.u32 2, %s21
        %p249 = scmp.lt.s32.totalorder %s20, 1
        %s250 = scalar_select %p249, %s20, 1
        %p251 = scmp.lt.s32.totalorder %s248, 1
        %s252 = scalar_select %p251, %s248, 1
        %s253 = smul.addr %s250, 2
        %s254 = sadd.s32 %s252, %s253
        %s255 = smul.addr %s254, 4
        %s256 = scalar_lea.vmem %s1, %s255
        %p257 = pneg %p79
        %p258 = pneg %p76
        %s259 = smul.u32 2, %s21
        %p260 = scmp.lt.s32.totalorder %s20, 1
        %s261 = scalar_select %p260, %s20, 1
        %p262 = scmp.lt.s32.totalorder %s259, 1
        %s263 = scalar_select %p262, %s259, 1
        %s264 = smul.addr %s261, 2
        %s265 = sadd.s32 %s263, %s264
        %s266 = smul.addr %s265, 4
        %s267 = scalar_lea.vmem %s2, %s266
        %p268 = pneg %p107
        %p269 = pneg %p104
        %p270 = pneg %p128
        %p271 = pneg %p125
        %p272 = pneg %p156
        %p273 = pneg %p153
        %s274 = smul.u32 2, %s21
        %p275 = scmp.lt.s32.totalorder %s20, 1
        %s276 = scalar_select %p275, %s20, 1
        %p277 = scmp.lt.s32.totalorder %s274, 1
        %s278 = scalar_select %p277, %s274, 1
        %s279 = smul.addr %s276, 2
        %s280 = sadd.s32 %s278, %s279
        %s281 = smul.addr %s280, 4
        %s282 = scalar_lea.vmem %s4, %s281
        %s283 = smul.u32 2, %s21
        %p284 = scmp.lt.s32.totalorder %s20, 1
        %s285 = scalar_select %p284, %s20, 1
        %p286 = scmp.lt.s32.totalorder %s283, 1
        %s287 = scalar_select %p286, %s283, 1
        %s288 = smul.addr %s285, 2
        %s289 = sadd.s32 %s287, %s288
        %s290 = smul.addr %s289, 4
        %s291 = scalar_lea.vmem %s0, %s290
        %s292 = smul.u32 2, %s21
        %s293 = smul.u32 2, %s21
        %p294 = scmp.lt.s32.totalorder %s20, 1
        %s295 = scalar_select %p294, %s20, 1
        %p296 = scmp.lt.s32.totalorder %s293, 1
        %s297 = scalar_select %p296, %s293, 1
        %s298 = smul.addr %s295, 2
        %s299 = sadd.s32 %s297, %s298
        %s300 = smul.addr %s299, 4
        %s301 = scalar_lea.vmem %s1, %s300
        %s302 = smul.u32 2, %s21
        %s303 = smul.u32 2, %s21
        %p304 = scmp.lt.s32.totalorder %s20, 1
        %s305 = scalar_select %p304, %s20, 1
        %p306 = scmp.lt.s32.totalorder %s303, 1
        %s307 = scalar_select %p306, %s303, 1
        %s308 = smul.addr %s305, 2
        %s309 = sadd.s32 %s307, %s308
        %s310 = smul.addr %s309, 4
        %s311 = scalar_lea.vmem %s2, %s310
        %s312 = smul.u32 2, %s21
        %s313 = smul.u32 2, %s21
        %p314 = scmp.lt.s32.totalorder %s20, 1
        %s315 = scalar_select %p314, %s20, 1
        %p316 = scmp.lt.s32.totalorder %s313, 1
        %s317 = scalar_select %p316, %s313, 1
        %s318 = smul.addr %s315, 2
        %s319 = sadd.s32 %s317, %s318
        %s320 = smul.addr %s319, 4
        %s321 = scalar_lea.vmem %s4, %s320
        %s322 = smul.u32 2, %s21
        %v323 = vld [vmem:[%s291] sm:$0xff]
        %v324 = vld [vmem:[%s301] sm:$0xff]
        %v325 = vld [vmem:[%s311] sm:$0xff]
        %s326 = sld [smem:[#allocation2]]
        %v327 = vmul.f32 %v325, %v325
        %v328 = vstv %s326
        %v329 = vmul.f32 %v328, %v327
        %v330 = vsub.f32 %v323, %v324
        %v331 = vmul.f32 %v329, %v330
        %v334 = vunpack.c.l.s4 1966171168
        %v335 = vunpack.c.0.s8 %v334
        %v336 = vlaneseq
        %v337 = vshrl.u32 %v336, 7
        %v338 = vsub.s32 %v335, %v337
        %v339 = vrot.slane %v331, %v338
        %v341 = vunpack.c.l.s4 1966171168
        %v342 = vunpack.c.0.s8 %v341
        %v343 = vlaneseq
        %v344 = vshrl.u32 %v343, 7
        %v345 = vsub.s32 %v342, %v344
        %v346 = vrot.slane %v339, %v345
        %v348 = vlaneseq
        %vm349 = vcmp.ge.s32.totalorder %v348, 0
        %vm350 = vcmp.lt.s32.totalorder %v348, 256
        %vm351 = vmand %vm349, %vm350
        %352 = vst.msk [vmem:[%s321] ss:$4 sm:$0x3] %vm351, %v346
        %s353 = sld [smem:[#allocation2 + $0x1]]
        %v354 = vstv %s353
        %v355 = vmul.f32 %v354, %v327
        %v356 = vmul.f32 %v355, %v330
        %v359 = vunpack.c.l.s4 1966171168
        %v360 = vunpack.c.0.s8 %v359
        %v361 = vlaneseq
        %v362 = vshrl.u32 %v361, 7
        %v363 = vsub.s32 %v360, %v362
        %v364 = vrot.slane %v356, %v363
        %v365 = vcombine.high %v364, %v364
        %v367 = vunpack.c.l.s4 1966171168
        %v368 = vunpack.c.0.s8 %v367
        %v369 = vlaneseq
        %v370 = vshrl.u32 %v369, 7
        %v371 = vsub.s32 %v368, %v370
        %v372 = vrot.slane %v365, %v371
        %s374 = scalar_lea.vmem %s321, 1
        %375 = vst.msk [vmem:[%s374] ss:$4 sm:$0x3] %vm351, %v372
        %s376 = sld [smem:[#allocation2 + $0x2]]
        %v377 = vstv %s376
        %v378 = vmul.f32 %v377, %v327
        %v379 = vmul.f32 %v378, %v330
        %v382 = vunpack.c.l.s4 1966171168
        %v383 = vunpack.c.0.s8 %v382
        %v384 = vlaneseq
        %v385 = vshrl.u32 %v384, 7
        %v386 = vsub.s32 %v383, %v385
        %v387 = vrot.slane %v379, %v386
        %v389 = vunpack.c.l.s4 1966171168
        %v390 = vunpack.c.0.s8 %v389
        %v391 = vlaneseq
        %v392 = vshrl.u32 %v391, 7
        %v393 = vsub.s32 %v390, %v392
        %v394 = vrot.slane %v387, %v393
        %v395 = vcombine.high %v394, %v394
        %s397 = scalar_lea.vmem %s321, 2
        %398 = vst.msk [vmem:[%s397] ss:$4 sm:$0x3] %vm351, %v395
        %s399 = sld [smem:[#allocation2 + $0x3]]
        %v400 = vstv %s399
        %v401 = vmul.f32 %v400, %v327
        %v402 = vmul.f32 %v401, %v330
        %v405 = vunpack.c.l.s4 1966171168
        %v406 = vunpack.c.0.s8 %v405
        %v407 = vlaneseq
        %v408 = vshrl.u32 %v407, 7
        %v409 = vsub.s32 %v406, %v408
        %v410 = vrot.slane %v402, %v409
        %v411 = vcombine.high %v410, %v410
        %v413 = vunpack.c.l.s4 1966171168
        %v414 = vunpack.c.0.s8 %v413
        %v415 = vlaneseq
        %v416 = vshrl.u32 %v415, 7
        %v417 = vsub.s32 %v414, %v416
        %v418 = vrot.slane %v411, %v417
        %v419 = vcombine.high %v418, %v418
        %s421 = scalar_lea.vmem %s321, 3
        %422 = vst.msk [vmem:[%s421] ss:$4 sm:$0x3] %vm351, %v419
        %s423 = smul.u32 2, %s21
        %p424 = scmp.lt.s32.totalorder %s20, 1
        %s425 = scalar_select %p424, %s20, 1
        %p426 = scmp.lt.s32.totalorder %s423, 1
        %s427 = scalar_select %p426, %s423, 1
        %s428 = smul.addr %s425, 2
        %s429 = sadd.s32 %s427, %s428
        %s430 = smul.addr %s429, 4
        %s431 = scalar_lea.vmem %s4, %s430
        // Predicated region
        $region41: #{closed_call.82} parent=35 // pred_check
          %p432 = pneg %p153
        $region42: #{closed_call.82} parent=35 // pred_check_branch
          %434 = sbr.rel (%p432) target = $region44
        $region43: #{closed_call.82} parent=35 // pred_region
          %s435 = smul.u32 2, %s21
        $region44: #{closed_call.82} parent=35 // pred_fallthru
          _
      $region36: #{closed_call.82} parent=5 // pred_fallthru
        _
      %p436 = scmp.le.s32.totalorder 2, %s11
      // Predicated region
      $region45: #{closed_call.82} parent=5 // pred_check
        %p437 = pneg %p436
      $region46: #{closed_call.82} parent=5 // pred_check_branch
        %439 = sbr.rel (%p437) target = $region48
      $region47: #{closed_call.82} parent=5 // pred_region
        %s440 = ssub.s32 %s11, 2
        // Predicated region
        $region49: #{closed_call.82} parent=47 // pred_check
          %p441 = pneg %p159
        $region50: #{closed_call.82} parent=47 // pred_check_branch
          %443 = sbr.rel (%p441) target = $region52
        $region51: #{closed_call.82} parent=47 // pred_region
          %s444 = smul.u32 2, %s23
          %p445 = scmp.lt.s32.totalorder %s22, 1
          %s446 = scalar_select %p445, %s22, 1
          %p447 = scmp.lt.s32.totalorder %s444, 1
          %s448 = scalar_select %p447, %s444, 1
          %s449 = smul.addr %s446, 2
          %s450 = sadd.s32 %s448, %s449
          %s451 = smul.addr %s450, 4
          %s452 = scalar_lea.vmem %s4, %s451
        $region52: #{closed_call.82} parent=47 // pred_fallthru
          _
      $region48: #{closed_call.82} parent=5 // pred_fallthru
        _
    $region6: #{closed_call.82} parent=1 // loop_footer
      %s15 = sadd.s32 1, %s11
    $region7: #{closed_call.82} parent=1 // loop_footer_branch
      %10 = sbr.rel target = $region3
    $region8: #{closed_call.82} parent=1 // loop_exit
      _
    %453 = vsyncpa [#allocation3], 1
    %s454 = scalar_lea.sflag [#allocation3], 1
    %455 = vsyncpa %s454, 1

// kernel: closed_call.87
$region0: #{closed_call.87}
  #allocation0 [shape = 'u32[]', space=smem, size = 0x4, offset = 0x4, fixed_abs, tag = 'smem constant byte address 0x4 - core index']
  #allocation1 [shape = 'u32[144,128]{1,0:T(1,128)}', space=vmem, size = 0x12000, scoped, tag = 'internal scratch']
  %s0 = inlined_call_operand.vmem [shape: f32[2,4,256], index: 0, kind: input, shape index: {}]
  %s1 = inlined_call_operand.vmem [shape: f32[2,4,256], index: 1, kind: input, shape index: {}]
  %s2 = inlined_call_operand.vmem [shape: f32[2,8,256], index: 2, kind: input, shape index: {}]
  %s3 = inlined_call_operand.vmem [shape: f32[4,8], index: 3, kind: input, shape index: {}]
  %s4 = inlined_call_operand.vmem [shape: f32[8,4], index: 4, kind: input, shape index: {}]
  %s5 = inlined_call_operand.vmem [shape: f32[2,4,256], index: 5, kind: output, shape index: {}]
  %s6 = sld [smem:[#allocation0]]
  $region61: #{closed_call.87} parent=0
    _
  %s8 = ssub.s32 1, %s6
  %s9 = scalar_select 0, %s8, %s6
  $region1: #{closed_call.87} parent=0
    #allocation2 [shape = 'u8[2048]{0}', space=smem, size = 0x800, scoped, tag = 'input window, operand 3, single buffered']
    #allocation3 [shape = 's32[2]{0}', space=sflag, size = 0x8, scoped, tag = 'scoped memory for closed_call.87']
    #allocation4 [shape = 'u8[4096]{0}', space=smem, size = 0x1000, scoped, tag = 'input window, operand 4, single buffered']
    #allocation5 [shape = 's32[1]{0}', space=sflag, size = 0x4, scoped, tag = 'scoped memory for closed_call.87']
    %10 = vsyncpa [#allocation3], 0
    %11 = vsyncpa [#allocation5], 0
    loop: start=0, step=1, limit=4
    $region2: #{closed_call.87} parent=1 // loop_pre_header
      _
    $region3: #{closed_call.87} parent=1 // loop_header
      %s13 = sphi 0, %s17
      %p14 = scmp.ge.s32.totalorder %s13, 4
      %s20 = sphi 0, %s32
      %s21 = sphi 0, %s28
      %s22 = sphi 0, %s20
      %s23 = sphi 0, %s21
      %s24 = sphi 0, %s22
      %s25 = sphi 0, %s23
      %s37 = sphi 0, %s39
      %s40 = sphi 0, %s37
      %s41 = sphi 0, %s40
      %s57 = sphi 0, %s41
      %s65 = sphi 0, %s67
      %s68 = sphi 0, %s65
      %s69 = sphi 0, %s68
      %s85 = sphi 0, %s69
      %s93 = sphi 0, %s95
      %s96 = sphi 0, %s93
      %s97 = sphi 0, %s96
      %s113 = sphi 0, %s97
      %s117 = sphi 0, %s117
      %s119 = sphi 0, %s117
      %s120 = sphi 0, %s119
      %s134 = sphi 0, %s120
      %s138 = sphi 0, %s138
      %s140 = sphi 0, %s138
      %s141 = sphi 0, %s140
      %s155 = sphi 0, %s141
      %s163 = sphi 0, %s165
      %s166 = sphi 0, %s163
      %s167 = sphi 0, %s166
      %s183 = sphi 0, %s167
    $region4: #{closed_call.87} parent=1 // loop_header_branch
      %16 = sbr.rel (%p14) target = $region8
    $region5: #{closed_call.87} parent=1 // loop_body
      %s18 = ssub.s32 %s13, 1
      %s19 = ssub.s32 %s13, 2
      %s26 = sadd.s32 1, %s21
      %p27 = scmp.ge.s32.totalorder %s26, 1
      %s28 = scalar_select %p27, 0, %s26
      %s29 = sadd.s32 1, %s20
      %s30 = scalar_select %p27, %s29, %s20
      %p31 = scmp.ge.s32.totalorder %s30, 2
      %s32 = scalar_select %p31, 0, %s30
      %s33 = ssub.s32 %s20, %s32
      %s34 = ssub.s32 %s21, %s28
      %s35 = sor.u32 %s33, %s34
      %p36 = scmp.eq.s32.totalorder %s35, 0
      %s38 = sadd.s32 %s37, 1
      %s39 = scalar_select %p36, %s37, %s38
      %p42 = pneg %p36
      %p43 = scmp.eq.s32.totalorder %s13, 1
      %p44 = por %p42, %p43
      %p45 = scmp.ne.s32.totalorder %s37, %s40
      %p46 = scmp.eq.s32.totalorder %s13, 0
      %p47 = por %p45, %p46
      %p48 = scmp.ne.s32.totalorder %s37, %s40
      %p49 = scmp.eq.s32.totalorder %s18, 1
      %p50 = por %p48, %p49
      %p51 = scmp.ne.s32.totalorder %s40, %s41
      %p52 = scmp.eq.s32.totalorder %s18, 0
      %p53 = por %p51, %p52
      %p54 = scmp.ne.s32.totalorder %s40, %s41
      %p55 = scmp.eq.s32.totalorder %s19, 1
      %p56 = por %p54, %p55
      %p58 = scmp.ne.s32.totalorder %s41, %s57
      %p59 = scmp.eq.s32.totalorder %s19, 0
      %p60 = por %p58, %p59
      %s61 = ssub.s32 %s20, %s32
      %s62 = ssub.s32 %s21, %s28
      %s63 = sor.u32 %s61, %s62
      %p64 = scmp.eq.s32.totalorder %s63, 0
      %s66 = sadd.s32 %s65, 1
      %s67 = scalar_select %p64, %s65, %s66
      %p70 = pneg %p64
      %p71 = scmp.eq.s32.totalorder %s13, 1
      %p72 = por %p70, %p71
      %p73 = scmp.ne.s32.totalorder %s65, %s68
      %p74 = scmp.eq.s32.totalorder %s13, 0
      %p75 = por %p73, %p74
      %p76 = scmp.ne.s32.totalorder %s65, %s68
      %p77 = scmp.eq.s32.totalorder %s18, 1
      %p78 = por %p76, %p77
      %p79 = scmp.ne.s32.totalorder %s68, %s69
      %p80 = scmp.eq.s32.totalorder %s18, 0
      %p81 = por %p79, %p80
      %p82 = scmp.ne.s32.totalorder %s68, %s69
      %p83 = scmp.eq.s32.totalorder %s19, 1
      %p84 = por %p82, %p83
      %p86 = scmp.ne.s32.totalorder %s69, %s85
      %p87 = scmp.eq.s32.totalorder %s19, 0
      %p88 = por %p86, %p87
      %s89 = ssub.s32 %s20, %s32
      %s90 = ssub.s32 %s21, %s28
      %s91 = sor.u32 %s89, %s90
      %p92 = scmp.eq.s32.totalorder %s91, 0
      %s94 = sadd.s32 %s93, 1
      %s95 = scalar_select %p92, %s93, %s94
      %p98 = pneg %p92
      %p99 = scmp.eq.s32.totalorder %s13, 1
      %p100 = por %p98, %p99
      %p101 = scmp.ne.s32.totalorder %s93, %s96
      %p102 = scmp.eq.s32.totalorder %s13, 0
      %p103 = por %p101, %p102
      %p104 = scmp.ne.s32.totalorder %s93, %s96
      %p105 = scmp.eq.s32.totalorder %s18, 1
      %p106 = por %p104, %p105
      %p107 = scmp.ne.s32.totalorder %s96, %s97
      %p108 = scmp.eq.s32.totalorder %s18, 0
      %p109 = por %p107, %p108
      %p110 = scmp.ne.s32.totalorder %s96, %s97
      %p111 = scmp.eq.s32.totalorder %s19, 1
      %p112 = por %p110, %p111
      %p114 = scmp.ne.s32.totalorder %s97, %s113
      %p115 = scmp.eq.s32.totalorder %s19, 0
      %p116 = por %p114, %p115
      %s118 = sadd.s32 %s117, 1
      %p121 = scmp.eq.s32.totalorder %s13, 1
      %p122 = scmp.ne.s32.totalorder %s117, %s119
      %p123 = scmp.eq.s32.totalorder %s13, 0
      %p124 = por %p122, %p123
      %p125 = scmp.ne.s32.totalorder %s117, %s119
      %p126 = scmp.eq.s32.totalorder %s18, 1
      %p127 = por %p125, %p126
      %p128 = scmp.ne.s32.totalorder %s119, %s120
      %p129 = scmp.eq.s32.totalorder %s18, 0
      %p130 = por %p128, %p129
      %p131 = scmp.ne.s32.totalorder %s119, %s120
      %p132 = scmp.eq.s32.totalorder %s19, 1
      %p133 = por %p131, %p132
      %p135 = scmp.ne.s32.totalorder %s120, %s134
      %p136 = scmp.eq.s32.totalorder %s19, 0
      %p137 = por %p135, %p136
      %s139 = sadd.s32 %s138, 1
      %p142 = scmp.eq.s32.totalorder %s13, 1
      %p143 = scmp.ne.s32.totalorder %s138, %s140
      %p144 = scmp.eq.s32.totalorder %s13, 0
      %p145 = por %p143, %p144
      %p146 = scmp.ne.s32.totalorder %s138, %s140
      %p147 = scmp.eq.s32.totalorder %s18, 1
      %p148 = por %p146, %p147
      %p149 = scmp.ne.s32.totalorder %s140, %s141
      %p150 = scmp.eq.s32.totalorder %s18, 0
      %p151 = por %p149, %p150
      %p152 = scmp.ne.s32.totalorder %s140, %s141
      %p153 = scmp.eq.s32.totalorder %s19, 1
      %p154 = por %p152, %p153
      %p156 = scmp.ne.s32.totalorder %s141, %s155
      %p157 = scmp.eq.s32.totalorder %s19, 0
      %p158 = por %p156, %p157
      %s159 = ssub.s32 %s20, %s32
      %s160 = ssub.s32 %s21, %s28
      %s161 = sor.u32 %s159, %s160
      %p162 = scmp.eq.s32.totalorder %s161, 0
      %s164 = sadd.s32 %s163, 1
      %s165 = scalar_select %p162, %s163, %s164
      %p168 = pneg %p162
      %p169 = scmp.eq.s32.totalorder %s13, 1
      %p170 = por %p168, %p169
      %p171 = scmp.ne.s32.totalorder %s163, %s166
      %p172 = scmp.eq.s32.totalorder %s13, 0
      %p173 = por %p171, %p172
      %p174 = scmp.ne.s32.totalorder %s163, %s166
      %p175 = scmp.eq.s32.totalorder %s18, 1
      %p176 = por %p174, %p175
      %p177 = scmp.ne.s32.totalorder %s166, %s167
      %p178 = scmp.eq.s32.totalorder %s18, 0
      %p179 = por %p177, %p178
      %p180 = scmp.ne.s32.totalorder %s166, %s167
      %p181 = scmp.eq.s32.totalorder %s19, 1
      %p182 = por %p180, %p181
      %p184 = scmp.ne.s32.totalorder %s167, %s183
      %p185 = scmp.eq.s32.totalorder %s19, 0
      %p186 = por %p184, %p185
      %p187 = scmp.le.s32.totalorder 1, %s13
      %p188 = scmp.lt.s32.totalorder %s13, 3
      %p189 = pnand %p187, %p188
      %p190 = pneg %p189
      // Predicated region
      $region9: #{closed_call.87} parent=5 // pred_check
        _
      $region10: #{closed_call.87} parent=5 // pred_check_branch
        %192 = sbr.rel (%p189) target = $region12
      $region11: #{closed_call.87} parent=5 // pred_region
        %s193 = ssub.s32 %s13, 1
        // Predicated region
        $region13: #{closed_call.87} parent=11 // pred_check
          %p194 = pneg %p130
        $region14: #{closed_call.87} parent=11 // pred_check_branch
          %196 = sbr.rel (%p194) target = $region16
        $region15: #{closed_call.87} parent=11 // pred_region
          %s198 = ssub.s32 64, 64
          %199 = vsyncadd [#allocation3], %s198
          %s201 = sshll.u32 %s3, 4
          %s202 = int_to_ptr.vmem [resolvable:$true] %s201
          %204 = dma.vmem_to_smem %s202, 64, [#allocation2], [#allocation3]
        $region16: #{closed_call.87} parent=11 // pred_fallthru
          _
        // Predicated region
        $region17: #{closed_call.87} parent=11 // pred_check
          %p205 = pneg %p151
        $region18: #{closed_call.87} parent=11 // pred_check_branch
          %207 = sbr.rel (%p205) target = $region20
        $region19: #{closed_call.87} parent=11 // pred_region
          %s209 = ssub.s32 128, 128
          %210 = vsyncadd [#allocation5], %s209
          %s212 = sshll.u32 %s4, 4
          %s213 = int_to_ptr.vmem [resolvable:$true] %s212
          %215 = dma.vmem_to_smem %s213, 128, [#allocation4], [#allocation5]
        $region20: #{closed_call.87} parent=11 // pred_fallthru
          _
      $region12: #{closed_call.87} parent=5 // pred_fallthru
        _
      %p216 = scmp.lt.s32.totalorder %s13, 2
      // Predicated region
      $region21: #{closed_call.87} parent=5 // pred_check
        %p217 = pneg %p216
      $region22: #{closed_call.87} parent=5 // pred_check_branch
        %219 = sbr.rel (%p217) target = $region24
      $region23: #{closed_call.87} parent=5 // pred_region
        // Predicated region
        $region25: #{closed_call.87} parent=23 // pred_check
          %p220 = pneg %p47
        $region26: #{closed_call.87} parent=23 // pred_check_branch
          %222 = sbr.rel (%p220) target = $region28
        $region27: #{closed_call.87} parent=23 // pred_region
          %s223 = smul.u32 2, %s21
          %p224 = scmp.lt.s32.totalorder %s20, 1
          %s225 = scalar_select %p224, %s20, 1
          %p226 = scmp.lt.s32.totalorder %s223, 1
          %s227 = scalar_select %p226, %s223, 1
          %s228 = smul.addr %s225, 2
          %s229 = sadd.s32 %s227, %s228
          %s230 = smul.addr %s229, 4
          %s231 = scalar_lea.vmem %s0, %s230
          %s232 = smul.u32 2, %s21
        $region28: #{closed_call.87} parent=23 // pred_fallthru
          _
        // Predicated region
        $region29: #{closed_call.87} parent=23 // pred_check
          %p233 = pneg %p75
        $region30: #{closed_call.87} parent=23 // pred_check_branch
          %235 = sbr.rel (%p233) target = $region32
        $region31: #{closed_call.87} parent=23 // pred_region
          %s236 = smul.u32 2, %s21
          %p237 = scmp.lt.s32.totalorder %s20, 1
          %s238 = scalar_select %p237, %s20, 1
          %p239 = scmp.lt.s32.totalorder %s236, 1
          %s240 = scalar_select %p239, %s236, 1
          %s241 = smul.addr %s238, 2
          %s242 = sadd.s32 %s240, %s241
          %s243 = smul.addr %s242, 4
          %s244 = scalar_lea.vmem %s1, %s243
          %s245 = smul.u32 2, %s21
        $region32: #{closed_call.87} parent=23 // pred_fallthru
          _
        // Predicated region
        $region33: #{closed_call.87} parent=23 // pred_check
          %p246 = pneg %p103
        $region34: #{closed_call.87} parent=23 // pred_check_branch
          %248 = sbr.rel (%p246) target = $region36
        $region35: #{closed_call.87} parent=23 // pred_region
          %s249 = smul.u32 2, %s21
          %p250 = scmp.lt.s32.totalorder %s20, 1
          %s251 = scalar_select %p250, %s20, 1
          %p252 = scmp.lt.s32.totalorder %s249, 1
          %s253 = scalar_select %p252, %s249, 1
          %s254 = smul.addr %s251, 2
          %s255 = sadd.s32 %s253, %s254
          %s256 = smul.addr %s255, 8
          %s257 = scalar_lea.vmem %s2, %s256
          %s258 = smul.u32 2, %s21
        $region36: #{closed_call.87} parent=23 // pred_fallthru
          _
      $region24: #{closed_call.87} parent=5 // pred_fallthru
        _
      %p259 = scmp.le.s32.totalorder 1, %s13
      %p260 = scmp.lt.s32.totalorder %s13, 3
      %p261 = pnand %p259, %p260
      %p262 = pneg %p261
      // Predicated region
      $region37: #{closed_call.87} parent=5 // pred_check
        _
      $region38: #{closed_call.87} parent=5 // pred_check_branch
        %264 = sbr.rel (%p261) target = $region40
      $region39: #{closed_call.87} parent=5 // pred_region
        %s265 = ssub.s32 %s13, 1
        // Predicated region
        $region41: #{closed_call.87} parent=39 // pred_check
          %p266 = pneg %p130
        $region42: #{closed_call.87} parent=39 // pred_check_branch
          %268 = sbr.rel (%p266) target = $region44
        $region43: #{closed_call.87} parent=39 // pred_region
          %269 = dma.done [#allocation3], 64
        $region44: #{closed_call.87} parent=39 // pred_fallthru
          _
        // Predicated region
        $region45: #{closed_call.87} parent=39 // pred_check
          %p270 = pneg %p151
        $region46: #{closed_call.87} parent=39 // pred_check_branch
          %272 = sbr.rel (%p270) target = $region48
        $region47: #{closed_call.87} parent=39 // pred_region
          %273 = dma.done [#allocation5], 128
        $region48: #{closed_call.87} parent=39 // pred_fallthru
          _
        %274 = sfence
        %s275 = smul.u32 2, %s23
        %p276 = scmp.lt.s32.totalorder %s22, 1
        %s277 = scalar_select %p276, %s22, 1
        %p278 = scmp.lt.s32.totalorder %s275, 1
        %s279 = scalar_select %p278, %s275, 1
        %s280 = smul.addr %s277, 2
        %s281 = sadd.s32 %s279, %s280
        %s282 = smul.addr %s281, 4
        %s283 = scalar_lea.vmem %s0, %s282
        %p284 = pneg %p53
        %p285 = pneg %p50
        %s286 = smul.u32 2, %s23
        %p287 = scmp.lt.s32.totalorder %s22, 1
        %s288 = scalar_select %p287, %s22, 1
        %p289 = scmp.lt.s32.totalorder %s286, 1
        %s290 = scalar_select %p289, %s286, 1
        %s291 = smul.addr %s288, 2
        %s292 = sadd.s32 %s290, %s291
        %s293 = smul.addr %s292, 4
        %s294 = scalar_lea.vmem %s1, %s293
        %p295 = pneg %p81
        %p296 = pneg %p78
        %s297 = smul.u32 2, %s23
        %p298 = scmp.lt.s32.totalorder %s22, 1
        %s299 = scalar_select %p298, %s22, 1
        %p300 = scmp.lt.s32.totalorder %s297, 1
        %s301 = scalar_select %p300, %s297, 1
        %s302 = smul.addr %s299, 2
        %s303 = sadd.s32 %s301, %s302
        %s304 = smul.addr %s303, 8
        %s305 = scalar_lea.vmem %s2, %s304
        %p306 = pneg %p109
        %p307 = pneg %p106
        %p308 = pneg %p130
        %p309 = pneg %p127
        %p310 = pneg %p151
        %p311 = pneg %p148
        %p312 = pneg %p179
        %p313 = pneg %p176
        %s314 = smul.u32 2, %s23
        %p315 = scmp.lt.s32.totalorder %s22, 1
        %s316 = scalar_select %p315, %s22, 1
        %p317 = scmp.lt.s32.totalorder %s314, 1
        %s318 = scalar_select %p317, %s314, 1
        %s319 = smul.addr %s316, 2
        %s320 = sadd.s32 %s318, %s319
        %s321 = smul.addr %s320, 4
        %s322 = scalar_lea.vmem %s5, %s321
        %s323 = smul.u32 2, %s23
        %p324 = scmp.lt.s32.totalorder %s22, 1
        %s325 = scalar_select %p324, %s22, 1
        %p326 = scmp.lt.s32.totalorder %s323, 1
        %s327 = scalar_select %p326, %s323, 1
        %s328 = smul.addr %s325, 2
        %s329 = sadd.s32 %s327, %s328
        %s330 = smul.addr %s329, 4
        %s331 = scalar_lea.vmem %s0, %s330
        %s332 = smul.u32 2, %s23
        %s333 = smul.u32 2, %s23
        %p334 = scmp.lt.s32.totalorder %s22, 1
        %s335 = scalar_select %p334, %s22, 1
        %p336 = scmp.lt.s32.totalorder %s333, 1
        %s337 = scalar_select %p336, %s333, 1
        %s338 = smul.addr %s335, 2
        %s339 = sadd.s32 %s337, %s338
        %s340 = smul.addr %s339, 4
        %s341 = scalar_lea.vmem %s1, %s340
        %s342 = smul.u32 2, %s23
        %s343 = smul.u32 2, %s23
        %p344 = scmp.lt.s32.totalorder %s22, 1
        %s345 = scalar_select %p344, %s22, 1
        %p346 = scmp.lt.s32.totalorder %s343, 1
        %s347 = scalar_select %p346, %s343, 1
        %s348 = smul.addr %s345, 2
        %s349 = sadd.s32 %s347, %s348
        %s350 = smul.addr %s349, 8
        %s351 = scalar_lea.vmem %s2, %s350
        %s352 = smul.u32 2, %s23
        %s353 = smul.u32 2, %s23
        %p354 = scmp.lt.s32.totalorder %s22, 1
        %s355 = scalar_select %p354, %s22, 1
        %p356 = scmp.lt.s32.totalorder %s353, 1
        %s357 = scalar_select %p356, %s353, 1
        %s358 = smul.addr %s355, 2
        %s359 = sadd.s32 %s357, %s358
        %s360 = smul.addr %s359, 4
        %s361 = scalar_lea.vmem %s5, %s360
        %s362 = smul.u32 2, %s23
        %v363 = vld [vmem:[%s341] sm:$0xff]
        %v364 = vld [vmem:[%s351] sm:$0xff]
        %v365 = vld [vmem:[%s351 + $0x8] sm:$0xff]
        %v366 = vld [vmem:[%s331] sm:$0xff]
        %s367 = sld [smem:[#allocation4]]
        %v368 = vstv %s367
        %v369 = vmul.f32 %v368, %v363
        %s370 = sld [smem:[#allocation4 + $0x1]]
        %v371 = vstv %s370
        %v372 = vmul.f32 %v371, %v363
        %v374 = vrot.slane %v372, 5
        %v375 = vrot.slane %v374, 4
        %v377 = vadd.f32 %v369, %v375
        %s378 = sld [smem:[#allocation4 + $0x2]]
        %v379 = vstv %s378
        %v380 = vmul.f32 %v379, %v363
        %v382 = vrot.slane %v380, 6
        %v383 = vrot.slane %v382, 4
        %v385 = vadd.f32 %v377, %v383
        %s386 = sld [smem:[#allocation4 + $0x3]]
        %v387 = vstv %s386
        %v388 = vmul.f32 %v387, %v363
        %v390 = vrot.slane %v388, 7
        %v391 = vrot.slane %v390, 4
        %v393 = vadd.f32 %v385, %v391
        %v394 = vmul.f32 %v364, %v364
        %v395 = vmul.f32 %v365, %v365
        %v396 = vsub.f32 1.0, %v394
        %v397 = vsub.f32 1.0, %v395
        %v400 = vcombine.low %v396, %v397
        %v402 = vmul.f32 %v393, %v400
        %s403 = sld [smem:[#allocation4 + $0x80]]
        %v404 = vstv %s403
        %v405 = vmul.f32 %v404, %v363
        %s406 = sld [smem:[#allocation4 + $0x81]]
        %v407 = vstv %s406
        %v408 = vmul.f32 %v407, %v363
        %v410 = vrot.slane %v408, 5
        %v411 = vrot.slane %v410, 4
        %v413 = vadd.f32 %v405, %v411
        %s414 = sld [smem:[#allocation4 + $0x82]]
        %v415 = vstv %s414
        %v416 = vmul.f32 %v415, %v363
        %v418 = vrot.slane %v416, 6
        %v419 = vrot.slane %v418, 4
        %v421 = vadd.f32 %v413, %v419
        %s422 = sld [smem:[#allocation4 + $0x83]]
        %v423 = vstv %s422
        %v424 = vmul.f32 %v423, %v363
        %v426 = vrot.slane %v424, 7
        %v427 = vrot.slane %v426, 4
        %v429 = vadd.f32 %v421, %v427
        %v430 = vrot.slane %v400, 5
        %v431 = vrot.slane %v430, 4
        %v433 = vmul.f32 %v429, %v431
        %s434 = sld [smem:[#allocation4 + $0x100]]
        %v435 = vstv %s434
        %v436 = vmul.f32 %v435, %v363
        %s437 = sld [smem:[#allocation4 + $0x101]]
        %v438 = vstv %s437
        %v439 = vmul.f32 %v438, %v363
        %v441 = vrot.slane %v439, 5
        %v442 = vrot.slane %v441, 4
        %v444 = vadd.f32 %v436, %v442
        %s445 = sld [smem:[#allocation4 + $0x102]]
        %v446 = vstv %s445
        %v447 = vmul.f32 %v446, %v363
        %v449 = vrot.slane %v447, 6
        %v450 = vrot.slane %v449, 4
        %v452 = vadd.f32 %v444, %v450
        %s453 = sld [smem:[#allocation4 + $0x103]]
        %v454 = vstv %s453
        %v455 = vmul.f32 %v454, %v363
        %v457 = vrot.slane %v455, 7
        %v458 = vrot.slane %v457, 4
        %v460 = vadd.f32 %v452, %v458
        %v461 = vrot.slane %v400, 6
        %v462 = vrot.slane %v461, 4
        %v464 = vmul.f32 %v460, %v462
        %s465 = sld [smem:[#allocation4 + $0x180]]
        %v466 = vstv %s465
        %v467 = vmul.f32 %v466, %v363
        %s468 = sld [smem:[#allocation4 + $0x181]]
        %v469 = vstv %s468
        %v470 = vmul.f32 %v469, %v363
        %v472 = vrot.slane %v470, 5
        %v473 = vrot.slane %v472, 4
        %v475 = vadd.f32 %v467, %v473
        %s476 = sld [smem:[#allocation4 + $0x182]]
        %v477 = vstv %s476
        %v478 = vmul.f32 %v477, %v363
        %v480 = vrot.slane %v478, 6
        %v481 = vrot.slane %v480, 4
        %v483 = vadd.f32 %v475, %v481
        %s484 = sld [smem:[#allocation4 + $0x183]]
        %v485 = vstv %s484
        %v486 = vmul.f32 %v485, %v363
        %v488 = vrot.slane %v486, 7
        %v489 = vrot.slane %v488, 4
        %v491 = vadd.f32 %v483, %v489
        %v492 = vrot.slane %v400, 7
        %v493 = vrot.slane %v492, 4
        %v495 = vmul.f32 %v491, %v493
        %s496 = sld [smem:[#allocation4 + $0x200]]
        %v497 = vstv %s496
        %v498 = vmul.f32 %v497, %v363
        %s499 = sld [smem:[#allocation4 + $0x201]]
        %v500 = vstv %s499
        %v501 = vmul.f32 %v500, %v363
        %v503 = vrot.slane %v501, 5
        %v504 = vrot.slane %v503, 4
        %v506 = vadd.f32 %v498, %v504
        %s507 = sld [smem:[#allocation4 + $0x202]]
        %v508 = vstv %s507
        %v509 = vmul.f32 %v508, %v363
        %v511 = vrot.slane %v509, 6
        %v512 = vrot.slane %v511, 4
        %v514 = vadd.f32 %v506, %v512
        %s515 = sld [smem:[#allocation4 + $0x203]]
        %v516 = vstv %s515
        %v517 = vmul.f32 %v516, %v363
        %v519 = vrot.slane %v517, 7
        %v520 = vrot.slane %v519, 4
        %v522 = vadd.f32 %v514, %v520
        %v523 = vcombine.high %v396, %v397
        %v525 = vmul.f32 %v522, %v523
        %s526 = sld [smem:[#allocation4 + $0x280]]
        %v527 = vstv %s526
        %v528 = vmul.f32 %v527, %v363
        %s529 = sld [smem:[#allocation4 + $0x281]]
        %v530 = vstv %s529
        %v531 = vmul.f32 %v530, %v363
        %v533 = vrot.slane %v531, 5
        %v534 = vrot.slane %v533, 4
        %v536 = vadd.f32 %v528, %v534
        %s537 = sld [smem:[#allocation4 + $0x282]]
        %v538 = vstv %s537
        %v539 = vmul.f32 %v538, %v363
        %v541 = vrot.slane %v539, 6
        %v542 = vrot.slane %v541, 4
        %v544 = vadd.f32 %v536, %v542
        %s545 = sld [smem:[#allocation4 + $0x283]]
        %v546 = vstv %s545
        %v547 = vmul.f32 %v546, %v363
        %v549 = vrot.slane %v547, 7
        %v550 = vrot.slane %v549, 4
        %v552 = vadd.f32 %v544, %v550
        %v553 = vrot.slane %v523, 5
        %v554 = vrot.slane %v553, 4
        %v556 = vmul.f32 %v552, %v554
        %s557 = sld [smem:[#allocation4 + $0x300]]
        %v558 = vstv %s557
        %v559 = vmul.f32 %v558, %v363
        %s560 = sld [smem:[#allocation4 + $0x301]]
        %v561 = vstv %s560
        %v562 = vmul.f32 %v561, %v363
        %v564 = vrot.slane %v562, 5
        %v565 = vrot.slane %v564, 4
        %v567 = vadd.f32 %v559, %v565
        %s568 = sld [smem:[#allocation4 + $0x302]]
        %v569 = vstv %s568
        %v570 = vmul.f32 %v569, %v363
        %v572 = vrot.slane %v570, 6
        %v573 = vrot.slane %v572, 4
        %v575 = vadd.f32 %v567, %v573
        %s576 = sld [smem:[#allocation4 + $0x303]]
        %v577 = vstv %s576
        %v578 = vmul.f32 %v577, %v363
        %v580 = vrot.slane %v578, 7
        %v581 = vrot.slane %v580, 4
        %v583 = vadd.f32 %v575, %v581
        %v584 = vrot.slane %v523, 6
        %v585 = vrot.slane %v584, 4
        %v587 = vmul.f32 %v583, %v585
        %s588 = sld [smem:[#allocation4 + $0x380]]
        %v589 = vstv %s588
        %v590 = vmul.f32 %v589, %v363
        %s591 = sld [smem:[#allocation4 + $0x381]]
        %v592 = vstv %s591
        %v593 = vmul.f32 %v592, %v363
        %v595 = vrot.slane %v593, 5
        %v596 = vrot.slane %v595, 4
        %v598 = vadd.f32 %v590, %v596
        %s599 = sld [smem:[#allocation4 + $0x382]]
        %v600 = vstv %s599
        %v601 = vmul.f32 %v600, %v363
        %v603 = vrot.slane %v601, 6
        %v604 = vrot.slane %v603, 4
        %v606 = vadd.f32 %v598, %v604
        %s607 = sld [smem:[#allocation4 + $0x383]]
        %v608 = vstv %s607
        %v609 = vmul.f32 %v608, %v363
        %v611 = vrot.slane %v609, 7
        %v612 = vrot.slane %v611, 4
        %v614 = vadd.f32 %v606, %v612
        %v615 = vrot.slane %v523, 7
        %v616 = vrot.slane %v615, 4
        %v618 = vmul.f32 %v614, %v616
        %s619 = sld [smem:[#allocation2]]
        %v620 = vstv %s619
        %v621 = vmul.f32 %v620, %v402
        %v622 = vadd.f32 %v363, %v621
        %s623 = sld [smem:[#allocation2 + $0x1]]
        %v624 = vstv %s623
        %v625 = vmul.f32 %v624, %v433
        %v626 = vadd.f32 %v622, %v625
        %s627 = sld [smem:[#allocation2 + $0x2]]
        %v628 = vstv %s627
        %v629 = vmul.f32 %v628, %v464
        %v630 = vadd.f32 %v626, %v629
        %s631 = sld [smem:[#allocation2 + $0x3]]
        %v632 = vstv %s631
        %v633 = vmul.f32 %v632, %v495
        %v634 = vadd.f32 %v630, %v633
        %s635 = sld [smem:[#allocation2 + $0x4]]
        %v636 = vstv %s635
        %v637 = vmul.f32 %v636, %v525
        %v638 = vadd.f32 %v634, %v637
        %s639 = sld [smem:[#allocation2 + $0x5]]
        %v640 = vstv %s639
        %v641 = vmul.f32 %v640, %v556
        %v642 = vadd.f32 %v638, %v641
        %s643 = sld [smem:[#allocation2 + $0x6]]
        %v644 = vstv %s643
        %v645 = vmul.f32 %v644, %v587
        %v646 = vadd.f32 %v642, %v645
        %s647 = sld [smem:[#allocation2 + $0x7]]
        %v648 = vstv %s647
        %v649 = vmul.f32 %v648, %v618
        %v650 = vadd.f32 %v646, %v649
        %v651 = vadd.f32 %v366, %v650
        %v654 = vunpack.c.l.s4 1966171168
        %v655 = vunpack.c.0.s8 %v654
        %v656 = vlaneseq
        %v657 = vshrl.u32 %v656, 7
        %v658 = vsub.s32 %v655, %v657
        %v659 = vrot.slane %v651, %v658
        %v661 = vunpack.c.l.s4 1966171168
        %v662 = vunpack.c.0.s8 %v661
        %v663 = vlaneseq
        %v664 = vshrl.u32 %v663, 7
        %v665 = vsub.s32 %v662, %v664
        %v666 = vrot.slane %v659, %v665
        %v668 = vlaneseq
        %vm669 = vcmp.ge.s32.totalorder %v668, 0
        %vm670 = vcmp.lt.s32.totalorder %v668, 256
        %vm671 = vmand %vm669, %vm670
        %672 = vst.msk [vmem:[%s361] ss:$4 sm:$0x3] %vm671, %v666
        %s673 = sld [smem:[#allocation2 + $0x80]]
        %v674 = vstv %s673
        %v675 = vmul.f32 %v674, %v402
        %v677 = vrot.slane %v675, 7
        %v679 = vadd.f32 %v363, %v677
        %s680 = sld [smem:[#allocation2 + $0x81]]
        %v681 = vstv %s680
        %v682 = vmul.f32 %v681, %v433
        %v684 = vrot.slane %v682, 7
        %v686 = vadd.f32 %v679, %v684
        %s687 = sld [smem:[#allocation2 + $0x82]]
        %v688 = vstv %s687
        %v689 = vmul.f32 %v688, %v464
        %v691 = vrot.slane %v689, 7
        %v693 = vadd.f32 %v686, %v691
        %s694 = sld [smem:[#allocation2 + $0x83]]
        %v695 = vstv %s694
        %v696 = vmul.f32 %v695, %v495
        %v698 = vrot.slane %v696, 7
        %v700 = vadd.f32 %v693, %v698
        %s701 = sld [smem:[#allocation2 + $0x84]]
        %v702 = vstv %s701
        %v703 = vmul.f32 %v702, %v525
        %v705 = vrot.slane %v703, 7
        %v707 = vadd.f32 %v700, %v705
        %s708 = sld [smem:[#allocation2 + $0x85]]
        %v709 = vstv %s708
        %v710 = vmul.f32 %v709, %v556
        %v712 = vrot.slane %v710, 7
        %v714 = vadd.f32 %v707, %v712
        %s715 = sld [smem:[#allocation2 + $0x86]]
        %v716 = vstv %s715
        %v717 = vmul.f32 %v716, %v587
        %v719 = vrot.slane %v717, 7
        %v721 = vadd.f32 %v714, %v719
        %s722 = sld [smem:[#allocation2 + $0x87]]
        %v723 = vstv %s722
        %v724 = vmul.f32 %v723, %v618
        %v726 = vrot.slane %v724, 7
        %v728 = vadd.f32 %v721, %v726
        %v729 = vadd.f32 %v366, %v728
        %v732 = vunpack.c.l.s4 1966171168
        %v733 = vunpack.c.0.s8 %v732
        %v734 = vlaneseq
        %v735 = vshrl.u32 %v734, 7
        %v736 = vsub.s32 %v733, %v735
        %v737 = vrot.slane %v729, %v736
        %v738 = vcombine.high %v737, %v737
        %v740 = vunpack.c.l.s4 1966171168
        %v741 = vunpack.c.0.s8 %v740
        %v742 = vlaneseq
        %v743 = vshrl.u32 %v742, 7
        %v744 = vsub.s32 %v741, %v743
        %v745 = vrot.slane %v738, %v744
        %s747 = scalar_lea.vmem %s361, 1
        %748 = vst.msk [vmem:[%s747] ss:$4 sm:$0x3] %vm671, %v745
        %s749 = sld [smem:[#allocation2 + $0x100]]
        %v750 = vstv %s749
        %v751 = vmul.f32 %v750, %v402
        %v753 = vrot.slane %v751, 6
        %v755 = vadd.f32 %v363, %v753
        %s756 = sld [smem:[#allocation2 + $0x101]]
        %v757 = vstv %s756
        %v758 = vmul.f32 %v757, %v433
        %v760 = vrot.slane %v758, 6
        %v762 = vadd.f32 %v755, %v760
        %s763 = sld [smem:[#allocation2 + $0x102]]
        %v764 = vstv %s763
        %v765 = vmul.f32 %v764, %v464
        %v767 = vrot.slane %v765, 6
        %v769 = vadd.f32 %v762, %v767
        %s770 = sld [smem:[#allocation2 + $0x103]]
        %v771 = vstv %s770
        %v772 = vmul.f32 %v771, %v495
        %v774 = vrot.slane %v772, 6
        %v776 = vadd.f32 %v769, %v774
        %s777 = sld [smem:[#allocation2 + $0x104]]
        %v778 = vstv %s777
        %v779 = vmul.f32 %v778, %v525
        %v781 = vrot.slane %v779, 6
        %v783 = vadd.f32 %v776, %v781
        %s784 = sld [smem:[#allocation2 + $0x105]]
        %v785 = vstv %s784
        %v786 = vmul.f32 %v785, %v556
        %v788 = vrot.slane %v786, 6
        %v790 = vadd.f32 %v783, %v788
        %s791 = sld [smem:[#allocation2 + $0x106]]
        %v792 = vstv %s791
        %v793 = vmul.f32 %v792, %v587
        %v795 = vrot.slane %v793, 6
        %v797 = vadd.f32 %v790, %v795
        %s798 = sld [smem:[#allocation2 + $0x107]]
        %v799 = vstv %s798
        %v800 = vmul.f32 %v799, %v618
        %v802 = vrot.slane %v800, 6
        %v804 = vadd.f32 %v797, %v802
        %v805 = vadd.f32 %v366, %v804
        %v808 = vunpack.c.l.s4 1966171168
        %v809 = vunpack.c.0.s8 %v808
        %v810 = vlaneseq
        %v811 = vshrl.u32 %v810, 7
        %v812 = vsub.s32 %v809, %v811
        %v813 = vrot.slane %v805, %v812
        %v815 = vunpack.c.l.s4 1966171168
        %v816 = vunpack.c.0.s8 %v815
        %v817 = vlaneseq
        %v818 = vshrl.u32 %v817, 7
        %v819 = vsub.s32 %v816, %v818
        %v820 = vrot.slane %v813, %v819
        %v821 = vcombine.high %v820, %v820
        %s823 = scalar_lea.vmem %s361, 2
        %824 = vst.msk [vmem:[%s823] ss:$4 sm:$0x3] %vm671, %v821
        %s825 = sld [smem:[#allocation2 + $0x180]]
        %v826 = vstv %s825
        %v827 = vmul.f32 %v826, %v402
        %v829 = vrot.slane %v827, 5
        %v831 = vadd.f32 %v363, %v829
        %s832 = sld [smem:[#allocation2 + $0x181]]
        %v833 = vstv %s832
        %v834 = vmul.f32 %v833, %v433
        %v836 = vrot.slane %v834, 5
        %v838 = vadd.f32 %v831, %v836
        %s839 = sld [smem:[#allocation2 + $0x182]]
        %v840 = vstv %s839
        %v841 = vmul.f32 %v840, %v464
        %v843 = vrot.slane %v841, 5
        %v845 = vadd.f32 %v838, %v843
        %s846 = sld [smem:[#allocation2 + $0x183]]
        %v847 = vstv %s846
        %v848 = vmul.f32 %v847, %v495
        %v850 = vrot.slane %v848, 5
        %v852 = vadd.f32 %v845, %v850
        %s853 = sld [smem:[#allocation2 + $0x184]]
        %v854 = vstv %s853
        %v855 = vmul.f32 %v854, %v525
        %v857 = vrot.slane %v855, 5
        %v859 = vadd.f32 %v852, %v857
        %s860 = sld [smem:[#allocation2 + $0x185]]
        %v861 = vstv %s860
        %v862 = vmul.f32 %v861, %v556
        %v864 = vrot.slane %v862, 5
        %v866 = vadd.f32 %v859, %v864
        %s867 = sld [smem:[#allocation2 + $0x186]]
        %v868 = vstv %s867
        %v869 = vmul.f32 %v868, %v587
        %v871 = vrot.slane %v869, 5
        %v873 = vadd.f32 %v866, %v871
        %s874 = sld [smem:[#allocation2 + $0x187]]
        %v875 = vstv %s874
        %v876 = vmul.f32 %v875, %v618
        %v878 = vrot.slane %v876, 5
        %v880 = vadd.f32 %v873, %v878
        %v881 = vadd.f32 %v366, %v880
        %v884 = vunpack.c.l.s4 1966171168
        %v885 = vunpack.c.0.s8 %v884
        %v886 = vlaneseq
        %v887 = vshrl.u32 %v886, 7
        %v888 = vsub.s32 %v885, %v887
        %v889 = vrot.slane %v881, %v888
        %v890 = vcombine.high %v889, %v889
        %v892 = vunpack.c.l.s4 1966171168
        %v893 = vunpack.c.0.s8 %v892
        %v894 = vlaneseq
        %v895 = vshrl.u32 %v894, 7
        %v896 = vsub.s32 %v893, %v895
        %v897 = vrot.slane %v890, %v896
        %v898 = vcombine.high %v897, %v897
        %s900 = scalar_lea.vmem %s361, 3
        %901 = vst.msk [vmem:[%s900] ss:$4 sm:$0x3] %vm671, %v898
        %s902 = smul.u32 2, %s23
        %p903 = scmp.lt.s32.totalorder %s22, 1
        %s904 = scalar_select %p903, %s22, 1
        %p905 = scmp.lt.s32.totalorder %s902, 1
        %s906 = scalar_select %p905, %s902, 1
        %s907 = smul.addr %s904, 2
        %s908 = sadd.s32 %s906, %s907
        %s909 = smul.addr %s908, 4
        %s910 = scalar_lea.vmem %s5, %s909
        // Predicated region
        $region49: #{closed_call.87} parent=39 // pred_check
          %p911 = pneg %p176
        $region50: #{closed_call.87} parent=39 // pred_check_branch
          %913 = sbr.rel (%p911) target = $region52
        $region51: #{closed_call.87} parent=39 // pred_region
          %s914 = smul.u32 2, %s23
        $region52: #{closed_call.87} parent=39 // pred_fallthru
          _
      $region40: #{closed_call.87} parent=5 // pred_fallthru
        _
      %p915 = scmp.le.s32.totalorder 2, %s13
      // Predicated region
      $region53: #{closed_call.87} parent=5 // pred_check
        %p916 = pneg %p915
      $region54: #{closed_call.87} parent=5 // pred_check_branch
        %918 = sbr.rel (%p916) target = $region56
      $region55: #{closed_call.87} parent=5 // pred_region
        %s919 = ssub.s32 %s13, 2
        // Predicated region
        $region57: #{closed_call.87} parent=55 // pred_check
          %p920 = pneg %p182
        $region58: #{closed_call.87} parent=55 // pred_check_branch
          %922 = sbr.rel (%p920) target = $region60
        $region59: #{closed_call.87} parent=55 // pred_region
          %s923 = smul.u32 2, %s25
          %p924 = scmp.lt.s32.totalorder %s24, 1
          %s925 = scalar_select %p924, %s24, 1
          %p926 = scmp.lt.s32.totalorder %s923, 1
          %s927 = scalar_select %p926, %s923, 1
          %s928 = smul.addr %s925, 2
          %s929 = sadd.s32 %s927, %s928
          %s930 = smul.addr %s929, 4
          %s931 = scalar_lea.vmem %s5, %s930
        $region60: #{closed_call.87} parent=55 // pred_fallthru
          _
      $region56: #{closed_call.87} parent=5 // pred_fallthru
        _
    $region6: #{closed_call.87} parent=1 // loop_footer
      %s17 = sadd.s32 1, %s13
    $region7: #{closed_call.87} parent=1 // loop_footer_branch
      %12 = sbr.rel target = $region3
    $region8: #{closed_call.87} parent=1 // loop_exit
      _
    %932 = vsyncpa [#allocation3], 1
    %s933 = scalar_lea.sflag [#allocation3], 1
    %934 = vsyncpa %s933, 1
    %935 = vsyncpa [#allocation5], 1

// kernel: closed_call.100
$region0: #{closed_call.100}
  #allocation0 [shape = 'u32[]', space=smem, size = 0x4, offset = 0x4, fixed_abs, tag = 'smem constant byte address 0x4 - core index']
  #allocation1 [shape = 'u32[144,128]{1,0:T(1,128)}', space=vmem, size = 0x12000, scoped, tag = 'internal scratch']
  %s0 = inlined_call_operand.vmem [shape: f32[2,4,256], index: 0, kind: input, shape index: {}]
  %s1 = inlined_call_operand.vmem [shape: f32[2,4,256], index: 1, kind: input, shape index: {}]
  %s2 = inlined_call_operand.vmem [shape: f32[2,4,256], index: 2, kind: input, shape index: {}]
  %s3 = inlined_call_operand.vmem [shape: f32[4], index: 3, kind: input, shape index: {}]
  %s4 = inlined_call_operand.vmem [shape: f32[2,4,256], index: 4, kind: output, shape index: {0}]
  %s5 = inlined_call_operand.vmem [shape: f32[2,4,256], index: 5, kind: output, shape index: {1}]
  %6 = xla_tuple %s4, %s5
  %s7 = sld [smem:[#allocation0]]
  $region61: #{closed_call.100} parent=0
    _
  %s9 = ssub.s32 1, %s7
  %s10 = scalar_select 0, %s9, %s7
  $region1: #{closed_call.100} parent=0
    #allocation2 [shape = 'u8[512]{0}', space=smem, size = 0x200, scoped, tag = 'input window, operand 3, single buffered']
    #allocation3 [shape = 's32[2]{0}', space=sflag, size = 0x8, scoped, tag = 'scoped memory for closed_call.100']
    %11 = vsyncpa [#allocation3], 0
    loop: start=0, step=1, limit=4
    $region2: #{closed_call.100} parent=1 // loop_pre_header
      _
    $region3: #{closed_call.100} parent=1 // loop_header
      %s13 = sphi 0, %s17
      %p14 = scmp.ge.s32.totalorder %s13, 4
      %s20 = sphi 0, %s32
      %s21 = sphi 0, %s28
      %s22 = sphi 0, %s20
      %s23 = sphi 0, %s21
      %s24 = sphi 0, %s22
      %s25 = sphi 0, %s23
      %s37 = sphi 0, %s39
      %s40 = sphi 0, %s37
      %s41 = sphi 0, %s40
      %s57 = sphi 0, %s41
      %s65 = sphi 0, %s67
      %s68 = sphi 0, %s65
      %s69 = sphi 0, %s68
      %s85 = sphi 0, %s69
      %s93 = sphi 0, %s95
      %s96 = sphi 0, %s93
      %s97 = sphi 0, %s96
      %s113 = sphi 0, %s97
      %s117 = sphi 0, %s117
      %s119 = sphi 0, %s117
      %s120 = sphi 0, %s119
      %s134 = sphi 0, %s120
      %s142 = sphi 0, %s144
      %s145 = sphi 0, %s142
      %s146 = sphi 0, %s145
      %s162 = sphi 0, %s146
      %s170 = sphi 0, %s172
      %s173 = sphi 0, %s170
      %s174 = sphi 0, %s173
      %s190 = sphi 0, %s174
    $region4: #{closed_call.100} parent=1 // loop_header_branch
      %16 = sbr.rel (%p14) target = $region8
    $region5: #{closed_call.100} parent=1 // loop_body
      %s18 = ssub.s32 %s13, 1
      %s19 = ssub.s32 %s13, 2
      %s26 = sadd.s32 1, %s21
      %p27 = scmp.ge.s32.totalorder %s26, 1
      %s28 = scalar_select %p27, 0, %s26
      %s29 = sadd.s32 1, %s20
      %s30 = scalar_select %p27, %s29, %s20
      %p31 = scmp.ge.s32.totalorder %s30, 2
      %s32 = scalar_select %p31, 0, %s30
      %s33 = ssub.s32 %s20, %s32
      %s34 = ssub.s32 %s21, %s28
      %s35 = sor.u32 %s33, %s34
      %p36 = scmp.eq.s32.totalorder %s35, 0
      %s38 = sadd.s32 %s37, 1
      %s39 = scalar_select %p36, %s37, %s38
      %p42 = pneg %p36
      %p43 = scmp.eq.s32.totalorder %s13, 1
      %p44 = por %p42, %p43
      %p45 = scmp.ne.s32.totalorder %s37, %s40
      %p46 = scmp.eq.s32.totalorder %s13, 0
      %p47 = por %p45, %p46
      %p48 = scmp.ne.s32.totalorder %s37, %s40
      %p49 = scmp.eq.s32.totalorder %s18, 1
      %p50 = por %p48, %p49
      %p51 = scmp.ne.s32.totalorder %s40, %s41
      %p52 = scmp.eq.s32.totalorder %s18, 0
      %p53 = por %p51, %p52
      %p54 = scmp.ne.s32.totalorder %s40, %s41
      %p55 = scmp.eq.s32.totalorder %s19, 1
      %p56 = por %p54, %p55
      %p58 = scmp.ne.s32.totalorder %s41, %s57
      %p59 = scmp.eq.s32.totalorder %s19, 0
      %p60 = por %p58, %p59
      %s61 = ssub.s32 %s20, %s32
      %s62 = ssub.s32 %s21, %s28
      %s63 = sor.u32 %s61, %s62
      %p64 = scmp.eq.s32.totalorder %s63, 0
      %s66 = sadd.s32 %s65, 1
      %s67 = scalar_select %p64, %s65, %s66
      %p70 = pneg %p64
      %p71 = scmp.eq.s32.totalorder %s13, 1
      %p72 = por %p70, %p71
      %p73 = scmp.ne.s32.totalorder %s65, %s68
      %p74 = scmp.eq.s32.totalorder %s13, 0
      %p75 = por %p73, %p74
      %p76 = scmp.ne.s32.totalorder %s65, %s68
      %p77 = scmp.eq.s32.totalorder %s18, 1
      %p78 = por %p76, %p77
      %p79 = scmp.ne.s32.totalorder %s68, %s69
      %p80 = scmp.eq.s32.totalorder %s18, 0
      %p81 = por %p79, %p80
      %p82 = scmp.ne.s32.totalorder %s68, %s69
      %p83 = scmp.eq.s32.totalorder %s19, 1
      %p84 = por %p82, %p83
      %p86 = scmp.ne.s32.totalorder %s69, %s85
      %p87 = scmp.eq.s32.totalorder %s19, 0
      %p88 = por %p86, %p87
      %s89 = ssub.s32 %s20, %s32
      %s90 = ssub.s32 %s21, %s28
      %s91 = sor.u32 %s89, %s90
      %p92 = scmp.eq.s32.totalorder %s91, 0
      %s94 = sadd.s32 %s93, 1
      %s95 = scalar_select %p92, %s93, %s94
      %p98 = pneg %p92
      %p99 = scmp.eq.s32.totalorder %s13, 1
      %p100 = por %p98, %p99
      %p101 = scmp.ne.s32.totalorder %s93, %s96
      %p102 = scmp.eq.s32.totalorder %s13, 0
      %p103 = por %p101, %p102
      %p104 = scmp.ne.s32.totalorder %s93, %s96
      %p105 = scmp.eq.s32.totalorder %s18, 1
      %p106 = por %p104, %p105
      %p107 = scmp.ne.s32.totalorder %s96, %s97
      %p108 = scmp.eq.s32.totalorder %s18, 0
      %p109 = por %p107, %p108
      %p110 = scmp.ne.s32.totalorder %s96, %s97
      %p111 = scmp.eq.s32.totalorder %s19, 1
      %p112 = por %p110, %p111
      %p114 = scmp.ne.s32.totalorder %s97, %s113
      %p115 = scmp.eq.s32.totalorder %s19, 0
      %p116 = por %p114, %p115
      %s118 = sadd.s32 %s117, 1
      %p121 = scmp.eq.s32.totalorder %s13, 1
      %p122 = scmp.ne.s32.totalorder %s117, %s119
      %p123 = scmp.eq.s32.totalorder %s13, 0
      %p124 = por %p122, %p123
      %p125 = scmp.ne.s32.totalorder %s117, %s119
      %p126 = scmp.eq.s32.totalorder %s18, 1
      %p127 = por %p125, %p126
      %p128 = scmp.ne.s32.totalorder %s119, %s120
      %p129 = scmp.eq.s32.totalorder %s18, 0
      %p130 = por %p128, %p129
      %p131 = scmp.ne.s32.totalorder %s119, %s120
      %p132 = scmp.eq.s32.totalorder %s19, 1
      %p133 = por %p131, %p132
      %p135 = scmp.ne.s32.totalorder %s120, %s134
      %p136 = scmp.eq.s32.totalorder %s19, 0
      %p137 = por %p135, %p136
      %s138 = ssub.s32 %s20, %s32
      %s139 = ssub.s32 %s21, %s28
      %s140 = sor.u32 %s138, %s139
      %p141 = scmp.eq.s32.totalorder %s140, 0
      %s143 = sadd.s32 %s142, 1
      %s144 = scalar_select %p141, %s142, %s143
      %p147 = pneg %p141
      %p148 = scmp.eq.s32.totalorder %s13, 1
      %p149 = por %p147, %p148
      %p150 = scmp.ne.s32.totalorder %s142, %s145
      %p151 = scmp.eq.s32.totalorder %s13, 0
      %p152 = por %p150, %p151
      %p153 = scmp.ne.s32.totalorder %s142, %s145
      %p154 = scmp.eq.s32.totalorder %s18, 1
      %p155 = por %p153, %p154
      %p156 = scmp.ne.s32.totalorder %s145, %s146
      %p157 = scmp.eq.s32.totalorder %s18, 0
      %p158 = por %p156, %p157
      %p159 = scmp.ne.s32.totalorder %s145, %s146
      %p160 = scmp.eq.s32.totalorder %s19, 1
      %p161 = por %p159, %p160
      %p163 = scmp.ne.s32.totalorder %s146, %s162
      %p164 = scmp.eq.s32.totalorder %s19, 0
      %p165 = por %p163, %p164
      %s166 = ssub.s32 %s20, %s32
      %s167 = ssub.s32 %s21, %s28
      %s168 = sor.u32 %s166, %s167
      %p169 = scmp.eq.s32.totalorder %s168, 0
      %s171 = sadd.s32 %s170, 1
      %s172 = scalar_select %p169, %s170, %s171
      %p175 = pneg %p169
      %p176 = scmp.eq.s32.totalorder %s13, 1
      %p177 = por %p175, %p176
      %p178 = scmp.ne.s32.totalorder %s170, %s173
      %p179 = scmp.eq.s32.totalorder %s13, 0
      %p180 = por %p178, %p179
      %p181 = scmp.ne.s32.totalorder %s170, %s173
      %p182 = scmp.eq.s32.totalorder %s18, 1
      %p183 = por %p181, %p182
      %p184 = scmp.ne.s32.totalorder %s173, %s174
      %p185 = scmp.eq.s32.totalorder %s18, 0
      %p186 = por %p184, %p185
      %p187 = scmp.ne.s32.totalorder %s173, %s174
      %p188 = scmp.eq.s32.totalorder %s19, 1
      %p189 = por %p187, %p188
      %p191 = scmp.ne.s32.totalorder %s174, %s190
      %p192 = scmp.eq.s32.totalorder %s19, 0
      %p193 = por %p191, %p192
      %p194 = scmp.le.s32.totalorder 1, %s13
      %p195 = scmp.lt.s32.totalorder %s13, 3
      %p196 = pnand %p194, %p195
      %p197 = pneg %p196
      // Predicated region
      $region9: #{closed_call.100} parent=5 // pred_check
        _
      $region10: #{closed_call.100} parent=5 // pred_check_branch
        %199 = sbr.rel (%p196) target = $region12
      $region11: #{closed_call.100} parent=5 // pred_region
        %s200 = ssub.s32 %s13, 1
        // Predicated region
        $region13: #{closed_call.100} parent=11 // pred_check
          %p201 = pneg %p130
        $region14: #{closed_call.100} parent=11 // pred_check_branch
          %203 = sbr.rel (%p201) target = $region16
        $region15: #{closed_call.100} parent=11 // pred_region
          %s205 = ssub.s32 16, 16
          %206 = vsyncadd [#allocation3], %s205
          %s208 = sshll.u32 %s3, 4
          %s209 = int_to_ptr.vmem [resolvable:$true] %s208
          %211 = dma.vmem_to_smem %s209, 16, [#allocation2], [#allocation3]
        $region16: #{closed_call.100} parent=11 // pred_fallthru
          _
      $region12: #{closed_call.100} parent=5 // pred_fallthru
        _
      %p212 = scmp.lt.s32.totalorder %s13, 2
      // Predicated region
      $region17: #{closed_call.100} parent=5 // pred_check
        %p213 = pneg %p212
      $region18: #{closed_call.100} parent=5 // pred_check_branch
        %215 = sbr.rel (%p213) target = $region20
      $region19: #{closed_call.100} parent=5 // pred_region
        // Predicated region
        $region21: #{closed_call.100} parent=19 // pred_check
          %p216 = pneg %p47
        $region22: #{closed_call.100} parent=19 // pred_check_branch
          %218 = sbr.rel (%p216) target = $region24
        $region23: #{closed_call.100} parent=19 // pred_region
          %s219 = smul.u32 2, %s21
          %p220 = scmp.lt.s32.totalorder %s20, 1
          %s221 = scalar_select %p220, %s20, 1
          %p222 = scmp.lt.s32.totalorder %s219, 1
          %s223 = scalar_select %p222, %s219, 1
          %s224 = smul.addr %s221, 2
          %s225 = sadd.s32 %s223, %s224
          %s226 = smul.addr %s225, 4
          %s227 = scalar_lea.vmem %s0, %s226
          %s228 = smul.u32 2, %s21
        $region24: #{closed_call.100} parent=19 // pred_fallthru
          _
        // Predicated region
        $region25: #{closed_call.100} parent=19 // pred_check
          %p229 = pneg %p75
        $region26: #{closed_call.100} parent=19 // pred_check_branch
          %231 = sbr.rel (%p229) target = $region28
        $region27: #{closed_call.100} parent=19 // pred_region
          %s232 = smul.u32 2, %s21
          %p233 = scmp.lt.s32.totalorder %s20, 1
          %s234 = scalar_select %p233, %s20, 1
          %p235 = scmp.lt.s32.totalorder %s232, 1
          %s236 = scalar_select %p235, %s232, 1
          %s237 = smul.addr %s234, 2
          %s238 = sadd.s32 %s236, %s237
          %s239 = smul.addr %s238, 4
          %s240 = scalar_lea.vmem %s1, %s239
          %s241 = smul.u32 2, %s21
        $region28: #{closed_call.100} parent=19 // pred_fallthru
          _
        // Predicated region
        $region29: #{closed_call.100} parent=19 // pred_check
          %p242 = pneg %p103
        $region30: #{closed_call.100} parent=19 // pred_check_branch
          %244 = sbr.rel (%p242) target = $region32
        $region31: #{closed_call.100} parent=19 // pred_region
          %s245 = smul.u32 2, %s21
          %p246 = scmp.lt.s32.totalorder %s20, 1
          %s247 = scalar_select %p246, %s20, 1
          %p248 = scmp.lt.s32.totalorder %s245, 1
          %s249 = scalar_select %p248, %s245, 1
          %s250 = smul.addr %s247, 2
          %s251 = sadd.s32 %s249, %s250
          %s252 = smul.addr %s251, 4
          %s253 = scalar_lea.vmem %s2, %s252
          %s254 = smul.u32 2, %s21
        $region32: #{closed_call.100} parent=19 // pred_fallthru
          _
      $region20: #{closed_call.100} parent=5 // pred_fallthru
        _
      %p255 = scmp.le.s32.totalorder 1, %s13
      %p256 = scmp.lt.s32.totalorder %s13, 3
      %p257 = pnand %p255, %p256
      %p258 = pneg %p257
      // Predicated region
      $region33: #{closed_call.100} parent=5 // pred_check
        _
      $region34: #{closed_call.100} parent=5 // pred_check_branch
        %260 = sbr.rel (%p257) target = $region36
      $region35: #{closed_call.100} parent=5 // pred_region
        %s261 = ssub.s32 %s13, 1
        // Predicated region
        $region37: #{closed_call.100} parent=35 // pred_check
          %p262 = pneg %p130
        $region38: #{closed_call.100} parent=35 // pred_check_branch
          %264 = sbr.rel (%p262) target = $region40
        $region39: #{closed_call.100} parent=35 // pred_region
          %265 = dma.done [#allocation3], 16
        $region40: #{closed_call.100} parent=35 // pred_fallthru
          _
        %266 = sfence
        %s267 = smul.u32 2, %s23
        %p268 = scmp.lt.s32.totalorder %s22, 1
        %s269 = scalar_select %p268, %s22, 1
        %p270 = scmp.lt.s32.totalorder %s267, 1
        %s271 = scalar_select %p270, %s267, 1
        %s272 = smul.addr %s269, 2
        %s273 = sadd.s32 %s271, %s272
        %s274 = smul.addr %s273, 4
        %s275 = scalar_lea.vmem %s0, %s274
        %p276 = pneg %p53
        %p277 = pneg %p50
        %s278 = smul.u32 2, %s23
        %p279 = scmp.lt.s32.totalorder %s22, 1
        %s280 = scalar_select %p279, %s22, 1
        %p281 = scmp.lt.s32.totalorder %s278, 1
        %s282 = scalar_select %p281, %s278, 1
        %s283 = smul.addr %s280, 2
        %s284 = sadd.s32 %s282, %s283
        %s285 = smul.addr %s284, 4
        %s286 = scalar_lea.vmem %s1, %s285
        %p287 = pneg %p81
        %p288 = pneg %p78
        %s289 = smul.u32 2, %s23
        %p290 = scmp.lt.s32.totalorder %s22, 1
        %s291 = scalar_select %p290, %s22, 1
        %p292 = scmp.lt.s32.totalorder %s289, 1
        %s293 = scalar_select %p292, %s289, 1
        %s294 = smul.addr %s291, 2
        %s295 = sadd.s32 %s293, %s294
        %s296 = smul.addr %s295, 4
        %s297 = scalar_lea.vmem %s2, %s296
        %p298 = pneg %p109
        %p299 = pneg %p106
        %p300 = pneg %p130
        %p301 = pneg %p127
        %p302 = pneg %p158
        %p303 = pneg %p155
        %s304 = smul.u32 2, %s23
        %p305 = scmp.lt.s32.totalorder %s22, 1
        %s306 = scalar_select %p305, %s22, 1
        %p307 = scmp.lt.s32.totalorder %s304, 1
        %s308 = scalar_select %p307, %s304, 1
        %s309 = smul.addr %s306, 2
        %s310 = sadd.s32 %s308, %s309
        %s311 = smul.addr %s310, 4
        %s312 = scalar_lea.vmem %s4, %s311
        %p313 = pneg %p186
        %p314 = pneg %p183
        %s315 = smul.u32 2, %s23
        %p316 = scmp.lt.s32.totalorder %s22, 1
        %s317 = scalar_select %p316, %s22, 1
        %p318 = scmp.lt.s32.totalorder %s315, 1
        %s319 = scalar_select %p318, %s315, 1
        %s320 = smul.addr %s317, 2
        %s321 = sadd.s32 %s319, %s320
        %s322 = smul.addr %s321, 4
        %s323 = scalar_lea.vmem %s5, %s322
        %s324 = smul.u32 2, %s23
        %p325 = scmp.lt.s32.totalorder %s22, 1
        %s326 = scalar_select %p325, %s22, 1
        %p327 = scmp.lt.s32.totalorder %s324, 1
        %s328 = scalar_select %p327, %s324, 1
        %s329 = smul.addr %s326, 2
        %s330 = sadd.s32 %s328, %s329
        %s331 = smul.addr %s330, 4
        %s332 = scalar_lea.vmem %s0, %s331
        %s333 = smul.u32 2, %s23
        %s334 = smul.u32 2, %s23
        %p335 = scmp.lt.s32.totalorder %s22, 1
        %s336 = scalar_select %p335, %s22, 1
        %p337 = scmp.lt.s32.totalorder %s334, 1
        %s338 = scalar_select %p337, %s334, 1
        %s339 = smul.addr %s336, 2
        %s340 = sadd.s32 %s338, %s339
        %s341 = smul.addr %s340, 4
        %s342 = scalar_lea.vmem %s1, %s341
        %s343 = smul.u32 2, %s23
        %s344 = smul.u32 2, %s23
        %p345 = scmp.lt.s32.totalorder %s22, 1
        %s346 = scalar_select %p345, %s22, 1
        %p347 = scmp.lt.s32.totalorder %s344, 1
        %s348 = scalar_select %p347, %s344, 1
        %s349 = smul.addr %s346, 2
        %s350 = sadd.s32 %s348, %s349
        %s351 = smul.addr %s350, 4
        %s352 = scalar_lea.vmem %s2, %s351
        %s353 = smul.u32 2, %s23
        %s354 = smul.u32 2, %s23
        %p355 = scmp.lt.s32.totalorder %s22, 1
        %s356 = scalar_select %p355, %s22, 1
        %p357 = scmp.lt.s32.totalorder %s354, 1
        %s358 = scalar_select %p357, %s354, 1
        %s359 = smul.addr %s356, 2
        %s360 = sadd.s32 %s358, %s359
        %s361 = smul.addr %s360, 4
        %s362 = scalar_lea.vmem %s4, %s361
        %s363 = smul.u32 2, %s23
        %s364 = smul.u32 2, %s23
        %p365 = scmp.lt.s32.totalorder %s22, 1
        %s366 = scalar_select %p365, %s22, 1
        %p367 = scmp.lt.s32.totalorder %s364, 1
        %s368 = scalar_select %p367, %s364, 1
        %s369 = smul.addr %s366, 2
        %s370 = sadd.s32 %s368, %s369
        %s371 = smul.addr %s370, 4
        %s372 = scalar_lea.vmem %s5, %s371
        %s373 = smul.u32 2, %s23
        %v374 = vld [vmem:[%s332] sm:$0xff]
        %v375 = vld [vmem:[%s342] sm:$0xff]
        %v376 = vld [vmem:[%s352] sm:$0xff]
        %s377 = sld [smem:[#allocation2]]
        %v378 = vsub.f32 %v374, %v375
        %v379 = vstv %s377
        %v380 = vmul.f32 %v379, %v378
        %v383 = vunpack.c.l.s4 1966171168
        %v384 = vunpack.c.0.s8 %v383
        %v385 = vlaneseq
        %v386 = vshrl.u32 %v385, 7
        %v387 = vsub.s32 %v384, %v386
        %v388 = vrot.slane %v380, %v387
        %v390 = vunpack.c.l.s4 1966171168
        %v391 = vunpack.c.0.s8 %v390
        %v392 = vlaneseq
        %v393 = vshrl.u32 %v392, 7
        %v394 = vsub.s32 %v391, %v393
        %v395 = vrot.slane %v388, %v394
        %v397 = vlaneseq
        %vm398 = vcmp.ge.s32.totalorder %v397, 0
        %vm399 = vcmp.lt.s32.totalorder %v397, 256
        %vm400 = vmand %vm398, %vm399
        %401 = vst.msk [vmem:[%s362] ss:$4 sm:$0x3] %vm400, %v395
        %v402 = vsub.f32 %v376, %v380
        %v405 = vunpack.c.l.s4 1966171168
        %v406 = vunpack.c.0.s8 %v405
        %v407 = vlaneseq
        %v408 = vshrl.u32 %v407, 7
        %v409 = vsub.s32 %v406, %v408
        %v410 = vrot.slane %v402, %v409
        %v412 = vunpack.c.l.s4 1966171168
        %v413 = vunpack.c.0.s8 %v412
        %v414 = vlaneseq
        %v415 = vshrl.u32 %v414, 7
        %v416 = vsub.s32 %v413, %v415
        %v417 = vrot.slane %v410, %v416
        %419 = vst.msk [vmem:[%s372] ss:$4 sm:$0x3] %vm400, %v417
        %s420 = sld [smem:[#allocation2 + $0x1]]
        %v421 = vstv %s420
        %v422 = vmul.f32 %v421, %v378
        %v425 = vunpack.c.l.s4 1966171168
        %v426 = vunpack.c.0.s8 %v425
        %v427 = vlaneseq
        %v428 = vshrl.u32 %v427, 7
        %v429 = vsub.s32 %v426, %v428
        %v430 = vrot.slane %v422, %v429
        %v431 = vcombine.high %v430, %v430
        %v433 = vunpack.c.l.s4 1966171168
        %v434 = vunpack.c.0.s8 %v433
        %v435 = vlaneseq
        %v436 = vshrl.u32 %v435, 7
        %v437 = vsub.s32 %v434, %v436
        %v438 = vrot.slane %v431, %v437
        %s440 = scalar_lea.vmem %s362, 1
        %441 = vst.msk [vmem:[%s440] ss:$4 sm:$0x3] %vm400, %v438
        %v442 = vsub.f32 %v376, %v422
        %v445 = vunpack.c.l.s4 1966171168
        %v446 = vunpack.c.0.s8 %v445
        %v447 = vlaneseq
        %v448 = vshrl.u32 %v447, 7
        %v449 = vsub.s32 %v446, %v448
        %v450 = vrot.slane %v442, %v449
        %v451 = vcombine.high %v450, %v450
        %v453 = vunpack.c.l.s4 1966171168
        %v454 = vunpack.c.0.s8 %v453
        %v455 = vlaneseq
        %v456 = vshrl.u32 %v455, 7
        %v457 = vsub.s32 %v454, %v456
        %v458 = vrot.slane %v451, %v457
        %s460 = scalar_lea.vmem %s372, 1
        %461 = vst.msk [vmem:[%s460] ss:$4 sm:$0x3] %vm400, %v458
        %s462 = sld [smem:[#allocation2 + $0x2]]
        %v463 = vstv %s462
        %v464 = vmul.f32 %v463, %v378
        %v467 = vunpack.c.l.s4 1966171168
        %v468 = vunpack.c.0.s8 %v467
        %v469 = vlaneseq
        %v470 = vshrl.u32 %v469, 7
        %v471 = vsub.s32 %v468, %v470
        %v472 = vrot.slane %v464, %v471
        %v474 = vunpack.c.l.s4 1966171168
        %v475 = vunpack.c.0.s8 %v474
        %v476 = vlaneseq
        %v477 = vshrl.u32 %v476, 7
        %v478 = vsub.s32 %v475, %v477
        %v479 = vrot.slane %v472, %v478
        %v480 = vcombine.high %v479, %v479
        %s482 = scalar_lea.vmem %s362, 2
        %483 = vst.msk [vmem:[%s482] ss:$4 sm:$0x3] %vm400, %v480
        %v484 = vsub.f32 %v376, %v464
        %v487 = vunpack.c.l.s4 1966171168
        %v488 = vunpack.c.0.s8 %v487
        %v489 = vlaneseq
        %v490 = vshrl.u32 %v489, 7
        %v491 = vsub.s32 %v488, %v490
        %v492 = vrot.slane %v484, %v491
        %v494 = vunpack.c.l.s4 1966171168
        %v495 = vunpack.c.0.s8 %v494
        %v496 = vlaneseq
        %v497 = vshrl.u32 %v496, 7
        %v498 = vsub.s32 %v495, %v497
        %v499 = vrot.slane %v492, %v498
        %v500 = vcombine.high %v499, %v499
        %s502 = scalar_lea.vmem %s372, 2
        %503 = vst.msk [vmem:[%s502] ss:$4 sm:$0x3] %vm400, %v500
        %s504 = sld [smem:[#allocation2 + $0x3]]
        %v505 = vstv %s504
        %v506 = vmul.f32 %v505, %v378
        %v509 = vunpack.c.l.s4 1966171168
        %v510 = vunpack.c.0.s8 %v509
        %v511 = vlaneseq
        %v512 = vshrl.u32 %v511, 7
        %v513 = vsub.s32 %v510, %v512
        %v514 = vrot.slane %v506, %v513
        %v515 = vcombine.high %v514, %v514
        %v517 = vunpack.c.l.s4 1966171168
        %v518 = vunpack.c.0.s8 %v517
        %v519 = vlaneseq
        %v520 = vshrl.u32 %v519, 7
        %v521 = vsub.s32 %v518, %v520
        %v522 = vrot.slane %v515, %v521
        %v523 = vcombine.high %v522, %v522
        %s525 = scalar_lea.vmem %s362, 3
        %526 = vst.msk [vmem:[%s525] ss:$4 sm:$0x3] %vm400, %v523
        %v527 = vsub.f32 %v376, %v506
        %v530 = vunpack.c.l.s4 1966171168
        %v531 = vunpack.c.0.s8 %v530
        %v532 = vlaneseq
        %v533 = vshrl.u32 %v532, 7
        %v534 = vsub.s32 %v531, %v533
        %v535 = vrot.slane %v527, %v534
        %v536 = vcombine.high %v535, %v535
        %v538 = vunpack.c.l.s4 1966171168
        %v539 = vunpack.c.0.s8 %v538
        %v540 = vlaneseq
        %v541 = vshrl.u32 %v540, 7
        %v542 = vsub.s32 %v539, %v541
        %v543 = vrot.slane %v536, %v542
        %v544 = vcombine.high %v543, %v543
        %s546 = scalar_lea.vmem %s372, 3
        %547 = vst.msk [vmem:[%s546] ss:$4 sm:$0x3] %vm400, %v544
        %s548 = smul.u32 2, %s23
        %p549 = scmp.lt.s32.totalorder %s22, 1
        %s550 = scalar_select %p549, %s22, 1
        %p551 = scmp.lt.s32.totalorder %s548, 1
        %s552 = scalar_select %p551, %s548, 1
        %s553 = smul.addr %s550, 2
        %s554 = sadd.s32 %s552, %s553
        %s555 = smul.addr %s554, 4
        %s556 = scalar_lea.vmem %s4, %s555
        %s557 = smul.u32 2, %s23
        %p558 = scmp.lt.s32.totalorder %s22, 1
        %s559 = scalar_select %p558, %s22, 1
        %p560 = scmp.lt.s32.totalorder %s557, 1
        %s561 = scalar_select %p560, %s557, 1
        %s562 = smul.addr %s559, 2
        %s563 = sadd.s32 %s561, %s562
        %s564 = smul.addr %s563, 4
        %s565 = scalar_lea.vmem %s5, %s564
        // Predicated region
        $region41: #{closed_call.100} parent=35 // pred_check
          %p566 = pneg %p155
        $region42: #{closed_call.100} parent=35 // pred_check_branch
          %568 = sbr.rel (%p566) target = $region44
        $region43: #{closed_call.100} parent=35 // pred_region
          %s569 = smul.u32 2, %s23
        $region44: #{closed_call.100} parent=35 // pred_fallthru
          _
        // Predicated region
        $region45: #{closed_call.100} parent=35 // pred_check
          %p570 = pneg %p183
        $region46: #{closed_call.100} parent=35 // pred_check_branch
          %572 = sbr.rel (%p570) target = $region48
        $region47: #{closed_call.100} parent=35 // pred_region
          %s573 = smul.u32 2, %s23
        $region48: #{closed_call.100} parent=35 // pred_fallthru
          _
      $region36: #{closed_call.100} parent=5 // pred_fallthru
        _
      %p574 = scmp.le.s32.totalorder 2, %s13
      // Predicated region
      $region49: #{closed_call.100} parent=5 // pred_check
        %p575 = pneg %p574
      $region50: #{closed_call.100} parent=5 // pred_check_branch
        %577 = sbr.rel (%p575) target = $region52
      $region51: #{closed_call.100} parent=5 // pred_region
        %s578 = ssub.s32 %s13, 2
        // Predicated region
        $region53: #{closed_call.100} parent=51 // pred_check
          %p579 = pneg %p161
        $region54: #{closed_call.100} parent=51 // pred_check_branch
          %581 = sbr.rel (%p579) target = $region56
        $region55: #{closed_call.100} parent=51 // pred_region
          %s582 = smul.u32 2, %s25
          %p583 = scmp.lt.s32.totalorder %s24, 1
          %s584 = scalar_select %p583, %s24, 1
          %p585 = scmp.lt.s32.totalorder %s582, 1
          %s586 = scalar_select %p585, %s582, 1
          %s587 = smul.addr %s584, 2
          %s588 = sadd.s32 %s586, %s587
          %s589 = smul.addr %s588, 4
          %s590 = scalar_lea.vmem %s4, %s589
        $region56: #{closed_call.100} parent=51 // pred_fallthru
          _
        // Predicated region
        $region57: #{closed_call.100} parent=51 // pred_check
          %p591 = pneg %p189
        $region58: #{closed_call.100} parent=51 // pred_check_branch
          %593 = sbr.rel (%p591) target = $region60
        $region59: #{closed_call.100} parent=51 // pred_region
          %s594 = smul.u32 2, %s25
          %p595 = scmp.lt.s32.totalorder %s24, 1
          %s596 = scalar_select %p595, %s24, 1
          %p597 = scmp.lt.s32.totalorder %s594, 1
          %s598 = scalar_select %p597, %s594, 1
          %s599 = smul.addr %s596, 2
          %s600 = sadd.s32 %s598, %s599
          %s601 = smul.addr %s600, 4
          %s602 = scalar_lea.vmem %s5, %s601
        $region60: #{closed_call.100} parent=51 // pred_fallthru
          _
      $region52: #{closed_call.100} parent=5 // pred_fallthru
        _
    $region6: #{closed_call.100} parent=1 // loop_footer
      %s17 = sadd.s32 1, %s13
    $region7: #{closed_call.100} parent=1 // loop_footer_branch
      %12 = sbr.rel target = $region3
    $region8: #{closed_call.100} parent=1 // loop_exit
      _
    %603 = vsyncpa [#allocation3], 1
    %s604 = scalar_lea.sflag [#allocation3], 1
    %605 = vsyncpa %s604, 1

// kernel: closed_call.83
$region0: #{closed_call.83}
  #allocation0 [shape = 'u32[]', space=smem, size = 0x4, offset = 0x4, fixed_abs, tag = 'smem constant byte address 0x4 - core index']
  #allocation1 [shape = 'u32[144,128]{1,0:T(1,128)}', space=vmem, size = 0x12000, scoped, tag = 'internal scratch']
  %s0 = inlined_call_operand.vmem [shape: f32[2,4,256], index: 0, kind: input, shape index: {}]
  %s1 = inlined_call_operand.vmem [shape: f32[4,8], index: 1, kind: input, shape index: {}]
  %s2 = inlined_call_operand.vmem [shape: f32[8], index: 2, kind: input, shape index: {}]
  %s3 = inlined_call_operand.vmem [shape: f32[8,4], index: 3, kind: input, shape index: {}]
  %s4 = inlined_call_operand.vmem [shape: f32[4], index: 4, kind: input, shape index: {}]
  %s5 = inlined_call_operand.vmem [shape: f32[2,4,256], index: 5, kind: output, shape index: {0}]
  %s6 = inlined_call_operand.vmem [shape: f32[2,8,256], index: 6, kind: output, shape index: {1}]
  %7 = xla_tuple %s5, %s6
  %s8 = sld [smem:[#allocation0]]
  $region77: #{closed_call.83} parent=0
    _
  %s10 = ssub.s32 1, %s8
  %s11 = scalar_select 0, %s10, %s8
  $region1: #{closed_call.83} parent=0
    #allocation2 [shape = 'u8[2048]{0}', space=smem, size = 0x800, scoped, tag = 'input window, operand 1, single buffered']
    #allocation3 [shape = 's32[2]{0}', space=sflag, size = 0x8, scoped, tag = 'scoped memory for closed_call.83']
    #allocation4 [shape = 'u8[512]{0}', space=smem, size = 0x200, scoped, tag = 'input window, operand 2, single buffered']
    #allocation5 [shape = 's32[1]{0}', space=sflag, size = 0x4, scoped, tag = 'scoped memory for closed_call.83']
    #allocation6 [shape = 'u8[4096]{0}', space=smem, size = 0x1000, scoped, tag = 'input window, operand 3, single buffered']
    #allocation7 [shape = 'u8[512]{0}', space=smem, size = 0x200, scoped, tag = 'input window, operand 4, single buffered']
    #allocation8 [shape = 's32[1]{0}', space=sflag, size = 0x4, scoped, tag = 'scoped memory for closed_call.83']
    %12 = vsyncpa [#allocation3], 0
    %13 = vsyncpa [#allocation5], 0
    %14 = vsyncpa [#allocation8], 0
    loop: start=0, step=1, limit=4
    $region2: #{closed_call.83} parent=1 // loop_pre_header
      _
    $region3: #{closed_call.83} parent=1 // loop_header
      %s16 = sphi 0, %s20
      %p17 = scmp.ge.s32.totalorder %s16, 4
      %s23 = sphi 0, %s35
      %s24 = sphi 0, %s31
      %s25 = sphi 0, %s23
      %s26 = sphi 0, %s24
      %s27 = sphi 0, %s25
      %s28 = sphi 0, %s26
      %s40 = sphi 0, %s42
      %s43 = sphi 0, %s40
      %s44 = sphi 0, %s43
      %s60 = sphi 0, %s44
      %s64 = sphi 0, %s64
      %s66 = sphi 0, %s64
      %s67 = sphi 0, %s66
      %s81 = sphi 0, %s67
      %s85 = sphi 0, %s85
      %s87 = sphi 0, %s85
      %s88 = sphi 0, %s87
      %s102 = sphi 0, %s88
      %s106 = sphi 0, %s106
      %s108 = sphi 0, %s106
      %s109 = sphi 0, %s108
      %s123 = sphi 0, %s109
      %s127 = sphi 0, %s127
      %s129 = sphi 0, %s127
      %s130 = sphi 0, %s129
      %s144 = sphi 0, %s130
      %s152 = sphi 0, %s154
      %s155 = sphi 0, %s152
      %s156 = sphi 0, %s155
      %s172 = sphi 0, %s156
      %s180 = sphi 0, %s182
      %s183 = sphi 0, %s180
      %s184 = sphi 0, %s183
      %s200 = sphi 0, %s184
    $region4: #{closed_call.83} parent=1 // loop_header_branch
      %19 = sbr.rel (%p17) target = $region8
    $region5: #{closed_call.83} parent=1 // loop_body
      %s21 = ssub.s32 %s16, 1
      %s22 = ssub.s32 %s16, 2
      %s29 = sadd.s32 1, %s24
      %p30 = scmp.ge.s32.totalorder %s29, 1
      %s31 = scalar_select %p30, 0, %s29
      %s32 = sadd.s32 1, %s23
      %s33 = scalar_select %p30, %s32, %s23
      %p34 = scmp.ge.s32.totalorder %s33, 2
      %s35 = scalar_select %p34, 0, %s33
      %s36 = ssub.s32 %s23, %s35
      %s37 = ssub.s32 %s24, %s31
      %s38 = sor.u32 %s36, %s37
      %p39 = scmp.eq.s32.totalorder %s38, 0
      %s41 = sadd.s32 %s40, 1
      %s42 = scalar_select %p39, %s40, %s41
      %p45 = pneg %p39
      %p46 = scmp.eq.s32.totalorder %s16, 1
      %p47 = por %p45, %p46
      %p48 = scmp.ne.s32.totalorder %s40, %s43
      %p49 = scmp.eq.s32.totalorder %s16, 0
      %p50 = por %p48, %p49
      %p51 = scmp.ne.s32.totalorder %s40, %s43
      %p52 = scmp.eq.s32.totalorder %s21, 1
      %p53 = por %p51, %p52
      %p54 = scmp.ne.s32.totalorder %s43, %s44
      %p55 = scmp.eq.s32.totalorder %s21, 0
      %p56 = por %p54, %p55
      %p57 = scmp.ne.s32.totalorder %s43, %s44
      %p58 = scmp.eq.s32.totalorder %s22, 1
      %p59 = por %p57, %p58
      %p61 = scmp.ne.s32.totalorder %s44, %s60
      %p62 = scmp.eq.s32.totalorder %s22, 0
      %p63 = por %p61, %p62
      %s65 = sadd.s32 %s64, 1
      %p68 = scmp.eq.s32.totalorder %s16, 1
      %p69 = scmp.ne.s32.totalorder %s64, %s66
      %p70 = scmp.eq.s32.totalorder %s16, 0
      %p71 = por %p69, %p70
      %p72 = scmp.ne.s32.totalorder %s64, %s66
      %p73 = scmp.eq.s32.totalorder %s21, 1
      %p74 = por %p72, %p73
      %p75 = scmp.ne.s32.totalorder %s66, %s67
      %p76 = scmp.eq.s32.totalorder %s21, 0
      %p77 = por %p75, %p76
      %p78 = scmp.ne.s32.totalorder %s66, %s67
      %p79 = scmp.eq.s32.totalorder %s22, 1
      %p80 = por %p78, %p79
      %p82 = scmp.ne.s32.totalorder %s67, %s81
      %p83 = scmp.eq.s32.totalorder %s22, 0
      %p84 = por %p82, %p83
      %s86 = sadd.s32 %s85, 1
      %p89 = scmp.eq.s32.totalorder %s16, 1
      %p90 = scmp.ne.s32.totalorder %s85, %s87
      %p91 = scmp.eq.s32.totalorder %s16, 0
      %p92 = por %p90, %p91
      %p93 = scmp.ne.s32.totalorder %s85, %s87
      %p94 = scmp.eq.s32.totalorder %s21, 1
      %p95 = por %p93, %p94
      %p96 = scmp.ne.s32.totalorder %s87, %s88
      %p97 = scmp.eq.s32.totalorder %s21, 0
      %p98 = por %p96, %p97
      %p99 = scmp.ne.s32.totalorder %s87, %s88
      %p100 = scmp.eq.s32.totalorder %s22, 1
      %p101 = por %p99, %p100
      %p103 = scmp.ne.s32.totalorder %s88, %s102
      %p104 = scmp.eq.s32.totalorder %s22, 0
      %p105 = por %p103, %p104
      %s107 = sadd.s32 %s106, 1
      %p110 = scmp.eq.s32.totalorder %s16, 1
      %p111 = scmp.ne.s32.totalorder %s106, %s108
      %p112 = scmp.eq.s32.totalorder %s16, 0
      %p113 = por %p111, %p112
      %p114 = scmp.ne.s32.totalorder %s106, %s108
      %p115 = scmp.eq.s32.totalorder %s21, 1
      %p116 = por %p114, %p115
      %p117 = scmp.ne.s32.totalorder %s108, %s109
      %p118 = scmp.eq.s32.totalorder %s21, 0
      %p119 = por %p117, %p118
      %p120 = scmp.ne.s32.totalorder %s108, %s109
      %p121 = scmp.eq.s32.totalorder %s22, 1
      %p122 = por %p120, %p121
      %p124 = scmp.ne.s32.totalorder %s109, %s123
      %p125 = scmp.eq.s32.totalorder %s22, 0
      %p126 = por %p124, %p125
      %s128 = sadd.s32 %s127, 1
      %p131 = scmp.eq.s32.totalorder %s16, 1
      %p132 = scmp.ne.s32.totalorder %s127, %s129
      %p133 = scmp.eq.s32.totalorder %s16, 0
      %p134 = por %p132, %p133
      %p135 = scmp.ne.s32.totalorder %s127, %s129
      %p136 = scmp.eq.s32.totalorder %s21, 1
      %p137 = por %p135, %p136
      %p138 = scmp.ne.s32.totalorder %s129, %s130
      %p139 = scmp.eq.s32.totalorder %s21, 0
      %p140 = por %p138, %p139
      %p141 = scmp.ne.s32.totalorder %s129, %s130
      %p142 = scmp.eq.s32.totalorder %s22, 1
      %p143 = por %p141, %p142
      %p145 = scmp.ne.s32.totalorder %s130, %s144
      %p146 = scmp.eq.s32.totalorder %s22, 0
      %p147 = por %p145, %p146
      %s148 = ssub.s32 %s23, %s35
      %s149 = ssub.s32 %s24, %s31
      %s150 = sor.u32 %s148, %s149
      %p151 = scmp.eq.s32.totalorder %s150, 0
      %s153 = sadd.s32 %s152, 1
      %s154 = scalar_select %p151, %s152, %s153
      %p157 = pneg %p151
      %p158 = scmp.eq.s32.totalorder %s16, 1
      %p159 = por %p157, %p158
      %p160 = scmp.ne.s32.totalorder %s152, %s155
      %p161 = scmp.eq.s32.totalorder %s16, 0
      %p162 = por %p160, %p161
      %p163 = scmp.ne.s32.totalorder %s152, %s155
      %p164 = scmp.eq.s32.totalorder %s21, 1
      %p165 = por %p163, %p164
      %p166 = scmp.ne.s32.totalorder %s155, %s156
      %p167 = scmp.eq.s32.totalorder %s21, 0
      %p168 = por %p166, %p167
      %p169 = scmp.ne.s32.totalorder %s155, %s156
      %p170 = scmp.eq.s32.totalorder %s22, 1
      %p171 = por %p169, %p170
      %p173 = scmp.ne.s32.totalorder %s156, %s172
      %p174 = scmp.eq.s32.totalorder %s22, 0
      %p175 = por %p173, %p174
      %s176 = ssub.s32 %s23, %s35
      %s177 = ssub.s32 %s24, %s31
      %s178 = sor.u32 %s176, %s177
      %p179 = scmp.eq.s32.totalorder %s178, 0
      %s181 = sadd.s32 %s180, 1
      %s182 = scalar_select %p179, %s180, %s181
      %p185 = pneg %p179
      %p186 = scmp.eq.s32.totalorder %s16, 1
      %p187 = por %p185, %p186
      %p188 = scmp.ne.s32.totalorder %s180, %s183
      %p189 = scmp.eq.s32.totalorder %s16, 0
      %p190 = por %p188, %p189
      %p191 = scmp.ne.s32.totalorder %s180, %s183
      %p192 = scmp.eq.s32.totalorder %s21, 1
      %p193 = por %p191, %p192
      %p194 = scmp.ne.s32.totalorder %s183, %s184
      %p195 = scmp.eq.s32.totalorder %s21, 0
      %p196 = por %p194, %p195
      %p197 = scmp.ne.s32.totalorder %s183, %s184
      %p198 = scmp.eq.s32.totalorder %s22, 1
      %p199 = por %p197, %p198
      %p201 = scmp.ne.s32.totalorder %s184, %s200
      %p202 = scmp.eq.s32.totalorder %s22, 0
      %p203 = por %p201, %p202
      %p204 = scmp.le.s32.totalorder 1, %s16
      %p205 = scmp.lt.s32.totalorder %s16, 3
      %p206 = pnand %p204, %p205
      %p207 = pneg %p206
      // Predicated region
      $region9: #{closed_call.83} parent=5 // pred_check
        _
      $region10: #{closed_call.83} parent=5 // pred_check_branch
        %209 = sbr.rel (%p206) target = $region12
      $region11: #{closed_call.83} parent=5 // pred_region
        %s210 = ssub.s32 %s16, 1
        // Predicated region
        $region13: #{closed_call.83} parent=11 // pred_check
          %p211 = pneg %p77
        $region14: #{closed_call.83} parent=11 // pred_check_branch
          %213 = sbr.rel (%p211) target = $region16
        $region15: #{closed_call.83} parent=11 // pred_region
          %s215 = ssub.s32 64, 64
          %216 = vsyncadd [#allocation3], %s215
          %s218 = sshll.u32 %s1, 4
          %s219 = int_to_ptr.vmem [resolvable:$true] %s218
          %221 = dma.vmem_to_smem %s219, 64, [#allocation2], [#allocation3]
        $region16: #{closed_call.83} parent=11 // pred_fallthru
          _
        // Predicated region
        $region17: #{closed_call.83} parent=11 // pred_check
          %p222 = pneg %p98
        $region18: #{closed_call.83} parent=11 // pred_check_branch
          %224 = sbr.rel (%p222) target = $region20
        $region19: #{closed_call.83} parent=11 // pred_region
          %s226 = ssub.s32 16, 16
          %227 = vsyncadd [#allocation5], %s226
          %s229 = sshll.u32 %s2, 4
          %s230 = int_to_ptr.vmem [resolvable:$true] %s229
          %232 = dma.vmem_to_smem %s230, 16, [#allocation4], [#allocation5]
        $region20: #{closed_call.83} parent=11 // pred_fallthru
          _
        // Predicated region
        $region21: #{closed_call.83} parent=11 // pred_check
          %p233 = pneg %p119
        $region22: #{closed_call.83} parent=11 // pred_check_branch
          %235 = sbr.rel (%p233) target = $region24
        $region23: #{closed_call.83} parent=11 // pred_region
          %s237 = ssub.s32 128, 128
          %238 = vsyncadd [#allocation5], %s237
          %s240 = sshll.u32 %s3, 4
          %s241 = int_to_ptr.vmem [resolvable:$true] %s240
          %243 = dma.vmem_to_smem %s241, 128, [#allocation6], [#allocation5]
        $region24: #{closed_call.83} parent=11 // pred_fallthru
          _
        // Predicated region
        $region25: #{closed_call.83} parent=11 // pred_check
          %p244 = pneg %p140
        $region26: #{closed_call.83} parent=11 // pred_check_branch
          %246 = sbr.rel (%p244) target = $region28
        $region27: #{closed_call.83} parent=11 // pred_region
          %s248 = ssub.s32 16, 16
          %249 = vsyncadd [#allocation8], %s248
          %s251 = sshll.u32 %s4, 4
          %s252 = int_to_ptr.vmem [resolvable:$true] %s251
          %254 = dma.vmem_to_smem %s252, 16, [#allocation7], [#allocation8]
        $region28: #{closed_call.83} parent=11 // pred_fallthru
          _
      $region12: #{closed_call.83} parent=5 // pred_fallthru
        _
      %p255 = scmp.lt.s32.totalorder %s16, 2
      // Predicated region
      $region29: #{closed_call.83} parent=5 // pred_check
        %p256 = pneg %p255
      $region30: #{closed_call.83} parent=5 // pred_check_branch
        %258 = sbr.rel (%p256) target = $region32
      $region31: #{closed_call.83} parent=5 // pred_region
        // Predicated region
        $region33: #{closed_call.83} parent=31 // pred_check
          %p259 = pneg %p50
        $region34: #{closed_call.83} parent=31 // pred_check_branch
          %261 = sbr.rel (%p259) target = $region36
        $region35: #{closed_call.83} parent=31 // pred_region
          %s262 = smul.u32 2, %s24
          %p263 = scmp.lt.s32.totalorder %s23, 1
          %s264 = scalar_select %p263, %s23, 1
          %p265 = scmp.lt.s32.totalorder %s262, 1
          %s266 = scalar_select %p265, %s262, 1
          %s267 = smul.addr %s264, 2
          %s268 = sadd.s32 %s266, %s267
          %s269 = smul.addr %s268, 4
          %s270 = scalar_lea.vmem %s0, %s269
          %s271 = smul.u32 2, %s24
        $region36: #{closed_call.83} parent=31 // pred_fallthru
          _
      $region32: #{closed_call.83} parent=5 // pred_fallthru
        _
      %p272 = scmp.le.s32.totalorder 1, %s16
      %p273 = scmp.lt.s32.totalorder %s16, 3
      %p274 = pnand %p272, %p273
      %p275 = pneg %p274
      // Predicated region
      $region37: #{closed_call.83} parent=5 // pred_check
        _
      $region38: #{closed_call.83} parent=5 // pred_check_branch
        %277 = sbr.rel (%p274) target = $region40
      $region39: #{closed_call.83} parent=5 // pred_region
        %s278 = ssub.s32 %s16, 1
        // Predicated region
        $region41: #{closed_call.83} parent=39 // pred_check
          %p279 = pneg %p77
        $region42: #{closed_call.83} parent=39 // pred_check_branch
          %281 = sbr.rel (%p279) target = $region44
        $region43: #{closed_call.83} parent=39 // pred_region
          %282 = dma.done [#allocation3], 64
        $region44: #{closed_call.83} parent=39 // pred_fallthru
          _
        // Predicated region
        $region45: #{closed_call.83} parent=39 // pred_check
          %p283 = pneg %p98
        $region46: #{closed_call.83} parent=39 // pred_check_branch
          %285 = sbr.rel (%p283) target = $region48
        $region47: #{closed_call.83} parent=39 // pred_region
          %286 = dma.done [#allocation5], 16
        $region48: #{closed_call.83} parent=39 // pred_fallthru
          _
        // Predicated region
        $region49: #{closed_call.83} parent=39 // pred_check
          %p287 = pneg %p119
        $region50: #{closed_call.83} parent=39 // pred_check_branch
          %289 = sbr.rel (%p287) target = $region52
        $region51: #{closed_call.83} parent=39 // pred_region
          %290 = dma.done [#allocation5], 128
        $region52: #{closed_call.83} parent=39 // pred_fallthru
          _
        // Predicated region
        $region53: #{closed_call.83} parent=39 // pred_check
          %p291 = pneg %p140
        $region54: #{closed_call.83} parent=39 // pred_check_branch
          %293 = sbr.rel (%p291) target = $region56
        $region55: #{closed_call.83} parent=39 // pred_region
          %294 = dma.done [#allocation8], 16
        $region56: #{closed_call.83} parent=39 // pred_fallthru
          _
        %295 = sfence
        %s296 = smul.u32 2, %s26
        %p297 = scmp.lt.s32.totalorder %s25, 1
        %s298 = scalar_select %p297, %s25, 1
        %p299 = scmp.lt.s32.totalorder %s296, 1
        %s300 = scalar_select %p299, %s296, 1
        %s301 = smul.addr %s298, 2
        %s302 = sadd.s32 %s300, %s301
        %s303 = smul.addr %s302, 4
        %s304 = scalar_lea.vmem %s0, %s303
        %p305 = pneg %p56
        %p306 = pneg %p53
        %p307 = pneg %p77
        %p308 = pneg %p74
        %p309 = pneg %p98
        %p310 = pneg %p95
        %p311 = pneg %p119
        %p312 = pneg %p116
        %p313 = pneg %p140
        %p314 = pneg %p137
        %p315 = pneg %p168
        %p316 = pneg %p165
        %s317 = smul.u32 2, %s26
        %p318 = scmp.lt.s32.totalorder %s25, 1
        %s319 = scalar_select %p318, %s25, 1
        %p320 = scmp.lt.s32.totalorder %s317, 1
        %s321 = scalar_select %p320, %s317, 1
        %s322 = smul.addr %s319, 2
        %s323 = sadd.s32 %s321, %s322
        %s324 = smul.addr %s323, 4
        %s325 = scalar_lea.vmem %s5, %s324
        %p326 = pneg %p196
        %p327 = pneg %p193
        %s328 = smul.u32 2, %s26
        %p329 = scmp.lt.s32.totalorder %s25, 1
        %s330 = scalar_select %p329, %s25, 1
        %p331 = scmp.lt.s32.totalorder %s328, 1
        %s332 = scalar_select %p331, %s328, 1
        %s333 = smul.addr %s330, 2
        %s334 = sadd.s32 %s332, %s333
        %s335 = smul.addr %s334, 8
        %s336 = scalar_lea.vmem %s6, %s335
        %s337 = smul.u32 2, %s26
        %p338 = scmp.lt.s32.totalorder %s25, 1
        %s339 = scalar_select %p338, %s25, 1
        %p340 = scmp.lt.s32.totalorder %s337, 1
        %s341 = scalar_select %p340, %s337, 1
        %s342 = smul.addr %s339, 2
        %s343 = sadd.s32 %s341, %s342
        %s344 = smul.addr %s343, 4
        %s345 = scalar_lea.vmem %s0, %s344
        %s346 = smul.u32 2, %s26
        %s347 = smul.u32 2, %s26
        %p348 = scmp.lt.s32.totalorder %s25, 1
        %s349 = scalar_select %p348, %s25, 1
        %p350 = scmp.lt.s32.totalorder %s347, 1
        %s351 = scalar_select %p350, %s347, 1
        %s352 = smul.addr %s349, 2
        %s353 = sadd.s32 %s351, %s352
        %s354 = smul.addr %s353, 4
        %s355 = scalar_lea.vmem %s5, %s354
        %s356 = smul.u32 2, %s26
        %s357 = smul.u32 2, %s26
        %p358 = scmp.lt.s32.totalorder %s25, 1
        %s359 = scalar_select %p358, %s25, 1
        %p360 = scmp.lt.s32.totalorder %s357, 1
        %s361 = scalar_select %p360, %s357, 1
        %s362 = smul.addr %s359, 2
        %s363 = sadd.s32 %s361, %s362
        %s364 = smul.addr %s363, 8
        %s365 = scalar_lea.vmem %s6, %s364
        %s366 = smul.u32 2, %s26
        %v367 = vld [vmem:[%s345] sm:$0xff]
        %s368 = sld [smem:[#allocation2]]
        %v369 = vstv %s368
        %v370 = vmul.f32 %v369, %v367
        %s371 = sld [smem:[#allocation2 + $0x80]]
        %v372 = vstv %s371
        %v373 = vmul.f32 %v372, %v367
        %v375 = vrot.slane %v373, 5
        %v376 = vrot.slane %v375, 4
        %v378 = vadd.f32 %v370, %v376
        %s379 = sld [smem:[#allocation2 + $0x100]]
        %v380 = vstv %s379
        %v381 = vmul.f32 %v380, %v367
        %v383 = vrot.slane %v381, 6
        %v384 = vrot.slane %v383, 4
        %v386 = vadd.f32 %v378, %v384
        %s387 = sld [smem:[#allocation2 + $0x180]]
        %v388 = vstv %s387
        %v389 = vmul.f32 %v388, %v367
        %v391 = vrot.slane %v389, 7
        %v392 = vrot.slane %v391, 4
        %v394 = vadd.f32 %v386, %v392
        %s395 = sld [smem:[#allocation4]]
        %v396 = vstv %s395
        %v397 = vadd.f32 %v394, %v396
        %v398 = vtanh.pop %v397
        %s399 = sld [smem:[#allocation2 + $0x1]]
        %v400 = vstv %s399
        %v401 = vmul.f32 %v400, %v367
        %s402 = sld [smem:[#allocation2 + $0x81]]
        %v403 = vstv %s402
        %v404 = vmul.f32 %v403, %v367
        %v406 = vrot.slane %v404, 5
        %v407 = vrot.slane %v406, 4
        %v409 = vadd.f32 %v401, %v407
        %s410 = sld [smem:[#allocation2 + $0x101]]
        %v411 = vstv %s410
        %v412 = vmul.f32 %v411, %v367
        %v414 = vrot.slane %v412, 6
        %v415 = vrot.slane %v414, 4
        %v417 = vadd.f32 %v409, %v415
        %s418 = sld [smem:[#allocation2 + $0x181]]
        %v419 = vstv %s418
        %v420 = vmul.f32 %v419, %v367
        %v422 = vrot.slane %v420, 7
        %v423 = vrot.slane %v422, 4
        %v425 = vadd.f32 %v417, %v423
        %s426 = sld [smem:[#allocation4 + $0x1]]
        %v427 = vstv %s426
        %v428 = vadd.f32 %v425, %v427
        %v429 = vtanh.pop %v428
        %s430 = sld [smem:[#allocation2 + $0x2]]
        %v431 = vstv %s430
        %v432 = vmul.f32 %v431, %v367
        %s433 = sld [smem:[#allocation2 + $0x82]]
        %v434 = vstv %s433
        %v435 = vmul.f32 %v434, %v367
        %v437 = vrot.slane %v435, 5
        %v438 = vrot.slane %v437, 4
        %v440 = vadd.f32 %v432, %v438
        %s441 = sld [smem:[#allocation2 + $0x102]]
        %v442 = vstv %s441
        %v443 = vmul.f32 %v442, %v367
        %v445 = vrot.slane %v443, 6
        %v446 = vrot.slane %v445, 4
        %v448 = vadd.f32 %v440, %v446
        %s449 = sld [smem:[#allocation2 + $0x182]]
        %v450 = vstv %s449
        %v451 = vmul.f32 %v450, %v367
        %v453 = vrot.slane %v451, 7
        %v454 = vrot.slane %v453, 4
        %v456 = vadd.f32 %v448, %v454
        %s457 = sld [smem:[#allocation4 + $0x2]]
        %v458 = vstv %s457
        %v459 = vadd.f32 %v456, %v458
        %v460 = vtanh.pop %v459
        %s461 = sld [smem:[#allocation2 + $0x3]]
        %v462 = vstv %s461
        %v463 = vmul.f32 %v462, %v367
        %s464 = sld [smem:[#allocation2 + $0x83]]
        %v465 = vstv %s464
        %v466 = vmul.f32 %v465, %v367
        %v468 = vrot.slane %v466, 5
        %v469 = vrot.slane %v468, 4
        %v471 = vadd.f32 %v463, %v469
        %s472 = sld [smem:[#allocation2 + $0x103]]
        %v473 = vstv %s472
        %v474 = vmul.f32 %v473, %v367
        %v476 = vrot.slane %v474, 6
        %v477 = vrot.slane %v476, 4
        %v479 = vadd.f32 %v471, %v477
        %s480 = sld [smem:[#allocation2 + $0x183]]
        %v481 = vstv %s480
        %v482 = vmul.f32 %v481, %v367
        %v484 = vrot.slane %v482, 7
        %v485 = vrot.slane %v484, 4
        %v487 = vadd.f32 %v479, %v485
        %s488 = sld [smem:[#allocation4 + $0x3]]
        %v489 = vstv %s488
        %v490 = vadd.f32 %v487, %v489
        %v491 = vtanh.pop %v490
        %s492 = sld [smem:[#allocation2 + $0x4]]
        %v493 = vstv %s492
        %v494 = vmul.f32 %v493, %v367
        %s495 = sld [smem:[#allocation2 + $0x84]]
        %v496 = vstv %s495
        %v497 = vmul.f32 %v496, %v367
        %v499 = vrot.slane %v497, 5
        %v500 = vrot.slane %v499, 4
        %v502 = vadd.f32 %v494, %v500
        %s503 = sld [smem:[#allocation2 + $0x104]]
        %v504 = vstv %s503
        %v505 = vmul.f32 %v504, %v367
        %v507 = vrot.slane %v505, 6
        %v508 = vrot.slane %v507, 4
        %v510 = vadd.f32 %v502, %v508
        %s511 = sld [smem:[#allocation2 + $0x184]]
        %v512 = vstv %s511
        %v513 = vmul.f32 %v512, %v367
        %v515 = vrot.slane %v513, 7
        %v516 = vrot.slane %v515, 4
        %v518 = vadd.f32 %v510, %v516
        %s519 = sld [smem:[#allocation4 + $0x4]]
        %v520 = vstv %s519
        %v521 = vadd.f32 %v518, %v520
        %v522 = vtanh.pop %v521
        %s523 = sld [smem:[#allocation2 + $0x5]]
        %v524 = vstv %s523
        %v525 = vmul.f32 %v524, %v367
        %s526 = sld [smem:[#allocation2 + $0x85]]
        %v527 = vstv %s526
        %v528 = vmul.f32 %v527, %v367
        %v530 = vrot.slane %v528, 5
        %v531 = vrot.slane %v530, 4
        %v533 = vadd.f32 %v525, %v531
        %s534 = sld [smem:[#allocation2 + $0x105]]
        %v535 = vstv %s534
        %v536 = vmul.f32 %v535, %v367
        %v538 = vrot.slane %v536, 6
        %v539 = vrot.slane %v538, 4
        %v541 = vadd.f32 %v533, %v539
        %s542 = sld [smem:[#allocation2 + $0x185]]
        %v543 = vstv %s542
        %v544 = vmul.f32 %v543, %v367
        %v546 = vrot.slane %v544, 7
        %v547 = vrot.slane %v546, 4
        %v549 = vadd.f32 %v541, %v547
        %s550 = sld [smem:[#allocation4 + $0x5]]
        %v551 = vstv %s550
        %v552 = vadd.f32 %v549, %v551
        %v553 = vtanh.pop %v552
        %s554 = sld [smem:[#allocation2 + $0x6]]
        %v555 = vstv %s554
        %v556 = vmul.f32 %v555, %v367
        %s557 = sld [smem:[#allocation2 + $0x86]]
        %v558 = vstv %s557
        %v559 = vmul.f32 %v558, %v367
        %v561 = vrot.slane %v559, 5
        %v562 = vrot.slane %v561, 4
        %v564 = vadd.f32 %v556, %v562
        %s565 = sld [smem:[#allocation2 + $0x106]]
        %v566 = vstv %s565
        %v567 = vmul.f32 %v566, %v367
        %v569 = vrot.slane %v567, 6
        %v570 = vrot.slane %v569, 4
        %v572 = vadd.f32 %v564, %v570
        %s573 = sld [smem:[#allocation2 + $0x186]]
        %v574 = vstv %s573
        %v575 = vmul.f32 %v574, %v367
        %v577 = vrot.slane %v575, 7
        %v578 = vrot.slane %v577, 4
        %v580 = vadd.f32 %v572, %v578
        %s581 = sld [smem:[#allocation4 + $0x6]]
        %v582 = vstv %s581
        %v583 = vadd.f32 %v580, %v582
        %v584 = vtanh.pop %v583
        %s585 = sld [smem:[#allocation2 + $0x7]]
        %v586 = vstv %s585
        %v587 = vmul.f32 %v586, %v367
        %s588 = sld [smem:[#allocation2 + $0x87]]
        %v589 = vstv %s588
        %v590 = vmul.f32 %v589, %v367
        %v592 = vrot.slane %v590, 5
        %v593 = vrot.slane %v592, 4
        %v595 = vadd.f32 %v587, %v593
        %s596 = sld [smem:[#allocation2 + $0x107]]
        %v597 = vstv %s596
        %v598 = vmul.f32 %v597, %v367
        %v600 = vrot.slane %v598, 6
        %v601 = vrot.slane %v600, 4
        %v603 = vadd.f32 %v595, %v601
        %s604 = sld [smem:[#allocation2 + $0x187]]
        %v605 = vstv %s604
        %v606 = vmul.f32 %v605, %v367
        %v608 = vrot.slane %v606, 7
        %v609 = vrot.slane %v608, 4
        %v611 = vadd.f32 %v603, %v609
        %s612 = sld [smem:[#allocation4 + $0x7]]
        %v613 = vstv %s612
        %v614 = vadd.f32 %v611, %v613
        %v615 = vtanh.pop %v614
        %v618 = vunpack.c.l.s4 1966171168
        %v619 = vunpack.c.0.s8 %v618
        %v620 = vlaneseq
        %v621 = vshrl.u32 %v620, 7
        %v622 = vsub.s32 %v619, %v621
        %v623 = vrot.slane %v398, %v622
        %v625 = vunpack.c.l.s4 1966171168
        %v626 = vunpack.c.0.s8 %v625
        %v627 = vlaneseq
        %v628 = vshrl.u32 %v627, 7
        %v629 = vsub.s32 %v626, %v628
        %v630 = vrot.slane %v623, %v629
        %v632 = vlaneseq
        %vm633 = vcmp.ge.s32.totalorder %v632, 0
        %vm634 = vcmp.lt.s32.totalorder %v632, 256
        %vm635 = vmand %vm633, %vm634
        %636 = vst.msk [vmem:[%s365] ss:$8 sm:$0x3] %vm635, %v630
        %637 = vst.msk [vmem:[%s365] ss:$8 sm:$0x0] %vm635, %v630
        %v640 = vunpack.c.l.s4 1966171168
        %v641 = vunpack.c.0.s8 %v640
        %v642 = vlaneseq
        %v643 = vshrl.u32 %v642, 7
        %v644 = vsub.s32 %v641, %v643
        %v645 = vrot.slane %v429, %v644
        %v647 = vunpack.c.l.s4 1966171168
        %v648 = vunpack.c.0.s8 %v647
        %v649 = vlaneseq
        %v650 = vshrl.u32 %v649, 7
        %v651 = vsub.s32 %v648, %v650
        %v652 = vrot.slane %v645, %v651
        %s654 = scalar_lea.vmem %s365, 1
        %655 = vst.msk [vmem:[%s654] ss:$8 sm:$0x3] %vm635, %v652
        %656 = vst.msk [vmem:[%s654] ss:$8 sm:$0x0] %vm635, %v652
        %v659 = vunpack.c.l.s4 1966171168
        %v660 = vunpack.c.0.s8 %v659
        %v661 = vlaneseq
        %v662 = vshrl.u32 %v661, 7
        %v663 = vsub.s32 %v660, %v662
        %v664 = vrot.slane %v460, %v663
        %v666 = vunpack.c.l.s4 1966171168
        %v667 = vunpack.c.0.s8 %v666
        %v668 = vlaneseq
        %v669 = vshrl.u32 %v668, 7
        %v670 = vsub.s32 %v667, %v669
        %v671 = vrot.slane %v664, %v670
        %s673 = scalar_lea.vmem %s365, 2
        %674 = vst.msk [vmem:[%s673] ss:$8 sm:$0x3] %vm635, %v671
        %675 = vst.msk [vmem:[%s673] ss:$8 sm:$0x0] %vm635, %v671
        %v678 = vunpack.c.l.s4 1966171168
        %v679 = vunpack.c.0.s8 %v678
        %v680 = vlaneseq
        %v681 = vshrl.u32 %v680, 7
        %v682 = vsub.s32 %v679, %v681
        %v683 = vrot.slane %v491, %v682
        %v685 = vunpack.c.l.s4 1966171168
        %v686 = vunpack.c.0.s8 %v685
        %v687 = vlaneseq
        %v688 = vshrl.u32 %v687, 7
        %v689 = vsub.s32 %v686, %v688
        %v690 = vrot.slane %v683, %v689
        %s692 = scalar_lea.vmem %s365, 3
        %693 = vst.msk [vmem:[%s692] ss:$8 sm:$0x3] %vm635, %v690
        %694 = vst.msk [vmem:[%s692] ss:$8 sm:$0x0] %vm635, %v690
        %v697 = vunpack.c.l.s4 1966171168
        %v698 = vunpack.c.0.s8 %v697
        %v699 = vlaneseq
        %v700 = vshrl.u32 %v699, 7
        %v701 = vsub.s32 %v698, %v700
        %v702 = vrot.slane %v522, %v701
        %v704 = vunpack.c.l.s4 1966171168
        %v705 = vunpack.c.0.s8 %v704
        %v706 = vlaneseq
        %v707 = vshrl.u32 %v706, 7
        %v708 = vsub.s32 %v705, %v707
        %v709 = vrot.slane %v702, %v708
        %s711 = scalar_lea.vmem %s365, 4
        %712 = vst.msk [vmem:[%s711] ss:$8 sm:$0x3] %vm635, %v709
        %713 = vst.msk [vmem:[%s711] ss:$8 sm:$0x0] %vm635, %v709
        %v716 = vunpack.c.l.s4 1966171168
        %v717 = vunpack.c.0.s8 %v716
        %v718 = vlaneseq
        %v719 = vshrl.u32 %v718, 7
        %v720 = vsub.s32 %v717, %v719
        %v721 = vrot.slane %v553, %v720
        %v723 = vunpack.c.l.s4 1966171168
        %v724 = vunpack.c.0.s8 %v723
        %v725 = vlaneseq
        %v726 = vshrl.u32 %v725, 7
        %v727 = vsub.s32 %v724, %v726
        %v728 = vrot.slane %v721, %v727
        %s730 = scalar_lea.vmem %s365, 5
        %731 = vst.msk [vmem:[%s730] ss:$8 sm:$0x3] %vm635, %v728
        %732 = vst.msk [vmem:[%s730] ss:$8 sm:$0x0] %vm635, %v728
        %v735 = vunpack.c.l.s4 1966171168
        %v736 = vunpack.c.0.s8 %v735
        %v737 = vlaneseq
        %v738 = vshrl.u32 %v737, 7
        %v739 = vsub.s32 %v736, %v738
        %v740 = vrot.slane %v584, %v739
        %v742 = vunpack.c.l.s4 1966171168
        %v743 = vunpack.c.0.s8 %v742
        %v744 = vlaneseq
        %v745 = vshrl.u32 %v744, 7
        %v746 = vsub.s32 %v743, %v745
        %v747 = vrot.slane %v740, %v746
        %s749 = scalar_lea.vmem %s365, 6
        %750 = vst.msk [vmem:[%s749] ss:$8 sm:$0x3] %vm635, %v747
        %751 = vst.msk [vmem:[%s749] ss:$8 sm:$0x0] %vm635, %v747
        %v754 = vunpack.c.l.s4 1966171168
        %v755 = vunpack.c.0.s8 %v754
        %v756 = vlaneseq
        %v757 = vshrl.u32 %v756, 7
        %v758 = vsub.s32 %v755, %v757
        %v759 = vrot.slane %v615, %v758
        %v761 = vunpack.c.l.s4 1966171168
        %v762 = vunpack.c.0.s8 %v761
        %v763 = vlaneseq
        %v764 = vshrl.u32 %v763, 7
        %v765 = vsub.s32 %v762, %v764
        %v766 = vrot.slane %v759, %v765
        %s768 = scalar_lea.vmem %s365, 7
        %769 = vst.msk [vmem:[%s768] ss:$8 sm:$0x3] %vm635, %v766
        %770 = vst.msk [vmem:[%s768] ss:$8 sm:$0x0] %vm635, %v766
        %s771 = sld [smem:[#allocation6]]
        %v772 = vstv %s771
        %v773 = vmul.f32 %v772, %v398
        %s774 = sld [smem:[#allocation6 + $0x80]]
        %v775 = vstv %s774
        %v776 = vmul.f32 %v775, %v429
        %v777 = vadd.f32 %v773, %v776
        %s778 = sld [smem:[#allocation6 + $0x100]]
        %v779 = vstv %s778
        %v780 = vmul.f32 %v779, %v460
        %v781 = vadd.f32 %v777, %v780
        %s782 = sld [smem:[#allocation6 + $0x180]]
        %v783 = vstv %s782
        %v784 = vmul.f32 %v783, %v491
        %v785 = vadd.f32 %v781, %v784
        %s786 = sld [smem:[#allocation6 + $0x200]]
        %v787 = vstv %s786
        %v788 = vmul.f32 %v787, %v522
        %v789 = vadd.f32 %v785, %v788
        %s790 = sld [smem:[#allocation6 + $0x280]]
        %v791 = vstv %s790
        %v792 = vmul.f32 %v791, %v553
        %v793 = vadd.f32 %v789, %v792
        %s794 = sld [smem:[#allocation6 + $0x300]]
        %v795 = vstv %s794
        %v796 = vmul.f32 %v795, %v584
        %v797 = vadd.f32 %v793, %v796
        %s798 = sld [smem:[#allocation6 + $0x380]]
        %v799 = vstv %s798
        %v800 = vmul.f32 %v799, %v615
        %v801 = vadd.f32 %v797, %v800
        %v802 = vadd.f32 %v367, %v801
        %s803 = sld [smem:[#allocation7]]
        %v804 = vstv %s803
        %v805 = vadd.f32 %v802, %v804
        %v808 = vunpack.c.l.s4 1966171168
        %v809 = vunpack.c.0.s8 %v808
        %v810 = vlaneseq
        %v811 = vshrl.u32 %v810, 7
        %v812 = vsub.s32 %v809, %v811
        %v813 = vrot.slane %v805, %v812
        %v815 = vunpack.c.l.s4 1966171168
        %v816 = vunpack.c.0.s8 %v815
        %v817 = vlaneseq
        %v818 = vshrl.u32 %v817, 7
        %v819 = vsub.s32 %v816, %v818
        %v820 = vrot.slane %v813, %v819
        %822 = vst.msk [vmem:[%s355] ss:$4 sm:$0x3] %vm635, %v820
        %s823 = sld [smem:[#allocation6 + $0x1]]
        %v824 = vstv %s823
        %v825 = vmul.f32 %v824, %v398
        %s826 = sld [smem:[#allocation6 + $0x81]]
        %v827 = vstv %s826
        %v828 = vmul.f32 %v827, %v429
        %v829 = vadd.f32 %v825, %v828
        %s830 = sld [smem:[#allocation6 + $0x101]]
        %v831 = vstv %s830
        %v832 = vmul.f32 %v831, %v460
        %v833 = vadd.f32 %v829, %v832
        %s834 = sld [smem:[#allocation6 + $0x181]]
        %v835 = vstv %s834
        %v836 = vmul.f32 %v835, %v491
        %v837 = vadd.f32 %v833, %v836
        %s838 = sld [smem:[#allocation6 + $0x201]]
        %v839 = vstv %s838
        %v840 = vmul.f32 %v839, %v522
        %v841 = vadd.f32 %v837, %v840
        %s842 = sld [smem:[#allocation6 + $0x281]]
        %v843 = vstv %s842
        %v844 = vmul.f32 %v843, %v553
        %v845 = vadd.f32 %v841, %v844
        %s846 = sld [smem:[#allocation6 + $0x301]]
        %v847 = vstv %s846
        %v848 = vmul.f32 %v847, %v584
        %v849 = vadd.f32 %v845, %v848
        %s850 = sld [smem:[#allocation6 + $0x381]]
        %v851 = vstv %s850
        %v852 = vmul.f32 %v851, %v615
        %v853 = vadd.f32 %v849, %v852
        %v855 = vrot.slane %v853, 7
        %v857 = vadd.f32 %v367, %v855
        %s858 = sld [smem:[#allocation7 + $0x1]]
        %v859 = vstv %s858
        %v860 = vadd.f32 %v857, %v859
        %v863 = vunpack.c.l.s4 1966171168
        %v864 = vunpack.c.0.s8 %v863
        %v865 = vlaneseq
        %v866 = vshrl.u32 %v865, 7
        %v867 = vsub.s32 %v864, %v866
        %v868 = vrot.slane %v860, %v867
        %v869 = vcombine.high %v868, %v868
        %v871 = vunpack.c.l.s4 1966171168
        %v872 = vunpack.c.0.s8 %v871
        %v873 = vlaneseq
        %v874 = vshrl.u32 %v873, 7
        %v875 = vsub.s32 %v872, %v874
        %v876 = vrot.slane %v869, %v875
        %s878 = scalar_lea.vmem %s355, 1
        %879 = vst.msk [vmem:[%s878] ss:$4 sm:$0x3] %vm635, %v876
        %s880 = sld [smem:[#allocation6 + $0x2]]
        %v881 = vstv %s880
        %v882 = vmul.f32 %v881, %v398
        %s883 = sld [smem:[#allocation6 + $0x82]]
        %v884 = vstv %s883
        %v885 = vmul.f32 %v884, %v429
        %v886 = vadd.f32 %v882, %v885
        %s887 = sld [smem:[#allocation6 + $0x102]]
        %v888 = vstv %s887
        %v889 = vmul.f32 %v888, %v460
        %v890 = vadd.f32 %v886, %v889
        %s891 = sld [smem:[#allocation6 + $0x182]]
        %v892 = vstv %s891
        %v893 = vmul.f32 %v892, %v491
        %v894 = vadd.f32 %v890, %v893
        %s895 = sld [smem:[#allocation6 + $0x202]]
        %v896 = vstv %s895
        %v897 = vmul.f32 %v896, %v522
        %v898 = vadd.f32 %v894, %v897
        %s899 = sld [smem:[#allocation6 + $0x282]]
        %v900 = vstv %s899
        %v901 = vmul.f32 %v900, %v553
        %v902 = vadd.f32 %v898, %v901
        %s903 = sld [smem:[#allocation6 + $0x302]]
        %v904 = vstv %s903
        %v905 = vmul.f32 %v904, %v584
        %v906 = vadd.f32 %v902, %v905
        %s907 = sld [smem:[#allocation6 + $0x382]]
        %v908 = vstv %s907
        %v909 = vmul.f32 %v908, %v615
        %v910 = vadd.f32 %v906, %v909
        %v912 = vrot.slane %v910, 6
        %v914 = vadd.f32 %v367, %v912
        %s915 = sld [smem:[#allocation7 + $0x2]]
        %v916 = vstv %s915
        %v917 = vadd.f32 %v914, %v916
        %v920 = vunpack.c.l.s4 1966171168
        %v921 = vunpack.c.0.s8 %v920
        %v922 = vlaneseq
        %v923 = vshrl.u32 %v922, 7
        %v924 = vsub.s32 %v921, %v923
        %v925 = vrot.slane %v917, %v924
        %v927 = vunpack.c.l.s4 1966171168
        %v928 = vunpack.c.0.s8 %v927
        %v929 = vlaneseq
        %v930 = vshrl.u32 %v929, 7
        %v931 = vsub.s32 %v928, %v930
        %v932 = vrot.slane %v925, %v931
        %v933 = vcombine.high %v932, %v932
        %s935 = scalar_lea.vmem %s355, 2
        %936 = vst.msk [vmem:[%s935] ss:$4 sm:$0x3] %vm635, %v933
        %s937 = sld [smem:[#allocation6 + $0x3]]
        %v938 = vstv %s937
        %v939 = vmul.f32 %v938, %v398
        %s940 = sld [smem:[#allocation6 + $0x83]]
        %v941 = vstv %s940
        %v942 = vmul.f32 %v941, %v429
        %v943 = vadd.f32 %v939, %v942
        %s944 = sld [smem:[#allocation6 + $0x103]]
        %v945 = vstv %s944
        %v946 = vmul.f32 %v945, %v460
        %v947 = vadd.f32 %v943, %v946
        %s948 = sld [smem:[#allocation6 + $0x183]]
        %v949 = vstv %s948
        %v950 = vmul.f32 %v949, %v491
        %v951 = vadd.f32 %v947, %v950
        %s952 = sld [smem:[#allocation6 + $0x203]]
        %v953 = vstv %s952
        %v954 = vmul.f32 %v953, %v522
        %v955 = vadd.f32 %v951, %v954
        %s956 = sld [smem:[#allocation6 + $0x283]]
        %v957 = vstv %s956
        %v958 = vmul.f32 %v957, %v553
        %v959 = vadd.f32 %v955, %v958
        %s960 = sld [smem:[#allocation6 + $0x303]]
        %v961 = vstv %s960
        %v962 = vmul.f32 %v961, %v584
        %v963 = vadd.f32 %v959, %v962
        %s964 = sld [smem:[#allocation6 + $0x383]]
        %v965 = vstv %s964
        %v966 = vmul.f32 %v965, %v615
        %v967 = vadd.f32 %v963, %v966
        %v969 = vrot.slane %v967, 5
        %v971 = vadd.f32 %v367, %v969
        %s972 = sld [smem:[#allocation7 + $0x3]]
        %v973 = vstv %s972
        %v974 = vadd.f32 %v971, %v973
        %v977 = vunpack.c.l.s4 1966171168
        %v978 = vunpack.c.0.s8 %v977
        %v979 = vlaneseq
        %v980 = vshrl.u32 %v979, 7
        %v981 = vsub.s32 %v978, %v980
        %v982 = vrot.slane %v974, %v981
        %v983 = vcombine.high %v982, %v982
        %v985 = vunpack.c.l.s4 1966171168
        %v986 = vunpack.c.0.s8 %v985
        %v987 = vlaneseq
        %v988 = vshrl.u32 %v987, 7
        %v989 = vsub.s32 %v986, %v988
        %v990 = vrot.slane %v983, %v989
        %v991 = vcombine.high %v990, %v990
        %s993 = scalar_lea.vmem %s355, 3
        %994 = vst.msk [vmem:[%s993] ss:$4 sm:$0x3] %vm635, %v991
        %s995 = smul.u32 2, %s26
        %p996 = scmp.lt.s32.totalorder %s25, 1
        %s997 = scalar_select %p996, %s25, 1
        %p998 = scmp.lt.s32.totalorder %s995, 1
        %s999 = scalar_select %p998, %s995, 1
        %s1000 = smul.addr %s997, 2
        %s1001 = sadd.s32 %s999, %s1000
        %s1002 = smul.addr %s1001, 4
        %s1003 = scalar_lea.vmem %s5, %s1002
        %s1004 = smul.u32 2, %s26
        %p1005 = scmp.lt.s32.totalorder %s25, 1
        %s1006 = scalar_select %p1005, %s25, 1
        %p1007 = scmp.lt.s32.totalorder %s1004, 1
        %s1008 = scalar_select %p1007, %s1004, 1
        %s1009 = smul.addr %s1006, 2
        %s1010 = sadd.s32 %s1008, %s1009
        %s1011 = smul.addr %s1010, 8
        %s1012 = scalar_lea.vmem %s6, %s1011
        // Predicated region
        $region57: #{closed_call.83} parent=39 // pred_check
          %p1013 = pneg %p165
        $region58: #{closed_call.83} parent=39 // pred_check_branch
          %1015 = sbr.rel (%p1013) target = $region60
        $region59: #{closed_call.83} parent=39 // pred_region
          %s1016 = smul.u32 2, %s26
        $region60: #{closed_call.83} parent=39 // pred_fallthru
          _
        // Predicated region
        $region61: #{closed_call.83} parent=39 // pred_check
          %p1017 = pneg %p193
        $region62: #{closed_call.83} parent=39 // pred_check_branch
          %1019 = sbr.rel (%p1017) target = $region64
        $region63: #{closed_call.83} parent=39 // pred_region
          %s1020 = smul.u32 2, %s26
        $region64: #{closed_call.83} parent=39 // pred_fallthru
          _
      $region40: #{closed_call.83} parent=5 // pred_fallthru
        _
      %p1021 = scmp.le.s32.totalorder 2, %s16
      // Predicated region
      $region65: #{closed_call.83} parent=5 // pred_check
        %p1022 = pneg %p1021
      $region66: #{closed_call.83} parent=5 // pred_check_branch
        %1024 = sbr.rel (%p1022) target = $region68
      $region67: #{closed_call.83} parent=5 // pred_region
        %s1025 = ssub.s32 %s16, 2
        // Predicated region
        $region69: #{closed_call.83} parent=67 // pred_check
          %p1026 = pneg %p171
        $region70: #{closed_call.83} parent=67 // pred_check_branch
          %1028 = sbr.rel (%p1026) target = $region72
        $region71: #{closed_call.83} parent=67 // pred_region
          %s1029 = smul.u32 2, %s28
          %p1030 = scmp.lt.s32.totalorder %s27, 1
          %s1031 = scalar_select %p1030, %s27, 1
          %p1032 = scmp.lt.s32.totalorder %s1029, 1
          %s1033 = scalar_select %p1032, %s1029, 1
          %s1034 = smul.addr %s1031, 2
          %s1035 = sadd.s32 %s1033, %s1034
          %s1036 = smul.addr %s1035, 4
          %s1037 = scalar_lea.vmem %s5, %s1036
        $region72: #{closed_call.83} parent=67 // pred_fallthru
          _
        // Predicated region
        $region73: #{closed_call.83} parent=67 // pred_check
          %p1038 = pneg %p199
        $region74: #{closed_call.83} parent=67 // pred_check_branch
          %1040 = sbr.rel (%p1038) target = $region76
        $region75: #{closed_call.83} parent=67 // pred_region
          %s1041 = smul.u32 2, %s28
          %p1042 = scmp.lt.s32.totalorder %s27, 1
          %s1043 = scalar_select %p1042, %s27, 1
          %p1044 = scmp.lt.s32.totalorder %s1041, 1
          %s1045 = scalar_select %p1044, %s1041, 1
          %s1046 = smul.addr %s1043, 2
          %s1047 = sadd.s32 %s1045, %s1046
          %s1048 = smul.addr %s1047, 8
          %s1049 = scalar_lea.vmem %s6, %s1048
        $region76: #{closed_call.83} parent=67 // pred_fallthru
          _
      $region68: #{closed_call.83} parent=5 // pred_fallthru
        _
    $region6: #{closed_call.83} parent=1 // loop_footer
      %s20 = sadd.s32 1, %s16
    $region7: #{closed_call.83} parent=1 // loop_footer_branch
      %15 = sbr.rel target = $region3
    $region8: #{closed_call.83} parent=1 // loop_exit
      _
    %1050 = vsyncpa [#allocation3], 1
    %s1051 = scalar_lea.sflag [#allocation3], 1
    %1052 = vsyncpa %s1051, 1
    %1053 = vsyncpa [#allocation5], 1
    %1054 = vsyncpa [#allocation8], 1

// kernel: closed_call.105
$region0: #{closed_call.105}
  #allocation0 [shape = 'u32[]', space=smem, size = 0x4, offset = 0x4, fixed_abs, tag = 'smem constant byte address 0x4 - core index']
  #allocation1 [shape = 'u32[144,128]{1,0:T(1,128)}', space=vmem, size = 0x12000, scoped, tag = 'internal scratch']
  %s0 = inlined_call_operand.vmem [shape: f32[2,4,256], index: 0, kind: input, shape index: {}]
  %s1 = inlined_call_operand.vmem [shape: f32[2,4,256], index: 1, kind: input, shape index: {}]
  %s2 = inlined_call_operand.vmem [shape: f32[2,4,256], index: 2, kind: output, shape index: {0}]
  %s3 = inlined_call_operand.vmem [shape: f32[2], index: 3, kind: output, shape index: {1}]
  %4 = xla_tuple %s2, %s3
  %s5 = sld [smem:[#allocation0]]
  $region57: #{closed_call.105} parent=0
    _
  %s7 = ssub.s32 1, %s5
  %s8 = scalar_select 0, %s7, %s5
  $region1: #{closed_call.105} parent=0
    #allocation2 [shape = 'u8[512]{0}', space=smem, size = 0x200, scoped, tag = 'output window, operand 1, single buffered']
    #allocation3 [shape = 's32[2]{0}', space=sflag, size = 0x8, scoped, tag = 'scoped memory for closed_call.105']
    %9 = vsyncpa [#allocation3], 0
    loop: start=0, step=1, limit=4
    $region2: #{closed_call.105} parent=1 // loop_pre_header
      _
    $region3: #{closed_call.105} parent=1 // loop_header
      %s11 = sphi 0, %s15
      %p12 = scmp.ge.s32.totalorder %s11, 4
      %s18 = sphi 0, %s30
      %s19 = sphi 0, %s26
      %s20 = sphi 0, %s18
      %s21 = sphi 0, %s19
      %s22 = sphi 0, %s20
      %s23 = sphi 0, %s21
      %s35 = sphi 0, %s37
      %s38 = sphi 0, %s35
      %s39 = sphi 0, %s38
      %s55 = sphi 0, %s39
      %s63 = sphi 0, %s65
      %s66 = sphi 0, %s63
      %s67 = sphi 0, %s66
      %s83 = sphi 0, %s67
      %s91 = sphi 0, %s93
      %s94 = sphi 0, %s91
      %s95 = sphi 0, %s94
      %s111 = sphi 0, %s95
      %s115 = sphi 0, %s115
      %s117 = sphi 0, %s115
      %s118 = sphi 0, %s117
      %s132 = sphi 0, %s118
    $region4: #{closed_call.105} parent=1 // loop_header_branch
      %14 = sbr.rel (%p12) target = $region8
    $region5: #{closed_call.105} parent=1 // loop_body
      %s16 = ssub.s32 %s11, 1
      %s17 = ssub.s32 %s11, 2
      %s24 = sadd.s32 1, %s19
      %p25 = scmp.ge.s32.totalorder %s24, 1
      %s26 = scalar_select %p25, 0, %s24
      %s27 = sadd.s32 1, %s18
      %s28 = scalar_select %p25, %s27, %s18
      %p29 = scmp.ge.s32.totalorder %s28, 2
      %s30 = scalar_select %p29, 0, %s28
      %s31 = ssub.s32 %s18, %s30
      %s32 = ssub.s32 %s19, %s26
      %s33 = sor.u32 %s31, %s32
      %p34 = scmp.eq.s32.totalorder %s33, 0
      %s36 = sadd.s32 %s35, 1
      %s37 = scalar_select %p34, %s35, %s36
      %p40 = pneg %p34
      %p41 = scmp.eq.s32.totalorder %s11, 1
      %p42 = por %p40, %p41
      %p43 = scmp.ne.s32.totalorder %s35, %s38
      %p44 = scmp.eq.s32.totalorder %s11, 0
      %p45 = por %p43, %p44
      %p46 = scmp.ne.s32.totalorder %s35, %s38
      %p47 = scmp.eq.s32.totalorder %s16, 1
      %p48 = por %p46, %p47
      %p49 = scmp.ne.s32.totalorder %s38, %s39
      %p50 = scmp.eq.s32.totalorder %s16, 0
      %p51 = por %p49, %p50
      %p52 = scmp.ne.s32.totalorder %s38, %s39
      %p53 = scmp.eq.s32.totalorder %s17, 1
      %p54 = por %p52, %p53
      %p56 = scmp.ne.s32.totalorder %s39, %s55
      %p57 = scmp.eq.s32.totalorder %s17, 0
      %p58 = por %p56, %p57
      %s59 = ssub.s32 %s18, %s30
      %s60 = ssub.s32 %s19, %s26
      %s61 = sor.u32 %s59, %s60
      %p62 = scmp.eq.s32.totalorder %s61, 0
      %s64 = sadd.s32 %s63, 1
      %s65 = scalar_select %p62, %s63, %s64
      %p68 = pneg %p62
      %p69 = scmp.eq.s32.totalorder %s11, 1
      %p70 = por %p68, %p69
      %p71 = scmp.ne.s32.totalorder %s63, %s66
      %p72 = scmp.eq.s32.totalorder %s11, 0
      %p73 = por %p71, %p72
      %p74 = scmp.ne.s32.totalorder %s63, %s66
      %p75 = scmp.eq.s32.totalorder %s16, 1
      %p76 = por %p74, %p75
      %p77 = scmp.ne.s32.totalorder %s66, %s67
      %p78 = scmp.eq.s32.totalorder %s16, 0
      %p79 = por %p77, %p78
      %p80 = scmp.ne.s32.totalorder %s66, %s67
      %p81 = scmp.eq.s32.totalorder %s17, 1
      %p82 = por %p80, %p81
      %p84 = scmp.ne.s32.totalorder %s67, %s83
      %p85 = scmp.eq.s32.totalorder %s17, 0
      %p86 = por %p84, %p85
      %s87 = ssub.s32 %s18, %s30
      %s88 = ssub.s32 %s19, %s26
      %s89 = sor.u32 %s87, %s88
      %p90 = scmp.eq.s32.totalorder %s89, 0
      %s92 = sadd.s32 %s91, 1
      %s93 = scalar_select %p90, %s91, %s92
      %p96 = pneg %p90
      %p97 = scmp.eq.s32.totalorder %s11, 1
      %p98 = por %p96, %p97
      %p99 = scmp.ne.s32.totalorder %s91, %s94
      %p100 = scmp.eq.s32.totalorder %s11, 0
      %p101 = por %p99, %p100
      %p102 = scmp.ne.s32.totalorder %s91, %s94
      %p103 = scmp.eq.s32.totalorder %s16, 1
      %p104 = por %p102, %p103
      %p105 = scmp.ne.s32.totalorder %s94, %s95
      %p106 = scmp.eq.s32.totalorder %s16, 0
      %p107 = por %p105, %p106
      %p108 = scmp.ne.s32.totalorder %s94, %s95
      %p109 = scmp.eq.s32.totalorder %s17, 1
      %p110 = por %p108, %p109
      %p112 = scmp.ne.s32.totalorder %s95, %s111
      %p113 = scmp.eq.s32.totalorder %s17, 0
      %p114 = por %p112, %p113
      %s116 = sadd.s32 %s115, 1
      %p119 = scmp.eq.s32.totalorder %s11, 1
      %p120 = scmp.ne.s32.totalorder %s115, %s117
      %p121 = scmp.eq.s32.totalorder %s11, 0
      %p122 = por %p120, %p121
      %p123 = scmp.ne.s32.totalorder %s115, %s117
      %p124 = scmp.eq.s32.totalorder %s16, 1
      %p125 = por %p123, %p124
      %p126 = scmp.ne.s32.totalorder %s117, %s118
      %p127 = scmp.eq.s32.totalorder %s16, 0
      %p128 = por %p126, %p127
      %p129 = scmp.ne.s32.totalorder %s117, %s118
      %p130 = scmp.eq.s32.totalorder %s17, 1
      %p131 = por %p129, %p130
      %p133 = scmp.ne.s32.totalorder %s118, %s132
      %p134 = scmp.eq.s32.totalorder %s17, 0
      %p135 = por %p133, %p134
      %p136 = scmp.le.s32.totalorder 1, %s11
      %p137 = scmp.lt.s32.totalorder %s11, 3
      %p138 = pnand %p136, %p137
      %p139 = pneg %p138
      // Predicated region
      $region9: #{closed_call.105} parent=5 // pred_check
        _
      $region10: #{closed_call.105} parent=5 // pred_check_branch
        %141 = sbr.rel (%p138) target = $region12
      $region11: #{closed_call.105} parent=5 // pred_region
        %s142 = ssub.s32 %s11, 1
      $region12: #{closed_call.105} parent=5 // pred_fallthru
        _
      %p143 = scmp.lt.s32.totalorder %s11, 2
      // Predicated region
      $region13: #{closed_call.105} parent=5 // pred_check
        %p144 = pneg %p143
      $region14: #{closed_call.105} parent=5 // pred_check_branch
        %146 = sbr.rel (%p144) target = $region16
      $region15: #{closed_call.105} parent=5 // pred_region
        // Predicated region
        $region17: #{closed_call.105} parent=15 // pred_check
          %p147 = pneg %p45
        $region18: #{closed_call.105} parent=15 // pred_check_branch
          %149 = sbr.rel (%p147) target = $region20
        $region19: #{closed_call.105} parent=15 // pred_region
          %s150 = smul.u32 2, %s19
          %p151 = scmp.lt.s32.totalorder %s18, 1
          %s152 = scalar_select %p151, %s18, 1
          %p153 = scmp.lt.s32.totalorder %s150, 1
          %s154 = scalar_select %p153, %s150, 1
          %s155 = smul.addr %s152, 2
          %s156 = sadd.s32 %s154, %s155
          %s157 = smul.addr %s156, 4
          %s158 = scalar_lea.vmem %s0, %s157
          %s159 = smul.u32 2, %s19
        $region20: #{closed_call.105} parent=15 // pred_fallthru
          _
        // Predicated region
        $region21: #{closed_call.105} parent=15 // pred_check
          %p160 = pneg %p73
        $region22: #{closed_call.105} parent=15 // pred_check_branch
          %162 = sbr.rel (%p160) target = $region24
        $region23: #{closed_call.105} parent=15 // pred_region
          %s163 = smul.u32 2, %s19
          %p164 = scmp.lt.s32.totalorder %s18, 1
          %s165 = scalar_select %p164, %s18, 1
          %p166 = scmp.lt.s32.totalorder %s163, 1
          %s167 = scalar_select %p166, %s163, 1
          %s168 = smul.addr %s165, 2
          %s169 = sadd.s32 %s167, %s168
          %s170 = smul.addr %s169, 4
          %s171 = scalar_lea.vmem %s1, %s170
          %s172 = smul.u32 2, %s19
        $region24: #{closed_call.105} parent=15 // pred_fallthru
          _
      $region16: #{closed_call.105} parent=5 // pred_fallthru
        _
      %p173 = scmp.le.s32.totalorder 1, %s11
      %p174 = scmp.lt.s32.totalorder %s11, 3
      %p175 = pnand %p173, %p174
      %p176 = pneg %p175
      // Predicated region
      $region25: #{closed_call.105} parent=5 // pred_check
        _
      $region26: #{closed_call.105} parent=5 // pred_check_branch
        %178 = sbr.rel (%p175) target = $region28
      $region27: #{closed_call.105} parent=5 // pred_region
        %s179 = ssub.s32 %s11, 1
        %s180 = smul.u32 2, %s21
        %p181 = scmp.lt.s32.totalorder %s20, 1
        %s182 = scalar_select %p181, %s20, 1
        %p183 = scmp.lt.s32.totalorder %s180, 1
        %s184 = scalar_select %p183, %s180, 1
        %s185 = smul.addr %s182, 2
        %s186 = sadd.s32 %s184, %s185
        %s187 = smul.addr %s186, 4
        %s188 = scalar_lea.vmem %s0, %s187
        %p189 = pneg %p51
        %p190 = pneg %p48
        %s191 = smul.u32 2, %s21
        %p192 = scmp.lt.s32.totalorder %s20, 1
        %s193 = scalar_select %p192, %s20, 1
        %p194 = scmp.lt.s32.totalorder %s191, 1
        %s195 = scalar_select %p194, %s191, 1
        %s196 = smul.addr %s193, 2
        %s197 = sadd.s32 %s195, %s196
        %s198 = smul.addr %s197, 4
        %s199 = scalar_lea.vmem %s1, %s198
        %p200 = pneg %p79
        %p201 = pneg %p76
        %p202 = pneg %p107
        %p203 = pneg %p104
        %s204 = smul.u32 2, %s21
        %p205 = scmp.lt.s32.totalorder %s20, 1
        %s206 = scalar_select %p205, %s20, 1
        %p207 = scmp.lt.s32.totalorder %s204, 1
        %s208 = scalar_select %p207, %s204, 1
        %s209 = smul.addr %s206, 2
        %s210 = sadd.s32 %s208, %s209
        %s211 = smul.addr %s210, 4
        %s212 = scalar_lea.vmem %s2, %s211
        %p213 = pneg %p128
        %p214 = pneg %p125
        %s215 = smul.u32 2, %s21
        %p216 = scmp.lt.s32.totalorder %s20, 1
        %s217 = scalar_select %p216, %s20, 1
        %p218 = scmp.lt.s32.totalorder %s215, 1
        %s219 = scalar_select %p218, %s215, 1
        %s220 = smul.addr %s217, 2
        %s221 = sadd.s32 %s219, %s220
        %s222 = smul.addr %s221, 4
        %s223 = scalar_lea.vmem %s0, %s222
        %s224 = smul.u32 2, %s21
        %s225 = smul.u32 2, %s21
        %p226 = scmp.lt.s32.totalorder %s20, 1
        %s227 = scalar_select %p226, %s20, 1
        %p228 = scmp.lt.s32.totalorder %s225, 1
        %s229 = scalar_select %p228, %s225, 1
        %s230 = smul.addr %s227, 2
        %s231 = sadd.s32 %s229, %s230
        %s232 = smul.addr %s231, 4
        %s233 = scalar_lea.vmem %s1, %s232
        %s234 = smul.u32 2, %s21
        %s235 = smul.u32 2, %s21
        %p236 = scmp.lt.s32.totalorder %s20, 1
        %s237 = scalar_select %p236, %s20, 1
        %p238 = scmp.lt.s32.totalorder %s235, 1
        %s239 = scalar_select %p238, %s235, 1
        %s240 = smul.addr %s237, 2
        %s241 = sadd.s32 %s239, %s240
        %s242 = smul.addr %s241, 4
        %s243 = scalar_lea.vmem %s2, %s242
        %s244 = smul.u32 2, %s21
        %v245 = vld [vmem:[%s223] sm:$0xff]
        %v246 = vld [vmem:[%s233] sm:$0xff]
        %v247 = vadd.f32 %v245, %v246
        %248 = vst [vmem:[%s243] sm:$0xff] %v247
        %v249 = vmul.f32 %v247, %v247
        %v251 = vcombine.high %v249, %v249
        %vm253 = vcmask 1043456
        %v254 = vsel %vm253, %v249, 0.0
        %v255 = vsel %vm253, %v251, 0.0
        %v256 = vadd.f32 %v254, %v255
        %257 = vadd.xlane.f32.xlu0 %v256
        %v258 = vpop.xlane.xlu0 %257
        %v259 = vrot.slane %v258, 4
        %v260 = vadd.f32 %v258, %v259
        %v261 = vrot.slane %v260, 2
        %v262 = vadd.f32 %v260, %v261
        %v263 = vrot.slane %v262, 1
        %v264 = vadd.f32 %v262, %v263
        %s265 = vtos %v264
        %p266 = scmp.eq.s32.totalorder %s21, 0
        // Predicated region
        $region29: #{closed_call.105} parent=27 // pred_check
          %p267 = pneg %p266
        $region30: #{closed_call.105} parent=27 // pred_check_branch
          %269 = sbr.rel (%p267) target = $region32
        $region31: #{closed_call.105} parent=27 // pred_region
          %s270 = scalar_lea.smem [#allocation2], %s20
          %271 = sst [smem:[%s270]] %s265
        $region32: #{closed_call.105} parent=27 // pred_fallthru
          _
        %p272 = scmp.gt.s32.totalorder %s21, 0
        // Predicated region
        $region33: #{closed_call.105} parent=27 // pred_check
          %p273 = pneg %p272
        $region34: #{closed_call.105} parent=27 // pred_check_branch
          %275 = sbr.rel (%p273) target = $region36
        $region35: #{closed_call.105} parent=27 // pred_region
          %s276 = sld [smem:[#allocation2 + %s20]]
          %s277 = sadd.f32 %s276, %s265
          %s278 = scalar_lea.smem [#allocation2], %s20
          %279 = sst [smem:[%s278]] %s277
        $region36: #{closed_call.105} parent=27 // pred_fallthru
          _
        %s280 = smul.u32 2, %s21
        %p281 = scmp.lt.s32.totalorder %s20, 1
        %s282 = scalar_select %p281, %s20, 1
        %p283 = scmp.lt.s32.totalorder %s280, 1
        %s284 = scalar_select %p283, %s280, 1
        %s285 = smul.addr %s282, 2
        %s286 = sadd.s32 %s284, %s285
        %s287 = smul.addr %s286, 4
        %s288 = scalar_lea.vmem %s2, %s287
        // Predicated region
        $region37: #{closed_call.105} parent=27 // pred_check
          %p289 = pneg %p104
        $region38: #{closed_call.105} parent=27 // pred_check_branch
          %291 = sbr.rel (%p289) target = $region40
        $region39: #{closed_call.105} parent=27 // pred_region
          %s292 = smul.u32 2, %s21
        $region40: #{closed_call.105} parent=27 // pred_fallthru
          _
        // Predicated region
        $region41: #{closed_call.105} parent=27 // pred_check
          %p293 = pneg %p125
        $region42: #{closed_call.105} parent=27 // pred_check_branch
          %295 = sbr.rel (%p293) target = $region44
        $region43: #{closed_call.105} parent=27 // pred_region
          %s297 = ssub.s32 16, 16
          %298 = vsyncadd [#allocation3], %s297
          %s300 = sshll.u32 %s3, 4
          %s301 = int_to_ptr.vmem [resolvable:$true] %s300
          %303 = dma.smem_to_vmem [#allocation2], 16, %s301, [#allocation3]
        $region44: #{closed_call.105} parent=27 // pred_fallthru
          _
        // Predicated region
        $region45: #{closed_call.105} parent=27 // pred_check
          %p304 = pneg %p125
        $region46: #{closed_call.105} parent=27 // pred_check_branch
          %306 = sbr.rel (%p304) target = $region48
        $region47: #{closed_call.105} parent=27 // pred_region
          %307 = dma.done [#allocation3], 16
        $region48: #{closed_call.105} parent=27 // pred_fallthru
          _
        %308 = sfence
      $region28: #{closed_call.105} parent=5 // pred_fallthru
        _
      %p309 = scmp.le.s32.totalorder 2, %s11
      // Predicated region
      $region49: #{closed_call.105} parent=5 // pred_check
        %p310 = pneg %p309
      $region50: #{closed_call.105} parent=5 // pred_check_branch
        %312 = sbr.rel (%p310) target = $region52
      $region51: #{closed_call.105} parent=5 // pred_region
        %s313 = ssub.s32 %s11, 2
        // Predicated region
        $region53: #{closed_call.105} parent=51 // pred_check
          %p314 = pneg %p110
        $region54: #{closed_call.105} parent=51 // pred_check_branch
          %316 = sbr.rel (%p314) target = $region56
        $region55: #{closed_call.105} parent=51 // pred_region
          %s317 = smul.u32 2, %s23
          %p318 = scmp.lt.s32.totalorder %s22, 1
          %s319 = scalar_select %p318, %s22, 1
          %p320 = scmp.lt.s32.totalorder %s317, 1
          %s321 = scalar_select %p320, %s317, 1
          %s322 = smul.addr %s319, 2
          %s323 = sadd.s32 %s321, %s322
          %s324 = smul.addr %s323, 4
          %s325 = scalar_lea.vmem %s2, %s324
        $region56: #{closed_call.105} parent=51 // pred_fallthru
          _
      $region52: #{closed_call.105} parent=5 // pred_fallthru
        _
    $region6: #{closed_call.105} parent=1 // loop_footer
      %s15 = sadd.s32 1, %s11
    $region7: #{closed_call.105} parent=1 // loop_footer_branch
      %10 = sbr.rel target = $region3
    $region8: #{closed_call.105} parent=1 // loop_exit
      _
    %326 = vsyncpa [#allocation3], 1
    %s327 = scalar_lea.sflag [#allocation3], 1
    %328 = vsyncpa %s327, 1

// kernel: closed_call.106
$region0: #{closed_call.106}
  #allocation0 [shape = 'u32[]', space=smem, size = 0x4, offset = 0x4, fixed_abs, tag = 'smem constant byte address 0x4 - core index']
  #allocation1 [shape = 'u32[144,128]{1,0:T(1,128)}', space=vmem, size = 0x12000, scoped, tag = 'internal scratch']
  %s0 = inlined_call_operand.vmem [shape: f32[2,4,256], index: 0, kind: input, shape index: {}]
  %s1 = inlined_call_operand.vmem [shape: f32[2,4,256], index: 1, kind: input, shape index: {}]
  %s2 = inlined_call_operand.vmem [shape: f32[2,4,256], index: 2, kind: input, shape index: {}]
  %s3 = inlined_call_operand.vmem [shape: f32[2,4,256], index: 3, kind: input, shape index: {}]
  %s4 = inlined_call_operand.vmem [shape: f32[2], index: 4, kind: input, shape index: {}]
  %s5 = inlined_call_operand.vmem [shape: f32[8,16], index: 5, kind: input, shape index: {}]
  %s6 = inlined_call_operand.vmem [shape: f32[16], index: 6, kind: input, shape index: {}]
  %s7 = inlined_call_operand.vmem [shape: f32[4,4], index: 7, kind: input, shape index: {}]
  %s8 = inlined_call_operand.vmem [shape: f32[4], index: 8, kind: input, shape index: {}]
  %s9 = inlined_call_operand.vmem [shape: f32[2,4,256], index: 9, kind: output, shape index: {0}]
  %s10 = inlined_call_operand.vmem [shape: f32[2,4,256], index: 10, kind: output, shape index: {1}]
  %s11 = inlined_call_operand.vmem [shape: f32[2,4,256], index: 11, kind: output, shape index: {2}]
  %12 = xla_tuple %s9, %s10, %s11
  %s13 = sld [smem:[#allocation0]]
  $region105: #{closed_call.106} parent=0
    _
  %s15 = ssub.s32 1, %s13
  %s16 = scalar_select 0, %s15, %s13
  $region1: #{closed_call.106} parent=0
    #allocation2 [shape = 'u8[512]{0}', space=smem, size = 0x200, scoped, tag = 'input window, operand 4, single buffered']
    #allocation3 [shape = 's32[2]{0}', space=sflag, size = 0x8, scoped, tag = 'scoped memory for closed_call.106']
    #allocation4 [shape = 'u8[4096]{0}', space=smem, size = 0x1000, scoped, tag = 'input window, operand 5, single buffered']
    #allocation5 [shape = 's32[1]{0}', space=sflag, size = 0x4, scoped, tag = 'scoped memory for closed_call.106']
    #allocation6 [shape = 'u8[512]{0}', space=smem, size = 0x200, scoped, tag = 'input window, operand 6, single buffered']
    #allocation7 [shape = 'u8[2048]{0}', space=smem, size = 0x800, scoped, tag = 'input window, operand 7, single buffered']
    #allocation8 [shape = 's32[1]{0}', space=sflag, size = 0x4, scoped, tag = 'scoped memory for closed_call.106']
    #allocation9 [shape = 'u8[512]{0}', space=smem, size = 0x200, scoped, tag = 'input window, operand 8, single buffered']
    %17 = vsyncpa [#allocation3], 0
    %18 = vsyncpa [#allocation5], 0
    %19 = vsyncpa [#allocation8], 0
    loop: start=0, step=1, limit=4
    $region2: #{closed_call.106} parent=1 // loop_pre_header
      _
    $region3: #{closed_call.106} parent=1 // loop_header
      %s21 = sphi 0, %s25
      %p22 = scmp.ge.s32.totalorder %s21, 4
      %s28 = sphi 0, %s40
      %s29 = sphi 0, %s36
      %s30 = sphi 0, %s28
      %s31 = sphi 0, %s29
      %s32 = sphi 0, %s30
      %s33 = sphi 0, %s31
      %s45 = sphi 0, %s47
      %s48 = sphi 0, %s45
      %s49 = sphi 0, %s48
      %s65 = sphi 0, %s49
      %s73 = sphi 0, %s75
      %s76 = sphi 0, %s73
      %s77 = sphi 0, %s76
      %s93 = sphi 0, %s77
      %s101 = sphi 0, %s103
      %s104 = sphi 0, %s101
      %s105 = sphi 0, %s104
      %s121 = sphi 0, %s105
      %s129 = sphi 0, %s131
      %s132 = sphi 0, %s129
      %s133 = sphi 0, %s132
      %s149 = sphi 0, %s133
      %s153 = sphi 0, %s153
      %s155 = sphi 0, %s153
      %s156 = sphi 0, %s155
      %s170 = sphi 0, %s156
      %s174 = sphi 0, %s174
      %s176 = sphi 0, %s174
      %s177 = sphi 0, %s176
      %s191 = sphi 0, %s177
      %s195 = sphi 0, %s195
      %s197 = sphi 0, %s195
      %s198 = sphi 0, %s197
      %s212 = sphi 0, %s198
      %s216 = sphi 0, %s216
      %s218 = sphi 0, %s216
      %s219 = sphi 0, %s218
      %s233 = sphi 0, %s219
      %s237 = sphi 0, %s237
      %s239 = sphi 0, %s237
      %s240 = sphi 0, %s239
      %s254 = sphi 0, %s240
      %s262 = sphi 0, %s264
      %s265 = sphi 0, %s262
      %s266 = sphi 0, %s265
      %s282 = sphi 0, %s266
      %s290 = sphi 0, %s292
      %s293 = sphi 0, %s290
      %s294 = sphi 0, %s293
      %s310 = sphi 0, %s294
      %s318 = sphi 0, %s320
      %s321 = sphi 0, %s318
      %s322 = sphi 0, %s321
      %s338 = sphi 0, %s322
    $region4: #{closed_call.106} parent=1 // loop_header_branch
      %24 = sbr.rel (%p22) target = $region8
    $region5: #{closed_call.106} parent=1 // loop_body
      %s26 = ssub.s32 %s21, 1
      %s27 = ssub.s32 %s21, 2
      %s34 = sadd.s32 1, %s29
      %p35 = scmp.ge.s32.totalorder %s34, 1
      %s36 = scalar_select %p35, 0, %s34
      %s37 = sadd.s32 1, %s28
      %s38 = scalar_select %p35, %s37, %s28
      %p39 = scmp.ge.s32.totalorder %s38, 2
      %s40 = scalar_select %p39, 0, %s38
      %s41 = ssub.s32 %s28, %s40
      %s42 = ssub.s32 %s29, %s36
      %s43 = sor.u32 %s41, %s42
      %p44 = scmp.eq.s32.totalorder %s43, 0
      %s46 = sadd.s32 %s45, 1
      %s47 = scalar_select %p44, %s45, %s46
      %p50 = pneg %p44
      %p51 = scmp.eq.s32.totalorder %s21, 1
      %p52 = por %p50, %p51
      %p53 = scmp.ne.s32.totalorder %s45, %s48
      %p54 = scmp.eq.s32.totalorder %s21, 0
      %p55 = por %p53, %p54
      %p56 = scmp.ne.s32.totalorder %s45, %s48
      %p57 = scmp.eq.s32.totalorder %s26, 1
      %p58 = por %p56, %p57
      %p59 = scmp.ne.s32.totalorder %s48, %s49
      %p60 = scmp.eq.s32.totalorder %s26, 0
      %p61 = por %p59, %p60
      %p62 = scmp.ne.s32.totalorder %s48, %s49
      %p63 = scmp.eq.s32.totalorder %s27, 1
      %p64 = por %p62, %p63
      %p66 = scmp.ne.s32.totalorder %s49, %s65
      %p67 = scmp.eq.s32.totalorder %s27, 0
      %p68 = por %p66, %p67
      %s69 = ssub.s32 %s28, %s40
      %s70 = ssub.s32 %s29, %s36
      %s71 = sor.u32 %s69, %s70
      %p72 = scmp.eq.s32.totalorder %s71, 0
      %s74 = sadd.s32 %s73, 1
      %s75 = scalar_select %p72, %s73, %s74
      %p78 = pneg %p72
      %p79 = scmp.eq.s32.totalorder %s21, 1
      %p80 = por %p78, %p79
      %p81 = scmp.ne.s32.totalorder %s73, %s76
      %p82 = scmp.eq.s32.totalorder %s21, 0
      %p83 = por %p81, %p82
      %p84 = scmp.ne.s32.totalorder %s73, %s76
      %p85 = scmp.eq.s32.totalorder %s26, 1
      %p86 = por %p84, %p85
      %p87 = scmp.ne.s32.totalorder %s76, %s77
      %p88 = scmp.eq.s32.totalorder %s26, 0
      %p89 = por %p87, %p88
      %p90 = scmp.ne.s32.totalorder %s76, %s77
      %p91 = scmp.eq.s32.totalorder %s27, 1
      %p92 = por %p90, %p91
      %p94 = scmp.ne.s32.totalorder %s77, %s93
      %p95 = scmp.eq.s32.totalorder %s27, 0
      %p96 = por %p94, %p95
      %s97 = ssub.s32 %s28, %s40
      %s98 = ssub.s32 %s29, %s36
      %s99 = sor.u32 %s97, %s98
      %p100 = scmp.eq.s32.totalorder %s99, 0
      %s102 = sadd.s32 %s101, 1
      %s103 = scalar_select %p100, %s101, %s102
      %p106 = pneg %p100
      %p107 = scmp.eq.s32.totalorder %s21, 1
      %p108 = por %p106, %p107
      %p109 = scmp.ne.s32.totalorder %s101, %s104
      %p110 = scmp.eq.s32.totalorder %s21, 0
      %p111 = por %p109, %p110
      %p112 = scmp.ne.s32.totalorder %s101, %s104
      %p113 = scmp.eq.s32.totalorder %s26, 1
      %p114 = por %p112, %p113
      %p115 = scmp.ne.s32.totalorder %s104, %s105
      %p116 = scmp.eq.s32.totalorder %s26, 0
      %p117 = por %p115, %p116
      %p118 = scmp.ne.s32.totalorder %s104, %s105
      %p119 = scmp.eq.s32.totalorder %s27, 1
      %p120 = por %p118, %p119
      %p122 = scmp.ne.s32.totalorder %s105, %s121
      %p123 = scmp.eq.s32.totalorder %s27, 0
      %p124 = por %p122, %p123
      %s125 = ssub.s32 %s28, %s40
      %s126 = ssub.s32 %s29, %s36
      %s127 = sor.u32 %s125, %s126
      %p128 = scmp.eq.s32.totalorder %s127, 0
      %s130 = sadd.s32 %s129, 1
      %s131 = scalar_select %p128, %s129, %s130
      %p134 = pneg %p128
      %p135 = scmp.eq.s32.totalorder %s21, 1
      %p136 = por %p134, %p135
      %p137 = scmp.ne.s32.totalorder %s129, %s132
      %p138 = scmp.eq.s32.totalorder %s21, 0
      %p139 = por %p137, %p138
      %p140 = scmp.ne.s32.totalorder %s129, %s132
      %p141 = scmp.eq.s32.totalorder %s26, 1
      %p142 = por %p140, %p141
      %p143 = scmp.ne.s32.totalorder %s132, %s133
      %p144 = scmp.eq.s32.totalorder %s26, 0
      %p145 = por %p143, %p144
      %p146 = scmp.ne.s32.totalorder %s132, %s133
      %p147 = scmp.eq.s32.totalorder %s27, 1
      %p148 = por %p146, %p147
      %p150 = scmp.ne.s32.totalorder %s133, %s149
      %p151 = scmp.eq.s32.totalorder %s27, 0
      %p152 = por %p150, %p151
      %s154 = sadd.s32 %s153, 1
      %p157 = scmp.eq.s32.totalorder %s21, 1
      %p158 = scmp.ne.s32.totalorder %s153, %s155
      %p159 = scmp.eq.s32.totalorder %s21, 0
      %p160 = por %p158, %p159
      %p161 = scmp.ne.s32.totalorder %s153, %s155
      %p162 = scmp.eq.s32.totalorder %s26, 1
      %p163 = por %p161, %p162
      %p164 = scmp.ne.s32.totalorder %s155, %s156
      %p165 = scmp.eq.s32.totalorder %s26, 0
      %p166 = por %p164, %p165
      %p167 = scmp.ne.s32.totalorder %s155, %s156
      %p168 = scmp.eq.s32.totalorder %s27, 1
      %p169 = por %p167, %p168
      %p171 = scmp.ne.s32.totalorder %s156, %s170
      %p172 = scmp.eq.s32.totalorder %s27, 0
      %p173 = por %p171, %p172
      %s175 = sadd.s32 %s174, 1
      %p178 = scmp.eq.s32.totalorder %s21, 1
      %p179 = scmp.ne.s32.totalorder %s174, %s176
      %p180 = scmp.eq.s32.totalorder %s21, 0
      %p181 = por %p179, %p180
      %p182 = scmp.ne.s32.totalorder %s174, %s176
      %p183 = scmp.eq.s32.totalorder %s26, 1
      %p184 = por %p182, %p183
      %p185 = scmp.ne.s32.totalorder %s176, %s177
      %p186 = scmp.eq.s32.totalorder %s26, 0
      %p187 = por %p185, %p186
      %p188 = scmp.ne.s32.totalorder %s176, %s177
      %p189 = scmp.eq.s32.totalorder %s27, 1
      %p190 = por %p188, %p189
      %p192 = scmp.ne.s32.totalorder %s177, %s191
      %p193 = scmp.eq.s32.totalorder %s27, 0
      %p194 = por %p192, %p193
      %s196 = sadd.s32 %s195, 1
      %p199 = scmp.eq.s32.totalorder %s21, 1
      %p200 = scmp.ne.s32.totalorder %s195, %s197
      %p201 = scmp.eq.s32.totalorder %s21, 0
      %p202 = por %p200, %p201
      %p203 = scmp.ne.s32.totalorder %s195, %s197
      %p204 = scmp.eq.s32.totalorder %s26, 1
      %p205 = por %p203, %p204
      %p206 = scmp.ne.s32.totalorder %s197, %s198
      %p207 = scmp.eq.s32.totalorder %s26, 0
      %p208 = por %p206, %p207
      %p209 = scmp.ne.s32.totalorder %s197, %s198
      %p210 = scmp.eq.s32.totalorder %s27, 1
      %p211 = por %p209, %p210
      %p213 = scmp.ne.s32.totalorder %s198, %s212
      %p214 = scmp.eq.s32.totalorder %s27, 0
      %p215 = por %p213, %p214
      %s217 = sadd.s32 %s216, 1
      %p220 = scmp.eq.s32.totalorder %s21, 1
      %p221 = scmp.ne.s32.totalorder %s216, %s218
      %p222 = scmp.eq.s32.totalorder %s21, 0
      %p223 = por %p221, %p222
      %p224 = scmp.ne.s32.totalorder %s216, %s218
      %p225 = scmp.eq.s32.totalorder %s26, 1
      %p226 = por %p224, %p225
      %p227 = scmp.ne.s32.totalorder %s218, %s219
      %p228 = scmp.eq.s32.totalorder %s26, 0
      %p229 = por %p227, %p228
      %p230 = scmp.ne.s32.totalorder %s218, %s219
      %p231 = scmp.eq.s32.totalorder %s27, 1
      %p232 = por %p230, %p231
      %p234 = scmp.ne.s32.totalorder %s219, %s233
      %p235 = scmp.eq.s32.totalorder %s27, 0
      %p236 = por %p234, %p235
      %s238 = sadd.s32 %s237, 1
      %p241 = scmp.eq.s32.totalorder %s21, 1
      %p242 = scmp.ne.s32.totalorder %s237, %s239
      %p243 = scmp.eq.s32.totalorder %s21, 0
      %p244 = por %p242, %p243
      %p245 = scmp.ne.s32.totalorder %s237, %s239
      %p246 = scmp.eq.s32.totalorder %s26, 1
      %p247 = por %p245, %p246
      %p248 = scmp.ne.s32.totalorder %s239, %s240
      %p249 = scmp.eq.s32.totalorder %s26, 0
      %p250 = por %p248, %p249
      %p251 = scmp.ne.s32.totalorder %s239, %s240
      %p252 = scmp.eq.s32.totalorder %s27, 1
      %p253 = por %p251, %p252
      %p255 = scmp.ne.s32.totalorder %s240, %s254
      %p256 = scmp.eq.s32.totalorder %s27, 0
      %p257 = por %p255, %p256
      %s258 = ssub.s32 %s28, %s40
      %s259 = ssub.s32 %s29, %s36
      %s260 = sor.u32 %s258, %s259
      %p261 = scmp.eq.s32.totalorder %s260, 0
      %s263 = sadd.s32 %s262, 1
      %s264 = scalar_select %p261, %s262, %s263
      %p267 = pneg %p261
      %p268 = scmp.eq.s32.totalorder %s21, 1
      %p269 = por %p267, %p268
      %p270 = scmp.ne.s32.totalorder %s262, %s265
      %p271 = scmp.eq.s32.totalorder %s21, 0
      %p272 = por %p270, %p271
      %p273 = scmp.ne.s32.totalorder %s262, %s265
      %p274 = scmp.eq.s32.totalorder %s26, 1
      %p275 = por %p273, %p274
      %p276 = scmp.ne.s32.totalorder %s265, %s266
      %p277 = scmp.eq.s32.totalorder %s26, 0
      %p278 = por %p276, %p277
      %p279 = scmp.ne.s32.totalorder %s265, %s266
      %p280 = scmp.eq.s32.totalorder %s27, 1
      %p281 = por %p279, %p280
      %p283 = scmp.ne.s32.totalorder %s266, %s282
      %p284 = scmp.eq.s32.totalorder %s27, 0
      %p285 = por %p283, %p284
      %s286 = ssub.s32 %s28, %s40
      %s287 = ssub.s32 %s29, %s36
      %s288 = sor.u32 %s286, %s287
      %p289 = scmp.eq.s32.totalorder %s288, 0
      %s291 = sadd.s32 %s290, 1
      %s292 = scalar_select %p289, %s290, %s291
      %p295 = pneg %p289
      %p296 = scmp.eq.s32.totalorder %s21, 1
      %p297 = por %p295, %p296
      %p298 = scmp.ne.s32.totalorder %s290, %s293
      %p299 = scmp.eq.s32.totalorder %s21, 0
      %p300 = por %p298, %p299
      %p301 = scmp.ne.s32.totalorder %s290, %s293
      %p302 = scmp.eq.s32.totalorder %s26, 1
      %p303 = por %p301, %p302
      %p304 = scmp.ne.s32.totalorder %s293, %s294
      %p305 = scmp.eq.s32.totalorder %s26, 0
      %p306 = por %p304, %p305
      %p307 = scmp.ne.s32.totalorder %s293, %s294
      %p308 = scmp.eq.s32.totalorder %s27, 1
      %p309 = por %p307, %p308
      %p311 = scmp.ne.s32.totalorder %s294, %s310
      %p312 = scmp.eq.s32.totalorder %s27, 0
      %p313 = por %p311, %p312
      %s314 = ssub.s32 %s28, %s40
      %s315 = ssub.s32 %s29, %s36
      %s316 = sor.u32 %s314, %s315
      %p317 = scmp.eq.s32.totalorder %s316, 0
      %s319 = sadd.s32 %s318, 1
      %s320 = scalar_select %p317, %s318, %s319
      %p323 = pneg %p317
      %p324 = scmp.eq.s32.totalorder %s21, 1
      %p325 = por %p323, %p324
      %p326 = scmp.ne.s32.totalorder %s318, %s321
      %p327 = scmp.eq.s32.totalorder %s21, 0
      %p328 = por %p326, %p327
      %p329 = scmp.ne.s32.totalorder %s318, %s321
      %p330 = scmp.eq.s32.totalorder %s26, 1
      %p331 = por %p329, %p330
      %p332 = scmp.ne.s32.totalorder %s321, %s322
      %p333 = scmp.eq.s32.totalorder %s26, 0
      %p334 = por %p332, %p333
      %p335 = scmp.ne.s32.totalorder %s321, %s322
      %p336 = scmp.eq.s32.totalorder %s27, 1
      %p337 = por %p335, %p336
      %p339 = scmp.ne.s32.totalorder %s322, %s338
      %p340 = scmp.eq.s32.totalorder %s27, 0
      %p341 = por %p339, %p340
      %p342 = scmp.le.s32.totalorder 1, %s21
      %p343 = scmp.lt.s32.totalorder %s21, 3
      %p344 = pnand %p342, %p343
      %p345 = pneg %p344
      // Predicated region
      $region9: #{closed_call.106} parent=5 // pred_check
        _
      $region10: #{closed_call.106} parent=5 // pred_check_branch
        %347 = sbr.rel (%p344) target = $region12
      $region11: #{closed_call.106} parent=5 // pred_region
        %s348 = ssub.s32 %s21, 1
        // Predicated region
        $region13: #{closed_call.106} parent=11 // pred_check
          %p349 = pneg %p166
        $region14: #{closed_call.106} parent=11 // pred_check_branch
          %351 = sbr.rel (%p349) target = $region16
        $region15: #{closed_call.106} parent=11 // pred_region
          %s353 = ssub.s32 16, 16
          %354 = vsyncadd [#allocation3], %s353
          %s356 = sshll.u32 %s4, 4
          %s357 = int_to_ptr.vmem [resolvable:$true] %s356
          %359 = dma.vmem_to_smem %s357, 16, [#allocation2], [#allocation3]
        $region16: #{closed_call.106} parent=11 // pred_fallthru
          _
        // Predicated region
        $region17: #{closed_call.106} parent=11 // pred_check
          %p360 = pneg %p187
        $region18: #{closed_call.106} parent=11 // pred_check_branch
          %362 = sbr.rel (%p360) target = $region20
        $region19: #{closed_call.106} parent=11 // pred_region
          %s364 = ssub.s32 128, 128
          %365 = vsyncadd [#allocation5], %s364
          %s367 = sshll.u32 %s5, 4
          %s368 = int_to_ptr.vmem [resolvable:$true] %s367
          %370 = dma.vmem_to_smem %s368, 128, [#allocation4], [#allocation5]
        $region20: #{closed_call.106} parent=11 // pred_fallthru
          _
        // Predicated region
        $region21: #{closed_call.106} parent=11 // pred_check
          %p371 = pneg %p208
        $region22: #{closed_call.106} parent=11 // pred_check_branch
          %373 = sbr.rel (%p371) target = $region24
        $region23: #{closed_call.106} parent=11 // pred_region
          %s375 = ssub.s32 16, 16
          %376 = vsyncadd [#allocation5], %s375
          %s378 = sshll.u32 %s6, 4
          %s379 = int_to_ptr.vmem [resolvable:$true] %s378
          %381 = dma.vmem_to_smem %s379, 16, [#allocation6], [#allocation5]
        $region24: #{closed_call.106} parent=11 // pred_fallthru
          _
        // Predicated region
        $region25: #{closed_call.106} parent=11 // pred_check
          %p382 = pneg %p229
        $region26: #{closed_call.106} parent=11 // pred_check_branch
          %384 = sbr.rel (%p382) target = $region28
        $region27: #{closed_call.106} parent=11 // pred_region
          %s386 = ssub.s32 64, 64
          %387 = vsyncadd [#allocation8], %s386
          %s389 = sshll.u32 %s7, 4
          %s390 = int_to_ptr.vmem [resolvable:$true] %s389
          %392 = dma.vmem_to_smem %s390, 64, [#allocation7], [#allocation8]
        $region28: #{closed_call.106} parent=11 // pred_fallthru
          _
        // Predicated region
        $region29: #{closed_call.106} parent=11 // pred_check
          %p393 = pneg %p250
        $region30: #{closed_call.106} parent=11 // pred_check_branch
          %395 = sbr.rel (%p393) target = $region32
        $region31: #{closed_call.106} parent=11 // pred_region
          %s397 = ssub.s32 16, 16
          %398 = vsyncadd [#allocation8], %s397
          %s400 = sshll.u32 %s8, 4
          %s401 = int_to_ptr.vmem [resolvable:$true] %s400
          %403 = dma.vmem_to_smem %s401, 16, [#allocation9], [#allocation8]
        $region32: #{closed_call.106} parent=11 // pred_fallthru
          _
      $region12: #{closed_call.106} parent=5 // pred_fallthru
        _
      %p404 = scmp.lt.s32.totalorder %s21, 2
      // Predicated region
      $region33: #{closed_call.106} parent=5 // pred_check
        %p405 = pneg %p404
      $region34: #{closed_call.106} parent=5 // pred_check_branch
        %407 = sbr.rel (%p405) target = $region36
      $region35: #{closed_call.106} parent=5 // pred_region
        // Predicated region
        $region37: #{closed_call.106} parent=35 // pred_check
          %p408 = pneg %p55
        $region38: #{closed_call.106} parent=35 // pred_check_branch
          %410 = sbr.rel (%p408) target = $region40
        $region39: #{closed_call.106} parent=35 // pred_region
          %s411 = smul.u32 2, %s29
          %p412 = scmp.lt.s32.totalorder %s28, 1
          %s413 = scalar_select %p412, %s28, 1
          %p414 = scmp.lt.s32.totalorder %s411, 1
          %s415 = scalar_select %p414, %s411, 1
          %s416 = smul.addr %s413, 2
          %s417 = sadd.s32 %s415, %s416
          %s418 = smul.addr %s417, 4
          %s419 = scalar_lea.vmem %s0, %s418
          %s420 = smul.u32 2, %s29
        $region40: #{closed_call.106} parent=35 // pred_fallthru
          _
        // Predicated region
        $region41: #{closed_call.106} parent=35 // pred_check
          %p421 = pneg %p83
        $region42: #{closed_call.106} parent=35 // pred_check_branch
          %423 = sbr.rel (%p421) target = $region44
        $region43: #{closed_call.106} parent=35 // pred_region
          %s424 = smul.u32 2, %s29
          %p425 = scmp.lt.s32.totalorder %s28, 1
          %s426 = scalar_select %p425, %s28, 1
          %p427 = scmp.lt.s32.totalorder %s424, 1
          %s428 = scalar_select %p427, %s424, 1
          %s429 = smul.addr %s426, 2
          %s430 = sadd.s32 %s428, %s429
          %s431 = smul.addr %s430, 4
          %s432 = scalar_lea.vmem %s1, %s431
          %s433 = smul.u32 2, %s29
        $region44: #{closed_call.106} parent=35 // pred_fallthru
          _
        // Predicated region
        $region45: #{closed_call.106} parent=35 // pred_check
          %p434 = pneg %p111
        $region46: #{closed_call.106} parent=35 // pred_check_branch
          %436 = sbr.rel (%p434) target = $region48
        $region47: #{closed_call.106} parent=35 // pred_region
          %s437 = smul.u32 2, %s29
          %p438 = scmp.lt.s32.totalorder %s28, 1
          %s439 = scalar_select %p438, %s28, 1
          %p440 = scmp.lt.s32.totalorder %s437, 1
          %s441 = scalar_select %p440, %s437, 1
          %s442 = smul.addr %s439, 2
          %s443 = sadd.s32 %s441, %s442
          %s444 = smul.addr %s443, 4
          %s445 = scalar_lea.vmem %s2, %s444
          %s446 = smul.u32 2, %s29
        $region48: #{closed_call.106} parent=35 // pred_fallthru
          _
        // Predicated region
        $region49: #{closed_call.106} parent=35 // pred_check
          %p447 = pneg %p139
        $region50: #{closed_call.106} parent=35 // pred_check_branch
          %449 = sbr.rel (%p447) target = $region52
        $region51: #{closed_call.106} parent=35 // pred_region
          %s450 = smul.u32 2, %s29
          %p451 = scmp.lt.s32.totalorder %s28, 1
          %s452 = scalar_select %p451, %s28, 1
          %p453 = scmp.lt.s32.totalorder %s450, 1
          %s454 = scalar_select %p453, %s450, 1
          %s455 = smul.addr %s452, 2
          %s456 = sadd.s32 %s454, %s455
          %s457 = smul.addr %s456, 4
          %s458 = scalar_lea.vmem %s3, %s457
          %s459 = smul.u32 2, %s29
        $region52: #{closed_call.106} parent=35 // pred_fallthru
          _
      $region36: #{closed_call.106} parent=5 // pred_fallthru
        _
      %p460 = scmp.le.s32.totalorder 1, %s21
      %p461 = scmp.lt.s32.totalorder %s21, 3
      %p462 = pnand %p460, %p461
      %p463 = pneg %p462
      // Predicated region
      $region53: #{closed_call.106} parent=5 // pred_check
        _
      $region54: #{closed_call.106} parent=5 // pred_check_branch
        %465 = sbr.rel (%p462) target = $region56
      $region55: #{closed_call.106} parent=5 // pred_region
        %s466 = ssub.s32 %s21, 1
        // Predicated region
        $region57: #{closed_call.106} parent=55 // pred_check
          %p467 = pneg %p166
        $region58: #{closed_call.106} parent=55 // pred_check_branch
          %469 = sbr.rel (%p467) target = $region60
        $region59: #{closed_call.106} parent=55 // pred_region
          %470 = dma.done [#allocation3], 16
        $region60: #{closed_call.106} parent=55 // pred_fallthru
          _
        // Predicated region
        $region61: #{closed_call.106} parent=55 // pred_check
          %p471 = pneg %p187
        $region62: #{closed_call.106} parent=55 // pred_check_branch
          %473 = sbr.rel (%p471) target = $region64
        $region63: #{closed_call.106} parent=55 // pred_region
          %474 = dma.done [#allocation5], 128
        $region64: #{closed_call.106} parent=55 // pred_fallthru
          _
        // Predicated region
        $region65: #{closed_call.106} parent=55 // pred_check
          %p475 = pneg %p208
        $region66: #{closed_call.106} parent=55 // pred_check_branch
          %477 = sbr.rel (%p475) target = $region68
        $region67: #{closed_call.106} parent=55 // pred_region
          %478 = dma.done [#allocation5], 16
        $region68: #{closed_call.106} parent=55 // pred_fallthru
          _
        // Predicated region
        $region69: #{closed_call.106} parent=55 // pred_check
          %p479 = pneg %p229
        $region70: #{closed_call.106} parent=55 // pred_check_branch
          %481 = sbr.rel (%p479) target = $region72
        $region71: #{closed_call.106} parent=55 // pred_region
          %482 = dma.done [#allocation8], 64
        $region72: #{closed_call.106} parent=55 // pred_fallthru
          _
        // Predicated region
        $region73: #{closed_call.106} parent=55 // pred_check
          %p483 = pneg %p250
        $region74: #{closed_call.106} parent=55 // pred_check_branch
          %485 = sbr.rel (%p483) target = $region76
        $region75: #{closed_call.106} parent=55 // pred_region
          %486 = dma.done [#allocation8], 16
        $region76: #{closed_call.106} parent=55 // pred_fallthru
          _
        %487 = sfence
        %s488 = smul.u32 2, %s31
        %p489 = scmp.lt.s32.totalorder %s30, 1
        %s490 = scalar_select %p489, %s30, 1
        %p491 = scmp.lt.s32.totalorder %s488, 1
        %s492 = scalar_select %p491, %s488, 1
        %s493 = smul.addr %s490, 2
        %s494 = sadd.s32 %s492, %s493
        %s495 = smul.addr %s494, 4
        %s496 = scalar_lea.vmem %s0, %s495
        %p497 = pneg %p61
        %p498 = pneg %p58
        %s499 = smul.u32 2, %s31
        %p500 = scmp.lt.s32.totalorder %s30, 1
        %s501 = scalar_select %p500, %s30, 1
        %p502 = scmp.lt.s32.totalorder %s499, 1
        %s503 = scalar_select %p502, %s499, 1
        %s504 = smul.addr %s501, 2
        %s505 = sadd.s32 %s503, %s504
        %s506 = smul.addr %s505, 4
        %s507 = scalar_lea.vmem %s1, %s506
        %p508 = pneg %p89
        %p509 = pneg %p86
        %s510 = smul.u32 2, %s31
        %p511 = scmp.lt.s32.totalorder %s30, 1
        %s512 = scalar_select %p511, %s30, 1
        %p513 = scmp.lt.s32.totalorder %s510, 1
        %s514 = scalar_select %p513, %s510, 1
        %s515 = smul.addr %s512, 2
        %s516 = sadd.s32 %s514, %s515
        %s517 = smul.addr %s516, 4
        %s518 = scalar_lea.vmem %s2, %s517
        %p519 = pneg %p117
        %p520 = pneg %p114
        %s521 = smul.u32 2, %s31
        %p522 = scmp.lt.s32.totalorder %s30, 1
        %s523 = scalar_select %p522, %s30, 1
        %p524 = scmp.lt.s32.totalorder %s521, 1
        %s525 = scalar_select %p524, %s521, 1
        %s526 = smul.addr %s523, 2
        %s527 = sadd.s32 %s525, %s526
        %s528 = smul.addr %s527, 4
        %s529 = scalar_lea.vmem %s3, %s528
        %p530 = pneg %p145
        %p531 = pneg %p142
        %p532 = pneg %p166
        %p533 = pneg %p163
        %p534 = pneg %p187
        %p535 = pneg %p184
        %p536 = pneg %p208
        %p537 = pneg %p205
        %p538 = pneg %p229
        %p539 = pneg %p226
        %p540 = pneg %p250
        %p541 = pneg %p247
        %p542 = pneg %p278
        %p543 = pneg %p275
        %s544 = smul.u32 2, %s31
        %p545 = scmp.lt.s32.totalorder %s30, 1
        %s546 = scalar_select %p545, %s30, 1
        %p547 = scmp.lt.s32.totalorder %s544, 1
        %s548 = scalar_select %p547, %s544, 1
        %s549 = smul.addr %s546, 2
        %s550 = sadd.s32 %s548, %s549
        %s551 = smul.addr %s550, 4
        %s552 = scalar_lea.vmem %s9, %s551
        %p553 = pneg %p306
        %p554 = pneg %p303
        %s555 = smul.u32 2, %s31
        %p556 = scmp.lt.s32.totalorder %s30, 1
        %s557 = scalar_select %p556, %s30, 1
        %p558 = scmp.lt.s32.totalorder %s555, 1
        %s559 = scalar_select %p558, %s555, 1
        %s560 = smul.addr %s557, 2
        %s561 = sadd.s32 %s559, %s560
        %s562 = smul.addr %s561, 4
        %s563 = scalar_lea.vmem %s10, %s562
        %p564 = pneg %p334
        %p565 = pneg %p331
        %s566 = smul.u32 2, %s31
        %p567 = scmp.lt.s32.totalorder %s30, 1
        %s568 = scalar_select %p567, %s30, 1
        %p569 = scmp.lt.s32.totalorder %s566, 1
        %s570 = scalar_select %p569, %s566, 1
        %s571 = smul.addr %s568, 2
        %s572 = sadd.s32 %s570, %s571
        %s573 = smul.addr %s572, 4
        %s574 = scalar_lea.vmem %s11, %s573
        %s575 = smul.u32 2, %s31
        %p576 = scmp.lt.s32.totalorder %s30, 1
        %s577 = scalar_select %p576, %s30, 1
        %p578 = scmp.lt.s32.totalorder %s575, 1
        %s579 = scalar_select %p578, %s575, 1
        %s580 = smul.addr %s577, 2
        %s581 = sadd.s32 %s579, %s580
        %s582 = smul.addr %s581, 4
        %s583 = scalar_lea.vmem %s0, %s582
        %s584 = smul.u32 2, %s31
        %s585 = smul.u32 2, %s31
        %p586 = scmp.lt.s32.totalorder %s30, 1
        %s587 = scalar_select %p586, %s30, 1
        %p588 = scmp.lt.s32.totalorder %s585, 1
        %s589 = scalar_select %p588, %s585, 1
        %s590 = smul.addr %s587, 2
        %s591 = sadd.s32 %s589, %s590
        %s592 = smul.addr %s591, 4
        %s593 = scalar_lea.vmem %s1, %s592
        %s594 = smul.u32 2, %s31
        %s595 = smul.u32 2, %s31
        %p596 = scmp.lt.s32.totalorder %s30, 1
        %s597 = scalar_select %p596, %s30, 1
        %p598 = scmp.lt.s32.totalorder %s595, 1
        %s599 = scalar_select %p598, %s595, 1
        %s600 = smul.addr %s597, 2
        %s601 = sadd.s32 %s599, %s600
        %s602 = smul.addr %s601, 4
        %s603 = scalar_lea.vmem %s2, %s602
        %s604 = smul.u32 2, %s31
        %s605 = smul.u32 2, %s31
        %p606 = scmp.lt.s32.totalorder %s30, 1
        %s607 = scalar_select %p606, %s30, 1
        %p608 = scmp.lt.s32.totalorder %s605, 1
        %s609 = scalar_select %p608, %s605, 1
        %s610 = smul.addr %s607, 2
        %s611 = sadd.s32 %s609, %s610
        %s612 = smul.addr %s611, 4
        %s613 = scalar_lea.vmem %s3, %s612
        %s614 = smul.u32 2, %s31
        %s615 = smul.u32 2, %s31
        %p616 = scmp.lt.s32.totalorder %s30, 1
        %s617 = scalar_select %p616, %s30, 1
        %p618 = scmp.lt.s32.totalorder %s615, 1
        %s619 = scalar_select %p618, %s615, 1
        %s620 = smul.addr %s617, 2
        %s621 = sadd.s32 %s619, %s620
        %s622 = smul.addr %s621, 4
        %s623 = scalar_lea.vmem %s9, %s622
        %s624 = smul.u32 2, %s31
        %s625 = smul.u32 2, %s31
        %p626 = scmp.lt.s32.totalorder %s30, 1
        %s627 = scalar_select %p626, %s30, 1
        %p628 = scmp.lt.s32.totalorder %s625, 1
        %s629 = scalar_select %p628, %s625, 1
        %s630 = smul.addr %s627, 2
        %s631 = sadd.s32 %s629, %s630
        %s632 = smul.addr %s631, 4
        %s633 = scalar_lea.vmem %s10, %s632
        %s634 = smul.u32 2, %s31
        %s635 = smul.u32 2, %s31
        %p636 = scmp.lt.s32.totalorder %s30, 1
        %s637 = scalar_select %p636, %s30, 1
        %p638 = scmp.lt.s32.totalorder %s635, 1
        %s639 = scalar_select %p638, %s635, 1
        %s640 = smul.addr %s637, 2
        %s641 = sadd.s32 %s639, %s640
        %s642 = smul.addr %s641, 4
        %s643 = scalar_lea.vmem %s11, %s642
        %s644 = smul.u32 2, %s31
        %s645 = sld [smem:[#allocation2 + %s30]]
        %v646 = vld [vmem:[%s583] sm:$0xff]
        %v647 = vld [vmem:[%s593] sm:$0xff]
        %v648 = vld [vmem:[%s603] sm:$0xff]
        %v649 = vld [vmem:[%s613] sm:$0xff]
        %v650 = vstv %s645
        %v651 = vmul.f32 %v647, %v650
        %s652 = sld [smem:[#allocation4]]
        %v653 = vstv %s652
        %v654 = vmul.f32 %v653, %v651
        %s655 = sld [smem:[#allocation4 + $0x80]]
        %v656 = vstv %s655
        %v657 = vmul.f32 %v656, %v651
        %v659 = vrot.slane %v657, 5
        %v660 = vrot.slane %v659, 4
        %v662 = vadd.f32 %v654, %v660
        %s663 = sld [smem:[#allocation4 + $0x100]]
        %v664 = vstv %s663
        %v665 = vmul.f32 %v664, %v651
        %v667 = vrot.slane %v665, 6
        %v668 = vrot.slane %v667, 4
        %v670 = vadd.f32 %v662, %v668
        %s671 = sld [smem:[#allocation4 + $0x180]]
        %v672 = vstv %s671
        %v673 = vmul.f32 %v672, %v651
        %v675 = vrot.slane %v673, 7
        %v676 = vrot.slane %v675, 4
        %v678 = vadd.f32 %v670, %v676
        %s679 = sld [smem:[#allocation4 + $0x200]]
        %v680 = vstv %s679
        %v681 = vmul.f32 %v680, %v648
        %v682 = vadd.f32 %v678, %v681
        %s683 = sld [smem:[#allocation4 + $0x280]]
        %v684 = vstv %s683
        %v685 = vmul.f32 %v684, %v648
        %v687 = vrot.slane %v685, 5
        %v688 = vrot.slane %v687, 4
        %v690 = vadd.f32 %v682, %v688
        %s691 = sld [smem:[#allocation4 + $0x300]]
        %v692 = vstv %s691
        %v693 = vmul.f32 %v692, %v648
        %v695 = vrot.slane %v693, 6
        %v696 = vrot.slane %v695, 4
        %v698 = vadd.f32 %v690, %v696
        %s699 = sld [smem:[#allocation4 + $0x380]]
        %v700 = vstv %s699
        %v701 = vmul.f32 %v700, %v648
        %v703 = vrot.slane %v701, 7
        %v704 = vrot.slane %v703, 4
        %v706 = vadd.f32 %v698, %v704
        %s707 = sld [smem:[#allocation6]]
        %v708 = vstv %s707
        %v709 = vadd.f32 %v706, %v708
        %v710 = vxor.u32 %v709, 2147483648
        %v711 = vmul.f32 %v710, 1.442695
        %v712 = vpow.pop %v711
        %v713 = vadd.f32 %v712, 1.0
        %v714 = vrcp.pop %v713
        %v715 = vmul.f32 1.0, %v714
        %s716 = sld [smem:[#allocation4 + $0x4]]
        %v717 = vstv %s716
        %v718 = vmul.f32 %v717, %v651
        %s719 = sld [smem:[#allocation4 + $0x84]]
        %v720 = vstv %s719
        %v721 = vmul.f32 %v720, %v651
        %v723 = vrot.slane %v721, 5
        %v724 = vrot.slane %v723, 4
        %v726 = vadd.f32 %v718, %v724
        %s727 = sld [smem:[#allocation4 + $0x104]]
        %v728 = vstv %s727
        %v729 = vmul.f32 %v728, %v651
        %v731 = vrot.slane %v729, 6
        %v732 = vrot.slane %v731, 4
        %v734 = vadd.f32 %v726, %v732
        %s735 = sld [smem:[#allocation4 + $0x184]]
        %v736 = vstv %s735
        %v737 = vmul.f32 %v736, %v651
        %v739 = vrot.slane %v737, 7
        %v740 = vrot.slane %v739, 4
        %v742 = vadd.f32 %v734, %v740
        %s743 = sld [smem:[#allocation4 + $0x204]]
        %v744 = vstv %s743
        %v745 = vmul.f32 %v744, %v648
        %v746 = vadd.f32 %v742, %v745
        %s747 = sld [smem:[#allocation4 + $0x284]]
        %v748 = vstv %s747
        %v749 = vmul.f32 %v748, %v648
        %v751 = vrot.slane %v749, 5
        %v752 = vrot.slane %v751, 4
        %v754 = vadd.f32 %v746, %v752
        %s755 = sld [smem:[#allocation4 + $0x304]]
        %v756 = vstv %s755
        %v757 = vmul.f32 %v756, %v648
        %v759 = vrot.slane %v757, 6
        %v760 = vrot.slane %v759, 4
        %v762 = vadd.f32 %v754, %v760
        %s763 = sld [smem:[#allocation4 + $0x384]]
        %v764 = vstv %s763
        %v765 = vmul.f32 %v764, %v648
        %v767 = vrot.slane %v765, 7
        %v768 = vrot.slane %v767, 4
        %v770 = vadd.f32 %v762, %v768
        %s771 = sld [smem:[#allocation6 + $0x4]]
        %v772 = vstv %s771
        %v773 = vadd.f32 %v770, %v772
        %v774 = vxor.u32 %v773, 2147483648
        %v775 = vmul.f32 %v774, 1.442695
        %v776 = vpow.pop %v775
        %v777 = vadd.f32 %v776, 1.0
        %v778 = vrcp.pop %v777
        %v779 = vmul.f32 1.0, %v778
        %s780 = sld [smem:[#allocation4 + $0x8]]
        %v781 = vstv %s780
        %v782 = vmul.f32 %v781, %v651
        %s783 = sld [smem:[#allocation4 + $0x88]]
        %v784 = vstv %s783
        %v785 = vmul.f32 %v784, %v651
        %v787 = vrot.slane %v785, 5
        %v788 = vrot.slane %v787, 4
        %v790 = vadd.f32 %v782, %v788
        %s791 = sld [smem:[#allocation4 + $0x108]]
        %v792 = vstv %s791
        %v793 = vmul.f32 %v792, %v651
        %v795 = vrot.slane %v793, 6
        %v796 = vrot.slane %v795, 4
        %v798 = vadd.f32 %v790, %v796
        %s799 = sld [smem:[#allocation4 + $0x188]]
        %v800 = vstv %s799
        %v801 = vmul.f32 %v800, %v651
        %v803 = vrot.slane %v801, 7
        %v804 = vrot.slane %v803, 4
        %v806 = vadd.f32 %v798, %v804
        %s807 = sld [smem:[#allocation4 + $0x208]]
        %v808 = vstv %s807
        %v809 = vmul.f32 %v808, %v648
        %v810 = vadd.f32 %v806, %v809
        %s811 = sld [smem:[#allocation4 + $0x288]]
        %v812 = vstv %s811
        %v813 = vmul.f32 %v812, %v648
        %v815 = vrot.slane %v813, 5
        %v816 = vrot.slane %v815, 4
        %v818 = vadd.f32 %v810, %v816
        %s819 = sld [smem:[#allocation4 + $0x308]]
        %v820 = vstv %s819
        %v821 = vmul.f32 %v820, %v648
        %v823 = vrot.slane %v821, 6
        %v824 = vrot.slane %v823, 4
        %v826 = vadd.f32 %v818, %v824
        %s827 = sld [smem:[#allocation4 + $0x388]]
        %v828 = vstv %s827
        %v829 = vmul.f32 %v828, %v648
        %v831 = vrot.slane %v829, 7
        %v832 = vrot.slane %v831, 4
        %v834 = vadd.f32 %v826, %v832
        %s835 = sld [smem:[#allocation6 + $0x8]]
        %v836 = vstv %s835
        %v837 = vadd.f32 %v834, %v836
        %v838 = vxor.u32 %v837, 2147483648
        %v839 = vmul.f32 %v838, 1.442695
        %v840 = vpow.pop %v839
        %v841 = vadd.f32 %v840, 1.0
        %v842 = vrcp.pop %v841
        %v843 = vmul.f32 1.0, %v842
        %s844 = sld [smem:[#allocation4 + $0xc]]
        %v845 = vstv %s844
        %v846 = vmul.f32 %v845, %v651
        %s847 = sld [smem:[#allocation4 + $0x8c]]
        %v848 = vstv %s847
        %v849 = vmul.f32 %v848, %v651
        %v851 = vrot.slane %v849, 5
        %v852 = vrot.slane %v851, 4
        %v854 = vadd.f32 %v846, %v852
        %s855 = sld [smem:[#allocation4 + $0x10c]]
        %v856 = vstv %s855
        %v857 = vmul.f32 %v856, %v651
        %v859 = vrot.slane %v857, 6
        %v860 = vrot.slane %v859, 4
        %v862 = vadd.f32 %v854, %v860
        %s863 = sld [smem:[#allocation4 + $0x18c]]
        %v864 = vstv %s863
        %v865 = vmul.f32 %v864, %v651
        %v867 = vrot.slane %v865, 7
        %v868 = vrot.slane %v867, 4
        %v870 = vadd.f32 %v862, %v868
        %s871 = sld [smem:[#allocation4 + $0x20c]]
        %v872 = vstv %s871
        %v873 = vmul.f32 %v872, %v648
        %v874 = vadd.f32 %v870, %v873
        %s875 = sld [smem:[#allocation4 + $0x28c]]
        %v876 = vstv %s875
        %v877 = vmul.f32 %v876, %v648
        %v879 = vrot.slane %v877, 5
        %v880 = vrot.slane %v879, 4
        %v882 = vadd.f32 %v874, %v880
        %s883 = sld [smem:[#allocation4 + $0x30c]]
        %v884 = vstv %s883
        %v885 = vmul.f32 %v884, %v648
        %v887 = vrot.slane %v885, 6
        %v888 = vrot.slane %v887, 4
        %v890 = vadd.f32 %v882, %v888
        %s891 = sld [smem:[#allocation4 + $0x38c]]
        %v892 = vstv %s891
        %v893 = vmul.f32 %v892, %v648
        %v895 = vrot.slane %v893, 7
        %v896 = vrot.slane %v895, 4
        %v898 = vadd.f32 %v890, %v896
        %s899 = sld [smem:[#allocation6 + $0xc]]
        %v900 = vstv %s899
        %v901 = vadd.f32 %v898, %v900
        %v902 = vtanh.pop %v901
        %v903 = vmul.f32 %v779, %v649
        %v904 = vmul.f32 %v715, %v902
        %v905 = vadd.f32 %v903, %v904
        %v906 = vtanh.pop %v905
        %v907 = vmul.f32 %v843, %v906
        %v910 = vunpack.c.l.s4 1966171168
        %v911 = vunpack.c.0.s8 %v910
        %v912 = vlaneseq
        %v913 = vshrl.u32 %v912, 7
        %v914 = vsub.s32 %v911, %v913
        %v915 = vrot.slane %v905, %v914
        %v917 = vunpack.c.l.s4 1966171168
        %v918 = vunpack.c.0.s8 %v917
        %v919 = vlaneseq
        %v920 = vshrl.u32 %v919, 7
        %v921 = vsub.s32 %v918, %v920
        %v922 = vrot.slane %v915, %v921
        %v924 = vlaneseq
        %vm925 = vcmp.ge.s32.totalorder %v924, 0
        %vm926 = vcmp.lt.s32.totalorder %v924, 256
        %vm927 = vmand %vm925, %vm926
        %928 = vst.msk [vmem:[%s643] ss:$4 sm:$0x3] %vm927, %v922
        %v931 = vunpack.c.l.s4 1966171168
        %v932 = vunpack.c.0.s8 %v931
        %v933 = vlaneseq
        %v934 = vshrl.u32 %v933, 7
        %v935 = vsub.s32 %v932, %v934
        %v936 = vrot.slane %v907, %v935
        %v938 = vunpack.c.l.s4 1966171168
        %v939 = vunpack.c.0.s8 %v938
        %v940 = vlaneseq
        %v941 = vshrl.u32 %v940, 7
        %v942 = vsub.s32 %v939, %v941
        %v943 = vrot.slane %v936, %v942
        %945 = vst.msk [vmem:[%s633] ss:$4 sm:$0x3] %vm927, %v943
        %s946 = sld [smem:[#allocation4 + $0x1]]
        %v947 = vstv %s946
        %v948 = vmul.f32 %v947, %v651
        %s949 = sld [smem:[#allocation4 + $0x81]]
        %v950 = vstv %s949
        %v951 = vmul.f32 %v950, %v651
        %v953 = vrot.slane %v951, 5
        %v954 = vrot.slane %v953, 4
        %v956 = vadd.f32 %v948, %v954
        %s957 = sld [smem:[#allocation4 + $0x101]]
        %v958 = vstv %s957
        %v959 = vmul.f32 %v958, %v651
        %v961 = vrot.slane %v959, 6
        %v962 = vrot.slane %v961, 4
        %v964 = vadd.f32 %v956, %v962
        %s965 = sld [smem:[#allocation4 + $0x181]]
        %v966 = vstv %s965
        %v967 = vmul.f32 %v966, %v651
        %v969 = vrot.slane %v967, 7
        %v970 = vrot.slane %v969, 4
        %v972 = vadd.f32 %v964, %v970
        %s973 = sld [smem:[#allocation4 + $0x201]]
        %v974 = vstv %s973
        %v975 = vmul.f32 %v974, %v648
        %v976 = vadd.f32 %v972, %v975
        %s977 = sld [smem:[#allocation4 + $0x281]]
        %v978 = vstv %s977
        %v979 = vmul.f32 %v978, %v648
        %v981 = vrot.slane %v979, 5
        %v982 = vrot.slane %v981, 4
        %v984 = vadd.f32 %v976, %v982
        %s985 = sld [smem:[#allocation4 + $0x301]]
        %v986 = vstv %s985
        %v987 = vmul.f32 %v986, %v648
        %v989 = vrot.slane %v987, 6
        %v990 = vrot.slane %v989, 4
        %v992 = vadd.f32 %v984, %v990
        %s993 = sld [smem:[#allocation4 + $0x381]]
        %v994 = vstv %s993
        %v995 = vmul.f32 %v994, %v648
        %v997 = vrot.slane %v995, 7
        %v998 = vrot.slane %v997, 4
        %v1000 = vadd.f32 %v992, %v998
        %s1001 = sld [smem:[#allocation6 + $0x1]]
        %v1002 = vstv %s1001
        %v1003 = vadd.f32 %v1000, %v1002
        %v1004 = vxor.u32 %v1003, 2147483648
        %v1005 = vmul.f32 %v1004, 1.442695
        %v1006 = vpow.pop %v1005
        %v1007 = vadd.f32 %v1006, 1.0
        %v1008 = vrcp.pop %v1007
        %v1009 = vmul.f32 1.0, %v1008
        %s1010 = sld [smem:[#allocation4 + $0x5]]
        %v1011 = vstv %s1010
        %v1012 = vmul.f32 %v1011, %v651
        %s1013 = sld [smem:[#allocation4 + $0x85]]
        %v1014 = vstv %s1013
        %v1015 = vmul.f32 %v1014, %v651
        %v1017 = vrot.slane %v1015, 5
        %v1018 = vrot.slane %v1017, 4
        %v1020 = vadd.f32 %v1012, %v1018
        %s1021 = sld [smem:[#allocation4 + $0x105]]
        %v1022 = vstv %s1021
        %v1023 = vmul.f32 %v1022, %v651
        %v1025 = vrot.slane %v1023, 6
        %v1026 = vrot.slane %v1025, 4
        %v1028 = vadd.f32 %v1020, %v1026
        %s1029 = sld [smem:[#allocation4 + $0x185]]
        %v1030 = vstv %s1029
        %v1031 = vmul.f32 %v1030, %v651
        %v1033 = vrot.slane %v1031, 7
        %v1034 = vrot.slane %v1033, 4
        %v1036 = vadd.f32 %v1028, %v1034
        %s1037 = sld [smem:[#allocation4 + $0x205]]
        %v1038 = vstv %s1037
        %v1039 = vmul.f32 %v1038, %v648
        %v1040 = vadd.f32 %v1036, %v1039
        %s1041 = sld [smem:[#allocation4 + $0x285]]
        %v1042 = vstv %s1041
        %v1043 = vmul.f32 %v1042, %v648
        %v1045 = vrot.slane %v1043, 5
        %v1046 = vrot.slane %v1045, 4
        %v1048 = vadd.f32 %v1040, %v1046
        %s1049 = sld [smem:[#allocation4 + $0x305]]
        %v1050 = vstv %s1049
        %v1051 = vmul.f32 %v1050, %v648
        %v1053 = vrot.slane %v1051, 6
        %v1054 = vrot.slane %v1053, 4
        %v1056 = vadd.f32 %v1048, %v1054
        %s1057 = sld [smem:[#allocation4 + $0x385]]
        %v1058 = vstv %s1057
        %v1059 = vmul.f32 %v1058, %v648
        %v1061 = vrot.slane %v1059, 7
        %v1062 = vrot.slane %v1061, 4
        %v1064 = vadd.f32 %v1056, %v1062
        %s1065 = sld [smem:[#allocation6 + $0x5]]
        %v1066 = vstv %s1065
        %v1067 = vadd.f32 %v1064, %v1066
        %v1068 = vxor.u32 %v1067, 2147483648
        %v1069 = vmul.f32 %v1068, 1.442695
        %v1070 = vpow.pop %v1069
        %v1071 = vadd.f32 %v1070, 1.0
        %v1072 = vrcp.pop %v1071
        %v1073 = vmul.f32 1.0, %v1072
        %s1074 = sld [smem:[#allocation4 + $0x9]]
        %v1075 = vstv %s1074
        %v1076 = vmul.f32 %v1075, %v651
        %s1077 = sld [smem:[#allocation4 + $0x89]]
        %v1078 = vstv %s1077
        %v1079 = vmul.f32 %v1078, %v651
        %v1081 = vrot.slane %v1079, 5
        %v1082 = vrot.slane %v1081, 4
        %v1084 = vadd.f32 %v1076, %v1082
        %s1085 = sld [smem:[#allocation4 + $0x109]]
        %v1086 = vstv %s1085
        %v1087 = vmul.f32 %v1086, %v651
        %v1089 = vrot.slane %v1087, 6
        %v1090 = vrot.slane %v1089, 4
        %v1092 = vadd.f32 %v1084, %v1090
        %s1093 = sld [smem:[#allocation4 + $0x189]]
        %v1094 = vstv %s1093
        %v1095 = vmul.f32 %v1094, %v651
        %v1097 = vrot.slane %v1095, 7
        %v1098 = vrot.slane %v1097, 4
        %v1100 = vadd.f32 %v1092, %v1098
        %s1101 = sld [smem:[#allocation4 + $0x209]]
        %v1102 = vstv %s1101
        %v1103 = vmul.f32 %v1102, %v648
        %v1104 = vadd.f32 %v1100, %v1103
        %s1105 = sld [smem:[#allocation4 + $0x289]]
        %v1106 = vstv %s1105
        %v1107 = vmul.f32 %v1106, %v648
        %v1109 = vrot.slane %v1107, 5
        %v1110 = vrot.slane %v1109, 4
        %v1112 = vadd.f32 %v1104, %v1110
        %s1113 = sld [smem:[#allocation4 + $0x309]]
        %v1114 = vstv %s1113
        %v1115 = vmul.f32 %v1114, %v648
        %v1117 = vrot.slane %v1115, 6
        %v1118 = vrot.slane %v1117, 4
        %v1120 = vadd.f32 %v1112, %v1118
        %s1121 = sld [smem:[#allocation4 + $0x389]]
        %v1122 = vstv %s1121
        %v1123 = vmul.f32 %v1122, %v648
        %v1125 = vrot.slane %v1123, 7
        %v1126 = vrot.slane %v1125, 4
        %v1128 = vadd.f32 %v1120, %v1126
        %s1129 = sld [smem:[#allocation6 + $0x9]]
        %v1130 = vstv %s1129
        %v1131 = vadd.f32 %v1128, %v1130
        %v1132 = vxor.u32 %v1131, 2147483648
        %v1133 = vmul.f32 %v1132, 1.442695
        %v1134 = vpow.pop %v1133
        %v1135 = vadd.f32 %v1134, 1.0
        %v1136 = vrcp.pop %v1135
        %v1137 = vmul.f32 1.0, %v1136
        %s1138 = sld [smem:[#allocation4 + $0xd]]
        %v1139 = vstv %s1138
        %v1140 = vmul.f32 %v1139, %v651
        %s1141 = sld [smem:[#allocation4 + $0x8d]]
        %v1142 = vstv %s1141
        %v1143 = vmul.f32 %v1142, %v651
        %v1145 = vrot.slane %v1143, 5
        %v1146 = vrot.slane %v1145, 4
        %v1148 = vadd.f32 %v1140, %v1146
        %s1149 = sld [smem:[#allocation4 + $0x10d]]
        %v1150 = vstv %s1149
        %v1151 = vmul.f32 %v1150, %v651
        %v1153 = vrot.slane %v1151, 6
        %v1154 = vrot.slane %v1153, 4
        %v1156 = vadd.f32 %v1148, %v1154
        %s1157 = sld [smem:[#allocation4 + $0x18d]]
        %v1158 = vstv %s1157
        %v1159 = vmul.f32 %v1158, %v651
        %v1161 = vrot.slane %v1159, 7
        %v1162 = vrot.slane %v1161, 4
        %v1164 = vadd.f32 %v1156, %v1162
        %s1165 = sld [smem:[#allocation4 + $0x20d]]
        %v1166 = vstv %s1165
        %v1167 = vmul.f32 %v1166, %v648
        %v1168 = vadd.f32 %v1164, %v1167
        %s1169 = sld [smem:[#allocation4 + $0x28d]]
        %v1170 = vstv %s1169
        %v1171 = vmul.f32 %v1170, %v648
        %v1173 = vrot.slane %v1171, 5
        %v1174 = vrot.slane %v1173, 4
        %v1176 = vadd.f32 %v1168, %v1174
        %s1177 = sld [smem:[#allocation4 + $0x30d]]
        %v1178 = vstv %s1177
        %v1179 = vmul.f32 %v1178, %v648
        %v1181 = vrot.slane %v1179, 6
        %v1182 = vrot.slane %v1181, 4
        %v1184 = vadd.f32 %v1176, %v1182
        %s1185 = sld [smem:[#allocation4 + $0x38d]]
        %v1186 = vstv %s1185
        %v1187 = vmul.f32 %v1186, %v648
        %v1189 = vrot.slane %v1187, 7
        %v1190 = vrot.slane %v1189, 4
        %v1192 = vadd.f32 %v1184, %v1190
        %s1193 = sld [smem:[#allocation6 + $0xd]]
        %v1194 = vstv %s1193
        %v1195 = vadd.f32 %v1192, %v1194
        %v1196 = vtanh.pop %v1195
        %v1198 = vrot.slane %v649, 5
        %v1199 = vrot.slane %v1198, 4
        %v1201 = vmul.f32 %v1073, %v1199
        %v1202 = vmul.f32 %v1009, %v1196
        %v1203 = vadd.f32 %v1201, %v1202
        %v1204 = vtanh.pop %v1203
        %v1205 = vmul.f32 %v1137, %v1204
        %v1208 = vunpack.c.l.s4 1966171168
        %v1209 = vunpack.c.0.s8 %v1208
        %v1210 = vlaneseq
        %v1211 = vshrl.u32 %v1210, 7
        %v1212 = vsub.s32 %v1209, %v1211
        %v1213 = vrot.slane %v1203, %v1212
        %v1215 = vunpack.c.l.s4 1966171168
        %v1216 = vunpack.c.0.s8 %v1215
        %v1217 = vlaneseq
        %v1218 = vshrl.u32 %v1217, 7
        %v1219 = vsub.s32 %v1216, %v1218
        %v1220 = vrot.slane %v1213, %v1219
        %s1222 = scalar_lea.vmem %s643, 1
        %1223 = vst.msk [vmem:[%s1222] ss:$4 sm:$0x3] %vm927, %v1220
        %v1226 = vunpack.c.l.s4 1966171168
        %v1227 = vunpack.c.0.s8 %v1226
        %v1228 = vlaneseq
        %v1229 = vshrl.u32 %v1228, 7
        %v1230 = vsub.s32 %v1227, %v1229
        %v1231 = vrot.slane %v1205, %v1230
        %v1233 = vunpack.c.l.s4 1966171168
        %v1234 = vunpack.c.0.s8 %v1233
        %v1235 = vlaneseq
        %v1236 = vshrl.u32 %v1235, 7
        %v1237 = vsub.s32 %v1234, %v1236
        %v1238 = vrot.slane %v1231, %v1237
        %s1240 = scalar_lea.vmem %s633, 1
        %1241 = vst.msk [vmem:[%s1240] ss:$4 sm:$0x3] %vm927, %v1238
        %s1242 = sld [smem:[#allocation4 + $0x2]]
        %v1243 = vstv %s1242
        %v1244 = vmul.f32 %v1243, %v651
        %s1245 = sld [smem:[#allocation4 + $0x82]]
        %v1246 = vstv %s1245
        %v1247 = vmul.f32 %v1246, %v651
        %v1249 = vrot.slane %v1247, 5
        %v1250 = vrot.slane %v1249, 4
        %v1252 = vadd.f32 %v1244, %v1250
        %s1253 = sld [smem:[#allocation4 + $0x102]]
        %v1254 = vstv %s1253
        %v1255 = vmul.f32 %v1254, %v651
        %v1257 = vrot.slane %v1255, 6
        %v1258 = vrot.slane %v1257, 4
        %v1260 = vadd.f32 %v1252, %v1258
        %s1261 = sld [smem:[#allocation4 + $0x182]]
        %v1262 = vstv %s1261
        %v1263 = vmul.f32 %v1262, %v651
        %v1265 = vrot.slane %v1263, 7
        %v1266 = vrot.slane %v1265, 4
        %v1268 = vadd.f32 %v1260, %v1266
        %s1269 = sld [smem:[#allocation4 + $0x202]]
        %v1270 = vstv %s1269
        %v1271 = vmul.f32 %v1270, %v648
        %v1272 = vadd.f32 %v1268, %v1271
        %s1273 = sld [smem:[#allocation4 + $0x282]]
        %v1274 = vstv %s1273
        %v1275 = vmul.f32 %v1274, %v648
        %v1277 = vrot.slane %v1275, 5
        %v1278 = vrot.slane %v1277, 4
        %v1280 = vadd.f32 %v1272, %v1278
        %s1281 = sld [smem:[#allocation4 + $0x302]]
        %v1282 = vstv %s1281
        %v1283 = vmul.f32 %v1282, %v648
        %v1285 = vrot.slane %v1283, 6
        %v1286 = vrot.slane %v1285, 4
        %v1288 = vadd.f32 %v1280, %v1286
        %s1289 = sld [smem:[#allocation4 + $0x382]]
        %v1290 = vstv %s1289
        %v1291 = vmul.f32 %v1290, %v648
        %v1293 = vrot.slane %v1291, 7
        %v1294 = vrot.slane %v1293, 4
        %v1296 = vadd.f32 %v1288, %v1294
        %s1297 = sld [smem:[#allocation6 + $0x2]]
        %v1298 = vstv %s1297
        %v1299 = vadd.f32 %v1296, %v1298
        %v1300 = vxor.u32 %v1299, 2147483648
        %v1301 = vmul.f32 %v1300, 1.442695
        %v1302 = vpow.pop %v1301
        %v1303 = vadd.f32 %v1302, 1.0
        %v1304 = vrcp.pop %v1303
        %v1305 = vmul.f32 1.0, %v1304
        %s1306 = sld [smem:[#allocation4 + $0x6]]
        %v1307 = vstv %s1306
        %v1308 = vmul.f32 %v1307, %v651
        %s1309 = sld [smem:[#allocation4 + $0x86]]
        %v1310 = vstv %s1309
        %v1311 = vmul.f32 %v1310, %v651
        %v1313 = vrot.slane %v1311, 5
        %v1314 = vrot.slane %v1313, 4
        %v1316 = vadd.f32 %v1308, %v1314
        %s1317 = sld [smem:[#allocation4 + $0x106]]
        %v1318 = vstv %s1317
        %v1319 = vmul.f32 %v1318, %v651
        %v1321 = vrot.slane %v1319, 6
        %v1322 = vrot.slane %v1321, 4
        %v1324 = vadd.f32 %v1316, %v1322
        %s1325 = sld [smem:[#allocation4 + $0x186]]
        %v1326 = vstv %s1325
        %v1327 = vmul.f32 %v1326, %v651
        %v1329 = vrot.slane %v1327, 7
        %v1330 = vrot.slane %v1329, 4
        %v1332 = vadd.f32 %v1324, %v1330
        %s1333 = sld [smem:[#allocation4 + $0x206]]
        %v1334 = vstv %s1333
        %v1335 = vmul.f32 %v1334, %v648
        %v1336 = vadd.f32 %v1332, %v1335
        %s1337 = sld [smem:[#allocation4 + $0x286]]
        %v1338 = vstv %s1337
        %v1339 = vmul.f32 %v1338, %v648
        %v1341 = vrot.slane %v1339, 5
        %v1342 = vrot.slane %v1341, 4
        %v1344 = vadd.f32 %v1336, %v1342
        %s1345 = sld [smem:[#allocation4 + $0x306]]
        %v1346 = vstv %s1345
        %v1347 = vmul.f32 %v1346, %v648
        %v1349 = vrot.slane %v1347, 6
        %v1350 = vrot.slane %v1349, 4
        %v1352 = vadd.f32 %v1344, %v1350
        %s1353 = sld [smem:[#allocation4 + $0x386]]
        %v1354 = vstv %s1353
        %v1355 = vmul.f32 %v1354, %v648
        %v1357 = vrot.slane %v1355, 7
        %v1358 = vrot.slane %v1357, 4
        %v1360 = vadd.f32 %v1352, %v1358
        %s1361 = sld [smem:[#allocation6 + $0x6]]
        %v1362 = vstv %s1361
        %v1363 = vadd.f32 %v1360, %v1362
        %v1364 = vxor.u32 %v1363, 2147483648
        %v1365 = vmul.f32 %v1364, 1.442695
        %v1366 = vpow.pop %v1365
        %v1367 = vadd.f32 %v1366, 1.0
        %v1368 = vrcp.pop %v1367
        %v1369 = vmul.f32 1.0, %v1368
        %s1370 = sld [smem:[#allocation4 + $0xa]]
        %v1371 = vstv %s1370
        %v1372 = vmul.f32 %v1371, %v651
        %s1373 = sld [smem:[#allocation4 + $0x8a]]
        %v1374 = vstv %s1373
        %v1375 = vmul.f32 %v1374, %v651
        %v1377 = vrot.slane %v1375, 5
        %v1378 = vrot.slane %v1377, 4
        %v1380 = vadd.f32 %v1372, %v1378
        %s1381 = sld [smem:[#allocation4 + $0x10a]]
        %v1382 = vstv %s1381
        %v1383 = vmul.f32 %v1382, %v651
        %v1385 = vrot.slane %v1383, 6
        %v1386 = vrot.slane %v1385, 4
        %v1388 = vadd.f32 %v1380, %v1386
        %s1389 = sld [smem:[#allocation4 + $0x18a]]
        %v1390 = vstv %s1389
        %v1391 = vmul.f32 %v1390, %v651
        %v1393 = vrot.slane %v1391, 7
        %v1394 = vrot.slane %v1393, 4
        %v1396 = vadd.f32 %v1388, %v1394
        %s1397 = sld [smem:[#allocation4 + $0x20a]]
        %v1398 = vstv %s1397
        %v1399 = vmul.f32 %v1398, %v648
        %v1400 = vadd.f32 %v1396, %v1399
        %s1401 = sld [smem:[#allocation4 + $0x28a]]
        %v1402 = vstv %s1401
        %v1403 = vmul.f32 %v1402, %v648
        %v1405 = vrot.slane %v1403, 5
        %v1406 = vrot.slane %v1405, 4
        %v1408 = vadd.f32 %v1400, %v1406
        %s1409 = sld [smem:[#allocation4 + $0x30a]]
        %v1410 = vstv %s1409
        %v1411 = vmul.f32 %v1410, %v648
        %v1413 = vrot.slane %v1411, 6
        %v1414 = vrot.slane %v1413, 4
        %v1416 = vadd.f32 %v1408, %v1414
        %s1417 = sld [smem:[#allocation4 + $0x38a]]
        %v1418 = vstv %s1417
        %v1419 = vmul.f32 %v1418, %v648
        %v1421 = vrot.slane %v1419, 7
        %v1422 = vrot.slane %v1421, 4
        %v1424 = vadd.f32 %v1416, %v1422
        %s1425 = sld [smem:[#allocation6 + $0xa]]
        %v1426 = vstv %s1425
        %v1427 = vadd.f32 %v1424, %v1426
        %v1428 = vxor.u32 %v1427, 2147483648
        %v1429 = vmul.f32 %v1428, 1.442695
        %v1430 = vpow.pop %v1429
        %v1431 = vadd.f32 %v1430, 1.0
        %v1432 = vrcp.pop %v1431
        %v1433 = vmul.f32 1.0, %v1432
        %s1434 = sld [smem:[#allocation4 + $0xe]]
        %v1435 = vstv %s1434
        %v1436 = vmul.f32 %v1435, %v651
        %s1437 = sld [smem:[#allocation4 + $0x8e]]
        %v1438 = vstv %s1437
        %v1439 = vmul.f32 %v1438, %v651
        %v1441 = vrot.slane %v1439, 5
        %v1442 = vrot.slane %v1441, 4
        %v1444 = vadd.f32 %v1436, %v1442
        %s1445 = sld [smem:[#allocation4 + $0x10e]]
        %v1446 = vstv %s1445
        %v1447 = vmul.f32 %v1446, %v651
        %v1449 = vrot.slane %v1447, 6
        %v1450 = vrot.slane %v1449, 4
        %v1452 = vadd.f32 %v1444, %v1450
        %s1453 = sld [smem:[#allocation4 + $0x18e]]
        %v1454 = vstv %s1453
        %v1455 = vmul.f32 %v1454, %v651
        %v1457 = vrot.slane %v1455, 7
        %v1458 = vrot.slane %v1457, 4
        %v1460 = vadd.f32 %v1452, %v1458
        %s1461 = sld [smem:[#allocation4 + $0x20e]]
        %v1462 = vstv %s1461
        %v1463 = vmul.f32 %v1462, %v648
        %v1464 = vadd.f32 %v1460, %v1463
        %s1465 = sld [smem:[#allocation4 + $0x28e]]
        %v1466 = vstv %s1465
        %v1467 = vmul.f32 %v1466, %v648
        %v1469 = vrot.slane %v1467, 5
        %v1470 = vrot.slane %v1469, 4
        %v1472 = vadd.f32 %v1464, %v1470
        %s1473 = sld [smem:[#allocation4 + $0x30e]]
        %v1474 = vstv %s1473
        %v1475 = vmul.f32 %v1474, %v648
        %v1477 = vrot.slane %v1475, 6
        %v1478 = vrot.slane %v1477, 4
        %v1480 = vadd.f32 %v1472, %v1478
        %s1481 = sld [smem:[#allocation4 + $0x38e]]
        %v1482 = vstv %s1481
        %v1483 = vmul.f32 %v1482, %v648
        %v1485 = vrot.slane %v1483, 7
        %v1486 = vrot.slane %v1485, 4
        %v1488 = vadd.f32 %v1480, %v1486
        %s1489 = sld [smem:[#allocation6 + $0xe]]
        %v1490 = vstv %s1489
        %v1491 = vadd.f32 %v1488, %v1490
        %v1492 = vtanh.pop %v1491
        %v1493 = vrot.slane %v649, 6
        %v1494 = vrot.slane %v1493, 4
        %v1496 = vmul.f32 %v1369, %v1494
        %v1497 = vmul.f32 %v1305, %v1492
        %v1498 = vadd.f32 %v1496, %v1497
        %v1499 = vtanh.pop %v1498
        %v1500 = vmul.f32 %v1433, %v1499
        %v1503 = vunpack.c.l.s4 1966171168
        %v1504 = vunpack.c.0.s8 %v1503
        %v1505 = vlaneseq
        %v1506 = vshrl.u32 %v1505, 7
        %v1507 = vsub.s32 %v1504, %v1506
        %v1508 = vrot.slane %v1498, %v1507
        %v1510 = vunpack.c.l.s4 1966171168
        %v1511 = vunpack.c.0.s8 %v1510
        %v1512 = vlaneseq
        %v1513 = vshrl.u32 %v1512, 7
        %v1514 = vsub.s32 %v1511, %v1513
        %v1515 = vrot.slane %v1508, %v1514
        %s1517 = scalar_lea.vmem %s643, 2
        %1518 = vst.msk [vmem:[%s1517] ss:$4 sm:$0x3] %vm927, %v1515
        %v1521 = vunpack.c.l.s4 1966171168
        %v1522 = vunpack.c.0.s8 %v1521
        %v1523 = vlaneseq
        %v1524 = vshrl.u32 %v1523, 7
        %v1525 = vsub.s32 %v1522, %v1524
        %v1526 = vrot.slane %v1500, %v1525
        %v1528 = vunpack.c.l.s4 1966171168
        %v1529 = vunpack.c.0.s8 %v1528
        %v1530 = vlaneseq
        %v1531 = vshrl.u32 %v1530, 7
        %v1532 = vsub.s32 %v1529, %v1531
        %v1533 = vrot.slane %v1526, %v1532
        %s1535 = scalar_lea.vmem %s633, 2
        %1536 = vst.msk [vmem:[%s1535] ss:$4 sm:$0x3] %vm927, %v1533
        %s1537 = sld [smem:[#allocation4 + $0x3]]
        %v1538 = vstv %s1537
        %v1539 = vmul.f32 %v1538, %v651
        %s1540 = sld [smem:[#allocation4 + $0x83]]
        %v1541 = vstv %s1540
        %v1542 = vmul.f32 %v1541, %v651
        %v1544 = vrot.slane %v1542, 5
        %v1545 = vrot.slane %v1544, 4
        %v1547 = vadd.f32 %v1539, %v1545
        %s1548 = sld [smem:[#allocation4 + $0x103]]
        %v1549 = vstv %s1548
        %v1550 = vmul.f32 %v1549, %v651
        %v1552 = vrot.slane %v1550, 6
        %v1553 = vrot.slane %v1552, 4
        %v1555 = vadd.f32 %v1547, %v1553
        %s1556 = sld [smem:[#allocation4 + $0x183]]
        %v1557 = vstv %s1556
        %v1558 = vmul.f32 %v1557, %v651
        %v1560 = vrot.slane %v1558, 7
        %v1561 = vrot.slane %v1560, 4
        %v1563 = vadd.f32 %v1555, %v1561
        %s1564 = sld [smem:[#allocation4 + $0x203]]
        %v1565 = vstv %s1564
        %v1566 = vmul.f32 %v1565, %v648
        %v1567 = vadd.f32 %v1563, %v1566
        %s1568 = sld [smem:[#allocation4 + $0x283]]
        %v1569 = vstv %s1568
        %v1570 = vmul.f32 %v1569, %v648
        %v1572 = vrot.slane %v1570, 5
        %v1573 = vrot.slane %v1572, 4
        %v1575 = vadd.f32 %v1567, %v1573
        %s1576 = sld [smem:[#allocation4 + $0x303]]
        %v1577 = vstv %s1576
        %v1578 = vmul.f32 %v1577, %v648
        %v1580 = vrot.slane %v1578, 6
        %v1581 = vrot.slane %v1580, 4
        %v1583 = vadd.f32 %v1575, %v1581
        %s1584 = sld [smem:[#allocation4 + $0x383]]
        %v1585 = vstv %s1584
        %v1586 = vmul.f32 %v1585, %v648
        %v1588 = vrot.slane %v1586, 7
        %v1589 = vrot.slane %v1588, 4
        %v1591 = vadd.f32 %v1583, %v1589
        %s1592 = sld [smem:[#allocation6 + $0x3]]
        %v1593 = vstv %s1592
        %v1594 = vadd.f32 %v1591, %v1593
        %v1595 = vxor.u32 %v1594, 2147483648
        %v1596 = vmul.f32 %v1595, 1.442695
        %v1597 = vpow.pop %v1596
        %v1598 = vadd.f32 %v1597, 1.0
        %v1599 = vrcp.pop %v1598
        %v1600 = vmul.f32 1.0, %v1599
        %s1601 = sld [smem:[#allocation4 + $0x7]]
        %v1602 = vstv %s1601
        %v1603 = vmul.f32 %v1602, %v651
        %s1604 = sld [smem:[#allocation4 + $0x87]]
        %v1605 = vstv %s1604
        %v1606 = vmul.f32 %v1605, %v651
        %v1608 = vrot.slane %v1606, 5
        %v1609 = vrot.slane %v1608, 4
        %v1611 = vadd.f32 %v1603, %v1609
        %s1612 = sld [smem:[#allocation4 + $0x107]]
        %v1613 = vstv %s1612
        %v1614 = vmul.f32 %v1613, %v651
        %v1616 = vrot.slane %v1614, 6
        %v1617 = vrot.slane %v1616, 4
        %v1619 = vadd.f32 %v1611, %v1617
        %s1620 = sld [smem:[#allocation4 + $0x187]]
        %v1621 = vstv %s1620
        %v1622 = vmul.f32 %v1621, %v651
        %v1624 = vrot.slane %v1622, 7
        %v1625 = vrot.slane %v1624, 4
        %v1627 = vadd.f32 %v1619, %v1625
        %s1628 = sld [smem:[#allocation4 + $0x207]]
        %v1629 = vstv %s1628
        %v1630 = vmul.f32 %v1629, %v648
        %v1631 = vadd.f32 %v1627, %v1630
        %s1632 = sld [smem:[#allocation4 + $0x287]]
        %v1633 = vstv %s1632
        %v1634 = vmul.f32 %v1633, %v648
        %v1636 = vrot.slane %v1634, 5
        %v1637 = vrot.slane %v1636, 4
        %v1639 = vadd.f32 %v1631, %v1637
        %s1640 = sld [smem:[#allocation4 + $0x307]]
        %v1641 = vstv %s1640
        %v1642 = vmul.f32 %v1641, %v648
        %v1644 = vrot.slane %v1642, 6
        %v1645 = vrot.slane %v1644, 4
        %v1647 = vadd.f32 %v1639, %v1645
        %s1648 = sld [smem:[#allocation4 + $0x387]]
        %v1649 = vstv %s1648
        %v1650 = vmul.f32 %v1649, %v648
        %v1652 = vrot.slane %v1650, 7
        %v1653 = vrot.slane %v1652, 4
        %v1655 = vadd.f32 %v1647, %v1653
        %s1656 = sld [smem:[#allocation6 + $0x7]]
        %v1657 = vstv %s1656
        %v1658 = vadd.f32 %v1655, %v1657
        %v1659 = vxor.u32 %v1658, 2147483648
        %v1660 = vmul.f32 %v1659, 1.442695
        %v1661 = vpow.pop %v1660
        %v1662 = vadd.f32 %v1661, 1.0
        %v1663 = vrcp.pop %v1662
        %v1664 = vmul.f32 1.0, %v1663
        %s1665 = sld [smem:[#allocation4 + $0xb]]
        %v1666 = vstv %s1665
        %v1667 = vmul.f32 %v1666, %v651
        %s1668 = sld [smem:[#allocation4 + $0x8b]]
        %v1669 = vstv %s1668
        %v1670 = vmul.f32 %v1669, %v651
        %v1672 = vrot.slane %v1670, 5
        %v1673 = vrot.slane %v1672, 4
        %v1675 = vadd.f32 %v1667, %v1673
        %s1676 = sld [smem:[#allocation4 + $0x10b]]
        %v1677 = vstv %s1676
        %v1678 = vmul.f32 %v1677, %v651
        %v1680 = vrot.slane %v1678, 6
        %v1681 = vrot.slane %v1680, 4
        %v1683 = vadd.f32 %v1675, %v1681
        %s1684 = sld [smem:[#allocation4 + $0x18b]]
        %v1685 = vstv %s1684
        %v1686 = vmul.f32 %v1685, %v651
        %v1688 = vrot.slane %v1686, 7
        %v1689 = vrot.slane %v1688, 4
        %v1691 = vadd.f32 %v1683, %v1689
        %s1692 = sld [smem:[#allocation4 + $0x20b]]
        %v1693 = vstv %s1692
        %v1694 = vmul.f32 %v1693, %v648
        %v1695 = vadd.f32 %v1691, %v1694
        %s1696 = sld [smem:[#allocation4 + $0x28b]]
        %v1697 = vstv %s1696
        %v1698 = vmul.f32 %v1697, %v648
        %v1700 = vrot.slane %v1698, 5
        %v1701 = vrot.slane %v1700, 4
        %v1703 = vadd.f32 %v1695, %v1701
        %s1704 = sld [smem:[#allocation4 + $0x30b]]
        %v1705 = vstv %s1704
        %v1706 = vmul.f32 %v1705, %v648
        %v1708 = vrot.slane %v1706, 6
        %v1709 = vrot.slane %v1708, 4
        %v1711 = vadd.f32 %v1703, %v1709
        %s1712 = sld [smem:[#allocation4 + $0x38b]]
        %v1713 = vstv %s1712
        %v1714 = vmul.f32 %v1713, %v648
        %v1716 = vrot.slane %v1714, 7
        %v1717 = vrot.slane %v1716, 4
        %v1719 = vadd.f32 %v1711, %v1717
        %s1720 = sld [smem:[#allocation6 + $0xb]]
        %v1721 = vstv %s1720
        %v1722 = vadd.f32 %v1719, %v1721
        %v1723 = vxor.u32 %v1722, 2147483648
        %v1724 = vmul.f32 %v1723, 1.442695
        %v1725 = vpow.pop %v1724
        %v1726 = vadd.f32 %v1725, 1.0
        %v1727 = vrcp.pop %v1726
        %v1728 = vmul.f32 1.0, %v1727
        %s1729 = sld [smem:[#allocation4 + $0xf]]
        %v1730 = vstv %s1729
        %v1731 = vmul.f32 %v1730, %v651
        %s1732 = sld [smem:[#allocation4 + $0x8f]]
        %v1733 = vstv %s1732
        %v1734 = vmul.f32 %v1733, %v651
        %v1736 = vrot.slane %v1734, 5
        %v1737 = vrot.slane %v1736, 4
        %v1739 = vadd.f32 %v1731, %v1737
        %s1740 = sld [smem:[#allocation4 + $0x10f]]
        %v1741 = vstv %s1740
        %v1742 = vmul.f32 %v1741, %v651
        %v1744 = vrot.slane %v1742, 6
        %v1745 = vrot.slane %v1744, 4
        %v1747 = vadd.f32 %v1739, %v1745
        %s1748 = sld [smem:[#allocation4 + $0x18f]]
        %v1749 = vstv %s1748
        %v1750 = vmul.f32 %v1749, %v651
        %v1752 = vrot.slane %v1750, 7
        %v1753 = vrot.slane %v1752, 4
        %v1755 = vadd.f32 %v1747, %v1753
        %s1756 = sld [smem:[#allocation4 + $0x20f]]
        %v1757 = vstv %s1756
        %v1758 = vmul.f32 %v1757, %v648
        %v1759 = vadd.f32 %v1755, %v1758
        %s1760 = sld [smem:[#allocation4 + $0x28f]]
        %v1761 = vstv %s1760
        %v1762 = vmul.f32 %v1761, %v648
        %v1764 = vrot.slane %v1762, 5
        %v1765 = vrot.slane %v1764, 4
        %v1767 = vadd.f32 %v1759, %v1765
        %s1768 = sld [smem:[#allocation4 + $0x30f]]
        %v1769 = vstv %s1768
        %v1770 = vmul.f32 %v1769, %v648
        %v1772 = vrot.slane %v1770, 6
        %v1773 = vrot.slane %v1772, 4
        %v1775 = vadd.f32 %v1767, %v1773
        %s1776 = sld [smem:[#allocation4 + $0x38f]]
        %v1777 = vstv %s1776
        %v1778 = vmul.f32 %v1777, %v648
        %v1780 = vrot.slane %v1778, 7
        %v1781 = vrot.slane %v1780, 4
        %v1783 = vadd.f32 %v1775, %v1781
        %s1784 = sld [smem:[#allocation6 + $0xf]]
        %v1785 = vstv %s1784
        %v1786 = vadd.f32 %v1783, %v1785
        %v1787 = vtanh.pop %v1786
        %v1788 = vrot.slane %v649, 7
        %v1789 = vrot.slane %v1788, 4
        %v1791 = vmul.f32 %v1664, %v1789
        %v1792 = vmul.f32 %v1600, %v1787
        %v1793 = vadd.f32 %v1791, %v1792
        %v1794 = vtanh.pop %v1793
        %v1795 = vmul.f32 %v1728, %v1794
        %v1798 = vunpack.c.l.s4 1966171168
        %v1799 = vunpack.c.0.s8 %v1798
        %v1800 = vlaneseq
        %v1801 = vshrl.u32 %v1800, 7
        %v1802 = vsub.s32 %v1799, %v1801
        %v1803 = vrot.slane %v1793, %v1802
        %v1805 = vunpack.c.l.s4 1966171168
        %v1806 = vunpack.c.0.s8 %v1805
        %v1807 = vlaneseq
        %v1808 = vshrl.u32 %v1807, 7
        %v1809 = vsub.s32 %v1806, %v1808
        %v1810 = vrot.slane %v1803, %v1809
        %s1812 = scalar_lea.vmem %s643, 3
        %1813 = vst.msk [vmem:[%s1812] ss:$4 sm:$0x3] %vm927, %v1810
        %v1816 = vunpack.c.l.s4 1966171168
        %v1817 = vunpack.c.0.s8 %v1816
        %v1818 = vlaneseq
        %v1819 = vshrl.u32 %v1818, 7
        %v1820 = vsub.s32 %v1817, %v1819
        %v1821 = vrot.slane %v1795, %v1820
        %v1823 = vunpack.c.l.s4 1966171168
        %v1824 = vunpack.c.0.s8 %v1823
        %v1825 = vlaneseq
        %v1826 = vshrl.u32 %v1825, 7
        %v1827 = vsub.s32 %v1824, %v1826
        %v1828 = vrot.slane %v1821, %v1827
        %s1830 = scalar_lea.vmem %s633, 3
        %1831 = vst.msk [vmem:[%s1830] ss:$4 sm:$0x3] %vm927, %v1828
        %s1832 = sld [smem:[#allocation7]]
        %v1833 = vstv %s1832
        %v1834 = vmul.f32 %v1833, %v907
        %s1835 = sld [smem:[#allocation7 + $0x80]]
        %v1836 = vstv %s1835
        %v1837 = vmul.f32 %v1836, %v1205
        %v1838 = vadd.f32 %v1834, %v1837
        %s1839 = sld [smem:[#allocation7 + $0x100]]
        %v1840 = vstv %s1839
        %v1841 = vmul.f32 %v1840, %v1500
        %v1842 = vadd.f32 %v1838, %v1841
        %s1843 = sld [smem:[#allocation7 + $0x180]]
        %v1844 = vstv %s1843
        %v1845 = vmul.f32 %v1844, %v1795
        %v1846 = vadd.f32 %v1842, %v1845
        %s1847 = sld [smem:[#allocation9]]
        %v1848 = vstv %s1847
        %v1849 = vadd.f32 %v1846, %v1848
        %v1850 = vmul.f32 %v1849, 0.33333334
        %v1851 = vsub.f32 %v646, %v1850
        %v1854 = vunpack.c.l.s4 1966171168
        %v1855 = vunpack.c.0.s8 %v1854
        %v1856 = vlaneseq
        %v1857 = vshrl.u32 %v1856, 7
        %v1858 = vsub.s32 %v1855, %v1857
        %v1859 = vrot.slane %v1851, %v1858
        %v1861 = vunpack.c.l.s4 1966171168
        %v1862 = vunpack.c.0.s8 %v1861
        %v1863 = vlaneseq
        %v1864 = vshrl.u32 %v1863, 7
        %v1865 = vsub.s32 %v1862, %v1864
        %v1866 = vrot.slane %v1859, %v1865
        %1868 = vst.msk [vmem:[%s623] ss:$4 sm:$0x3] %vm927, %v1866
        %s1869 = sld [smem:[#allocation7 + $0x1]]
        %v1870 = vstv %s1869
        %v1871 = vmul.f32 %v1870, %v907
        %s1872 = sld [smem:[#allocation7 + $0x81]]
        %v1873 = vstv %s1872
        %v1874 = vmul.f32 %v1873, %v1205
        %v1875 = vadd.f32 %v1871, %v1874
        %s1876 = sld [smem:[#allocation7 + $0x101]]
        %v1877 = vstv %s1876
        %v1878 = vmul.f32 %v1877, %v1500
        %v1879 = vadd.f32 %v1875, %v1878
        %s1880 = sld [smem:[#allocation7 + $0x181]]
        %v1881 = vstv %s1880
        %v1882 = vmul.f32 %v1881, %v1795
        %v1883 = vadd.f32 %v1879, %v1882
        %s1884 = sld [smem:[#allocation9 + $0x1]]
        %v1885 = vstv %s1884
        %v1886 = vadd.f32 %v1883, %v1885
        %v1887 = vmul.f32 %v1886, 0.33333334
        %v1889 = vrot.slane %v1887, 7
        %v1891 = vsub.f32 %v646, %v1889
        %v1894 = vunpack.c.l.s4 1966171168
        %v1895 = vunpack.c.0.s8 %v1894
        %v1896 = vlaneseq
        %v1897 = vshrl.u32 %v1896, 7
        %v1898 = vsub.s32 %v1895, %v1897
        %v1899 = vrot.slane %v1891, %v1898
        %v1900 = vcombine.high %v1899, %v1899
        %v1902 = vunpack.c.l.s4 1966171168
        %v1903 = vunpack.c.0.s8 %v1902
        %v1904 = vlaneseq
        %v1905 = vshrl.u32 %v1904, 7
        %v1906 = vsub.s32 %v1903, %v1905
        %v1907 = vrot.slane %v1900, %v1906
        %s1909 = scalar_lea.vmem %s623, 1
        %1910 = vst.msk [vmem:[%s1909] ss:$4 sm:$0x3] %vm927, %v1907
        %s1911 = sld [smem:[#allocation7 + $0x2]]
        %v1912 = vstv %s1911
        %v1913 = vmul.f32 %v1912, %v907
        %s1914 = sld [smem:[#allocation7 + $0x82]]
        %v1915 = vstv %s1914
        %v1916 = vmul.f32 %v1915, %v1205
        %v1917 = vadd.f32 %v1913, %v1916
        %s1918 = sld [smem:[#allocation7 + $0x102]]
        %v1919 = vstv %s1918
        %v1920 = vmul.f32 %v1919, %v1500
        %v1921 = vadd.f32 %v1917, %v1920
        %s1922 = sld [smem:[#allocation7 + $0x182]]
        %v1923 = vstv %s1922
        %v1924 = vmul.f32 %v1923, %v1795
        %v1925 = vadd.f32 %v1921, %v1924
        %s1926 = sld [smem:[#allocation9 + $0x2]]
        %v1927 = vstv %s1926
        %v1928 = vadd.f32 %v1925, %v1927
        %v1929 = vmul.f32 %v1928, 0.33333334
        %v1931 = vrot.slane %v1929, 6
        %v1933 = vsub.f32 %v646, %v1931
        %v1936 = vunpack.c.l.s4 1966171168
        %v1937 = vunpack.c.0.s8 %v1936
        %v1938 = vlaneseq
        %v1939 = vshrl.u32 %v1938, 7
        %v1940 = vsub.s32 %v1937, %v1939
        %v1941 = vrot.slane %v1933, %v1940
        %v1943 = vunpack.c.l.s4 1966171168
        %v1944 = vunpack.c.0.s8 %v1943
        %v1945 = vlaneseq
        %v1946 = vshrl.u32 %v1945, 7
        %v1947 = vsub.s32 %v1944, %v1946
        %v1948 = vrot.slane %v1941, %v1947
        %v1949 = vcombine.high %v1948, %v1948
        %s1951 = scalar_lea.vmem %s623, 2
        %1952 = vst.msk [vmem:[%s1951] ss:$4 sm:$0x3] %vm927, %v1949
        %s1953 = sld [smem:[#allocation7 + $0x3]]
        %v1954 = vstv %s1953
        %v1955 = vmul.f32 %v1954, %v907
        %s1956 = sld [smem:[#allocation7 + $0x83]]
        %v1957 = vstv %s1956
        %v1958 = vmul.f32 %v1957, %v1205
        %v1959 = vadd.f32 %v1955, %v1958
        %s1960 = sld [smem:[#allocation7 + $0x103]]
        %v1961 = vstv %s1960
        %v1962 = vmul.f32 %v1961, %v1500
        %v1963 = vadd.f32 %v1959, %v1962
        %s1964 = sld [smem:[#allocation7 + $0x183]]
        %v1965 = vstv %s1964
        %v1966 = vmul.f32 %v1965, %v1795
        %v1967 = vadd.f32 %v1963, %v1966
        %s1968 = sld [smem:[#allocation9 + $0x3]]
        %v1969 = vstv %s1968
        %v1970 = vadd.f32 %v1967, %v1969
        %v1971 = vmul.f32 %v1970, 0.33333334
        %v1973 = vrot.slane %v1971, 5
        %v1975 = vsub.f32 %v646, %v1973
        %v1978 = vunpack.c.l.s4 1966171168
        %v1979 = vunpack.c.0.s8 %v1978
        %v1980 = vlaneseq
        %v1981 = vshrl.u32 %v1980, 7
        %v1982 = vsub.s32 %v1979, %v1981
        %v1983 = vrot.slane %v1975, %v1982
        %v1984 = vcombine.high %v1983, %v1983
        %v1986 = vunpack.c.l.s4 1966171168
        %v1987 = vunpack.c.0.s8 %v1986
        %v1988 = vlaneseq
        %v1989 = vshrl.u32 %v1988, 7
        %v1990 = vsub.s32 %v1987, %v1989
        %v1991 = vrot.slane %v1984, %v1990
        %v1992 = vcombine.high %v1991, %v1991
        %s1994 = scalar_lea.vmem %s623, 3
        %1995 = vst.msk [vmem:[%s1994] ss:$4 sm:$0x3] %vm927, %v1992
        %s1996 = smul.u32 2, %s31
        %p1997 = scmp.lt.s32.totalorder %s30, 1
        %s1998 = scalar_select %p1997, %s30, 1
        %p1999 = scmp.lt.s32.totalorder %s1996, 1
        %s2000 = scalar_select %p1999, %s1996, 1
        %s2001 = smul.addr %s1998, 2
        %s2002 = sadd.s32 %s2000, %s2001
        %s2003 = smul.addr %s2002, 4
        %s2004 = scalar_lea.vmem %s9, %s2003
        %s2005 = smul.u32 2, %s31
        %p2006 = scmp.lt.s32.totalorder %s30, 1
        %s2007 = scalar_select %p2006, %s30, 1
        %p2008 = scmp.lt.s32.totalorder %s2005, 1
        %s2009 = scalar_select %p2008, %s2005, 1
        %s2010 = smul.addr %s2007, 2
        %s2011 = sadd.s32 %s2009, %s2010
        %s2012 = smul.addr %s2011, 4
        %s2013 = scalar_lea.vmem %s10, %s2012
        %s2014 = smul.u32 2, %s31
        %p2015 = scmp.lt.s32.totalorder %s30, 1
        %s2016 = scalar_select %p2015, %s30, 1
        %p2017 = scmp.lt.s32.totalorder %s2014, 1
        %s2018 = scalar_select %p2017, %s2014, 1
        %s2019 = smul.addr %s2016, 2
        %s2020 = sadd.s32 %s2018, %s2019
        %s2021 = smul.addr %s2020, 4
        %s2022 = scalar_lea.vmem %s11, %s2021
        // Predicated region
        $region77: #{closed_call.106} parent=55 // pred_check
          %p2023 = pneg %p275
        $region78: #{closed_call.106} parent=55 // pred_check_branch
          %2025 = sbr.rel (%p2023) target = $region80
        $region79: #{closed_call.106} parent=55 // pred_region
          %s2026 = smul.u32 2, %s31
        $region80: #{closed_call.106} parent=55 // pred_fallthru
          _
        // Predicated region
        $region81: #{closed_call.106} parent=55 // pred_check
          %p2027 = pneg %p303
        $region82: #{closed_call.106} parent=55 // pred_check_branch
          %2029 = sbr.rel (%p2027) target = $region84
        $region83: #{closed_call.106} parent=55 // pred_region
          %s2030 = smul.u32 2, %s31
        $region84: #{closed_call.106} parent=55 // pred_fallthru
          _
        // Predicated region
        $region85: #{closed_call.106} parent=55 // pred_check
          %p2031 = pneg %p331
        $region86: #{closed_call.106} parent=55 // pred_check_branch
          %2033 = sbr.rel (%p2031) target = $region88
        $region87: #{closed_call.106} parent=55 // pred_region
          %s2034 = smul.u32 2, %s31
        $region88: #{closed_call.106} parent=55 // pred_fallthru
          _
      $region56: #{closed_call.106} parent=5 // pred_fallthru
        _
      %p2035 = scmp.le.s32.totalorder 2, %s21
      // Predicated region
      $region89: #{closed_call.106} parent=5 // pred_check
        %p2036 = pneg %p2035
      $region90: #{closed_call.106} parent=5 // pred_check_branch
        %2038 = sbr.rel (%p2036) target = $region92
      $region91: #{closed_call.106} parent=5 // pred_region
        %s2039 = ssub.s32 %s21, 2
        // Predicated region
        $region93: #{closed_call.106} parent=91 // pred_check
          %p2040 = pneg %p281
        $region94: #{closed_call.106} parent=91 // pred_check_branch
          %2042 = sbr.rel (%p2040) target = $region96
        $region95: #{closed_call.106} parent=91 // pred_region
          %s2043 = smul.u32 2, %s33
          %p2044 = scmp.lt.s32.totalorder %s32, 1
          %s2045 = scalar_select %p2044, %s32, 1
          %p2046 = scmp.lt.s32.totalorder %s2043, 1
          %s2047 = scalar_select %p2046, %s2043, 1
          %s2048 = smul.addr %s2045, 2
          %s2049 = sadd.s32 %s2047, %s2048
          %s2050 = smul.addr %s2049, 4
          %s2051 = scalar_lea.vmem %s9, %s2050
        $region96: #{closed_call.106} parent=91 // pred_fallthru
          _
        // Predicated region
        $region97: #{closed_call.106} parent=91 // pred_check
          %p2052 = pneg %p309
        $region98: #{closed_call.106} parent=91 // pred_check_branch
          %2054 = sbr.rel (%p2052) target = $region100
        $region99: #{closed_call.106} parent=91 // pred_region
          %s2055 = smul.u32 2, %s33
          %p2056 = scmp.lt.s32.totalorder %s32, 1
          %s2057 = scalar_select %p2056, %s32, 1
          %p2058 = scmp.lt.s32.totalorder %s2055, 1
          %s2059 = scalar_select %p2058, %s2055, 1
          %s2060 = smul.addr %s2057, 2
          %s2061 = sadd.s32 %s2059, %s2060
          %s2062 = smul.addr %s2061, 4
          %s2063 = scalar_lea.vmem %s10, %s2062
        $region100: #{closed_call.106} parent=91 // pred_fallthru
          _
        // Predicated region
        $region101: #{closed_call.106} parent=91 // pred_check
          %p2064 = pneg %p337
        $region102: #{closed_call.106} parent=91 // pred_check_branch
          %2066 = sbr.rel (%p2064) target = $region104
        $region103: #{closed_call.106} parent=91 // pred_region
          %s2067 = smul.u32 2, %s33
          %p2068 = scmp.lt.s32.totalorder %s32, 1
          %s2069 = scalar_select %p2068, %s32, 1
          %p2070 = scmp.lt.s32.totalorder %s2067, 1
          %s2071 = scalar_select %p2070, %s2067, 1
          %s2072 = smul.addr %s2069, 2
          %s2073 = sadd.s32 %s2071, %s2072
          %s2074 = smul.addr %s2073, 4
          %s2075 = scalar_lea.vmem %s11, %s2074
        $region104: #{closed_call.106} parent=91 // pred_fallthru
          _
      $region92: #{closed_call.106} parent=5 // pred_fallthru
        _
    $region6: #{closed_call.106} parent=1 // loop_footer
      %s25 = sadd.s32 1, %s21
    $region7: #{closed_call.106} parent=1 // loop_footer_branch
      %20 = sbr.rel target = $region3
    $region8: #{closed_call.106} parent=1 // loop_exit
      _
    %2076 = vsyncpa [#allocation3], 1
    %s2077 = scalar_lea.sflag [#allocation3], 1
    %2078 = vsyncpa %s2077, 1
    %2079 = vsyncpa [#allocation5], 1
    %2080 = vsyncpa [#allocation8], 1

</llo_original>
